<compile_context>
chip_gen: v7x
topology: tpu7x:2x2x1
jax: 0.10.0
libtpu: 0.0.40
codegen_flags: <defaults>
</compile_context>

<pallas_src>
import functools

import jax
import jax.numpy as jnp
from jax.experimental import pallas as pl
from jax.experimental.pallas import tpu as pltpu


_ACT_DTYPE = jnp.bfloat16          # storage dtype for activations / matmul inputs
_TM_TARGET = 512                   # patch rows per grid step (~1.2 MiB @ K=1152, bf16)
_VMEM_LIMIT = 32 * 1024 * 1024     # safe on v5e (128 MiB), v6e (128 MiB), v7x (64 MiB)


def _round_up(x, m):
    return (x + m - 1) // m * m


# ----------------------------------------------------------------------------
# Pallas kernels
# ----------------------------------------------------------------------------
def _conv_bn_kernel(do_relu, p_ref, w_ref, scale_ref, shift_ref, o_ref):
    """out = relu?((patches @ W) * bn_scale + bn_shift), f32 accumulate/epilogue."""
    acc = jnp.dot(p_ref[...], w_ref[...], preferred_element_type=jnp.float32)
    out = acc * scale_ref[...] + shift_ref[...]
    if do_relu:
        out = jnp.maximum(out, 0.0)
    o_ref[...] = out.astype(o_ref.dtype)


def _conv_bn_res_kernel(do_relu, p_ref, w_ref, scale_ref, shift_ref, res_ref, o_ref):
    """out = relu?((patches @ W) * bn_scale + bn_shift + residual)."""
    acc = jnp.dot(p_ref[...], w_ref[...], preferred_element_type=jnp.float32)
    out = acc * scale_ref[...] + shift_ref[...] + res_ref[...].astype(jnp.float32)
    if do_relu:
        out = jnp.maximum(out, 0.0)
    o_ref[...] = out.astype(o_ref.dtype)


def fused_conv_matmul(patches, w_flat, scale, shift, residual=None, do_relu=True):
    """patches [M,K] bf16, w_flat [K,C] bf16, scale/shift [1,C] f32,
    residual [M,C] bf16 or None.  Returns [M,C] bf16."""
    M, K = patches.shape
    C = w_flat.shape[1]

    TM = min(_TM_TARGET, _round_up(M, 8))
    M_pad = _round_up(M, TM)
    if M_pad != M:
        patches = jnp.pad(patches, ((0, M_pad - M), (0, 0)))
        if residual is not None:
            residual = jnp.pad(residual, ((0, M_pad - M), (0, 0)))
    grid = (M_pad // TM,)

    in_specs = [
        pl.BlockSpec((TM, K), lambda i: (i, 0)),   # streamed, double-buffered
        pl.BlockSpec((K, C), lambda i: (0, 0)),    # resident across M tiles
        pl.BlockSpec((1, C), lambda i: (0, 0)),
        pl.BlockSpec((1, C), lambda i: (0, 0)),
    ]
    operands = [patches, w_flat, scale, shift]
    bytes_accessed = (M_pad * K + K * C + M_pad * C) * 2 + 2 * C * 4
    if residual is not None:
        in_specs.append(pl.BlockSpec((TM, C), lambda i: (i, 0)))
        operands.append(residual)
        bytes_accessed += M_pad * C * 2
        kern = functools.partial(_conv_bn_res_kernel, do_relu)
    else:
        kern = functools.partial(_conv_bn_kernel, do_relu)

    out = pl.pallas_call(
        kern,
        out_shape=jax.ShapeDtypeStruct((M_pad, C), _ACT_DTYPE),
        grid=grid,
        in_specs=in_specs,
        out_specs=pl.BlockSpec((TM, C), lambda i: (i, 0)),
        compiler_params=pltpu.CompilerParams(
            dimension_semantics=("parallel",),
            vmem_limit_bytes=_VMEM_LIMIT,
        ),
        cost_estimate=pl.CostEstimate(
            flops=2 * M_pad * K * C,
            transcendentals=0,
            bytes_accessed=bytes_accessed,
        ),
    )(*operands)

    if M_pad != M:
        out = out[:M]
    return out


def _head_kernel(x_ref, w_ref, b_ref, o_ref):
    """Global average pool over HW then Linear(C, 1).  x: [N, HW, C] bf16."""
    pooled = jnp.mean(x_ref[...].astype(jnp.float32), axis=1)          # [N, C]
    o_ref[...] = jnp.dot(pooled, w_ref[...],
                         preferred_element_type=jnp.float32) + b_ref[...]


def head(x_nhwc, fc_w, fc_b):
    N, H, W, C = x_nhwc.shape
    x3 = x_nhwc.reshape(N, H * W, C)
    return pl.pallas_call(
        _head_kernel,
        out_shape=jax.ShapeDtypeStruct((N, 1), jnp.float32),
        grid=(1,),
        in_specs=[
            pl.BlockSpec((N, H * W, C), lambda i: (0, 0, 0)),
            pl.BlockSpec((C, 1), lambda i: (0, 0)),
            pl.BlockSpec((1, 1), lambda i: (0, 0)),
        ],
        out_specs=pl.BlockSpec((N, 1), lambda i: (0, 0)),
    )(x3, fc_w, fc_b)


# ----------------------------------------------------------------------------
# Plain-JAX glue: im2col patch extraction (bf16, single concatenate)
# ----------------------------------------------------------------------------
def im2col(x, k, stride, pad):
    """x: [N,H,W,C] bf16 -> patches [N*Ho*Wo, k*k*C], channel order (kh,kw,ci)."""
    N, H, W, C = x.shape
    if pad:
        x = jnp.pad(x, ((0, 0), (pad, pad), (pad, pad), (0, 0)))
    Ho = (H + 2 * pad - k) // stride + 1
    Wo = (W + 2 * pad - k) // stride + 1
    cols = []
    for kh in range(k):
        for kw in range(k):
            cols.append(
                x[:, kh:kh + (Ho - 1) * stride + 1:stride,
                     kw:kw + (Wo - 1) * stride + 1:stride, :]
            )
    patches = jnp.concatenate(cols, axis=-1)            # [N, Ho, Wo, k*k*C]
    return patches.reshape(N * Ho * Wo, k * k * C), Ho, Wo


def conv_bn_act(x, w, scale, shift, stride, pad, residual_flat=None, relu=True):
    """Conv2d(bias=False) + BN affine + optional residual + optional ReLU."""
    N = x.shape[0]
    k, _, cin, cout = w.shape
    patches, Ho, Wo = im2col(x.astype(_ACT_DTYPE), k, stride, pad)
    w_flat = w.reshape(k * k * cin, cout).astype(_ACT_DTYPE)
    out = fused_conv_matmul(patches, w_flat, scale, shift, residual_flat, relu)
    return out.reshape(N, Ho, Wo, cout)


# ----------------------------------------------------------------------------
# Model: ResBlock and GAN_Critic forward
# ----------------------------------------------------------------------------
def resblock_forward(x, p, stride):
    cout = p["w1"].shape[3]
    # conv1 -> bn1 -> relu (no residual stream DMA'd here)
    out = conv_bn_act(x, p["w1"], p["s1"], p["b1"], stride, 1, None, relu=True)
    # residual path
    if p["wd"] is not None:
        res = conv_bn_act(x, p["wd"], p["sd"], p["bd"], stride, 0, None, relu=False)
    else:
        res = x
    res_flat = res.reshape(-1, cout).astype(_ACT_DTYPE)
    # conv2 -> bn2 -> (+residual) -> relu, fused in one Pallas call
    out = conv_bn_act(out, p["w2"], p["s2"], p["b2"], 1, 1, res_flat, relu=True)
    return out


def gan_critic_forward(params, x_nchw):
    # layout: convert PyTorch NCHW input to NHWC (bf16) for the TPU kernels.
    x = jnp.transpose(x_nchw, (0, 2, 3, 1)).astype(_ACT_DTYPE)

    # initial: Conv2d(in, 32, k=4, s=2, p=1, bias=False) -- no BN / no ReLU
    c0 = params["initial_w"].shape[3]
    ones = jnp.ones((1, c0), jnp.float32)
    zeros = jnp.zeros((1, c0), jnp.float32)
    x = conv_bn_act(x, params["initial_w"], ones, zeros, 2, 1, None, relu=False)

    for layer_name in ("layer1", "layer2", "layer3"):
        for bi, blk in enumerate(params[layer_name]):
            stride = 2 if bi == 0 else 1
            x = resblock_forward(x, blk, stride)

    # avgpool(1,1) + flatten + fc(128 -> 1)
    return head(x, params["fc_w"], params["fc_b"])


# ----------------------------------------------------------------------------
# Deterministic parameter construction (shapes mirror the PyTorch __init__)
# ----------------------------------------------------------------------------
def make_params(key, in_channels=3, features_d=(32, 32, 64, 128)):
    keys = iter(jax.random.split(key, 256))

    def conv_w(k, cin, cout):
        return jax.random.normal(next(keys), (k, k, cin, cout), jnp.float32) * 0.05

    def bn(c):
        gamma = 1.0 + 0.1 * jax.random.normal(next(keys), (c,), jnp.float32)
        beta = 0.1 * jax.random.normal(next(keys), (c,), jnp.float32)
        mean = 0.1 * jax.random.normal(next(keys), (c,), jnp.float32)
        var = 1.0 + 0.1 * jax.random.uniform(next(keys), (c,), jnp.float32)
        eps = 1e-5
        scale = gamma / jnp.sqrt(var + eps)
        shift = beta - mean * scale
        return scale.reshape(1, c), shift.reshape(1, c)

    params = {"initial_w": conv_w(4, in_channels, features_d[0])}

    cin = features_d[0]
    for li, cout in enumerate(features_d[1:4], start=1):
        blocks = []
        for bi in range(4):                      # num_residual_blocks = 4
            stride = 2 if bi == 0 else 1
            bcin = cin if bi == 0 else cout
            blk = {
                "w1": conv_w(3, bcin, cout),
                "w2": conv_w(3, cout, cout),
            }
            blk["s1"], blk["b1"] = bn(cout)
            blk["s2"], blk["b2"] = bn(cout)
            if stride != 1 or bcin != cout:
                blk["wd"] = conv_w(1, bcin, cout)
                blk["sd"], blk["bd"] = bn(cout)
            else:
                blk["wd"], blk["sd"], blk["bd"] = None, None, None
            blocks.append(blk)
        params[f"layer{li}"] = blocks
        cin = cout

    # fc: Linear(features_d[3]=128, 1); weight stored as [C, 1] for the kernel dot.
    params["fc_w"] = jax.random.normal(next(keys), (features_d[3], 1), jnp.float32) * 0.05
    params["fc_b"] = jnp.zeros((1, 1), jnp.float32)
    return params


# ----------------------------------------------------------------------------
if __name__ == "__main__":
    key = jax.random.PRNGKey(0)
    pkey, xkey = jax.random.split(key)

    params = make_params(pkey, in_channels=3)
    # Small NCHW input, same convention as the PyTorch module.
    x = jax.random.normal(xkey, (2, 3, 32, 32), jnp.float32)

    fwd = jax.jit(gan_critic_forward)
    out = fwd(params, x)
    out = jax.block_until_ready(out)

    assert out.shape == (2, 1), out.shape
    assert jnp.all(jnp.isfinite(out))
    print("KERNEL_OK")
</pallas_src>

<mosaic_0001>
module attributes {stable_mosaic.version = 11 : i64} {
  func.func @_conv_bn_kernel(%arg0: i32, %arg1: memref<512x48xbf16, #tpu.memory_space<vmem>>, %arg2: memref<48x32xbf16, #tpu.memory_space<vmem>>, %arg3: memref<1x32xf32, #tpu.memory_space<vmem>>, %arg4: memref<1x32xf32, #tpu.memory_space<vmem>>, %arg5: memref<512x32xbf16, #tpu.memory_space<vmem>>) attributes {dimension_semantics = [#tpu.dimension_semantics<parallel>], iteration_bounds = array<i64: 1>, scalar_prefetch = 0 : i64, scratch_operands = 0 : i64, tpu.core_type = #tpu.core_type<tc>, window_params = [{transform_indices = @transform_0, window_bounds = array<i64: 512, 48>}, {pipeline_mode = #tpu.pipeline_mode<synchronous>, transform_indices = @transform_1, window_bounds = array<i64: 48, 32>}, {pipeline_mode = #tpu.pipeline_mode<synchronous>, transform_indices = @transform_2, window_bounds = array<i64: 1, 32>}, {pipeline_mode = #tpu.pipeline_mode<synchronous>, transform_indices = @transform_3, window_bounds = array<i64: 1, 32>}, {transform_indices = @transform_4, window_bounds = array<i64: 512, 32>}]} {
    %c0 = arith.constant 0 : index
    %c0_0 = arith.constant 0 : index
    %0 = vector.load %arg1[%c0, %c0_0] : memref<512x48xbf16, #tpu.memory_space<vmem>>, vector<512x48xbf16>
    %c0_1 = arith.constant 0 : index
    %c0_2 = arith.constant 0 : index
    %1 = vector.load %arg2[%c0_1, %c0_2] : memref<48x32xbf16, #tpu.memory_space<vmem>>, vector<48x32xbf16>
    %cst = arith.constant dense<0.000000e+00> : vector<512x32xf32>
    %2 = tpu.matmul %0, %1, %cst {dimension_numbers = #tpu.dot_dimension_numbers<[1], [0], [0], [1], [0, 0, 1, 1], [], []>} : vector<512x48xbf16>, vector<48x32xbf16>, vector<512x32xf32> -> vector<512x32xf32>
    %c0_3 = arith.constant 0 : index
    %c0_4 = arith.constant 0 : index
    %3 = vector.load %arg3[%c0_3, %c0_4] : memref<1x32xf32, #tpu.memory_space<vmem>>, vector<1x32xf32>
    %4 = vector.broadcast %3 : vector<1x32xf32> to vector<512x32xf32>
    %5 = arith.mulf %2, %4 : vector<512x32xf32>
    %c0_5 = arith.constant 0 : index
    %c0_6 = arith.constant 0 : index
    %6 = vector.load %arg4[%c0_5, %c0_6] : memref<1x32xf32, #tpu.memory_space<vmem>>, vector<1x32xf32>
    %7 = vector.broadcast %6 : vector<1x32xf32> to vector<512x32xf32>
    %8 = arith.addf %5, %7 : vector<512x32xf32>
    %9 = arith.truncf %8 : vector<512x32xf32> to vector<512x32xbf16>
    %c0_7 = arith.constant 0 : index
    %c0_8 = arith.constant 0 : index
    %10 = vector.load %arg5[%c0_7, %c0_8] : memref<512x32xbf16, #tpu.memory_space<vmem>>, vector<512x32xbf16>
    tpu.vector_store %arg5[%c0_7, %c0_8], %9 {strides = array<i32>} : memref<512x32xbf16, #tpu.memory_space<vmem>>, vector<512x32xbf16>,
    return
  }
  func.func @transform_0(%arg0: i32) -> (i32, i32) {
    %c0_i32 = arith.constant 0 : i32
    %c0_i32_0 = arith.constant 0 : i32
    return %arg0, %c0_i32 : i32, i32
  }
  func.func @transform_1(%arg0: i32) -> (i32, i32) {
    %c0_i32 = arith.constant 0 : i32
    %c0_i32_0 = arith.constant 0 : i32
    %c0_i32_1 = arith.constant 0 : i32
    return %c0_i32, %c0_i32_0 : i32, i32
  }
  func.func @transform_2(%arg0: i32) -> (i32, i32) {
    %c0_i32 = arith.constant 0 : i32
    %c0_i32_0 = arith.constant 0 : i32
    %c0_i32_1 = arith.constant 0 : i32
    return %c0_i32, %c0_i32_0 : i32, i32
  }
  func.func @transform_3(%arg0: i32) -> (i32, i32) {
    %c0_i32 = arith.constant 0 : i32
    %c0_i32_0 = arith.constant 0 : i32
    %c0_i32_1 = arith.constant 0 : i32
    return %c0_i32, %c0_i32_0 : i32, i32
  }
  func.func @transform_4(%arg0: i32) -> (i32, i32) {
    %c0_i32 = arith.constant 0 : i32
    %c0_i32_0 = arith.constant 0 : i32
    return %arg0, %c0_i32 : i32, i32
  }
}

module attributes {stable_mosaic.version = 11 : i64} {
  func.func @_conv_bn_kernel(%arg0: i32, %arg1: memref<128x288xbf16, #tpu.memory_space<vmem>>, %arg2: memref<288x32xbf16, #tpu.memory_space<vmem>>, %arg3: memref<1x32xf32, #tpu.memory_space<vmem>>, %arg4: memref<1x32xf32, #tpu.memory_space<vmem>>, %arg5: memref<128x32xbf16, #tpu.memory_space<vmem>>) attributes {dimension_semantics = [#tpu.dimension_semantics<parallel>], iteration_bounds = array<i64: 1>, scalar_prefetch = 0 : i64, scratch_operands = 0 : i64, tpu.core_type = #tpu.core_type<tc>, window_params = [{transform_indices = @transform_0, window_bounds = array<i64: 128, 288>}, {pipeline_mode = #tpu.pipeline_mode<synchronous>, transform_indices = @transform_1, window_bounds = array<i64: 288, 32>}, {pipeline_mode = #tpu.pipeline_mode<synchronous>, transform_indices = @transform_2, window_bounds = array<i64: 1, 32>}, {pipeline_mode = #tpu.pipeline_mode<synchronous>, transform_indices = @transform_3, window_bounds = array<i64: 1, 32>}, {transform_indices = @transform_4, window_bounds = array<i64: 128, 32>}]} {
    %c0 = arith.constant 0 : index
    %c0_0 = arith.constant 0 : index
    %0 = vector.load %arg1[%c0, %c0_0] : memref<128x288xbf16, #tpu.memory_space<vmem>>, vector<128x288xbf16>
    %c0_1 = arith.constant 0 : index
    %c0_2 = arith.constant 0 : index
    %1 = vector.load %arg2[%c0_1, %c0_2] : memref<288x32xbf16, #tpu.memory_space<vmem>>, vector<288x32xbf16>
    %cst = arith.constant dense<0.000000e+00> : vector<128x32xf32>
    %2 = tpu.matmul %0, %1, %cst {dimension_numbers = #tpu.dot_dimension_numbers<[1], [0], [0], [1], [0, 0, 1, 1], [], []>} : vector<128x288xbf16>, vector<288x32xbf16>, vector<128x32xf32> -> vector<128x32xf32>
    %c0_3 = arith.constant 0 : index
    %c0_4 = arith.constant 0 : index
    %3 = vector.load %arg3[%c0_3, %c0_4] : memref<1x32xf32, #tpu.memory_space<vmem>>, vector<1x32xf32>
    %4 = vector.broadcast %3 : vector<1x32xf32> to vector<128x32xf32>
    %5 = arith.mulf %2, %4 : vector<128x32xf32>
    %c0_5 = arith.constant 0 : index
    %c0_6 = arith.constant 0 : index
    %6 = vector.load %arg4[%c0_5, %c0_6] : memref<1x32xf32, #tpu.memory_space<vmem>>, vector<1x32xf32>
    %7 = vector.broadcast %6 : vector<1x32xf32> to vector<128x32xf32>
    %8 = arith.addf %5, %7 : vector<128x32xf32>
    %cst_7 = arith.constant 0.000000e+00 : f32
    %9 = vector.broadcast %cst_7 : f32 to vector<128x32xf32>
    %10 = arith.maximumf %8, %9 : vector<128x32xf32>
    %11 = arith.truncf %10 : vector<128x32xf32> to vector<128x32xbf16>
    %c0_8 = arith.constant 0 : index
    %c0_9 = arith.constant 0 : index
    %12 = vector.load %arg5[%c0_8, %c0_9] : memref<128x32xbf16, #tpu.memory_space<vmem>>, vector<128x32xbf16>
    tpu.vector_store %arg5[%c0_8, %c0_9], %11 {strides = array<i32>} : memref<128x32xbf16, #tpu.memory_space<vmem>>, vector<128x32xbf16>,
    return
  }
  func.func @transform_0(%arg0: i32) -> (i32, i32) {
    %c0_i32 = arith.constant 0 : i32
    %c0_i32_0 = arith.constant 0 : i32
    return %arg0, %c0_i32 : i32, i32
  }
  func.func @transform_1(%arg0: i32) -> (i32, i32) {
    %c0_i32 = arith.constant 0 : i32
    %c0_i32_0 = arith.constant 0 : i32
    %c0_i32_1 = arith.constant 0 : i32
    return %c0_i32, %c0_i32_0 : i32, i32
  }
  func.func @transform_2(%arg0: i32) -> (i32, i32) {
    %c0_i32 = arith.constant 0 : i32
    %c0_i32_0 = arith.constant 0 : i32
    %c0_i32_1 = arith.constant 0 : i32
    return %c0_i32, %c0_i32_0 : i32, i32
  }
  func.func @transform_3(%arg0: i32) -> (i32, i32) {
    %c0_i32 = arith.constant 0 : i32
    %c0_i32_0 = arith.constant 0 : i32
    %c0_i32_1 = arith.constant 0 : i32
    return %c0_i32, %c0_i32_0 : i32, i32
  }
  func.func @transform_4(%arg0: i32) -> (i32, i32) {
    %c0_i32 = arith.constant 0 : i32
    %c0_i32_0 = arith.constant 0 : i32
    return %arg0, %c0_i32 : i32, i32
  }
}

module attributes {stable_mosaic.version = 11 : i64} {
  func.func @_conv_bn_kernel(%arg0: i32, %arg1: memref<128x32xbf16, #tpu.memory_space<vmem>>, %arg2: memref<32x32xbf16, #tpu.memory_space<vmem>>, %arg3: memref<1x32xf32, #tpu.memory_space<vmem>>, %arg4: memref<1x32xf32, #tpu.memory_space<vmem>>, %arg5: memref<128x32xbf16, #tpu.memory_space<vmem>>) attributes {dimension_semantics = [#tpu.dimension_semantics<parallel>], iteration_bounds = array<i64: 1>, scalar_prefetch = 0 : i64, scratch_operands = 0 : i64, tpu.core_type = #tpu.core_type<tc>, window_params = [{transform_indices = @transform_0, window_bounds = array<i64: 128, 32>}, {pipeline_mode = #tpu.pipeline_mode<synchronous>, transform_indices = @transform_1, window_bounds = array<i64: 32, 32>}, {pipeline_mode = #tpu.pipeline_mode<synchronous>, transform_indices = @transform_2, window_bounds = array<i64: 1, 32>}, {pipeline_mode = #tpu.pipeline_mode<synchronous>, transform_indices = @transform_3, window_bounds = array<i64: 1, 32>}, {transform_indices = @transform_4, window_bounds = array<i64: 128, 32>}]} {
    %c0 = arith.constant 0 : index
    %c0_0 = arith.constant 0 : index
    %0 = vector.load %arg1[%c0, %c0_0] : memref<128x32xbf16, #tpu.memory_space<vmem>>, vector<128x32xbf16>
    %c0_1 = arith.constant 0 : index
    %c0_2 = arith.constant 0 : index
    %1 = vector.load %arg2[%c0_1, %c0_2] : memref<32x32xbf16, #tpu.memory_space<vmem>>, vector<32x32xbf16>
    %cst = arith.constant dense<0.000000e+00> : vector<128x32xf32>
    %2 = tpu.matmul %0, %1, %cst {dimension_numbers = #tpu.dot_dimension_numbers<[1], [0], [0], [1], [0, 0, 1, 1], [], []>} : vector<128x32xbf16>, vector<32x32xbf16>, vector<128x32xf32> -> vector<128x32xf32>
    %c0_3 = arith.constant 0 : index
    %c0_4 = arith.constant 0 : index
    %3 = vector.load %arg3[%c0_3, %c0_4] : memref<1x32xf32, #tpu.memory_space<vmem>>, vector<1x32xf32>
    %4 = vector.broadcast %3 : vector<1x32xf32> to vector<128x32xf32>
    %5 = arith.mulf %2, %4 : vector<128x32xf32>
    %c0_5 = arith.constant 0 : index
    %c0_6 = arith.constant 0 : index
    %6 = vector.load %arg4[%c0_5, %c0_6] : memref<1x32xf32, #tpu.memory_space<vmem>>, vector<1x32xf32>
    %7 = vector.broadcast %6 : vector<1x32xf32> to vector<128x32xf32>
    %8 = arith.addf %5, %7 : vector<128x32xf32>
    %9 = arith.truncf %8 : vector<128x32xf32> to vector<128x32xbf16>
    %c0_7 = arith.constant 0 : index
    %c0_8 = arith.constant 0 : index
    %10 = vector.load %arg5[%c0_7, %c0_8] : memref<128x32xbf16, #tpu.memory_space<vmem>>, vector<128x32xbf16>
    tpu.vector_store %arg5[%c0_7, %c0_8], %9 {strides = array<i32>} : memref<128x32xbf16, #tpu.memory_space<vmem>>, vector<128x32xbf16>,
    return
  }
  func.func @transform_0(%arg0: i32) -> (i32, i32) {
    %c0_i32 = arith.constant 0 : i32
    %c0_i32_0 = arith.constant 0 : i32
    return %arg0, %c0_i32 : i32, i32
  }
  func.func @transform_1(%arg0: i32) -> (i32, i32) {
    %c0_i32 = arith.constant 0 : i32
    %c0_i32_0 = arith.constant 0 : i32
    %c0_i32_1 = arith.constant 0 : i32
    return %c0_i32, %c0_i32_0 : i32, i32
  }
  func.func @transform_2(%arg0: i32) -> (i32, i32) {
    %c0_i32 = arith.constant 0 : i32
    %c0_i32_0 = arith.constant 0 : i32
    %c0_i32_1 = arith.constant 0 : i32
    return %c0_i32, %c0_i32_0 : i32, i32
  }
  func.func @transform_3(%arg0: i32) -> (i32, i32) {
    %c0_i32 = arith.constant 0 : i32
    %c0_i32_0 = arith.constant 0 : i32
    %c0_i32_1 = arith.constant 0 : i32
    return %c0_i32, %c0_i32_0 : i32, i32
  }
  func.func @transform_4(%arg0: i32) -> (i32, i32) {
    %c0_i32 = arith.constant 0 : i32
    %c0_i32_0 = arith.constant 0 : i32
    return %arg0, %c0_i32 : i32, i32
  }
}

module attributes {stable_mosaic.version = 11 : i64} {
  func.func @_conv_bn_res_kernel(%arg0: i32, %arg1: memref<128x288xbf16, #tpu.memory_space<vmem>>, %arg2: memref<288x32xbf16, #tpu.memory_space<vmem>>, %arg3: memref<1x32xf32, #tpu.memory_space<vmem>>, %arg4: memref<1x32xf32, #tpu.memory_space<vmem>>, %arg5: memref<128x32xbf16, #tpu.memory_space<vmem>>, %arg6: memref<128x32xbf16, #tpu.memory_space<vmem>>) attributes {dimension_semantics = [#tpu.dimension_semantics<parallel>], iteration_bounds = array<i64: 1>, scalar_prefetch = 0 : i64, scratch_operands = 0 : i64, tpu.core_type = #tpu.core_type<tc>, window_params = [{transform_indices = @transform_0, window_bounds = array<i64: 128, 288>}, {pipeline_mode = #tpu.pipeline_mode<synchronous>, transform_indices = @transform_1, window_bounds = array<i64: 288, 32>}, {pipeline_mode = #tpu.pipeline_mode<synchronous>, transform_indices = @transform_2, window_bounds = array<i64: 1, 32>}, {pipeline_mode = #tpu.pipeline_mode<synchronous>, transform_indices = @transform_3, window_bounds = array<i64: 1, 32>}, {transform_indices = @transform_4, window_bounds = array<i64: 128, 32>}, {transform_indices = @transform_5, window_bounds = array<i64: 128, 32>}]} {
    %c0 = arith.constant 0 : index
    %c0_0 = arith.constant 0 : index
    %0 = vector.load %arg1[%c0, %c0_0] : memref<128x288xbf16, #tpu.memory_space<vmem>>, vector<128x288xbf16>
    %c0_1 = arith.constant 0 : index
    %c0_2 = arith.constant 0 : index
    %1 = vector.load %arg2[%c0_1, %c0_2] : memref<288x32xbf16, #tpu.memory_space<vmem>>, vector<288x32xbf16>
    %cst = arith.constant dense<0.000000e+00> : vector<128x32xf32>
    %2 = tpu.matmul %0, %1, %cst {dimension_numbers = #tpu.dot_dimension_numbers<[1], [0], [0], [1], [0, 0, 1, 1], [], []>} : vector<128x288xbf16>, vector<288x32xbf16>, vector<128x32xf32> -> vector<128x32xf32>
    %c0_3 = arith.constant 0 : index
    %c0_4 = arith.constant 0 : index
    %3 = vector.load %arg3[%c0_3, %c0_4] : memref<1x32xf32, #tpu.memory_space<vmem>>, vector<1x32xf32>
    %4 = vector.broadcast %3 : vector<1x32xf32> to vector<128x32xf32>
    %5 = arith.mulf %2, %4 : vector<128x32xf32>
    %c0_5 = arith.constant 0 : index
    %c0_6 = arith.constant 0 : index
    %6 = vector.load %arg4[%c0_5, %c0_6] : memref<1x32xf32, #tpu.memory_space<vmem>>, vector<1x32xf32>
    %7 = vector.broadcast %6 : vector<1x32xf32> to vector<128x32xf32>
    %8 = arith.addf %5, %7 : vector<128x32xf32>
    %c0_7 = arith.constant 0 : index
    %c0_8 = arith.constant 0 : index
    %9 = vector.load %arg5[%c0_7, %c0_8] : memref<128x32xbf16, #tpu.memory_space<vmem>>, vector<128x32xbf16>
    %10 = arith.extf %9 : vector<128x32xbf16> to vector<128x32xf32>
    %11 = arith.addf %8, %10 : vector<128x32xf32>
    %cst_9 = arith.constant 0.000000e+00 : f32
    %12 = vector.broadcast %cst_9 : f32 to vector<128x32xf32>
    %13 = arith.maximumf %11, %12 : vector<128x32xf32>
    %14 = arith.truncf %13 : vector<128x32xf32> to vector<128x32xbf16>
    %c0_10 = arith.constant 0 : index
    %c0_11 = arith.constant 0 : index
    %15 = vector.load %arg6[%c0_10, %c0_11] : memref<128x32xbf16, #tpu.memory_space<vmem>>, vector<128x32xbf16>
    tpu.vector_store %arg6[%c0_10, %c0_11], %14 {strides = array<i32>} : memref<128x32xbf16, #tpu.memory_space<vmem>>, vector<128x32xbf16>,
    return
  }
  func.func @transform_0(%arg0: i32) -> (i32, i32) {
    %c0_i32 = arith.constant 0 : i32
    %c0_i32_0 = arith.constant 0 : i32
    return %arg0, %c0_i32 : i32, i32
  }
  func.func @transform_1(%arg0: i32) -> (i32, i32) {
    %c0_i32 = arith.constant 0 : i32
    %c0_i32_0 = arith.constant 0 : i32
    %c0_i32_1 = arith.constant 0 : i32
    return %c0_i32, %c0_i32_0 : i32, i32
  }
  func.func @transform_2(%arg0: i32) -> (i32, i32) {
    %c0_i32 = arith.constant 0 : i32
    %c0_i32_0 = arith.constant 0 : i32
    %c0_i32_1 = arith.constant 0 : i32
    return %c0_i32, %c0_i32_0 : i32, i32
  }
  func.func @transform_3(%arg0: i32) -> (i32, i32) {
    %c0_i32 = arith.constant 0 : i32
    %c0_i32_0 = arith.constant 0 : i32
    %c0_i32_1 = arith.constant 0 : i32
    return %c0_i32, %c0_i32_0 : i32, i32
  }
  func.func @transform_4(%arg0: i32) -> (i32, i32) {
    %c0_i32 = arith.constant 0 : i32
    %c0_i32_0 = arith.constant 0 : i32
    return %arg0, %c0_i32 : i32, i32
  }
  func.func @transform_5(%arg0: i32) -> (i32, i32) {
    %c0_i32 = arith.constant 0 : i32
    %c0_i32_0 = arith.constant 0 : i32
    return %arg0, %c0_i32 : i32, i32
  }
}

module attributes {stable_mosaic.version = 11 : i64} {
  func.func @_conv_bn_kernel(%arg0: i32, %arg1: memref<32x288xbf16, #tpu.memory_space<vmem>>, %arg2: memref<288x64xbf16, #tpu.memory_space<vmem>>, %arg3: memref<1x64xf32, #tpu.memory_space<vmem>>, %arg4: memref<1x64xf32, #tpu.memory_space<vmem>>, %arg5: memref<32x64xbf16, #tpu.memory_space<vmem>>) attributes {dimension_semantics = [#tpu.dimension_semantics<parallel>], iteration_bounds = array<i64: 1>, scalar_prefetch = 0 : i64, scratch_operands = 0 : i64, tpu.core_type = #tpu.core_type<tc>, window_params = [{transform_indices = @transform_0, window_bounds = array<i64: 32, 288>}, {pipeline_mode = #tpu.pipeline_mode<synchronous>, transform_indices = @transform_1, window_bounds = array<i64: 288, 64>}, {pipeline_mode = #tpu.pipeline_mode<synchronous>, transform_indices = @transform_2, window_bounds = array<i64: 1, 64>}, {pipeline_mode = #tpu.pipeline_mode<synchronous>, transform_indices = @transform_3, window_bounds = array<i64: 1, 64>}, {transform_indices = @transform_4, window_bounds = array<i64: 32, 64>}]} {
    %c0 = arith.constant 0 : index
    %c0_0 = arith.constant 0 : index
    %0 = vector.load %arg1[%c0, %c0_0] : memref<32x288xbf16, #tpu.memory_space<vmem>>, vector<32x288xbf16>
    %c0_1 = arith.constant 0 : index
    %c0_2 = arith.constant 0 : index
    %1 = vector.load %arg2[%c0_1, %c0_2] : memref<288x64xbf16, #tpu.memory_space<vmem>>, vector<288x64xbf16>
    %cst = arith.constant dense<0.000000e+00> : vector<32x64xf32>
    %2 = tpu.matmul %0, %1, %cst {dimension_numbers = #tpu.dot_dimension_numbers<[1], [0], [0], [1], [0, 0, 1, 1], [], []>} : vector<32x288xbf16>, vector<288x64xbf16>, vector<32x64xf32> -> vector<32x64xf32>
    %c0_3 = arith.constant 0 : index
    %c0_4 = arith.constant 0 : index
    %3 = vector.load %arg3[%c0_3, %c0_4] : memref<1x64xf32, #tpu.memory_space<vmem>>, vector<1x64xf32>
    %4 = vector.broadcast %3 : vector<1x64xf32> to vector<32x64xf32>
    %5 = arith.mulf %2, %4 : vector<32x64xf32>
    %c0_5 = arith.constant 0 : index
    %c0_6 = arith.constant 0 : index
    %6 = vector.load %arg4[%c0_5, %c0_6] : memref<1x64xf32, #tpu.memory_space<vmem>>, vector<1x64xf32>
    %7 = vector.broadcast %6 : vector<1x64xf32> to vector<32x64xf32>
    %8 = arith.addf %5, %7 : vector<32x64xf32>
    %cst_7 = arith.constant 0.000000e+00 : f32
    %9 = vector.broadcast %cst_7 : f32 to vector<32x64xf32>
    %10 = arith.maximumf %8, %9 : vector<32x64xf32>
    %11 = arith.truncf %10 : vector<32x64xf32> to vector<32x64xbf16>
    %c0_8 = arith.constant 0 : index
    %c0_9 = arith.constant 0 : index
    %12 = vector.load %arg5[%c0_8, %c0_9] : memref<32x64xbf16, #tpu.memory_space<vmem>>, vector<32x64xbf16>
    tpu.vector_store %arg5[%c0_8, %c0_9], %11 {strides = array<i32>} : memref<32x64xbf16, #tpu.memory_space<vmem>>, vector<32x64xbf16>,
    return
  }
  func.func @transform_0(%arg0: i32) -> (i32, i32) {
    %c0_i32 = arith.constant 0 : i32
    %c0_i32_0 = arith.constant 0 : i32
    return %arg0, %c0_i32 : i32, i32
  }
  func.func @transform_1(%arg0: i32) -> (i32, i32) {
    %c0_i32 = arith.constant 0 : i32
    %c0_i32_0 = arith.constant 0 : i32
    %c0_i32_1 = arith.constant 0 : i32
    return %c0_i32, %c0_i32_0 : i32, i32
  }
  func.func @transform_2(%arg0: i32) -> (i32, i32) {
    %c0_i32 = arith.constant 0 : i32
    %c0_i32_0 = arith.constant 0 : i32
    %c0_i32_1 = arith.constant 0 : i32
    return %c0_i32, %c0_i32_0 : i32, i32
  }
  func.func @transform_3(%arg0: i32) -> (i32, i32) {
    %c0_i32 = arith.constant 0 : i32
    %c0_i32_0 = arith.constant 0 : i32
    %c0_i32_1 = arith.constant 0 : i32
    return %c0_i32, %c0_i32_0 : i32, i32
  }
  func.func @transform_4(%arg0: i32) -> (i32, i32) {
    %c0_i32 = arith.constant 0 : i32
    %c0_i32_0 = arith.constant 0 : i32
    return %arg0, %c0_i32 : i32, i32
  }
}

module attributes {stable_mosaic.version = 11 : i64} {
  func.func @_conv_bn_kernel(%arg0: i32, %arg1: memref<32x32xbf16, #tpu.memory_space<vmem>>, %arg2: memref<32x64xbf16, #tpu.memory_space<vmem>>, %arg3: memref<1x64xf32, #tpu.memory_space<vmem>>, %arg4: memref<1x64xf32, #tpu.memory_space<vmem>>, %arg5: memref<32x64xbf16, #tpu.memory_space<vmem>>) attributes {dimension_semantics = [#tpu.dimension_semantics<parallel>], iteration_bounds = array<i64: 1>, scalar_prefetch = 0 : i64, scratch_operands = 0 : i64, tpu.core_type = #tpu.core_type<tc>, window_params = [{transform_indices = @transform_0, window_bounds = array<i64: 32, 32>}, {pipeline_mode = #tpu.pipeline_mode<synchronous>, transform_indices = @transform_1, window_bounds = array<i64: 32, 64>}, {pipeline_mode = #tpu.pipeline_mode<synchronous>, transform_indices = @transform_2, window_bounds = array<i64: 1, 64>}, {pipeline_mode = #tpu.pipeline_mode<synchronous>, transform_indices = @transform_3, window_bounds = array<i64: 1, 64>}, {transform_indices = @transform_4, window_bounds = array<i64: 32, 64>}]} {
    %c0 = arith.constant 0 : index
    %c0_0 = arith.constant 0 : index
    %0 = vector.load %arg1[%c0, %c0_0] : memref<32x32xbf16, #tpu.memory_space<vmem>>, vector<32x32xbf16>
    %c0_1 = arith.constant 0 : index
    %c0_2 = arith.constant 0 : index
    %1 = vector.load %arg2[%c0_1, %c0_2] : memref<32x64xbf16, #tpu.memory_space<vmem>>, vector<32x64xbf16>
    %cst = arith.constant dense<0.000000e+00> : vector<32x64xf32>
    %2 = tpu.matmul %0, %1, %cst {dimension_numbers = #tpu.dot_dimension_numbers<[1], [0], [0], [1], [0, 0, 1, 1], [], []>} : vector<32x32xbf16>, vector<32x64xbf16>, vector<32x64xf32> -> vector<32x64xf32>
    %c0_3 = arith.constant 0 : index
    %c0_4 = arith.constant 0 : index
    %3 = vector.load %arg3[%c0_3, %c0_4] : memref<1x64xf32, #tpu.memory_space<vmem>>, vector<1x64xf32>
    %4 = vector.broadcast %3 : vector<1x64xf32> to vector<32x64xf32>
    %5 = arith.mulf %2, %4 : vector<32x64xf32>
    %c0_5 = arith.constant 0 : index
    %c0_6 = arith.constant 0 : index
    %6 = vector.load %arg4[%c0_5, %c0_6] : memref<1x64xf32, #tpu.memory_space<vmem>>, vector<1x64xf32>
    %7 = vector.broadcast %6 : vector<1x64xf32> to vector<32x64xf32>
    %8 = arith.addf %5, %7 : vector<32x64xf32>
    %9 = arith.truncf %8 : vector<32x64xf32> to vector<32x64xbf16>
    %c0_7 = arith.constant 0 : index
    %c0_8 = arith.constant 0 : index
    %10 = vector.load %arg5[%c0_7, %c0_8] : memref<32x64xbf16, #tpu.memory_space<vmem>>, vector<32x64xbf16>
    tpu.vector_store %arg5[%c0_7, %c0_8], %9 {strides = array<i32>} : memref<32x64xbf16, #tpu.memory_space<vmem>>, vector<32x64xbf16>,
    return
  }
  func.func @transform_0(%arg0: i32) -> (i32, i32) {
    %c0_i32 = arith.constant 0 : i32
    %c0_i32_0 = arith.constant 0 : i32
    return %arg0, %c0_i32 : i32, i32
  }
  func.func @transform_1(%arg0: i32) -> (i32, i32) {
    %c0_i32 = arith.constant 0 : i32
    %c0_i32_0 = arith.constant 0 : i32
    %c0_i32_1 = arith.constant 0 : i32
    return %c0_i32, %c0_i32_0 : i32, i32
  }
  func.func @transform_2(%arg0: i32) -> (i32, i32) {
    %c0_i32 = arith.constant 0 : i32
    %c0_i32_0 = arith.constant 0 : i32
    %c0_i32_1 = arith.constant 0 : i32
    return %c0_i32, %c0_i32_0 : i32, i32
  }
  func.func @transform_3(%arg0: i32) -> (i32, i32) {
    %c0_i32 = arith.constant 0 : i32
    %c0_i32_0 = arith.constant 0 : i32
    %c0_i32_1 = arith.constant 0 : i32
    return %c0_i32, %c0_i32_0 : i32, i32
  }
  func.func @transform_4(%arg0: i32) -> (i32, i32) {
    %c0_i32 = arith.constant 0 : i32
    %c0_i32_0 = arith.constant 0 : i32
    return %arg0, %c0_i32 : i32, i32
  }
}

module attributes {stable_mosaic.version = 11 : i64} {
  func.func @_conv_bn_res_kernel(%arg0: i32, %arg1: memref<32x576xbf16, #tpu.memory_space<vmem>>, %arg2: memref<576x64xbf16, #tpu.memory_space<vmem>>, %arg3: memref<1x64xf32, #tpu.memory_space<vmem>>, %arg4: memref<1x64xf32, #tpu.memory_space<vmem>>, %arg5: memref<32x64xbf16, #tpu.memory_space<vmem>>, %arg6: memref<32x64xbf16, #tpu.memory_space<vmem>>) attributes {dimension_semantics = [#tpu.dimension_semantics<parallel>], iteration_bounds = array<i64: 1>, scalar_prefetch = 0 : i64, scratch_operands = 0 : i64, tpu.core_type = #tpu.core_type<tc>, window_params = [{transform_indices = @transform_0, window_bounds = array<i64: 32, 576>}, {pipeline_mode = #tpu.pipeline_mode<synchronous>, transform_indices = @transform_1, window_bounds = array<i64: 576, 64>}, {pipeline_mode = #tpu.pipeline_mode<synchronous>, transform_indices = @transform_2, window_bounds = array<i64: 1, 64>}, {pipeline_mode = #tpu.pipeline_mode<synchronous>, transform_indices = @transform_3, window_bounds = array<i64: 1, 64>}, {transform_indices = @transform_4, window_bounds = array<i64: 32, 64>}, {transform_indices = @transform_5, window_bounds = array<i64: 32, 64>}]} {
    %c0 = arith.constant 0 : index
    %c0_0 = arith.constant 0 : index
    %0 = vector.load %arg1[%c0, %c0_0] : memref<32x576xbf16, #tpu.memory_space<vmem>>, vector<32x576xbf16>
    %c0_1 = arith.constant 0 : index
    %c0_2 = arith.constant 0 : index
    %1 = vector.load %arg2[%c0_1, %c0_2] : memref<576x64xbf16, #tpu.memory_space<vmem>>, vector<576x64xbf16>
    %cst = arith.constant dense<0.000000e+00> : vector<32x64xf32>
    %2 = tpu.matmul %0, %1, %cst {dimension_numbers = #tpu.dot_dimension_numbers<[1], [0], [0], [1], [0, 0, 1, 1], [], []>} : vector<32x576xbf16>, vector<576x64xbf16>, vector<32x64xf32> -> vector<32x64xf32>
    %c0_3 = arith.constant 0 : index
    %c0_4 = arith.constant 0 : index
    %3 = vector.load %arg3[%c0_3, %c0_4] : memref<1x64xf32, #tpu.memory_space<vmem>>, vector<1x64xf32>
    %4 = vector.broadcast %3 : vector<1x64xf32> to vector<32x64xf32>
    %5 = arith.mulf %2, %4 : vector<32x64xf32>
    %c0_5 = arith.constant 0 : index
    %c0_6 = arith.constant 0 : index
    %6 = vector.load %arg4[%c0_5, %c0_6] : memref<1x64xf32, #tpu.memory_space<vmem>>, vector<1x64xf32>
    %7 = vector.broadcast %6 : vector<1x64xf32> to vector<32x64xf32>
    %8 = arith.addf %5, %7 : vector<32x64xf32>
    %c0_7 = arith.constant 0 : index
    %c0_8 = arith.constant 0 : index
    %9 = vector.load %arg5[%c0_7, %c0_8] : memref<32x64xbf16, #tpu.memory_space<vmem>>, vector<32x64xbf16>
    %10 = arith.extf %9 : vector<32x64xbf16> to vector<32x64xf32>
    %11 = arith.addf %8, %10 : vector<32x64xf32>
    %cst_9 = arith.constant 0.000000e+00 : f32
    %12 = vector.broadcast %cst_9 : f32 to vector<32x64xf32>
    %13 = arith.maximumf %11, %12 : vector<32x64xf32>
    %14 = arith.truncf %13 : vector<32x64xf32> to vector<32x64xbf16>
    %c0_10 = arith.constant 0 : index
    %c0_11 = arith.constant 0 : index
    %15 = vector.load %arg6[%c0_10, %c0_11] : memref<32x64xbf16, #tpu.memory_space<vmem>>, vector<32x64xbf16>
    tpu.vector_store %arg6[%c0_10, %c0_11], %14 {strides = array<i32>} : memref<32x64xbf16, #tpu.memory_space<vmem>>, vector<32x64xbf16>,
    return
  }
  func.func @transform_0(%arg0: i32) -> (i32, i32) {
    %c0_i32 = arith.constant 0 : i32
    %c0_i32_0 = arith.constant 0 : i32
    return %arg0, %c0_i32 : i32, i32
  }
  func.func @transform_1(%arg0: i32) -> (i32, i32) {
    %c0_i32 = arith.constant 0 : i32
    %c0_i32_0 = arith.constant 0 : i32
    %c0_i32_1 = arith.constant 0 : i32
    return %c0_i32, %c0_i32_0 : i32, i32
  }
  func.func @transform_2(%arg0: i32) -> (i32, i32) {
    %c0_i32 = arith.constant 0 : i32
    %c0_i32_0 = arith.constant 0 : i32
    %c0_i32_1 = arith.constant 0 : i32
    return %c0_i32, %c0_i32_0 : i32, i32
  }
  func.func @transform_3(%arg0: i32) -> (i32, i32) {
    %c0_i32 = arith.constant 0 : i32
    %c0_i32_0 = arith.constant 0 : i32
    %c0_i32_1 = arith.constant 0 : i32
    return %c0_i32, %c0_i32_0 : i32, i32
  }
  func.func @transform_4(%arg0: i32) -> (i32, i32) {
    %c0_i32 = arith.constant 0 : i32
    %c0_i32_0 = arith.constant 0 : i32
    return %arg0, %c0_i32 : i32, i32
  }
  func.func @transform_5(%arg0: i32) -> (i32, i32) {
    %c0_i32 = arith.constant 0 : i32
    %c0_i32_0 = arith.constant 0 : i32
    return %arg0, %c0_i32 : i32, i32
  }
}

module attributes {stable_mosaic.version = 11 : i64} {
  func.func @_conv_bn_kernel(%arg0: i32, %arg1: memref<32x576xbf16, #tpu.memory_space<vmem>>, %arg2: memref<576x64xbf16, #tpu.memory_space<vmem>>, %arg3: memref<1x64xf32, #tpu.memory_space<vmem>>, %arg4: memref<1x64xf32, #tpu.memory_space<vmem>>, %arg5: memref<32x64xbf16, #tpu.memory_space<vmem>>) attributes {dimension_semantics = [#tpu.dimension_semantics<parallel>], iteration_bounds = array<i64: 1>, scalar_prefetch = 0 : i64, scratch_operands = 0 : i64, tpu.core_type = #tpu.core_type<tc>, window_params = [{transform_indices = @transform_0, window_bounds = array<i64: 32, 576>}, {pipeline_mode = #tpu.pipeline_mode<synchronous>, transform_indices = @transform_1, window_bounds = array<i64: 576, 64>}, {pipeline_mode = #tpu.pipeline_mode<synchronous>, transform_indices = @transform_2, window_bounds = array<i64: 1, 64>}, {pipeline_mode = #tpu.pipeline_mode<synchronous>, transform_indices = @transform_3, window_bounds = array<i64: 1, 64>}, {transform_indices = @transform_4, window_bounds = array<i64: 32, 64>}]} {
    %c0 = arith.constant 0 : index
    %c0_0 = arith.constant 0 : index
    %0 = vector.load %arg1[%c0, %c0_0] : memref<32x576xbf16, #tpu.memory_space<vmem>>, vector<32x576xbf16>
    %c0_1 = arith.constant 0 : index
    %c0_2 = arith.constant 0 : index
    %1 = vector.load %arg2[%c0_1, %c0_2] : memref<576x64xbf16, #tpu.memory_space<vmem>>, vector<576x64xbf16>
    %cst = arith.constant dense<0.000000e+00> : vector<32x64xf32>
    %2 = tpu.matmul %0, %1, %cst {dimension_numbers = #tpu.dot_dimension_numbers<[1], [0], [0], [1], [0, 0, 1, 1], [], []>} : vector<32x576xbf16>, vector<576x64xbf16>, vector<32x64xf32> -> vector<32x64xf32>
    %c0_3 = arith.constant 0 : index
    %c0_4 = arith.constant 0 : index
    %3 = vector.load %arg3[%c0_3, %c0_4] : memref<1x64xf32, #tpu.memory_space<vmem>>, vector<1x64xf32>
    %4 = vector.broadcast %3 : vector<1x64xf32> to vector<32x64xf32>
    %5 = arith.mulf %2, %4 : vector<32x64xf32>
    %c0_5 = arith.constant 0 : index
    %c0_6 = arith.constant 0 : index
    %6 = vector.load %arg4[%c0_5, %c0_6] : memref<1x64xf32, #tpu.memory_space<vmem>>, vector<1x64xf32>
    %7 = vector.broadcast %6 : vector<1x64xf32> to vector<32x64xf32>
    %8 = arith.addf %5, %7 : vector<32x64xf32>
    %cst_7 = arith.constant 0.000000e+00 : f32
    %9 = vector.broadcast %cst_7 : f32 to vector<32x64xf32>
    %10 = arith.maximumf %8, %9 : vector<32x64xf32>
    %11 = arith.truncf %10 : vector<32x64xf32> to vector<32x64xbf16>
    %c0_8 = arith.constant 0 : index
    %c0_9 = arith.constant 0 : index
    %12 = vector.load %arg5[%c0_8, %c0_9] : memref<32x64xbf16, #tpu.memory_space<vmem>>, vector<32x64xbf16>
    tpu.vector_store %arg5[%c0_8, %c0_9], %11 {strides = array<i32>} : memref<32x64xbf16, #tpu.memory_space<vmem>>, vector<32x64xbf16>,
    return
  }
  func.func @transform_0(%arg0: i32) -> (i32, i32) {
    %c0_i32 = arith.constant 0 : i32
    %c0_i32_0 = arith.constant 0 : i32
    return %arg0, %c0_i32 : i32, i32
  }
  func.func @transform_1(%arg0: i32) -> (i32, i32) {
    %c0_i32 = arith.constant 0 : i32
    %c0_i32_0 = arith.constant 0 : i32
    %c0_i32_1 = arith.constant 0 : i32
    return %c0_i32, %c0_i32_0 : i32, i32
  }
  func.func @transform_2(%arg0: i32) -> (i32, i32) {
    %c0_i32 = arith.constant 0 : i32
    %c0_i32_0 = arith.constant 0 : i32
    %c0_i32_1 = arith.constant 0 : i32
    return %c0_i32, %c0_i32_0 : i32, i32
  }
  func.func @transform_3(%arg0: i32) -> (i32, i32) {
    %c0_i32 = arith.constant 0 : i32
    %c0_i32_0 = arith.constant 0 : i32
    %c0_i32_1 = arith.constant 0 : i32
    return %c0_i32, %c0_i32_0 : i32, i32
  }
  func.func @transform_4(%arg0: i32) -> (i32, i32) {
    %c0_i32 = arith.constant 0 : i32
    %c0_i32_0 = arith.constant 0 : i32
    return %arg0, %c0_i32 : i32, i32
  }
}

module attributes {stable_mosaic.version = 11 : i64} {
  func.func @_conv_bn_kernel(%arg0: i32, %arg1: memref<8x576xbf16, #tpu.memory_space<vmem>>, %arg2: memref<576x128xbf16, #tpu.memory_space<vmem>>, %arg3: memref<1x128xf32, #tpu.memory_space<vmem>>, %arg4: memref<1x128xf32, #tpu.memory_space<vmem>>, %arg5: memref<8x128xbf16, #tpu.memory_space<vmem>>) attributes {dimension_semantics = [#tpu.dimension_semantics<parallel>], iteration_bounds = array<i64: 1>, scalar_prefetch = 0 : i64, scratch_operands = 0 : i64, tpu.core_type = #tpu.core_type<tc>, window_params = [{transform_indices = @transform_0, window_bounds = array<i64: 8, 576>}, {pipeline_mode = #tpu.pipeline_mode<synchronous>, transform_indices = @transform_1, window_bounds = array<i64: 576, 128>}, {pipeline_mode = #tpu.pipeline_mode<synchronous>, transform_indices = @transform_2, window_bounds = array<i64: 1, 128>}, {pipeline_mode = #tpu.pipeline_mode<synchronous>, transform_indices = @transform_3, window_bounds = array<i64: 1, 128>}, {transform_indices = @transform_4, window_bounds = array<i64: 8, 128>}]} {
    %c0 = arith.constant 0 : index
    %c0_0 = arith.constant 0 : index
    %0 = vector.load %arg1[%c0, %c0_0] : memref<8x576xbf16, #tpu.memory_space<vmem>>, vector<8x576xbf16>
    %c0_1 = arith.constant 0 : index
    %c0_2 = arith.constant 0 : index
    %1 = vector.load %arg2[%c0_1, %c0_2] : memref<576x128xbf16, #tpu.memory_space<vmem>>, vector<576x128xbf16>
    %cst = arith.constant dense<0.000000e+00> : vector<8x128xf32>
    %2 = tpu.matmul %0, %1, %cst {dimension_numbers = #tpu.dot_dimension_numbers<[1], [0], [0], [1], [0, 0, 1, 1], [], []>} : vector<8x576xbf16>, vector<576x128xbf16>, vector<8x128xf32> -> vector<8x128xf32>
    %c0_3 = arith.constant 0 : index
    %c0_4 = arith.constant 0 : index
    %3 = vector.load %arg3[%c0_3, %c0_4] : memref<1x128xf32, #tpu.memory_space<vmem>>, vector<1x128xf32>
    %4 = vector.broadcast %3 : vector<1x128xf32> to vector<8x128xf32>
    %5 = arith.mulf %2, %4 : vector<8x128xf32>
    %c0_5 = arith.constant 0 : index
    %c0_6 = arith.constant 0 : index
    %6 = vector.load %arg4[%c0_5, %c0_6] : memref<1x128xf32, #tpu.memory_space<vmem>>, vector<1x128xf32>
    %7 = vector.broadcast %6 : vector<1x128xf32> to vector<8x128xf32>
    %8 = arith.addf %5, %7 : vector<8x128xf32>
    %cst_7 = arith.constant 0.000000e+00 : f32
    %9 = vector.broadcast %cst_7 : f32 to vector<8x128xf32>
    %10 = arith.maximumf %8, %9 : vector<8x128xf32>
    %11 = arith.truncf %10 : vector<8x128xf32> to vector<8x128xbf16>
    %c0_8 = arith.constant 0 : index
    %c0_9 = arith.constant 0 : index
    %12 = vector.load %arg5[%c0_8, %c0_9] : memref<8x128xbf16, #tpu.memory_space<vmem>>, vector<8x128xbf16>
    tpu.vector_store %arg5[%c0_8, %c0_9], %11 {strides = array<i32>} : memref<8x128xbf16, #tpu.memory_space<vmem>>, vector<8x128xbf16>,
    return
  }
  func.func @transform_0(%arg0: i32) -> (i32, i32) {
    %c0_i32 = arith.constant 0 : i32
    %c0_i32_0 = arith.constant 0 : i32
    return %arg0, %c0_i32 : i32, i32
  }
  func.func @transform_1(%arg0: i32) -> (i32, i32) {
    %c0_i32 = arith.constant 0 : i32
    %c0_i32_0 = arith.constant 0 : i32
    %c0_i32_1 = arith.constant 0 : i32
    return %c0_i32, %c0_i32_0 : i32, i32
  }
  func.func @transform_2(%arg0: i32) -> (i32, i32) {
    %c0_i32 = arith.constant 0 : i32
    %c0_i32_0 = arith.constant 0 : i32
    %c0_i32_1 = arith.constant 0 : i32
    return %c0_i32, %c0_i32_0 : i32, i32
  }
  func.func @transform_3(%arg0: i32) -> (i32, i32) {
    %c0_i32 = arith.constant 0 : i32
    %c0_i32_0 = arith.constant 0 : i32
    %c0_i32_1 = arith.constant 0 : i32
    return %c0_i32, %c0_i32_0 : i32, i32
  }
  func.func @transform_4(%arg0: i32) -> (i32, i32) {
    %c0_i32 = arith.constant 0 : i32
    %c0_i32_0 = arith.constant 0 : i32
    return %arg0, %c0_i32 : i32, i32
  }
}

module attributes {stable_mosaic.version = 11 : i64} {
  func.func @_conv_bn_kernel(%arg0: i32, %arg1: memref<8x64xbf16, #tpu.memory_space<vmem>>, %arg2: memref<64x128xbf16, #tpu.memory_space<vmem>>, %arg3: memref<1x128xf32, #tpu.memory_space<vmem>>, %arg4: memref<1x128xf32, #tpu.memory_space<vmem>>, %arg5: memref<8x128xbf16, #tpu.memory_space<vmem>>) attributes {dimension_semantics = [#tpu.dimension_semantics<parallel>], iteration_bounds = array<i64: 1>, scalar_prefetch = 0 : i64, scratch_operands = 0 : i64, tpu.core_type = #tpu.core_type<tc>, window_params = [{transform_indices = @transform_0, window_bounds = array<i64: 8, 64>}, {pipeline_mode = #tpu.pipeline_mode<synchronous>, transform_indices = @transform_1, window_bounds = array<i64: 64, 128>}, {pipeline_mode = #tpu.pipeline_mode<synchronous>, transform_indices = @transform_2, window_bounds = array<i64: 1, 128>}, {pipeline_mode = #tpu.pipeline_mode<synchronous>, transform_indices = @transform_3, window_bounds = array<i64: 1, 128>}, {transform_indices = @transform_4, window_bounds = array<i64: 8, 128>}]} {
    %c0 = arith.constant 0 : index
    %c0_0 = arith.constant 0 : index
    %0 = vector.load %arg1[%c0, %c0_0] : memref<8x64xbf16, #tpu.memory_space<vmem>>, vector<8x64xbf16>
    %c0_1 = arith.constant 0 : index
    %c0_2 = arith.constant 0 : index
    %1 = vector.load %arg2[%c0_1, %c0_2] : memref<64x128xbf16, #tpu.memory_space<vmem>>, vector<64x128xbf16>
    %cst = arith.constant dense<0.000000e+00> : vector<8x128xf32>
    %2 = tpu.matmul %0, %1, %cst {dimension_numbers = #tpu.dot_dimension_numbers<[1], [0], [0], [1], [0, 0, 1, 1], [], []>} : vector<8x64xbf16>, vector<64x128xbf16>, vector<8x128xf32> -> vector<8x128xf32>
    %c0_3 = arith.constant 0 : index
    %c0_4 = arith.constant 0 : index
    %3 = vector.load %arg3[%c0_3, %c0_4] : memref<1x128xf32, #tpu.memory_space<vmem>>, vector<1x128xf32>
    %4 = vector.broadcast %3 : vector<1x128xf32> to vector<8x128xf32>
    %5 = arith.mulf %2, %4 : vector<8x128xf32>
    %c0_5 = arith.constant 0 : index
    %c0_6 = arith.constant 0 : index
    %6 = vector.load %arg4[%c0_5, %c0_6] : memref<1x128xf32, #tpu.memory_space<vmem>>, vector<1x128xf32>
    %7 = vector.broadcast %6 : vector<1x128xf32> to vector<8x128xf32>
    %8 = arith.addf %5, %7 : vector<8x128xf32>
    %9 = arith.truncf %8 : vector<8x128xf32> to vector<8x128xbf16>
    %c0_7 = arith.constant 0 : index
    %c0_8 = arith.constant 0 : index
    %10 = vector.load %arg5[%c0_7, %c0_8] : memref<8x128xbf16, #tpu.memory_space<vmem>>, vector<8x128xbf16>
    tpu.vector_store %arg5[%c0_7, %c0_8], %9 {strides = array<i32>} : memref<8x128xbf16, #tpu.memory_space<vmem>>, vector<8x128xbf16>,
    return
  }
  func.func @transform_0(%arg0: i32) -> (i32, i32) {
    %c0_i32 = arith.constant 0 : i32
    %c0_i32_0 = arith.constant 0 : i32
    return %arg0, %c0_i32 : i32, i32
  }
  func.func @transform_1(%arg0: i32) -> (i32, i32) {
    %c0_i32 = arith.constant 0 : i32
    %c0_i32_0 = arith.constant 0 : i32
    %c0_i32_1 = arith.constant 0 : i32
    return %c0_i32, %c0_i32_0 : i32, i32
  }
  func.func @transform_2(%arg0: i32) -> (i32, i32) {
    %c0_i32 = arith.constant 0 : i32
    %c0_i32_0 = arith.constant 0 : i32
    %c0_i32_1 = arith.constant 0 : i32
    return %c0_i32, %c0_i32_0 : i32, i32
  }
  func.func @transform_3(%arg0: i32) -> (i32, i32) {
    %c0_i32 = arith.constant 0 : i32
    %c0_i32_0 = arith.constant 0 : i32
    %c0_i32_1 = arith.constant 0 : i32
    return %c0_i32, %c0_i32_0 : i32, i32
  }
  func.func @transform_4(%arg0: i32) -> (i32, i32) {
    %c0_i32 = arith.constant 0 : i32
    %c0_i32_0 = arith.constant 0 : i32
    return %arg0, %c0_i32 : i32, i32
  }
}

module attributes {stable_mosaic.version = 11 : i64} {
  func.func @_conv_bn_res_kernel(%arg0: i32, %arg1: memref<8x1152xbf16, #tpu.memory_space<vmem>>, %arg2: memref<1152x128xbf16, #tpu.memory_space<vmem>>, %arg3: memref<1x128xf32, #tpu.memory_space<vmem>>, %arg4: memref<1x128xf32, #tpu.memory_space<vmem>>, %arg5: memref<8x128xbf16, #tpu.memory_space<vmem>>, %arg6: memref<8x128xbf16, #tpu.memory_space<vmem>>) attributes {dimension_semantics = [#tpu.dimension_semantics<parallel>], iteration_bounds = array<i64: 1>, scalar_prefetch = 0 : i64, scratch_operands = 0 : i64, tpu.core_type = #tpu.core_type<tc>, window_params = [{transform_indices = @transform_0, window_bounds = array<i64: 8, 1152>}, {pipeline_mode = #tpu.pipeline_mode<synchronous>, transform_indices = @transform_1, window_bounds = array<i64: 1152, 128>}, {pipeline_mode = #tpu.pipeline_mode<synchronous>, transform_indices = @transform_2, window_bounds = array<i64: 1, 128>}, {pipeline_mode = #tpu.pipeline_mode<synchronous>, transform_indices = @transform_3, window_bounds = array<i64: 1, 128>}, {transform_indices = @transform_4, window_bounds = array<i64: 8, 128>}, {transform_indices = @transform_5, window_bounds = array<i64: 8, 128>}]} {
    %c0 = arith.constant 0 : index
    %c0_0 = arith.constant 0 : index
    %0 = vector.load %arg1[%c0, %c0_0] : memref<8x1152xbf16, #tpu.memory_space<vmem>>, vector<8x1152xbf16>
    %c0_1 = arith.constant 0 : index
    %c0_2 = arith.constant 0 : index
    %1 = vector.load %arg2[%c0_1, %c0_2] : memref<1152x128xbf16, #tpu.memory_space<vmem>>, vector<1152x128xbf16>
    %cst = arith.constant dense<0.000000e+00> : vector<8x128xf32>
    %2 = tpu.matmul %0, %1, %cst {dimension_numbers = #tpu.dot_dimension_numbers<[1], [0], [0], [1], [0, 0, 1, 1], [], []>} : vector<8x1152xbf16>, vector<1152x128xbf16>, vector<8x128xf32> -> vector<8x128xf32>
    %c0_3 = arith.constant 0 : index
    %c0_4 = arith.constant 0 : index
    %3 = vector.load %arg3[%c0_3, %c0_4] : memref<1x128xf32, #tpu.memory_space<vmem>>, vector<1x128xf32>
    %4 = vector.broadcast %3 : vector<1x128xf32> to vector<8x128xf32>
    %5 = arith.mulf %2, %4 : vector<8x128xf32>
    %c0_5 = arith.constant 0 : index
    %c0_6 = arith.constant 0 : index
    %6 = vector.load %arg4[%c0_5, %c0_6] : memref<1x128xf32, #tpu.memory_space<vmem>>, vector<1x128xf32>
    %7 = vector.broadcast %6 : vector<1x128xf32> to vector<8x128xf32>
    %8 = arith.addf %5, %7 : vector<8x128xf32>
    %c0_7 = arith.constant 0 : index
    %c0_8 = arith.constant 0 : index
    %9 = vector.load %arg5[%c0_7, %c0_8] : memref<8x128xbf16, #tpu.memory_space<vmem>>, vector<8x128xbf16>
    %10 = arith.extf %9 : vector<8x128xbf16> to vector<8x128xf32>
    %11 = arith.addf %8, %10 : vector<8x128xf32>
    %cst_9 = arith.constant 0.000000e+00 : f32
    %12 = vector.broadcast %cst_9 : f32 to vector<8x128xf32>
    %13 = arith.maximumf %11, %12 : vector<8x128xf32>
    %14 = arith.truncf %13 : vector<8x128xf32> to vector<8x128xbf16>
    %c0_10 = arith.constant 0 : index
    %c0_11 = arith.constant 0 : index
    %15 = vector.load %arg6[%c0_10, %c0_11] : memref<8x128xbf16, #tpu.memory_space<vmem>>, vector<8x128xbf16>
    tpu.vector_store %arg6[%c0_10, %c0_11], %14 {strides = array<i32>} : memref<8x128xbf16, #tpu.memory_space<vmem>>, vector<8x128xbf16>,
    return
  }
  func.func @transform_0(%arg0: i32) -> (i32, i32) {
    %c0_i32 = arith.constant 0 : i32
    %c0_i32_0 = arith.constant 0 : i32
    return %arg0, %c0_i32 : i32, i32
  }
  func.func @transform_1(%arg0: i32) -> (i32, i32) {
    %c0_i32 = arith.constant 0 : i32
    %c0_i32_0 = arith.constant 0 : i32
    %c0_i32_1 = arith.constant 0 : i32
    return %c0_i32, %c0_i32_0 : i32, i32
  }
  func.func @transform_2(%arg0: i32) -> (i32, i32) {
    %c0_i32 = arith.constant 0 : i32
    %c0_i32_0 = arith.constant 0 : i32
    %c0_i32_1 = arith.constant 0 : i32
    return %c0_i32, %c0_i32_0 : i32, i32
  }
  func.func @transform_3(%arg0: i32) -> (i32, i32) {
    %c0_i32 = arith.constant 0 : i32
    %c0_i32_0 = arith.constant 0 : i32
    %c0_i32_1 = arith.constant 0 : i32
    return %c0_i32, %c0_i32_0 : i32, i32
  }
  func.func @transform_4(%arg0: i32) -> (i32, i32) {
    %c0_i32 = arith.constant 0 : i32
    %c0_i32_0 = arith.constant 0 : i32
    return %arg0, %c0_i32 : i32, i32
  }
  func.func @transform_5(%arg0: i32) -> (i32, i32) {
    %c0_i32 = arith.constant 0 : i32
    %c0_i32_0 = arith.constant 0 : i32
    return %arg0, %c0_i32 : i32, i32
  }
}

module attributes {stable_mosaic.version = 11 : i64} {
  func.func @_conv_bn_kernel(%arg0: i32, %arg1: memref<8x1152xbf16, #tpu.memory_space<vmem>>, %arg2: memref<1152x128xbf16, #tpu.memory_space<vmem>>, %arg3: memref<1x128xf32, #tpu.memory_space<vmem>>, %arg4: memref<1x128xf32, #tpu.memory_space<vmem>>, %arg5: memref<8x128xbf16, #tpu.memory_space<vmem>>) attributes {dimension_semantics = [#tpu.dimension_semantics<parallel>], iteration_bounds = array<i64: 1>, scalar_prefetch = 0 : i64, scratch_operands = 0 : i64, tpu.core_type = #tpu.core_type<tc>, window_params = [{transform_indices = @transform_0, window_bounds = array<i64: 8, 1152>}, {pipeline_mode = #tpu.pipeline_mode<synchronous>, transform_indices = @transform_1, window_bounds = array<i64: 1152, 128>}, {pipeline_mode = #tpu.pipeline_mode<synchronous>, transform_indices = @transform_2, window_bounds = array<i64: 1, 128>}, {pipeline_mode = #tpu.pipeline_mode<synchronous>, transform_indices = @transform_3, window_bounds = array<i64: 1, 128>}, {transform_indices = @transform_4, window_bounds = array<i64: 8, 128>}]} {
    %c0 = arith.constant 0 : index
    %c0_0 = arith.constant 0 : index
    %0 = vector.load %arg1[%c0, %c0_0] : memref<8x1152xbf16, #tpu.memory_space<vmem>>, vector<8x1152xbf16>
    %c0_1 = arith.constant 0 : index
    %c0_2 = arith.constant 0 : index
    %1 = vector.load %arg2[%c0_1, %c0_2] : memref<1152x128xbf16, #tpu.memory_space<vmem>>, vector<1152x128xbf16>
    %cst = arith.constant dense<0.000000e+00> : vector<8x128xf32>
    %2 = tpu.matmul %0, %1, %cst {dimension_numbers = #tpu.dot_dimension_numbers<[1], [0], [0], [1], [0, 0, 1, 1], [], []>} : vector<8x1152xbf16>, vector<1152x128xbf16>, vector<8x128xf32> -> vector<8x128xf32>
    %c0_3 = arith.constant 0 : index
    %c0_4 = arith.constant 0 : index
    %3 = vector.load %arg3[%c0_3, %c0_4] : memref<1x128xf32, #tpu.memory_space<vmem>>, vector<1x128xf32>
    %4 = vector.broadcast %3 : vector<1x128xf32> to vector<8x128xf32>
    %5 = arith.mulf %2, %4 : vector<8x128xf32>
    %c0_5 = arith.constant 0 : index
    %c0_6 = arith.constant 0 : index
    %6 = vector.load %arg4[%c0_5, %c0_6] : memref<1x128xf32, #tpu.memory_space<vmem>>, vector<1x128xf32>
    %7 = vector.broadcast %6 : vector<1x128xf32> to vector<8x128xf32>
    %8 = arith.addf %5, %7 : vector<8x128xf32>
    %cst_7 = arith.constant 0.000000e+00 : f32
    %9 = vector.broadcast %cst_7 : f32 to vector<8x128xf32>
    %10 = arith.maximumf %8, %9 : vector<8x128xf32>
    %11 = arith.truncf %10 : vector<8x128xf32> to vector<8x128xbf16>
    %c0_8 = arith.constant 0 : index
    %c0_9 = arith.constant 0 : index
    %12 = vector.load %arg5[%c0_8, %c0_9] : memref<8x128xbf16, #tpu.memory_space<vmem>>, vector<8x128xbf16>
    tpu.vector_store %arg5[%c0_8, %c0_9], %11 {strides = array<i32>} : memref<8x128xbf16, #tpu.memory_space<vmem>>, vector<8x128xbf16>,
    return
  }
  func.func @transform_0(%arg0: i32) -> (i32, i32) {
    %c0_i32 = arith.constant 0 : i32
    %c0_i32_0 = arith.constant 0 : i32
    return %arg0, %c0_i32 : i32, i32
  }
  func.func @transform_1(%arg0: i32) -> (i32, i32) {
    %c0_i32 = arith.constant 0 : i32
    %c0_i32_0 = arith.constant 0 : i32
    %c0_i32_1 = arith.constant 0 : i32
    return %c0_i32, %c0_i32_0 : i32, i32
  }
  func.func @transform_2(%arg0: i32) -> (i32, i32) {
    %c0_i32 = arith.constant 0 : i32
    %c0_i32_0 = arith.constant 0 : i32
    %c0_i32_1 = arith.constant 0 : i32
    return %c0_i32, %c0_i32_0 : i32, i32
  }
  func.func @transform_3(%arg0: i32) -> (i32, i32) {
    %c0_i32 = arith.constant 0 : i32
    %c0_i32_0 = arith.constant 0 : i32
    %c0_i32_1 = arith.constant 0 : i32
    return %c0_i32, %c0_i32_0 : i32, i32
  }
  func.func @transform_4(%arg0: i32) -> (i32, i32) {
    %c0_i32 = arith.constant 0 : i32
    %c0_i32_0 = arith.constant 0 : i32
    return %arg0, %c0_i32 : i32, i32
  }
}

module attributes {stable_mosaic.version = 11 : i64} {
  func.func @_head_kernel(%arg0: i32, %arg1: memref<2x4x128xbf16, #tpu.memory_space<vmem>>, %arg2: memref<128x1xf32, #tpu.memory_space<vmem>>, %arg3: memref<1x1xf32, #tpu.memory_space<vmem>>, %arg4: memref<2x1xf32, #tpu.memory_space<vmem>>) attributes {dimension_semantics = [#tpu.dimension_semantics<arbitrary>], iteration_bounds = array<i64: 1>, scalar_prefetch = 0 : i64, scratch_operands = 0 : i64, tpu.core_type = #tpu.core_type<tc>, window_params = [{pipeline_mode = #tpu.pipeline_mode<synchronous>, transform_indices = @transform_0, window_bounds = array<i64: 2, 4, 128>}, {pipeline_mode = #tpu.pipeline_mode<synchronous>, transform_indices = @transform_1, window_bounds = array<i64: 128, 1>}, {pipeline_mode = #tpu.pipeline_mode<synchronous>, transform_indices = @transform_2, window_bounds = array<i64: 1, 1>}, {pipeline_mode = #tpu.pipeline_mode<synchronous>, transform_indices = @transform_3, window_bounds = array<i64: 2, 1>}]} {
    %c0 = arith.constant 0 : index
    %c0_0 = arith.constant 0 : index
    %c0_1 = arith.constant 0 : index
    %0 = vector.load %arg1[%c0, %c0_0, %c0_1] : memref<2x4x128xbf16, #tpu.memory_space<vmem>>, vector<2x4x128xbf16>
    %1 = arith.extf %0 : vector<2x4x128xbf16> to vector<2x4x128xf32>
    %cst = arith.constant dense<0.000000e+00> : vector<2x128xf32>
    %2 = vector.multi_reduction <add>, %1, %cst [1] : vector<2x4x128xf32> to vector<2x128xf32>
    %cst_2 = arith.constant 4.000000e+00 : f32
    %3 = vector.broadcast %cst_2 : f32 to vector<2x128xf32>
    %4 = arith.divf %2, %3 : vector<2x128xf32>
    %c0_3 = arith.constant 0 : index
    %c0_4 = arith.constant 0 : index
    %5 = vector.load %arg2[%c0_3, %c0_4] : memref<128x1xf32, #tpu.memory_space<vmem>>, vector<128x1xf32>
    %cst_5 = arith.constant dense<0.000000e+00> : vector<2x1xf32>
    %6 = tpu.matmul %4, %5, %cst_5 {dimension_numbers = #tpu.dot_dimension_numbers<[1], [0], [0], [1], [0, 0, 1, 1], [], []>} : vector<2x128xf32>, vector<128x1xf32>, vector<2x1xf32> -> vector<2x1xf32>
    %c0_6 = arith.constant 0 : index
    %c0_7 = arith.constant 0 : index
    %7 = vector.load %arg3[%c0_6, %c0_7] : memref<1x1xf32, #tpu.memory_space<vmem>>, vector<1x1xf32>
    %8 = vector.broadcast %7 : vector<1x1xf32> to vector<2x1xf32>
    %9 = arith.addf %6, %8 : vector<2x1xf32>
    %c0_8 = arith.constant 0 : index
    %c0_9 = arith.constant 0 : index
    %10 = vector.load %arg4[%c0_8, %c0_9] : memref<2x1xf32, #tpu.memory_space<vmem>>, vector<2x1xf32>
    tpu.vector_store %arg4[%c0_8, %c0_9], %9 {strides = array<i32>} : memref<2x1xf32, #tpu.memory_space<vmem>>, vector<2x1xf32>,
    return
  }
  func.func @transform_0(%arg0: i32) -> (i32, i32, i32) {
    %c0_i32 = arith.constant 0 : i32
    %c0_i32_0 = arith.constant 0 : i32
    %c0_i32_1 = arith.constant 0 : i32
    %c0_i32_2 = arith.constant 0 : i32
    return %c0_i32, %c0_i32_0, %c0_i32_1 : i32, i32, i32
  }
  func.func @transform_1(%arg0: i32) -> (i32, i32) {
    %c0_i32 = arith.constant 0 : i32
    %c0_i32_0 = arith.constant 0 : i32
    %c0_i32_1 = arith.constant 0 : i32
    return %c0_i32, %c0_i32_0 : i32, i32
  }
  func.func @transform_2(%arg0: i32) -> (i32, i32) {
    %c0_i32 = arith.constant 0 : i32
    %c0_i32_0 = arith.constant 0 : i32
    %c0_i32_1 = arith.constant 0 : i32
    return %c0_i32, %c0_i32_0 : i32, i32
  }
  func.func @transform_3(%arg0: i32) -> (i32, i32) {
    %c0_i32 = arith.constant 0 : i32
    %c0_i32_0 = arith.constant 0 : i32
    %c0_i32_1 = arith.constant 0 : i32
    return %c0_i32, %c0_i32_0 : i32, i32
  }
}

</mosaic_0001>

<llo_original>
// kernel: gan_critic_forward.29
$region0: #{gan_critic_forward.29}
  #allocation0 [shape = 'u32[]', space=smem, size = 0x4, offset = 0x4, fixed_abs, tag = 'smem constant byte address 0x4 - core index']
  #allocation1 [shape = 'u32[144,128]{1,0:T(1,128)}', space=vmem, size = 0x12000, scoped, tag = 'internal scratch']
  %s0 = inlined_call_operand.vmem [shape: bf16[512,48], index: 0, kind: input, shape index: {}]
  %s1 = inlined_call_operand.vmem [shape: bf16[48,32], index: 1, kind: input, shape index: {}]
  %s2 = inlined_call_operand.vmem [shape: f32[1,32], index: 2, kind: input, shape index: {}]
  %s3 = inlined_call_operand.vmem [shape: f32[1,32], index: 3, kind: input, shape index: {}]
  %s4 = inlined_call_operand.vmem [shape: bf16[512,32], index: 4, kind: output, shape index: {}]
  %s5 = sld [smem:[#allocation0]]
  $region26: #{gan_critic_forward.29} parent=0
    _
  %s7 = ssub.s32 1, %s5
  %s8 = scalar_select 0, %s7, %s5
  // Predicated region
  $region2: #{gan_critic_forward.29} parent=0 // pred_check
    _
  $region3: #{gan_critic_forward.29} parent=0 // pred_check_branch
    %10 = sbr.rel (0) target = $region5
  $region4: #{gan_critic_forward.29} parent=0 // pred_region
    _
  $region5: #{gan_critic_forward.29} parent=0 // pred_fallthru
    _
  // Predicated region
  $region6: #{gan_critic_forward.29} parent=0 // pred_check
    _
  $region7: #{gan_critic_forward.29} parent=0 // pred_check_branch
    %12 = sbr.rel (0) target = $region9
  $region8: #{gan_critic_forward.29} parent=0 // pred_region
    _
  $region9: #{gan_critic_forward.29} parent=0 // pred_fallthru
    _
  // Predicated region
  $region10: #{gan_critic_forward.29} parent=0 // pred_check
    _
  $region11: #{gan_critic_forward.29} parent=0 // pred_check_branch
    %14 = sbr.rel (0) target = $region13
  $region12: #{gan_critic_forward.29} parent=0 // pred_region
    _
  $region13: #{gan_critic_forward.29} parent=0 // pred_fallthru
    _
  // Predicated region
  $region14: #{gan_critic_forward.29} parent=0 // pred_check
    _
  $region15: #{gan_critic_forward.29} parent=0 // pred_check_branch
    %16 = sbr.rel (0) target = $region17
  $region16: #{gan_critic_forward.29} parent=0 // pred_region
    _
  $region17: #{gan_critic_forward.29} parent=0 // pred_fallthru
    _
  %v18 = vld [vmem:[%s0] sm:$0xf]
  %v19 = vld [vmem:[%s0 + $0x4] sm:$0xf]
  %v20 = vld [vmem:[%s0 + $0x8] sm:$0xf]
  %v21 = vld [vmem:[%s0 + $0xc] sm:$0xf]
  %v22 = vld [vmem:[%s0 + $0x10] sm:$0xf]
  %v23 = vld [vmem:[%s0 + $0x14] sm:$0xf]
  %v24 = vld [vmem:[%s0 + $0x18] sm:$0xf]
  %v25 = vld [vmem:[%s0 + $0x1c] sm:$0xf]
  %v26 = vld [vmem:[%s0 + $0x20] sm:$0xf]
  %v27 = vld [vmem:[%s0 + $0x24] sm:$0xf]
  %v28 = vld [vmem:[%s0 + $0x28] sm:$0xf]
  %v29 = vld [vmem:[%s0 + $0x2c] sm:$0xf]
  %v30 = vld [vmem:[%s0 + $0x30] sm:$0xf]
  %v31 = vld [vmem:[%s0 + $0x34] sm:$0xf]
  %v32 = vld [vmem:[%s0 + $0x38] sm:$0xf]
  %v33 = vld [vmem:[%s0 + $0x3c] sm:$0xf]
  %v34 = vld [vmem:[%s0 + $0x40] sm:$0xf]
  %v35 = vld [vmem:[%s0 + $0x44] sm:$0xf]
  %v36 = vld [vmem:[%s0 + $0x48] sm:$0xf]
  %v37 = vld [vmem:[%s0 + $0x4c] sm:$0xf]
  %v38 = vld [vmem:[%s0 + $0x50] sm:$0xf]
  %v39 = vld [vmem:[%s0 + $0x54] sm:$0xf]
  %v40 = vld [vmem:[%s0 + $0x58] sm:$0xf]
  %v41 = vld [vmem:[%s0 + $0x5c] sm:$0xf]
  %v42 = vld [vmem:[%s0 + $0x60] sm:$0xf]
  %v43 = vld [vmem:[%s0 + $0x64] sm:$0xf]
  %v44 = vld [vmem:[%s0 + $0x68] sm:$0xf]
  %v45 = vld [vmem:[%s0 + $0x6c] sm:$0xf]
  %v46 = vld [vmem:[%s0 + $0x70] sm:$0xf]
  %v47 = vld [vmem:[%s0 + $0x74] sm:$0xf]
  %v48 = vld [vmem:[%s0 + $0x78] sm:$0xf]
  %v49 = vld [vmem:[%s0 + $0x7c] sm:$0xf]
  %v50 = vld [vmem:[%s0 + $0x80] sm:$0xf]
  %v51 = vld [vmem:[%s0 + $0x84] sm:$0xf]
  %v52 = vld [vmem:[%s0 + $0x88] sm:$0xf]
  %v53 = vld [vmem:[%s0 + $0x8c] sm:$0xf]
  %v54 = vld [vmem:[%s0 + $0x90] sm:$0xf]
  %v55 = vld [vmem:[%s0 + $0x94] sm:$0xf]
  %v56 = vld [vmem:[%s0 + $0x98] sm:$0xf]
  %v57 = vld [vmem:[%s0 + $0x9c] sm:$0xf]
  %v58 = vld [vmem:[%s0 + $0xa0] sm:$0xf]
  %v59 = vld [vmem:[%s0 + $0xa4] sm:$0xf]
  %v60 = vld [vmem:[%s0 + $0xa8] sm:$0xf]
  %v61 = vld [vmem:[%s0 + $0xac] sm:$0xf]
  %v62 = vld [vmem:[%s0 + $0xb0] sm:$0xf]
  %v63 = vld [vmem:[%s0 + $0xb4] sm:$0xf]
  %v64 = vld [vmem:[%s0 + $0xb8] sm:$0xf]
  %v65 = vld [vmem:[%s0 + $0xbc] sm:$0xf]
  %v66 = vld [vmem:[%s0 + $0xc0] sm:$0xf]
  %v67 = vld [vmem:[%s0 + $0xc4] sm:$0xf]
  %v68 = vld [vmem:[%s0 + $0xc8] sm:$0xf]
  %v69 = vld [vmem:[%s0 + $0xcc] sm:$0xf]
  %v70 = vld [vmem:[%s0 + $0xd0] sm:$0xf]
  %v71 = vld [vmem:[%s0 + $0xd4] sm:$0xf]
  %v72 = vld [vmem:[%s0 + $0xd8] sm:$0xf]
  %v73 = vld [vmem:[%s0 + $0xdc] sm:$0xf]
  %v74 = vld [vmem:[%s0 + $0xe0] sm:$0xf]
  %v75 = vld [vmem:[%s0 + $0xe4] sm:$0xf]
  %v76 = vld [vmem:[%s0 + $0xe8] sm:$0xf]
  %v77 = vld [vmem:[%s0 + $0xec] sm:$0xf]
  %v78 = vld [vmem:[%s0 + $0xf0] sm:$0xf]
  %v79 = vld [vmem:[%s0 + $0xf4] sm:$0xf]
  %v80 = vld [vmem:[%s0 + $0xf8] sm:$0xf]
  %v81 = vld [vmem:[%s0 + $0xfc] sm:$0xf]
  %v82 = vld [vmem:[%s1] sm:$0xf]
  %v83 = vld [vmem:[%s1 + $0x4] sm:$0xf]
  %v84 = vld [vmem:[%s1 + $0x8] sm:$0xf]
  %v85 = vld [vmem:[%s1 + $0xc] sm:$0xf]
  %v86 = vld [vmem:[%s1 + $0x10] sm:$0xf]
  %v87 = vld [vmem:[%s1 + $0x14] sm:$0xf]
  %v152 = vunpack.c.l.b16 %v18
  %v153 = vunpack.c.l.b16 %v19
  %v154 = vunpack.c.l.b16 %v20
  %v155 = vunpack.c.l.b16 %v21
  %v156 = vunpack.c.l.b16 %v22
  %v157 = vunpack.c.l.b16 %v23
  %v158 = vunpack.c.l.b16 %v24
  %v159 = vunpack.c.l.b16 %v25
  %v160 = vunpack.c.l.b16 %v26
  %v161 = vunpack.c.l.b16 %v27
  %v162 = vunpack.c.l.b16 %v28
  %v163 = vunpack.c.l.b16 %v29
  %v164 = vunpack.c.l.b16 %v30
  %v165 = vunpack.c.l.b16 %v31
  %v166 = vunpack.c.l.b16 %v32
  %v167 = vunpack.c.l.b16 %v33
  %v168 = vunpack.c.l.b16 %v34
  %v169 = vunpack.c.l.b16 %v35
  %v170 = vunpack.c.l.b16 %v36
  %v171 = vunpack.c.l.b16 %v37
  %v172 = vunpack.c.l.b16 %v38
  %v173 = vunpack.c.l.b16 %v39
  %v174 = vunpack.c.l.b16 %v40
  %v175 = vunpack.c.l.b16 %v41
  %v176 = vunpack.c.l.b16 %v42
  %v177 = vunpack.c.l.b16 %v43
  %v178 = vunpack.c.l.b16 %v44
  %v179 = vunpack.c.l.b16 %v45
  %v180 = vunpack.c.l.b16 %v46
  %v181 = vunpack.c.l.b16 %v47
  %v182 = vunpack.c.l.b16 %v48
  %v183 = vunpack.c.l.b16 %v49
  %v184 = vunpack.c.l.b16 %v50
  %v185 = vunpack.c.l.b16 %v51
  %v186 = vunpack.c.l.b16 %v52
  %v187 = vunpack.c.l.b16 %v53
  %v188 = vunpack.c.l.b16 %v54
  %v189 = vunpack.c.l.b16 %v55
  %v190 = vunpack.c.l.b16 %v56
  %v191 = vunpack.c.l.b16 %v57
  %v192 = vunpack.c.l.b16 %v58
  %v193 = vunpack.c.l.b16 %v59
  %v194 = vunpack.c.l.b16 %v60
  %v195 = vunpack.c.l.b16 %v61
  %v196 = vunpack.c.l.b16 %v62
  %v197 = vunpack.c.l.b16 %v63
  %v198 = vunpack.c.l.b16 %v64
  %v199 = vunpack.c.l.b16 %v65
  %v200 = vunpack.c.l.b16 %v66
  %v201 = vunpack.c.l.b16 %v67
  %v202 = vunpack.c.l.b16 %v68
  %v203 = vunpack.c.l.b16 %v69
  %v204 = vunpack.c.l.b16 %v70
  %v205 = vunpack.c.l.b16 %v71
  %v206 = vunpack.c.l.b16 %v72
  %v207 = vunpack.c.l.b16 %v73
  %v208 = vunpack.c.l.b16 %v74
  %v209 = vunpack.c.l.b16 %v75
  %v210 = vunpack.c.l.b16 %v76
  %v211 = vunpack.c.l.b16 %v77
  %v212 = vunpack.c.l.b16 %v78
  %v213 = vunpack.c.l.b16 %v79
  %v214 = vunpack.c.l.b16 %v80
  %v215 = vunpack.c.l.b16 %v81
  %v216 = vpack.c.b16 %v153, %v152
  %v217 = vpack.c.b16 %v155, %v154
  %v218 = vpack.c.b16 %v157, %v156
  %v219 = vpack.c.b16 %v159, %v158
  %v220 = vpack.c.b16 %v161, %v160
  %v221 = vpack.c.b16 %v163, %v162
  %v222 = vpack.c.b16 %v165, %v164
  %v223 = vpack.c.b16 %v167, %v166
  %v224 = vpack.c.b16 %v169, %v168
  %v225 = vpack.c.b16 %v171, %v170
  %v226 = vpack.c.b16 %v173, %v172
  %v227 = vpack.c.b16 %v175, %v174
  %v228 = vpack.c.b16 %v177, %v176
  %v229 = vpack.c.b16 %v179, %v178
  %v230 = vpack.c.b16 %v181, %v180
  %v231 = vpack.c.b16 %v183, %v182
  %v232 = vpack.c.b16 %v185, %v184
  %v233 = vpack.c.b16 %v187, %v186
  %v234 = vpack.c.b16 %v189, %v188
  %v235 = vpack.c.b16 %v191, %v190
  %v236 = vpack.c.b16 %v193, %v192
  %v237 = vpack.c.b16 %v195, %v194
  %v238 = vpack.c.b16 %v197, %v196
  %v239 = vpack.c.b16 %v199, %v198
  %v240 = vpack.c.b16 %v201, %v200
  %v241 = vpack.c.b16 %v203, %v202
  %v242 = vpack.c.b16 %v205, %v204
  %v243 = vpack.c.b16 %v207, %v206
  %v244 = vpack.c.b16 %v209, %v208
  %v245 = vpack.c.b16 %v211, %v210
  %v246 = vpack.c.b16 %v213, %v212
  %v247 = vpack.c.b16 %v215, %v214
  %v254 = vunpack.c.l.b16 %v82
  %v255 = vunpack.c.l.b16 %v83
  %v256 = vunpack.c.l.b16 %v84
  %v257 = vunpack.c.l.b16 %v85
  %v258 = vunpack.c.l.b16 %v86
  %v259 = vunpack.c.l.b16 %v87
  %v260 = vpack.c.b16 %v255, %v254
  %v261 = vpack.c.b16 %v257, %v256
  %v262 = vpack.c.b16 %v259, %v258
  %vm266 = vcmask 392192
  %v268 = vsel %vm266, %v216, 0
  %v271 = vsel %vm266, %v217, 0
  %v274 = vsel %vm266, %v218, 0
  %v277 = vsel %vm266, %v219, 0
  %v280 = vsel %vm266, %v220, 0
  %v283 = vsel %vm266, %v221, 0
  %v286 = vsel %vm266, %v222, 0
  %v289 = vsel %vm266, %v223, 0
  %v292 = vsel %vm266, %v224, 0
  %v295 = vsel %vm266, %v225, 0
  %v298 = vsel %vm266, %v226, 0
  %v301 = vsel %vm266, %v227, 0
  %v304 = vsel %vm266, %v228, 0
  %v307 = vsel %vm266, %v229, 0
  %v310 = vsel %vm266, %v230, 0
  %v313 = vsel %vm266, %v231, 0
  %v316 = vsel %vm266, %v232, 0
  %v319 = vsel %vm266, %v233, 0
  %v322 = vsel %vm266, %v234, 0
  %v325 = vsel %vm266, %v235, 0
  %v328 = vsel %vm266, %v236, 0
  %v331 = vsel %vm266, %v237, 0
  %v334 = vsel %vm266, %v238, 0
  %v337 = vsel %vm266, %v239, 0
  %v340 = vsel %vm266, %v240, 0
  %v343 = vsel %vm266, %v241, 0
  %v346 = vsel %vm266, %v242, 0
  %v349 = vsel %vm266, %v243, 0
  %v352 = vsel %vm266, %v244, 0
  %v355 = vsel %vm266, %v245, 0
  %v358 = vsel %vm266, %v246, 0
  %v361 = vsel %vm266, %v247, 0
  %363 = vmatprep.subr.bf16.mxu0 0
  %364 = vmatpush1.bf16.msra.mxu0 %v260
  %365 = vmatprep.subr.bf16.mxu0 0
  %366 = vmatpush1.bf16.msra.mxu0 %v261
  %367 = vmatprep.subr.bf16.mxu0 0
  %368 = vmatpush1.bf16.msra.mxu0 %v262
  %369 = vmatprep.subr.bf16.mxu0 0
  %370 = vmatpush1.bf16.msra.mxu0 0
  %371 = vmatprep.subr.bf16.mxu0 0
  %372 = vmatpush1.bf16.msra.mxu0 0
  %373 = vmatprep.subr.bf16.mxu0 0
  %374 = vmatpush1.bf16.msra.mxu0 0
  %375 = vmatprep.subr.bf16.mxu0 0
  %376 = vmatpush1.bf16.msra.mxu0 0
  %377 = vmatprep.subr.bf16.mxu0 0
  %378 = vmatpush1.bf16.msra.mxu0 0
  %379 = vmatprep.subr.bf16.mxu0 0
  %380 = vmatpush1.bf16.msra.mxu0 0
  %381 = vmatprep.subr.bf16.mxu0 0
  %382 = vmatpush1.bf16.msra.mxu0 0
  %383 = vmatprep.subr.bf16.mxu0 0
  %384 = vmatpush1.bf16.msra.mxu0 0
  %385 = vmatprep.subr.bf16.mxu0 0
  %386 = vmatpush1.bf16.msra.mxu0 0
  %387 = vmatprep.subr.bf16.mxu0 0
  %388 = vmatpush1.bf16.msra.mxu0 0
  %389 = vmatprep.subr.bf16.mxu0 0
  %390 = vmatpush1.bf16.msra.mxu0 0
  %391 = vmatprep.subr.bf16.mxu0 0
  %392 = vmatpush1.bf16.msra.mxu0 0
  %393 = vmatprep.subr.bf16.mxu0 0
  %394 = vmatpush1.bf16.msra.mxu0 0
  %395 = vmatprep.mubr.bf16.mxu0 0
  %396 = vmatmul.mubr.bf16.gmra.mrb[0].mxu0 %v268
  %v397 = vpop.f32.mrb[0].mxu0
  %v398 = vadd.f32 0.0, %v397
  %v399 = vpop.f32.mrb[0].mxu0
  %v400 = vpop.f32.mrb[0].mxu0
  %v401 = vadd.f32 0.0, %v400
  %v402 = vpop.f32.mrb[0].mxu0
  %403 = vmatprep.mubr.bf16.mxu0 0
  %404 = vmatmul.mubr.bf16.gmra.mrb[0].mxu0 %v271
  %v405 = vpop.f32.mrb[0].mxu0
  %v406 = vadd.f32 0.0, %v405
  %v407 = vpop.f32.mrb[0].mxu0
  %v408 = vpop.f32.mrb[0].mxu0
  %v409 = vadd.f32 0.0, %v408
  %v410 = vpop.f32.mrb[0].mxu0
  %411 = vmatprep.mubr.bf16.mxu0 0
  %412 = vmatmul.mubr.bf16.gmra.mrb[0].mxu0 %v274
  %v413 = vpop.f32.mrb[0].mxu0
  %v414 = vadd.f32 0.0, %v413
  %v415 = vpop.f32.mrb[0].mxu0
  %v416 = vpop.f32.mrb[0].mxu0
  %v417 = vadd.f32 0.0, %v416
  %v418 = vpop.f32.mrb[0].mxu0
  %419 = vmatprep.mubr.bf16.mxu0 0
  %420 = vmatmul.mubr.bf16.gmra.mrb[0].mxu0 %v277
  %v421 = vpop.f32.mrb[0].mxu0
  %v422 = vadd.f32 0.0, %v421
  %v423 = vpop.f32.mrb[0].mxu0
  %v424 = vpop.f32.mrb[0].mxu0
  %v425 = vadd.f32 0.0, %v424
  %v426 = vpop.f32.mrb[0].mxu0
  %427 = vmatprep.mubr.bf16.mxu0 0
  %428 = vmatmul.mubr.bf16.gmra.mrb[0].mxu0 %v280
  %v429 = vpop.f32.mrb[0].mxu0
  %v430 = vadd.f32 0.0, %v429
  %v431 = vpop.f32.mrb[0].mxu0
  %v432 = vpop.f32.mrb[0].mxu0
  %v433 = vadd.f32 0.0, %v432
  %v434 = vpop.f32.mrb[0].mxu0
  %435 = vmatprep.mubr.bf16.mxu0 0
  %436 = vmatmul.mubr.bf16.gmra.mrb[0].mxu0 %v283
  %v437 = vpop.f32.mrb[0].mxu0
  %v438 = vadd.f32 0.0, %v437
  %v439 = vpop.f32.mrb[0].mxu0
  %v440 = vpop.f32.mrb[0].mxu0
  %v441 = vadd.f32 0.0, %v440
  %v442 = vpop.f32.mrb[0].mxu0
  %443 = vmatprep.mubr.bf16.mxu0 0
  %444 = vmatmul.mubr.bf16.gmra.mrb[0].mxu0 %v286
  %v445 = vpop.f32.mrb[0].mxu0
  %v446 = vadd.f32 0.0, %v445
  %v447 = vpop.f32.mrb[0].mxu0
  %v448 = vpop.f32.mrb[0].mxu0
  %v449 = vadd.f32 0.0, %v448
  %v450 = vpop.f32.mrb[0].mxu0
  %451 = vmatprep.mubr.bf16.mxu0 0
  %452 = vmatmul.mubr.bf16.gmra.mrb[0].mxu0 %v289
  %v453 = vpop.f32.mrb[0].mxu0
  %v454 = vadd.f32 0.0, %v453
  %v455 = vpop.f32.mrb[0].mxu0
  %v456 = vpop.f32.mrb[0].mxu0
  %v457 = vadd.f32 0.0, %v456
  %v458 = vpop.f32.mrb[0].mxu0
  %459 = vmatprep.mubr.bf16.mxu0 0
  %460 = vmatmul.mubr.bf16.gmra.mrb[0].mxu0 %v292
  %v461 = vpop.f32.mrb[0].mxu0
  %v462 = vadd.f32 0.0, %v461
  %v463 = vpop.f32.mrb[0].mxu0
  %v464 = vpop.f32.mrb[0].mxu0
  %v465 = vadd.f32 0.0, %v464
  %v466 = vpop.f32.mrb[0].mxu0
  %467 = vmatprep.mubr.bf16.mxu0 0
  %468 = vmatmul.mubr.bf16.gmra.mrb[0].mxu0 %v295
  %v469 = vpop.f32.mrb[0].mxu0
  %v470 = vadd.f32 0.0, %v469
  %v471 = vpop.f32.mrb[0].mxu0
  %v472 = vpop.f32.mrb[0].mxu0
  %v473 = vadd.f32 0.0, %v472
  %v474 = vpop.f32.mrb[0].mxu0
  %475 = vmatprep.mubr.bf16.mxu0 0
  %476 = vmatmul.mubr.bf16.gmra.mrb[0].mxu0 %v298
  %v477 = vpop.f32.mrb[0].mxu0
  %v478 = vadd.f32 0.0, %v477
  %v479 = vpop.f32.mrb[0].mxu0
  %v480 = vpop.f32.mrb[0].mxu0
  %v481 = vadd.f32 0.0, %v480
  %v482 = vpop.f32.mrb[0].mxu0
  %483 = vmatprep.mubr.bf16.mxu0 0
  %484 = vmatmul.mubr.bf16.gmra.mrb[0].mxu0 %v301
  %v485 = vpop.f32.mrb[0].mxu0
  %v486 = vadd.f32 0.0, %v485
  %v487 = vpop.f32.mrb[0].mxu0
  %v488 = vpop.f32.mrb[0].mxu0
  %v489 = vadd.f32 0.0, %v488
  %v490 = vpop.f32.mrb[0].mxu0
  %491 = vmatprep.mubr.bf16.mxu0 0
  %492 = vmatmul.mubr.bf16.gmra.mrb[0].mxu0 %v304
  %v493 = vpop.f32.mrb[0].mxu0
  %v494 = vadd.f32 0.0, %v493
  %v495 = vpop.f32.mrb[0].mxu0
  %v496 = vpop.f32.mrb[0].mxu0
  %v497 = vadd.f32 0.0, %v496
  %v498 = vpop.f32.mrb[0].mxu0
  %499 = vmatprep.mubr.bf16.mxu0 0
  %500 = vmatmul.mubr.bf16.gmra.mrb[0].mxu0 %v307
  %v501 = vpop.f32.mrb[0].mxu0
  %v502 = vadd.f32 0.0, %v501
  %v503 = vpop.f32.mrb[0].mxu0
  %v504 = vpop.f32.mrb[0].mxu0
  %v505 = vadd.f32 0.0, %v504
  %v506 = vpop.f32.mrb[0].mxu0
  %507 = vmatprep.mubr.bf16.mxu0 0
  %508 = vmatmul.mubr.bf16.gmra.mrb[0].mxu0 %v310
  %v509 = vpop.f32.mrb[0].mxu0
  %v510 = vadd.f32 0.0, %v509
  %v511 = vpop.f32.mrb[0].mxu0
  %v512 = vpop.f32.mrb[0].mxu0
  %v513 = vadd.f32 0.0, %v512
  %v514 = vpop.f32.mrb[0].mxu0
  %515 = vmatprep.mubr.bf16.mxu0 0
  %516 = vmatmul.mubr.bf16.gmra.mrb[0].mxu0 %v313
  %v517 = vpop.f32.mrb[0].mxu0
  %v518 = vadd.f32 0.0, %v517
  %v519 = vpop.f32.mrb[0].mxu0
  %v520 = vpop.f32.mrb[0].mxu0
  %v521 = vadd.f32 0.0, %v520
  %v522 = vpop.f32.mrb[0].mxu0
  %523 = vmatprep.mubr.bf16.mxu0 0
  %524 = vmatmul.mubr.bf16.gmra.mrb[0].mxu0 %v316
  %v525 = vpop.f32.mrb[0].mxu0
  %v526 = vadd.f32 0.0, %v525
  %v527 = vpop.f32.mrb[0].mxu0
  %v528 = vpop.f32.mrb[0].mxu0
  %v529 = vadd.f32 0.0, %v528
  %v530 = vpop.f32.mrb[0].mxu0
  %531 = vmatprep.mubr.bf16.mxu0 0
  %532 = vmatmul.mubr.bf16.gmra.mrb[0].mxu0 %v319
  %v533 = vpop.f32.mrb[0].mxu0
  %v534 = vadd.f32 0.0, %v533
  %v535 = vpop.f32.mrb[0].mxu0
  %v536 = vpop.f32.mrb[0].mxu0
  %v537 = vadd.f32 0.0, %v536
  %v538 = vpop.f32.mrb[0].mxu0
  %539 = vmatprep.mubr.bf16.mxu0 0
  %540 = vmatmul.mubr.bf16.gmra.mrb[0].mxu0 %v322
  %v541 = vpop.f32.mrb[0].mxu0
  %v542 = vadd.f32 0.0, %v541
  %v543 = vpop.f32.mrb[0].mxu0
  %v544 = vpop.f32.mrb[0].mxu0
  %v545 = vadd.f32 0.0, %v544
  %v546 = vpop.f32.mrb[0].mxu0
  %547 = vmatprep.mubr.bf16.mxu0 0
  %548 = vmatmul.mubr.bf16.gmra.mrb[0].mxu0 %v325
  %v549 = vpop.f32.mrb[0].mxu0
  %v550 = vadd.f32 0.0, %v549
  %v551 = vpop.f32.mrb[0].mxu0
  %v552 = vpop.f32.mrb[0].mxu0
  %v553 = vadd.f32 0.0, %v552
  %v554 = vpop.f32.mrb[0].mxu0
  %555 = vmatprep.mubr.bf16.mxu0 0
  %556 = vmatmul.mubr.bf16.gmra.mrb[0].mxu0 %v328
  %v557 = vpop.f32.mrb[0].mxu0
  %v558 = vadd.f32 0.0, %v557
  %v559 = vpop.f32.mrb[0].mxu0
  %v560 = vpop.f32.mrb[0].mxu0
  %v561 = vadd.f32 0.0, %v560
  %v562 = vpop.f32.mrb[0].mxu0
  %563 = vmatprep.mubr.bf16.mxu0 0
  %564 = vmatmul.mubr.bf16.gmra.mrb[0].mxu0 %v331
  %v565 = vpop.f32.mrb[0].mxu0
  %v566 = vadd.f32 0.0, %v565
  %v567 = vpop.f32.mrb[0].mxu0
  %v568 = vpop.f32.mrb[0].mxu0
  %v569 = vadd.f32 0.0, %v568
  %v570 = vpop.f32.mrb[0].mxu0
  %571 = vmatprep.mubr.bf16.mxu0 0
  %572 = vmatmul.mubr.bf16.gmra.mrb[0].mxu0 %v334
  %v573 = vpop.f32.mrb[0].mxu0
  %v574 = vadd.f32 0.0, %v573
  %v575 = vpop.f32.mrb[0].mxu0
  %v576 = vpop.f32.mrb[0].mxu0
  %v577 = vadd.f32 0.0, %v576
  %v578 = vpop.f32.mrb[0].mxu0
  %579 = vmatprep.mubr.bf16.mxu0 0
  %580 = vmatmul.mubr.bf16.gmra.mrb[0].mxu0 %v337
  %v581 = vpop.f32.mrb[0].mxu0
  %v582 = vadd.f32 0.0, %v581
  %v583 = vpop.f32.mrb[0].mxu0
  %v584 = vpop.f32.mrb[0].mxu0
  %v585 = vadd.f32 0.0, %v584
  %v586 = vpop.f32.mrb[0].mxu0
  %587 = vmatprep.mubr.bf16.mxu0 0
  %588 = vmatmul.mubr.bf16.gmra.mrb[0].mxu0 %v340
  %v589 = vpop.f32.mrb[0].mxu0
  %v590 = vadd.f32 0.0, %v589
  %v591 = vpop.f32.mrb[0].mxu0
  %v592 = vpop.f32.mrb[0].mxu0
  %v593 = vadd.f32 0.0, %v592
  %v594 = vpop.f32.mrb[0].mxu0
  %595 = vmatprep.mubr.bf16.mxu0 0
  %596 = vmatmul.mubr.bf16.gmra.mrb[0].mxu0 %v343
  %v597 = vpop.f32.mrb[0].mxu0
  %v598 = vadd.f32 0.0, %v597
  %v599 = vpop.f32.mrb[0].mxu0
  %v600 = vpop.f32.mrb[0].mxu0
  %v601 = vadd.f32 0.0, %v600
  %v602 = vpop.f32.mrb[0].mxu0
  %603 = vmatprep.mubr.bf16.mxu0 0
  %604 = vmatmul.mubr.bf16.gmra.mrb[0].mxu0 %v346
  %v605 = vpop.f32.mrb[0].mxu0
  %v606 = vadd.f32 0.0, %v605
  %v607 = vpop.f32.mrb[0].mxu0
  %v608 = vpop.f32.mrb[0].mxu0
  %v609 = vadd.f32 0.0, %v608
  %v610 = vpop.f32.mrb[0].mxu0
  %611 = vmatprep.mubr.bf16.mxu0 0
  %612 = vmatmul.mubr.bf16.gmra.mrb[0].mxu0 %v349
  %v613 = vpop.f32.mrb[0].mxu0
  %v614 = vadd.f32 0.0, %v613
  %v615 = vpop.f32.mrb[0].mxu0
  %v616 = vpop.f32.mrb[0].mxu0
  %v617 = vadd.f32 0.0, %v616
  %v618 = vpop.f32.mrb[0].mxu0
  %619 = vmatprep.mubr.bf16.mxu0 0
  %620 = vmatmul.mubr.bf16.gmra.mrb[0].mxu0 %v352
  %v621 = vpop.f32.mrb[0].mxu0
  %v622 = vadd.f32 0.0, %v621
  %v623 = vpop.f32.mrb[0].mxu0
  %v624 = vpop.f32.mrb[0].mxu0
  %v625 = vadd.f32 0.0, %v624
  %v626 = vpop.f32.mrb[0].mxu0
  %627 = vmatprep.mubr.bf16.mxu0 0
  %628 = vmatmul.mubr.bf16.gmra.mrb[0].mxu0 %v355
  %v629 = vpop.f32.mrb[0].mxu0
  %v630 = vadd.f32 0.0, %v629
  %v631 = vpop.f32.mrb[0].mxu0
  %v632 = vpop.f32.mrb[0].mxu0
  %v633 = vadd.f32 0.0, %v632
  %v634 = vpop.f32.mrb[0].mxu0
  %635 = vmatprep.mubr.bf16.mxu0 0
  %636 = vmatmul.mubr.bf16.gmra.mrb[0].mxu0 %v358
  %v637 = vpop.f32.mrb[0].mxu0
  %v638 = vadd.f32 0.0, %v637
  %v639 = vpop.f32.mrb[0].mxu0
  %v640 = vpop.f32.mrb[0].mxu0
  %v641 = vadd.f32 0.0, %v640
  %v642 = vpop.f32.mrb[0].mxu0
  %643 = vmatprep.mubr.bf16.mxu0 0
  %644 = vmatmul.mubr.bf16.gmra.mrb[0].mxu0 %v361
  %v645 = vpop.f32.mrb[0].mxu0
  %v646 = vadd.f32 0.0, %v645
  %v647 = vpop.f32.mrb[0].mxu0
  %v648 = vpop.f32.mrb[0].mxu0
  %v649 = vadd.f32 0.0, %v648
  %v650 = vpop.f32.mrb[0].mxu0
  %651 = vdwg.mxu0
  %v652 = vld [vmem:[%s2] sm:$0x1]
  %v654 = vlaneseq
  %v655 = vshrl.u32 %v654, 7
  %v656 = vsub.s32 0, %v655
  %v657 = vrot.slane %v652, %v656
  %v659 = vmul.f32 %v398, %v657
  %v660 = vmul.f32 %v401, %v657
  %v661 = vmul.f32 %v406, %v657
  %v662 = vmul.f32 %v409, %v657
  %v663 = vmul.f32 %v414, %v657
  %v664 = vmul.f32 %v417, %v657
  %v665 = vmul.f32 %v422, %v657
  %v666 = vmul.f32 %v425, %v657
  %v667 = vmul.f32 %v430, %v657
  %v668 = vmul.f32 %v433, %v657
  %v669 = vmul.f32 %v438, %v657
  %v670 = vmul.f32 %v441, %v657
  %v671 = vmul.f32 %v446, %v657
  %v672 = vmul.f32 %v449, %v657
  %v673 = vmul.f32 %v454, %v657
  %v674 = vmul.f32 %v457, %v657
  %v675 = vmul.f32 %v462, %v657
  %v676 = vmul.f32 %v465, %v657
  %v677 = vmul.f32 %v470, %v657
  %v678 = vmul.f32 %v473, %v657
  %v679 = vmul.f32 %v478, %v657
  %v680 = vmul.f32 %v481, %v657
  %v681 = vmul.f32 %v486, %v657
  %v682 = vmul.f32 %v489, %v657
  %v683 = vmul.f32 %v494, %v657
  %v684 = vmul.f32 %v497, %v657
  %v685 = vmul.f32 %v502, %v657
  %v686 = vmul.f32 %v505, %v657
  %v687 = vmul.f32 %v510, %v657
  %v688 = vmul.f32 %v513, %v657
  %v689 = vmul.f32 %v518, %v657
  %v690 = vmul.f32 %v521, %v657
  %v691 = vmul.f32 %v526, %v657
  %v692 = vmul.f32 %v529, %v657
  %v693 = vmul.f32 %v534, %v657
  %v694 = vmul.f32 %v537, %v657
  %v695 = vmul.f32 %v542, %v657
  %v696 = vmul.f32 %v545, %v657
  %v697 = vmul.f32 %v550, %v657
  %v698 = vmul.f32 %v553, %v657
  %v699 = vmul.f32 %v558, %v657
  %v700 = vmul.f32 %v561, %v657
  %v701 = vmul.f32 %v566, %v657
  %v702 = vmul.f32 %v569, %v657
  %v703 = vmul.f32 %v574, %v657
  %v704 = vmul.f32 %v577, %v657
  %v705 = vmul.f32 %v582, %v657
  %v706 = vmul.f32 %v585, %v657
  %v707 = vmul.f32 %v590, %v657
  %v708 = vmul.f32 %v593, %v657
  %v709 = vmul.f32 %v598, %v657
  %v710 = vmul.f32 %v601, %v657
  %v711 = vmul.f32 %v606, %v657
  %v712 = vmul.f32 %v609, %v657
  %v713 = vmul.f32 %v614, %v657
  %v714 = vmul.f32 %v617, %v657
  %v715 = vmul.f32 %v622, %v657
  %v716 = vmul.f32 %v625, %v657
  %v717 = vmul.f32 %v630, %v657
  %v718 = vmul.f32 %v633, %v657
  %v719 = vmul.f32 %v638, %v657
  %v720 = vmul.f32 %v641, %v657
  %v721 = vmul.f32 %v646, %v657
  %v722 = vmul.f32 %v649, %v657
  %v723 = vld [vmem:[%s3] sm:$0x1]
  %v725 = vlaneseq
  %v726 = vshrl.u32 %v725, 7
  %v727 = vsub.s32 0, %v726
  %v728 = vrot.slane %v723, %v727
  %v730 = vadd.f32 %v659, %v728
  %v731 = vadd.f32 %v660, %v728
  %v732 = vadd.f32 %v661, %v728
  %v733 = vadd.f32 %v662, %v728
  %v734 = vadd.f32 %v663, %v728
  %v735 = vadd.f32 %v664, %v728
  %v736 = vadd.f32 %v665, %v728
  %v737 = vadd.f32 %v666, %v728
  %v738 = vadd.f32 %v667, %v728
  %v739 = vadd.f32 %v668, %v728
  %v740 = vadd.f32 %v669, %v728
  %v741 = vadd.f32 %v670, %v728
  %v742 = vadd.f32 %v671, %v728
  %v743 = vadd.f32 %v672, %v728
  %v744 = vadd.f32 %v673, %v728
  %v745 = vadd.f32 %v674, %v728
  %v746 = vadd.f32 %v675, %v728
  %v747 = vadd.f32 %v676, %v728
  %v748 = vadd.f32 %v677, %v728
  %v749 = vadd.f32 %v678, %v728
  %v750 = vadd.f32 %v679, %v728
  %v751 = vadd.f32 %v680, %v728
  %v752 = vadd.f32 %v681, %v728
  %v753 = vadd.f32 %v682, %v728
  %v754 = vadd.f32 %v683, %v728
  %v755 = vadd.f32 %v684, %v728
  %v756 = vadd.f32 %v685, %v728
  %v757 = vadd.f32 %v686, %v728
  %v758 = vadd.f32 %v687, %v728
  %v759 = vadd.f32 %v688, %v728
  %v760 = vadd.f32 %v689, %v728
  %v761 = vadd.f32 %v690, %v728
  %v762 = vadd.f32 %v691, %v728
  %v763 = vadd.f32 %v692, %v728
  %v764 = vadd.f32 %v693, %v728
  %v765 = vadd.f32 %v694, %v728
  %v766 = vadd.f32 %v695, %v728
  %v767 = vadd.f32 %v696, %v728
  %v768 = vadd.f32 %v697, %v728
  %v769 = vadd.f32 %v698, %v728
  %v770 = vadd.f32 %v699, %v728
  %v771 = vadd.f32 %v700, %v728
  %v772 = vadd.f32 %v701, %v728
  %v773 = vadd.f32 %v702, %v728
  %v774 = vadd.f32 %v703, %v728
  %v775 = vadd.f32 %v704, %v728
  %v776 = vadd.f32 %v705, %v728
  %v777 = vadd.f32 %v706, %v728
  %v778 = vadd.f32 %v707, %v728
  %v779 = vadd.f32 %v708, %v728
  %v780 = vadd.f32 %v709, %v728
  %v781 = vadd.f32 %v710, %v728
  %v782 = vadd.f32 %v711, %v728
  %v783 = vadd.f32 %v712, %v728
  %v784 = vadd.f32 %v713, %v728
  %v785 = vadd.f32 %v714, %v728
  %v786 = vadd.f32 %v715, %v728
  %v787 = vadd.f32 %v716, %v728
  %v788 = vadd.f32 %v717, %v728
  %v789 = vadd.f32 %v718, %v728
  %v790 = vadd.f32 %v719, %v728
  %v791 = vadd.f32 %v720, %v728
  %v792 = vadd.f32 %v721, %v728
  %v793 = vadd.f32 %v722, %v728
  %v794 = vpack.c.bf16 %v731, %v730
  %v795 = vpack.c.bf16 %v733, %v732
  %v796 = vpack.c.bf16 %v735, %v734
  %v797 = vpack.c.bf16 %v737, %v736
  %v798 = vpack.c.bf16 %v739, %v738
  %v799 = vpack.c.bf16 %v741, %v740
  %v800 = vpack.c.bf16 %v743, %v742
  %v801 = vpack.c.bf16 %v745, %v744
  %v802 = vpack.c.bf16 %v747, %v746
  %v803 = vpack.c.bf16 %v749, %v748
  %v804 = vpack.c.bf16 %v751, %v750
  %v805 = vpack.c.bf16 %v753, %v752
  %v806 = vpack.c.bf16 %v755, %v754
  %v807 = vpack.c.bf16 %v757, %v756
  %v808 = vpack.c.bf16 %v759, %v758
  %v809 = vpack.c.bf16 %v761, %v760
  %v810 = vpack.c.bf16 %v763, %v762
  %v811 = vpack.c.bf16 %v765, %v764
  %v812 = vpack.c.bf16 %v767, %v766
  %v813 = vpack.c.bf16 %v769, %v768
  %v814 = vpack.c.bf16 %v771, %v770
  %v815 = vpack.c.bf16 %v773, %v772
  %v816 = vpack.c.bf16 %v775, %v774
  %v817 = vpack.c.bf16 %v777, %v776
  %v818 = vpack.c.bf16 %v779, %v778
  %v819 = vpack.c.bf16 %v781, %v780
  %v820 = vpack.c.bf16 %v783, %v782
  %v821 = vpack.c.bf16 %v785, %v784
  %v822 = vpack.c.bf16 %v787, %v786
  %v823 = vpack.c.bf16 %v789, %v788
  %v824 = vpack.c.bf16 %v791, %v790
  %v825 = vpack.c.bf16 %v793, %v792
  %v858 = vunpack.c.l.b16 %v794
  %v859 = vunpack.c.h.b16 %v794
  %v860 = vunpack.c.l.b16 %v795
  %v861 = vunpack.c.h.b16 %v795
  %v862 = vunpack.c.l.b16 %v796
  %v863 = vunpack.c.h.b16 %v796
  %v864 = vunpack.c.l.b16 %v797
  %v865 = vunpack.c.h.b16 %v797
  %v866 = vunpack.c.l.b16 %v798
  %v867 = vunpack.c.h.b16 %v798
  %v868 = vunpack.c.l.b16 %v799
  %v869 = vunpack.c.h.b16 %v799
  %v870 = vunpack.c.l.b16 %v800
  %v871 = vunpack.c.h.b16 %v800
  %v872 = vunpack.c.l.b16 %v801
  %v873 = vunpack.c.h.b16 %v801
  %v874 = vunpack.c.l.b16 %v802
  %v875 = vunpack.c.h.b16 %v802
  %v876 = vunpack.c.l.b16 %v803
  %v877 = vunpack.c.h.b16 %v803
  %v878 = vunpack.c.l.b16 %v804
  %v879 = vunpack.c.h.b16 %v804
  %v880 = vunpack.c.l.b16 %v805
  %v881 = vunpack.c.h.b16 %v805
  %v882 = vunpack.c.l.b16 %v806
  %v883 = vunpack.c.h.b16 %v806
  %v884 = vunpack.c.l.b16 %v807
  %v885 = vunpack.c.h.b16 %v807
  %v886 = vunpack.c.l.b16 %v808
  %v887 = vunpack.c.h.b16 %v808
  %v888 = vunpack.c.l.b16 %v809
  %v889 = vunpack.c.h.b16 %v809
  %v890 = vunpack.c.l.b16 %v810
  %v891 = vunpack.c.h.b16 %v810
  %v892 = vunpack.c.l.b16 %v811
  %v893 = vunpack.c.h.b16 %v811
  %v894 = vunpack.c.l.b16 %v812
  %v895 = vunpack.c.h.b16 %v812
  %v896 = vunpack.c.l.b16 %v813
  %v897 = vunpack.c.h.b16 %v813
  %v898 = vunpack.c.l.b16 %v814
  %v899 = vunpack.c.h.b16 %v814
  %v900 = vunpack.c.l.b16 %v815
  %v901 = vunpack.c.h.b16 %v815
  %v902 = vunpack.c.l.b16 %v816
  %v903 = vunpack.c.h.b16 %v816
  %v904 = vunpack.c.l.b16 %v817
  %v905 = vunpack.c.h.b16 %v817
  %v906 = vunpack.c.l.b16 %v818
  %v907 = vunpack.c.h.b16 %v818
  %v908 = vunpack.c.l.b16 %v819
  %v909 = vunpack.c.h.b16 %v819
  %v910 = vunpack.c.l.b16 %v820
  %v911 = vunpack.c.h.b16 %v820
  %v912 = vunpack.c.l.b16 %v821
  %v913 = vunpack.c.h.b16 %v821
  %v914 = vunpack.c.l.b16 %v822
  %v915 = vunpack.c.h.b16 %v822
  %v916 = vunpack.c.l.b16 %v823
  %v917 = vunpack.c.h.b16 %v823
  %v918 = vunpack.c.l.b16 %v824
  %v919 = vunpack.c.h.b16 %v824
  %v920 = vunpack.c.l.b16 %v825
  %v921 = vunpack.c.h.b16 %v825
  %v922 = vpack.c.b16 %v858, %v858
  %v923 = vpack.c.b16 %v859, %v859
  %v924 = vpack.c.b16 %v860, %v860
  %v925 = vpack.c.b16 %v861, %v861
  %v926 = vpack.c.b16 %v862, %v862
  %v927 = vpack.c.b16 %v863, %v863
  %v928 = vpack.c.b16 %v864, %v864
  %v929 = vpack.c.b16 %v865, %v865
  %v930 = vpack.c.b16 %v866, %v866
  %v931 = vpack.c.b16 %v867, %v867
  %v932 = vpack.c.b16 %v868, %v868
  %v933 = vpack.c.b16 %v869, %v869
  %v934 = vpack.c.b16 %v870, %v870
  %v935 = vpack.c.b16 %v871, %v871
  %v936 = vpack.c.b16 %v872, %v872
  %v937 = vpack.c.b16 %v873, %v873
  %v938 = vpack.c.b16 %v874, %v874
  %v939 = vpack.c.b16 %v875, %v875
  %v940 = vpack.c.b16 %v876, %v876
  %v941 = vpack.c.b16 %v877, %v877
  %v942 = vpack.c.b16 %v878, %v878
  %v943 = vpack.c.b16 %v879, %v879
  %v944 = vpack.c.b16 %v880, %v880
  %v945 = vpack.c.b16 %v881, %v881
  %v946 = vpack.c.b16 %v882, %v882
  %v947 = vpack.c.b16 %v883, %v883
  %v948 = vpack.c.b16 %v884, %v884
  %v949 = vpack.c.b16 %v885, %v885
  %v950 = vpack.c.b16 %v886, %v886
  %v951 = vpack.c.b16 %v887, %v887
  %v952 = vpack.c.b16 %v888, %v888
  %v953 = vpack.c.b16 %v889, %v889
  %v954 = vpack.c.b16 %v890, %v890
  %v955 = vpack.c.b16 %v891, %v891
  %v956 = vpack.c.b16 %v892, %v892
  %v957 = vpack.c.b16 %v893, %v893
  %v958 = vpack.c.b16 %v894, %v894
  %v959 = vpack.c.b16 %v895, %v895
  %v960 = vpack.c.b16 %v896, %v896
  %v961 = vpack.c.b16 %v897, %v897
  %v962 = vpack.c.b16 %v898, %v898
  %v963 = vpack.c.b16 %v899, %v899
  %v964 = vpack.c.b16 %v900, %v900
  %v965 = vpack.c.b16 %v901, %v901
  %v966 = vpack.c.b16 %v902, %v902
  %v967 = vpack.c.b16 %v903, %v903
  %v968 = vpack.c.b16 %v904, %v904
  %v969 = vpack.c.b16 %v905, %v905
  %v970 = vpack.c.b16 %v906, %v906
  %v971 = vpack.c.b16 %v907, %v907
  %v972 = vpack.c.b16 %v908, %v908
  %v973 = vpack.c.b16 %v909, %v909
  %v974 = vpack.c.b16 %v910, %v910
  %v975 = vpack.c.b16 %v911, %v911
  %v976 = vpack.c.b16 %v912, %v912
  %v977 = vpack.c.b16 %v913, %v913
  %v978 = vpack.c.b16 %v914, %v914
  %v979 = vpack.c.b16 %v915, %v915
  %v980 = vpack.c.b16 %v916, %v916
  %v981 = vpack.c.b16 %v917, %v917
  %v982 = vpack.c.b16 %v918, %v918
  %v983 = vpack.c.b16 %v919, %v919
  %v984 = vpack.c.b16 %v920, %v920
  %v985 = vpack.c.b16 %v921, %v921
  %vm1050 = vcmask 257024
  %1051 = vst.msk [vmem:[%s4] sm:$0xf] %vm1050, %v922
  %1052 = vst.msk [vmem:[%s4 + $0x4] sm:$0xf] %vm1050, %v923
  %1053 = vst.msk [vmem:[%s4 + $0x8] sm:$0xf] %vm1050, %v924
  %1054 = vst.msk [vmem:[%s4 + $0xc] sm:$0xf] %vm1050, %v925
  %1055 = vst.msk [vmem:[%s4 + $0x10] sm:$0xf] %vm1050, %v926
  %1056 = vst.msk [vmem:[%s4 + $0x14] sm:$0xf] %vm1050, %v927
  %1057 = vst.msk [vmem:[%s4 + $0x18] sm:$0xf] %vm1050, %v928
  %1058 = vst.msk [vmem:[%s4 + $0x1c] sm:$0xf] %vm1050, %v929
  %1059 = vst.msk [vmem:[%s4 + $0x20] sm:$0xf] %vm1050, %v930
  %1060 = vst.msk [vmem:[%s4 + $0x24] sm:$0xf] %vm1050, %v931
  %1061 = vst.msk [vmem:[%s4 + $0x28] sm:$0xf] %vm1050, %v932
  %1062 = vst.msk [vmem:[%s4 + $0x2c] sm:$0xf] %vm1050, %v933
  %1063 = vst.msk [vmem:[%s4 + $0x30] sm:$0xf] %vm1050, %v934
  %1064 = vst.msk [vmem:[%s4 + $0x34] sm:$0xf] %vm1050, %v935
  %1065 = vst.msk [vmem:[%s4 + $0x38] sm:$0xf] %vm1050, %v936
  %1066 = vst.msk [vmem:[%s4 + $0x3c] sm:$0xf] %vm1050, %v937
  %1067 = vst.msk [vmem:[%s4 + $0x40] sm:$0xf] %vm1050, %v938
  %1068 = vst.msk [vmem:[%s4 + $0x44] sm:$0xf] %vm1050, %v939
  %1069 = vst.msk [vmem:[%s4 + $0x48] sm:$0xf] %vm1050, %v940
  %1070 = vst.msk [vmem:[%s4 + $0x4c] sm:$0xf] %vm1050, %v941
  %1071 = vst.msk [vmem:[%s4 + $0x50] sm:$0xf] %vm1050, %v942
  %1072 = vst.msk [vmem:[%s4 + $0x54] sm:$0xf] %vm1050, %v943
  %1073 = vst.msk [vmem:[%s4 + $0x58] sm:$0xf] %vm1050, %v944
  %1074 = vst.msk [vmem:[%s4 + $0x5c] sm:$0xf] %vm1050, %v945
  %1075 = vst.msk [vmem:[%s4 + $0x60] sm:$0xf] %vm1050, %v946
  %1076 = vst.msk [vmem:[%s4 + $0x64] sm:$0xf] %vm1050, %v947
  %1077 = vst.msk [vmem:[%s4 + $0x68] sm:$0xf] %vm1050, %v948
  %1078 = vst.msk [vmem:[%s4 + $0x6c] sm:$0xf] %vm1050, %v949
  %1079 = vst.msk [vmem:[%s4 + $0x70] sm:$0xf] %vm1050, %v950
  %1080 = vst.msk [vmem:[%s4 + $0x74] sm:$0xf] %vm1050, %v951
  %1081 = vst.msk [vmem:[%s4 + $0x78] sm:$0xf] %vm1050, %v952
  %1082 = vst.msk [vmem:[%s4 + $0x7c] sm:$0xf] %vm1050, %v953
  %1083 = vst.msk [vmem:[%s4 + $0x80] sm:$0xf] %vm1050, %v954
  %1084 = vst.msk [vmem:[%s4 + $0x84] sm:$0xf] %vm1050, %v955
  %1085 = vst.msk [vmem:[%s4 + $0x88] sm:$0xf] %vm1050, %v956
  %1086 = vst.msk [vmem:[%s4 + $0x8c] sm:$0xf] %vm1050, %v957
  %1087 = vst.msk [vmem:[%s4 + $0x90] sm:$0xf] %vm1050, %v958
  %1088 = vst.msk [vmem:[%s4 + $0x94] sm:$0xf] %vm1050, %v959
  %1089 = vst.msk [vmem:[%s4 + $0x98] sm:$0xf] %vm1050, %v960
  %1090 = vst.msk [vmem:[%s4 + $0x9c] sm:$0xf] %vm1050, %v961
  %1091 = vst.msk [vmem:[%s4 + $0xa0] sm:$0xf] %vm1050, %v962
  %1092 = vst.msk [vmem:[%s4 + $0xa4] sm:$0xf] %vm1050, %v963
  %1093 = vst.msk [vmem:[%s4 + $0xa8] sm:$0xf] %vm1050, %v964
  %1094 = vst.msk [vmem:[%s4 + $0xac] sm:$0xf] %vm1050, %v965
  %1095 = vst.msk [vmem:[%s4 + $0xb0] sm:$0xf] %vm1050, %v966
  %1096 = vst.msk [vmem:[%s4 + $0xb4] sm:$0xf] %vm1050, %v967
  %1097 = vst.msk [vmem:[%s4 + $0xb8] sm:$0xf] %vm1050, %v968
  %1098 = vst.msk [vmem:[%s4 + $0xbc] sm:$0xf] %vm1050, %v969
  %1099 = vst.msk [vmem:[%s4 + $0xc0] sm:$0xf] %vm1050, %v970
  %1100 = vst.msk [vmem:[%s4 + $0xc4] sm:$0xf] %vm1050, %v971
  %1101 = vst.msk [vmem:[%s4 + $0xc8] sm:$0xf] %vm1050, %v972
  %1102 = vst.msk [vmem:[%s4 + $0xcc] sm:$0xf] %vm1050, %v973
  %1103 = vst.msk [vmem:[%s4 + $0xd0] sm:$0xf] %vm1050, %v974
  %1104 = vst.msk [vmem:[%s4 + $0xd4] sm:$0xf] %vm1050, %v975
  %1105 = vst.msk [vmem:[%s4 + $0xd8] sm:$0xf] %vm1050, %v976
  %1106 = vst.msk [vmem:[%s4 + $0xdc] sm:$0xf] %vm1050, %v977
  %1107 = vst.msk [vmem:[%s4 + $0xe0] sm:$0xf] %vm1050, %v978
  %1108 = vst.msk [vmem:[%s4 + $0xe4] sm:$0xf] %vm1050, %v979
  %1109 = vst.msk [vmem:[%s4 + $0xe8] sm:$0xf] %vm1050, %v980
  %1110 = vst.msk [vmem:[%s4 + $0xec] sm:$0xf] %vm1050, %v981
  %1111 = vst.msk [vmem:[%s4 + $0xf0] sm:$0xf] %vm1050, %v982
  %1112 = vst.msk [vmem:[%s4 + $0xf4] sm:$0xf] %vm1050, %v983
  %1113 = vst.msk [vmem:[%s4 + $0xf8] sm:$0xf] %vm1050, %v984
  %1114 = vst.msk [vmem:[%s4 + $0xfc] sm:$0xf] %vm1050, %v985
  // Predicated region
  $region18: #{gan_critic_forward.29} parent=0 // pred_check
    _
  $region19: #{gan_critic_forward.29} parent=0 // pred_check_branch
    %1116 = sbr.rel (0) target = $region21
  $region20: #{gan_critic_forward.29} parent=0 // pred_region
    _
  $region21: #{gan_critic_forward.29} parent=0 // pred_fallthru
    _
  // Predicated region
  $region22: #{gan_critic_forward.29} parent=0 // pred_check
    _
  $region23: #{gan_critic_forward.29} parent=0 // pred_check_branch
    %1118 = sbr.rel (0) target = $region25
  $region24: #{gan_critic_forward.29} parent=0 // pred_region
    _
  $region25: #{gan_critic_forward.29} parent=0 // pred_fallthru
    _

// kernel: gan_critic_forward.30
$region0: #{gan_critic_forward.30}
  #allocation0 [shape = 'u32[]', space=smem, size = 0x4, offset = 0x4, fixed_abs, tag = 'smem constant byte address 0x4 - core index']
  #allocation1 [shape = 'u32[144,128]{1,0:T(1,128)}', space=vmem, size = 0x12000, scoped, tag = 'internal scratch']
  %s0 = inlined_call_operand.vmem [shape: bf16[128,288], index: 0, kind: input, shape index: {}]
  %s1 = inlined_call_operand.vmem [shape: bf16[288,32], index: 1, kind: input, shape index: {}]
  %s2 = inlined_call_operand.vmem [shape: f32[1,32], index: 2, kind: input, shape index: {}]
  %s3 = inlined_call_operand.vmem [shape: f32[1,32], index: 3, kind: input, shape index: {}]
  %s4 = inlined_call_operand.vmem [shape: bf16[128,32], index: 4, kind: output, shape index: {}]
  %s5 = sld [smem:[#allocation0]]
  $region26: #{gan_critic_forward.30} parent=0
    _
  %s7 = ssub.s32 1, %s5
  %s8 = scalar_select 0, %s7, %s5
  // Predicated region
  $region2: #{gan_critic_forward.30} parent=0 // pred_check
    _
  $region3: #{gan_critic_forward.30} parent=0 // pred_check_branch
    %10 = sbr.rel (0) target = $region5
  $region4: #{gan_critic_forward.30} parent=0 // pred_region
    _
  $region5: #{gan_critic_forward.30} parent=0 // pred_fallthru
    _
  // Predicated region
  $region6: #{gan_critic_forward.30} parent=0 // pred_check
    _
  $region7: #{gan_critic_forward.30} parent=0 // pred_check_branch
    %12 = sbr.rel (0) target = $region9
  $region8: #{gan_critic_forward.30} parent=0 // pred_region
    _
  $region9: #{gan_critic_forward.30} parent=0 // pred_fallthru
    _
  // Predicated region
  $region10: #{gan_critic_forward.30} parent=0 // pred_check
    _
  $region11: #{gan_critic_forward.30} parent=0 // pred_check_branch
    %14 = sbr.rel (0) target = $region13
  $region12: #{gan_critic_forward.30} parent=0 // pred_region
    _
  $region13: #{gan_critic_forward.30} parent=0 // pred_fallthru
    _
  // Predicated region
  $region14: #{gan_critic_forward.30} parent=0 // pred_check
    _
  $region15: #{gan_critic_forward.30} parent=0 // pred_check_branch
    %16 = sbr.rel (0) target = $region17
  $region16: #{gan_critic_forward.30} parent=0 // pred_region
    _
  $region17: #{gan_critic_forward.30} parent=0 // pred_fallthru
    _
  %v18 = vld [vmem:[%s0] sm:$0xff]
  %v19 = vld [vmem:[%s0 + $0x8] sm:$0xf]
  %v20 = vld [vmem:[%s0 + $0xc] sm:$0xff]
  %v21 = vld [vmem:[%s0 + $0x14] sm:$0xf]
  %v22 = vld [vmem:[%s0 + $0x18] sm:$0xff]
  %v23 = vld [vmem:[%s0 + $0x20] sm:$0xf]
  %v24 = vld [vmem:[%s0 + $0x24] sm:$0xff]
  %v25 = vld [vmem:[%s0 + $0x2c] sm:$0xf]
  %v26 = vld [vmem:[%s0 + $0x30] sm:$0xff]
  %v27 = vld [vmem:[%s0 + $0x38] sm:$0xf]
  %v28 = vld [vmem:[%s0 + $0x3c] sm:$0xff]
  %v29 = vld [vmem:[%s0 + $0x44] sm:$0xf]
  %v30 = vld [vmem:[%s0 + $0x48] sm:$0xff]
  %v31 = vld [vmem:[%s0 + $0x50] sm:$0xf]
  %v32 = vld [vmem:[%s0 + $0x54] sm:$0xff]
  %v33 = vld [vmem:[%s0 + $0x5c] sm:$0xf]
  %v34 = vld [vmem:[%s0 + $0x60] sm:$0xff]
  %v35 = vld [vmem:[%s0 + $0x68] sm:$0xf]
  %v36 = vld [vmem:[%s0 + $0x6c] sm:$0xff]
  %v37 = vld [vmem:[%s0 + $0x74] sm:$0xf]
  %v38 = vld [vmem:[%s0 + $0x78] sm:$0xff]
  %v39 = vld [vmem:[%s0 + $0x80] sm:$0xf]
  %v40 = vld [vmem:[%s0 + $0x84] sm:$0xff]
  %v41 = vld [vmem:[%s0 + $0x8c] sm:$0xf]
  %v42 = vld [vmem:[%s0 + $0x90] sm:$0xff]
  %v43 = vld [vmem:[%s0 + $0x98] sm:$0xf]
  %v44 = vld [vmem:[%s0 + $0x9c] sm:$0xff]
  %v45 = vld [vmem:[%s0 + $0xa4] sm:$0xf]
  %v46 = vld [vmem:[%s0 + $0xa8] sm:$0xff]
  %v47 = vld [vmem:[%s0 + $0xb0] sm:$0xf]
  %v48 = vld [vmem:[%s0 + $0xb4] sm:$0xff]
  %v49 = vld [vmem:[%s0 + $0xbc] sm:$0xf]
  %v50 = vld [vmem:[%s1] sm:$0xf]
  %v51 = vld [vmem:[%s1 + $0x4] sm:$0xf]
  %v52 = vld [vmem:[%s1 + $0x8] sm:$0xf]
  %v53 = vld [vmem:[%s1 + $0xc] sm:$0xf]
  %v54 = vld [vmem:[%s1 + $0x10] sm:$0xf]
  %v55 = vld [vmem:[%s1 + $0x14] sm:$0xf]
  %v56 = vld [vmem:[%s1 + $0x18] sm:$0xf]
  %v57 = vld [vmem:[%s1 + $0x1c] sm:$0xf]
  %v58 = vld [vmem:[%s1 + $0x20] sm:$0xf]
  %v59 = vld [vmem:[%s1 + $0x24] sm:$0xf]
  %v60 = vld [vmem:[%s1 + $0x28] sm:$0xf]
  %v61 = vld [vmem:[%s1 + $0x2c] sm:$0xf]
  %v62 = vld [vmem:[%s1 + $0x30] sm:$0xf]
  %v63 = vld [vmem:[%s1 + $0x34] sm:$0xf]
  %v64 = vld [vmem:[%s1 + $0x38] sm:$0xf]
  %v65 = vld [vmem:[%s1 + $0x3c] sm:$0xf]
  %v66 = vld [vmem:[%s1 + $0x40] sm:$0xf]
  %v67 = vld [vmem:[%s1 + $0x44] sm:$0xf]
  %v68 = vld [vmem:[%s1 + $0x48] sm:$0xf]
  %v69 = vld [vmem:[%s1 + $0x4c] sm:$0xf]
  %v70 = vld [vmem:[%s1 + $0x50] sm:$0xf]
  %v71 = vld [vmem:[%s1 + $0x54] sm:$0xf]
  %v72 = vld [vmem:[%s1 + $0x58] sm:$0xf]
  %v73 = vld [vmem:[%s1 + $0x5c] sm:$0xf]
  %v74 = vld [vmem:[%s1 + $0x60] sm:$0xf]
  %v75 = vld [vmem:[%s1 + $0x64] sm:$0xf]
  %v76 = vld [vmem:[%s1 + $0x68] sm:$0xf]
  %v77 = vld [vmem:[%s1 + $0x6c] sm:$0xf]
  %v78 = vld [vmem:[%s1 + $0x70] sm:$0xf]
  %v79 = vld [vmem:[%s1 + $0x74] sm:$0xf]
  %v80 = vld [vmem:[%s1 + $0x78] sm:$0xf]
  %v81 = vld [vmem:[%s1 + $0x7c] sm:$0xf]
  %v82 = vld [vmem:[%s1 + $0x80] sm:$0xf]
  %v83 = vld [vmem:[%s1 + $0x84] sm:$0xf]
  %v84 = vld [vmem:[%s1 + $0x88] sm:$0xf]
  %v85 = vld [vmem:[%s1 + $0x8c] sm:$0xf]
  %v118 = vunpack.c.l.b16 %v18
  %v119 = vunpack.c.h.b16 %v18
  %v120 = vunpack.c.l.b16 %v19
  %v121 = vunpack.c.l.b16 %v20
  %v122 = vunpack.c.h.b16 %v20
  %v123 = vunpack.c.l.b16 %v21
  %v124 = vunpack.c.l.b16 %v22
  %v125 = vunpack.c.h.b16 %v22
  %v126 = vunpack.c.l.b16 %v23
  %v127 = vunpack.c.l.b16 %v24
  %v128 = vunpack.c.h.b16 %v24
  %v129 = vunpack.c.l.b16 %v25
  %v130 = vunpack.c.l.b16 %v26
  %v131 = vunpack.c.h.b16 %v26
  %v132 = vunpack.c.l.b16 %v27
  %v133 = vunpack.c.l.b16 %v28
  %v134 = vunpack.c.h.b16 %v28
  %v135 = vunpack.c.l.b16 %v29
  %v136 = vunpack.c.l.b16 %v30
  %v137 = vunpack.c.h.b16 %v30
  %v138 = vunpack.c.l.b16 %v31
  %v139 = vunpack.c.l.b16 %v32
  %v140 = vunpack.c.h.b16 %v32
  %v141 = vunpack.c.l.b16 %v33
  %v142 = vunpack.c.l.b16 %v34
  %v143 = vunpack.c.h.b16 %v34
  %v144 = vunpack.c.l.b16 %v35
  %v145 = vunpack.c.l.b16 %v36
  %v146 = vunpack.c.h.b16 %v36
  %v147 = vunpack.c.l.b16 %v37
  %v148 = vunpack.c.l.b16 %v38
  %v149 = vunpack.c.h.b16 %v38
  %v150 = vunpack.c.l.b16 %v39
  %v151 = vunpack.c.l.b16 %v40
  %v152 = vunpack.c.h.b16 %v40
  %v153 = vunpack.c.l.b16 %v41
  %v154 = vunpack.c.l.b16 %v42
  %v155 = vunpack.c.h.b16 %v42
  %v156 = vunpack.c.l.b16 %v43
  %v157 = vunpack.c.l.b16 %v44
  %v158 = vunpack.c.h.b16 %v44
  %v159 = vunpack.c.l.b16 %v45
  %v160 = vunpack.c.l.b16 %v46
  %v161 = vunpack.c.h.b16 %v46
  %v162 = vunpack.c.l.b16 %v47
  %v163 = vunpack.c.l.b16 %v48
  %v164 = vunpack.c.h.b16 %v48
  %v165 = vunpack.c.l.b16 %v49
  %v166 = vpack.c.b16 %v121, %v118
  %v167 = vpack.c.b16 %v122, %v119
  %v168 = vpack.c.b16 %v123, %v120
  %v169 = vpack.c.b16 %v127, %v124
  %v170 = vpack.c.b16 %v128, %v125
  %v171 = vpack.c.b16 %v129, %v126
  %v172 = vpack.c.b16 %v133, %v130
  %v173 = vpack.c.b16 %v134, %v131
  %v174 = vpack.c.b16 %v135, %v132
  %v175 = vpack.c.b16 %v139, %v136
  %v176 = vpack.c.b16 %v140, %v137
  %v177 = vpack.c.b16 %v141, %v138
  %v178 = vpack.c.b16 %v145, %v142
  %v179 = vpack.c.b16 %v146, %v143
  %v180 = vpack.c.b16 %v147, %v144
  %v181 = vpack.c.b16 %v151, %v148
  %v182 = vpack.c.b16 %v152, %v149
  %v183 = vpack.c.b16 %v153, %v150
  %v184 = vpack.c.b16 %v157, %v154
  %v185 = vpack.c.b16 %v158, %v155
  %v186 = vpack.c.b16 %v159, %v156
  %v187 = vpack.c.b16 %v163, %v160
  %v188 = vpack.c.b16 %v164, %v161
  %v189 = vpack.c.b16 %v165, %v162
  %v242 = vunpack.c.l.b16 %v50
  %v243 = vunpack.c.l.b16 %v51
  %v244 = vunpack.c.l.b16 %v52
  %v245 = vunpack.c.l.b16 %v53
  %v246 = vunpack.c.l.b16 %v54
  %v247 = vunpack.c.l.b16 %v55
  %v248 = vunpack.c.l.b16 %v56
  %v249 = vunpack.c.l.b16 %v57
  %v250 = vunpack.c.l.b16 %v58
  %v251 = vunpack.c.l.b16 %v59
  %v252 = vunpack.c.l.b16 %v60
  %v253 = vunpack.c.l.b16 %v61
  %v254 = vunpack.c.l.b16 %v62
  %v255 = vunpack.c.l.b16 %v63
  %v256 = vunpack.c.l.b16 %v64
  %v257 = vunpack.c.l.b16 %v65
  %v258 = vunpack.c.l.b16 %v66
  %v259 = vunpack.c.l.b16 %v67
  %v260 = vunpack.c.l.b16 %v68
  %v261 = vunpack.c.l.b16 %v69
  %v262 = vunpack.c.l.b16 %v70
  %v263 = vunpack.c.l.b16 %v71
  %v264 = vunpack.c.l.b16 %v72
  %v265 = vunpack.c.l.b16 %v73
  %v266 = vunpack.c.l.b16 %v74
  %v267 = vunpack.c.l.b16 %v75
  %v268 = vunpack.c.l.b16 %v76
  %v269 = vunpack.c.l.b16 %v77
  %v270 = vunpack.c.l.b16 %v78
  %v271 = vunpack.c.l.b16 %v79
  %v272 = vunpack.c.l.b16 %v80
  %v273 = vunpack.c.l.b16 %v81
  %v274 = vunpack.c.l.b16 %v82
  %v275 = vunpack.c.l.b16 %v83
  %v276 = vunpack.c.l.b16 %v84
  %v277 = vunpack.c.l.b16 %v85
  %v278 = vpack.c.b16 %v243, %v242
  %v279 = vpack.c.b16 %v245, %v244
  %v280 = vpack.c.b16 %v247, %v246
  %v281 = vpack.c.b16 %v249, %v248
  %v282 = vpack.c.b16 %v251, %v250
  %v283 = vpack.c.b16 %v253, %v252
  %v284 = vpack.c.b16 %v255, %v254
  %v285 = vpack.c.b16 %v257, %v256
  %v286 = vpack.c.b16 %v259, %v258
  %v287 = vpack.c.b16 %v261, %v260
  %v288 = vpack.c.b16 %v263, %v262
  %v289 = vpack.c.b16 %v265, %v264
  %v290 = vpack.c.b16 %v267, %v266
  %v291 = vpack.c.b16 %v269, %v268
  %v292 = vpack.c.b16 %v271, %v270
  %v293 = vpack.c.b16 %v273, %v272
  %v294 = vpack.c.b16 %v275, %v274
  %v295 = vpack.c.b16 %v277, %v276
  %vm314 = vcmask 261120
  %v316 = vsel %vm314, %v168, 0
  %v319 = vsel %vm314, %v171, 0
  %v322 = vsel %vm314, %v174, 0
  %v325 = vsel %vm314, %v177, 0
  %v328 = vsel %vm314, %v180, 0
  %v331 = vsel %vm314, %v183, 0
  %v334 = vsel %vm314, %v186, 0
  %v337 = vsel %vm314, %v189, 0
  %339 = vmatprep.subr.bf16.mxu0 0
  %340 = vmatpush1.bf16.msra.mxu0 %v278
  %341 = vmatprep.subr.bf16.mxu0 0
  %342 = vmatpush1.bf16.msra.mxu0 %v279
  %343 = vmatprep.subr.bf16.mxu0 0
  %344 = vmatpush1.bf16.msra.mxu0 %v280
  %345 = vmatprep.subr.bf16.mxu0 0
  %346 = vmatpush1.bf16.msra.mxu0 %v281
  %347 = vmatprep.subr.bf16.mxu0 0
  %348 = vmatpush1.bf16.msra.mxu0 %v282
  %349 = vmatprep.subr.bf16.mxu0 0
  %350 = vmatpush1.bf16.msra.mxu0 %v283
  %351 = vmatprep.subr.bf16.mxu0 0
  %352 = vmatpush1.bf16.msra.mxu0 %v284
  %353 = vmatprep.subr.bf16.mxu0 0
  %354 = vmatpush1.bf16.msra.mxu0 %v285
  %355 = vmatprep.subr.bf16.mxu0 0
  %356 = vmatpush1.bf16.msra.mxu0 %v286
  %357 = vmatprep.subr.bf16.mxu0 0
  %358 = vmatpush1.bf16.msra.mxu0 %v287
  %359 = vmatprep.subr.bf16.mxu0 0
  %360 = vmatpush1.bf16.msra.mxu0 %v288
  %361 = vmatprep.subr.bf16.mxu0 0
  %362 = vmatpush1.bf16.msra.mxu0 %v289
  %363 = vmatprep.subr.bf16.mxu0 0
  %364 = vmatpush1.bf16.msra.mxu0 %v290
  %365 = vmatprep.subr.bf16.mxu0 0
  %366 = vmatpush1.bf16.msra.mxu0 %v291
  %367 = vmatprep.subr.bf16.mxu0 0
  %368 = vmatpush1.bf16.msra.mxu0 %v292
  %369 = vmatprep.subr.bf16.mxu0 0
  %370 = vmatpush1.bf16.msra.mxu0 %v293
  %371 = vmatprep.mubr.bf16.mxu0 %v167
  %372 = vmatmul.mubr.bf16.gmra.mrb[0].mxu0 %v166
  %v373 = vpop.f32.mrb[0].mxu0
  %v374 = vadd.f32 0.0, %v373
  %v375 = vpop.f32.mrb[0].mxu0
  %v376 = vpop.f32.mrb[0].mxu0
  %v377 = vadd.f32 0.0, %v376
  %v378 = vpop.f32.mrb[0].mxu0
  %379 = vmatprep.mubr.bf16.mxu0 %v170
  %380 = vmatmul.mubr.bf16.gmra.mrb[0].mxu0 %v169
  %v381 = vpop.f32.mrb[0].mxu0
  %v382 = vadd.f32 0.0, %v381
  %v383 = vpop.f32.mrb[0].mxu0
  %v384 = vpop.f32.mrb[0].mxu0
  %v385 = vadd.f32 0.0, %v384
  %v386 = vpop.f32.mrb[0].mxu0
  %387 = vmatprep.mubr.bf16.mxu0 %v173
  %388 = vmatmul.mubr.bf16.gmra.mrb[0].mxu0 %v172
  %v389 = vpop.f32.mrb[0].mxu0
  %v390 = vadd.f32 0.0, %v389
  %v391 = vpop.f32.mrb[0].mxu0
  %v392 = vpop.f32.mrb[0].mxu0
  %v393 = vadd.f32 0.0, %v392
  %v394 = vpop.f32.mrb[0].mxu0
  %395 = vmatprep.mubr.bf16.mxu0 %v176
  %396 = vmatmul.mubr.bf16.gmra.mrb[0].mxu0 %v175
  %v397 = vpop.f32.mrb[0].mxu0
  %v398 = vadd.f32 0.0, %v397
  %v399 = vpop.f32.mrb[0].mxu0
  %v400 = vpop.f32.mrb[0].mxu0
  %v401 = vadd.f32 0.0, %v400
  %v402 = vpop.f32.mrb[0].mxu0
  %403 = vmatprep.mubr.bf16.mxu0 %v179
  %404 = vmatmul.mubr.bf16.gmra.mrb[0].mxu0 %v178
  %v405 = vpop.f32.mrb[0].mxu0
  %v406 = vadd.f32 0.0, %v405
  %v407 = vpop.f32.mrb[0].mxu0
  %v408 = vpop.f32.mrb[0].mxu0
  %v409 = vadd.f32 0.0, %v408
  %v410 = vpop.f32.mrb[0].mxu0
  %411 = vmatprep.mubr.bf16.mxu0 %v182
  %412 = vmatmul.mubr.bf16.gmra.mrb[0].mxu0 %v181
  %v413 = vpop.f32.mrb[0].mxu0
  %v414 = vadd.f32 0.0, %v413
  %v415 = vpop.f32.mrb[0].mxu0
  %v416 = vpop.f32.mrb[0].mxu0
  %v417 = vadd.f32 0.0, %v416
  %v418 = vpop.f32.mrb[0].mxu0
  %419 = vmatprep.mubr.bf16.mxu0 %v185
  %420 = vmatmul.mubr.bf16.gmra.mrb[0].mxu0 %v184
  %v421 = vpop.f32.mrb[0].mxu0
  %v422 = vadd.f32 0.0, %v421
  %v423 = vpop.f32.mrb[0].mxu0
  %v424 = vpop.f32.mrb[0].mxu0
  %v425 = vadd.f32 0.0, %v424
  %v426 = vpop.f32.mrb[0].mxu0
  %427 = vmatprep.mubr.bf16.mxu0 %v188
  %428 = vmatmul.mubr.bf16.gmra.mrb[0].mxu0 %v187
  %v429 = vpop.f32.mrb[0].mxu0
  %v430 = vadd.f32 0.0, %v429
  %v431 = vpop.f32.mrb[0].mxu0
  %v432 = vpop.f32.mrb[0].mxu0
  %v433 = vadd.f32 0.0, %v432
  %v434 = vpop.f32.mrb[0].mxu0
  %435 = vdwg.mxu0
  %436 = vmatprep.subr.bf16.mxu0 0
  %437 = vmatpush1.bf16.msra.mxu0 %v294
  %438 = vmatprep.subr.bf16.mxu0 0
  %439 = vmatpush1.bf16.msra.mxu0 %v295
  %440 = vmatprep.subr.bf16.mxu0 0
  %441 = vmatpush1.bf16.msra.mxu0 0
  %442 = vmatprep.subr.bf16.mxu0 0
  %443 = vmatpush1.bf16.msra.mxu0 0
  %444 = vmatprep.subr.bf16.mxu0 0
  %445 = vmatpush1.bf16.msra.mxu0 0
  %446 = vmatprep.subr.bf16.mxu0 0
  %447 = vmatpush1.bf16.msra.mxu0 0
  %448 = vmatprep.subr.bf16.mxu0 0
  %449 = vmatpush1.bf16.msra.mxu0 0
  %450 = vmatprep.subr.bf16.mxu0 0
  %451 = vmatpush1.bf16.msra.mxu0 0
  %452 = vmatprep.subr.bf16.mxu0 0
  %453 = vmatpush1.bf16.msra.mxu0 0
  %454 = vmatprep.subr.bf16.mxu0 0
  %455 = vmatpush1.bf16.msra.mxu0 0
  %456 = vmatprep.subr.bf16.mxu0 0
  %457 = vmatpush1.bf16.msra.mxu0 0
  %458 = vmatprep.subr.bf16.mxu0 0
  %459 = vmatpush1.bf16.msra.mxu0 0
  %460 = vmatprep.subr.bf16.mxu0 0
  %461 = vmatpush1.bf16.msra.mxu0 0
  %462 = vmatprep.subr.bf16.mxu0 0
  %463 = vmatpush1.bf16.msra.mxu0 0
  %464 = vmatprep.subr.bf16.mxu0 0
  %465 = vmatpush1.bf16.msra.mxu0 0
  %466 = vmatprep.subr.bf16.mxu0 0
  %467 = vmatpush1.bf16.msra.mxu0 0
  %468 = vmatprep.mubr.bf16.mxu0 0
  %469 = vmatmul.mubr.bf16.gmra.mrb[0].mxu0 %v316
  %v470 = vpop.f32.mrb[0].mxu0
  %v471 = vadd.f32 %v374, %v470
  %v472 = vpop.f32.mrb[0].mxu0
  %v473 = vpop.f32.mrb[0].mxu0
  %v474 = vadd.f32 %v377, %v473
  %v475 = vpop.f32.mrb[0].mxu0
  %476 = vmatprep.mubr.bf16.mxu0 0
  %477 = vmatmul.mubr.bf16.gmra.mrb[0].mxu0 %v319
  %v478 = vpop.f32.mrb[0].mxu0
  %v479 = vadd.f32 %v382, %v478
  %v480 = vpop.f32.mrb[0].mxu0
  %v481 = vpop.f32.mrb[0].mxu0
  %v482 = vadd.f32 %v385, %v481
  %v483 = vpop.f32.mrb[0].mxu0
  %484 = vmatprep.mubr.bf16.mxu0 0
  %485 = vmatmul.mubr.bf16.gmra.mrb[0].mxu0 %v322
  %v486 = vpop.f32.mrb[0].mxu0
  %v487 = vadd.f32 %v390, %v486
  %v488 = vpop.f32.mrb[0].mxu0
  %v489 = vpop.f32.mrb[0].mxu0
  %v490 = vadd.f32 %v393, %v489
  %v491 = vpop.f32.mrb[0].mxu0
  %492 = vmatprep.mubr.bf16.mxu0 0
  %493 = vmatmul.mubr.bf16.gmra.mrb[0].mxu0 %v325
  %v494 = vpop.f32.mrb[0].mxu0
  %v495 = vadd.f32 %v398, %v494
  %v496 = vpop.f32.mrb[0].mxu0
  %v497 = vpop.f32.mrb[0].mxu0
  %v498 = vadd.f32 %v401, %v497
  %v499 = vpop.f32.mrb[0].mxu0
  %500 = vmatprep.mubr.bf16.mxu0 0
  %501 = vmatmul.mubr.bf16.gmra.mrb[0].mxu0 %v328
  %v502 = vpop.f32.mrb[0].mxu0
  %v503 = vadd.f32 %v406, %v502
  %v504 = vpop.f32.mrb[0].mxu0
  %v505 = vpop.f32.mrb[0].mxu0
  %v506 = vadd.f32 %v409, %v505
  %v507 = vpop.f32.mrb[0].mxu0
  %508 = vmatprep.mubr.bf16.mxu0 0
  %509 = vmatmul.mubr.bf16.gmra.mrb[0].mxu0 %v331
  %v510 = vpop.f32.mrb[0].mxu0
  %v511 = vadd.f32 %v414, %v510
  %v512 = vpop.f32.mrb[0].mxu0
  %v513 = vpop.f32.mrb[0].mxu0
  %v514 = vadd.f32 %v417, %v513
  %v515 = vpop.f32.mrb[0].mxu0
  %516 = vmatprep.mubr.bf16.mxu0 0
  %517 = vmatmul.mubr.bf16.gmra.mrb[0].mxu0 %v334
  %v518 = vpop.f32.mrb[0].mxu0
  %v519 = vadd.f32 %v422, %v518
  %v520 = vpop.f32.mrb[0].mxu0
  %v521 = vpop.f32.mrb[0].mxu0
  %v522 = vadd.f32 %v425, %v521
  %v523 = vpop.f32.mrb[0].mxu0
  %524 = vmatprep.mubr.bf16.mxu0 0
  %525 = vmatmul.mubr.bf16.gmra.mrb[0].mxu0 %v337
  %v526 = vpop.f32.mrb[0].mxu0
  %v527 = vadd.f32 %v430, %v526
  %v528 = vpop.f32.mrb[0].mxu0
  %v529 = vpop.f32.mrb[0].mxu0
  %v530 = vadd.f32 %v433, %v529
  %v531 = vpop.f32.mrb[0].mxu0
  %532 = vdwg.mxu0
  %v533 = vld [vmem:[%s2] sm:$0x1]
  %v535 = vlaneseq
  %v536 = vshrl.u32 %v535, 7
  %v537 = vsub.s32 0, %v536
  %v538 = vrot.slane %v533, %v537
  %v540 = vmul.f32 %v471, %v538
  %v541 = vmul.f32 %v474, %v538
  %v542 = vmul.f32 %v479, %v538
  %v543 = vmul.f32 %v482, %v538
  %v544 = vmul.f32 %v487, %v538
  %v545 = vmul.f32 %v490, %v538
  %v546 = vmul.f32 %v495, %v538
  %v547 = vmul.f32 %v498, %v538
  %v548 = vmul.f32 %v503, %v538
  %v549 = vmul.f32 %v506, %v538
  %v550 = vmul.f32 %v511, %v538
  %v551 = vmul.f32 %v514, %v538
  %v552 = vmul.f32 %v519, %v538
  %v553 = vmul.f32 %v522, %v538
  %v554 = vmul.f32 %v527, %v538
  %v555 = vmul.f32 %v530, %v538
  %v556 = vld [vmem:[%s3] sm:$0x1]
  %v558 = vlaneseq
  %v559 = vshrl.u32 %v558, 7
  %v560 = vsub.s32 0, %v559
  %v561 = vrot.slane %v556, %v560
  %v563 = vadd.f32 %v540, %v561
  %v564 = vadd.f32 %v541, %v561
  %v565 = vadd.f32 %v542, %v561
  %v566 = vadd.f32 %v543, %v561
  %v567 = vadd.f32 %v544, %v561
  %v568 = vadd.f32 %v545, %v561
  %v569 = vadd.f32 %v546, %v561
  %v570 = vadd.f32 %v547, %v561
  %v571 = vadd.f32 %v548, %v561
  %v572 = vadd.f32 %v549, %v561
  %v573 = vadd.f32 %v550, %v561
  %v574 = vadd.f32 %v551, %v561
  %v575 = vadd.f32 %v552, %v561
  %v576 = vadd.f32 %v553, %v561
  %v577 = vadd.f32 %v554, %v561
  %v578 = vadd.f32 %v555, %v561
  %v579 = vmax.f32 %v563, 0.0
  %v580 = vmax.f32 %v564, 0.0
  %v581 = vmax.f32 %v565, 0.0
  %v582 = vmax.f32 %v566, 0.0
  %v583 = vmax.f32 %v567, 0.0
  %v584 = vmax.f32 %v568, 0.0
  %v585 = vmax.f32 %v569, 0.0
  %v586 = vmax.f32 %v570, 0.0
  %v587 = vmax.f32 %v571, 0.0
  %v588 = vmax.f32 %v572, 0.0
  %v589 = vmax.f32 %v573, 0.0
  %v590 = vmax.f32 %v574, 0.0
  %v591 = vmax.f32 %v575, 0.0
  %v592 = vmax.f32 %v576, 0.0
  %v593 = vmax.f32 %v577, 0.0
  %v594 = vmax.f32 %v578, 0.0
  %v595 = vpack.c.bf16 %v580, %v579
  %v596 = vpack.c.bf16 %v582, %v581
  %v597 = vpack.c.bf16 %v584, %v583
  %v598 = vpack.c.bf16 %v586, %v585
  %v599 = vpack.c.bf16 %v588, %v587
  %v600 = vpack.c.bf16 %v590, %v589
  %v601 = vpack.c.bf16 %v592, %v591
  %v602 = vpack.c.bf16 %v594, %v593
  %v611 = vunpack.c.l.b16 %v595
  %v612 = vunpack.c.h.b16 %v595
  %v613 = vunpack.c.l.b16 %v596
  %v614 = vunpack.c.h.b16 %v596
  %v615 = vunpack.c.l.b16 %v597
  %v616 = vunpack.c.h.b16 %v597
  %v617 = vunpack.c.l.b16 %v598
  %v618 = vunpack.c.h.b16 %v598
  %v619 = vunpack.c.l.b16 %v599
  %v620 = vunpack.c.h.b16 %v599
  %v621 = vunpack.c.l.b16 %v600
  %v622 = vunpack.c.h.b16 %v600
  %v623 = vunpack.c.l.b16 %v601
  %v624 = vunpack.c.h.b16 %v601
  %v625 = vunpack.c.l.b16 %v602
  %v626 = vunpack.c.h.b16 %v602
  %v627 = vpack.c.b16 %v611, %v611
  %v628 = vpack.c.b16 %v612, %v612
  %v629 = vpack.c.b16 %v613, %v613
  %v630 = vpack.c.b16 %v614, %v614
  %v631 = vpack.c.b16 %v615, %v615
  %v632 = vpack.c.b16 %v616, %v616
  %v633 = vpack.c.b16 %v617, %v617
  %v634 = vpack.c.b16 %v618, %v618
  %v635 = vpack.c.b16 %v619, %v619
  %v636 = vpack.c.b16 %v620, %v620
  %v637 = vpack.c.b16 %v621, %v621
  %v638 = vpack.c.b16 %v622, %v622
  %v639 = vpack.c.b16 %v623, %v623
  %v640 = vpack.c.b16 %v624, %v624
  %v641 = vpack.c.b16 %v625, %v625
  %v642 = vpack.c.b16 %v626, %v626
  %vm659 = vcmask 257024
  %660 = vst.msk [vmem:[%s4] sm:$0xf] %vm659, %v627
  %661 = vst.msk [vmem:[%s4 + $0x4] sm:$0xf] %vm659, %v628
  %662 = vst.msk [vmem:[%s4 + $0x8] sm:$0xf] %vm659, %v629
  %663 = vst.msk [vmem:[%s4 + $0xc] sm:$0xf] %vm659, %v630
  %664 = vst.msk [vmem:[%s4 + $0x10] sm:$0xf] %vm659, %v631
  %665 = vst.msk [vmem:[%s4 + $0x14] sm:$0xf] %vm659, %v632
  %666 = vst.msk [vmem:[%s4 + $0x18] sm:$0xf] %vm659, %v633
  %667 = vst.msk [vmem:[%s4 + $0x1c] sm:$0xf] %vm659, %v634
  %668 = vst.msk [vmem:[%s4 + $0x20] sm:$0xf] %vm659, %v635
  %669 = vst.msk [vmem:[%s4 + $0x24] sm:$0xf] %vm659, %v636
  %670 = vst.msk [vmem:[%s4 + $0x28] sm:$0xf] %vm659, %v637
  %671 = vst.msk [vmem:[%s4 + $0x2c] sm:$0xf] %vm659, %v638
  %672 = vst.msk [vmem:[%s4 + $0x30] sm:$0xf] %vm659, %v639
  %673 = vst.msk [vmem:[%s4 + $0x34] sm:$0xf] %vm659, %v640
  %674 = vst.msk [vmem:[%s4 + $0x38] sm:$0xf] %vm659, %v641
  %675 = vst.msk [vmem:[%s4 + $0x3c] sm:$0xf] %vm659, %v642
  // Predicated region
  $region18: #{gan_critic_forward.30} parent=0 // pred_check
    _
  $region19: #{gan_critic_forward.30} parent=0 // pred_check_branch
    %677 = sbr.rel (0) target = $region21
  $region20: #{gan_critic_forward.30} parent=0 // pred_region
    _
  $region21: #{gan_critic_forward.30} parent=0 // pred_fallthru
    _
  // Predicated region
  $region22: #{gan_critic_forward.30} parent=0 // pred_check
    _
  $region23: #{gan_critic_forward.30} parent=0 // pred_check_branch
    %679 = sbr.rel (0) target = $region25
  $region24: #{gan_critic_forward.30} parent=0 // pred_region
    _
  $region25: #{gan_critic_forward.30} parent=0 // pred_fallthru
    _

// kernel: gan_critic_forward.31
$region0: #{gan_critic_forward.31}
  #allocation0 [shape = 'u32[]', space=smem, size = 0x4, offset = 0x4, fixed_abs, tag = 'smem constant byte address 0x4 - core index']
  #allocation1 [shape = 'u32[144,128]{1,0:T(1,128)}', space=vmem, size = 0x12000, scoped, tag = 'internal scratch']
  %s0 = inlined_call_operand.vmem [shape: bf16[128,32], index: 0, kind: input, shape index: {}]
  %s1 = inlined_call_operand.vmem [shape: bf16[32,32], index: 1, kind: input, shape index: {}]
  %s2 = inlined_call_operand.vmem [shape: f32[1,32], index: 2, kind: input, shape index: {}]
  %s3 = inlined_call_operand.vmem [shape: f32[1,32], index: 3, kind: input, shape index: {}]
  %s4 = inlined_call_operand.vmem [shape: bf16[128,32], index: 4, kind: output, shape index: {}]
  %s5 = sld [smem:[#allocation0]]
  $region26: #{gan_critic_forward.31} parent=0
    _
  %s7 = ssub.s32 1, %s5
  %s8 = scalar_select 0, %s7, %s5
  // Predicated region
  $region2: #{gan_critic_forward.31} parent=0 // pred_check
    _
  $region3: #{gan_critic_forward.31} parent=0 // pred_check_branch
    %10 = sbr.rel (0) target = $region5
  $region4: #{gan_critic_forward.31} parent=0 // pred_region
    _
  $region5: #{gan_critic_forward.31} parent=0 // pred_fallthru
    _
  // Predicated region
  $region6: #{gan_critic_forward.31} parent=0 // pred_check
    _
  $region7: #{gan_critic_forward.31} parent=0 // pred_check_branch
    %12 = sbr.rel (0) target = $region9
  $region8: #{gan_critic_forward.31} parent=0 // pred_region
    _
  $region9: #{gan_critic_forward.31} parent=0 // pred_fallthru
    _
  // Predicated region
  $region10: #{gan_critic_forward.31} parent=0 // pred_check
    _
  $region11: #{gan_critic_forward.31} parent=0 // pred_check_branch
    %14 = sbr.rel (0) target = $region13
  $region12: #{gan_critic_forward.31} parent=0 // pred_region
    _
  $region13: #{gan_critic_forward.31} parent=0 // pred_fallthru
    _
  // Predicated region
  $region14: #{gan_critic_forward.31} parent=0 // pred_check
    _
  $region15: #{gan_critic_forward.31} parent=0 // pred_check_branch
    %16 = sbr.rel (0) target = $region17
  $region16: #{gan_critic_forward.31} parent=0 // pred_region
    _
  $region17: #{gan_critic_forward.31} parent=0 // pred_fallthru
    _
  %v18 = vld [vmem:[%s0] sm:$0xf]
  %v19 = vld [vmem:[%s0 + $0x4] sm:$0xf]
  %v20 = vld [vmem:[%s0 + $0x8] sm:$0xf]
  %v21 = vld [vmem:[%s0 + $0xc] sm:$0xf]
  %v22 = vld [vmem:[%s0 + $0x10] sm:$0xf]
  %v23 = vld [vmem:[%s0 + $0x14] sm:$0xf]
  %v24 = vld [vmem:[%s0 + $0x18] sm:$0xf]
  %v25 = vld [vmem:[%s0 + $0x1c] sm:$0xf]
  %v26 = vld [vmem:[%s0 + $0x20] sm:$0xf]
  %v27 = vld [vmem:[%s0 + $0x24] sm:$0xf]
  %v28 = vld [vmem:[%s0 + $0x28] sm:$0xf]
  %v29 = vld [vmem:[%s0 + $0x2c] sm:$0xf]
  %v30 = vld [vmem:[%s0 + $0x30] sm:$0xf]
  %v31 = vld [vmem:[%s0 + $0x34] sm:$0xf]
  %v32 = vld [vmem:[%s0 + $0x38] sm:$0xf]
  %v33 = vld [vmem:[%s0 + $0x3c] sm:$0xf]
  %v34 = vld [vmem:[%s1] sm:$0xf]
  %v35 = vld [vmem:[%s1 + $0x4] sm:$0xf]
  %v36 = vld [vmem:[%s1 + $0x8] sm:$0xf]
  %v37 = vld [vmem:[%s1 + $0xc] sm:$0xf]
  %v54 = vunpack.c.l.b16 %v18
  %v55 = vunpack.c.l.b16 %v19
  %v56 = vunpack.c.l.b16 %v20
  %v57 = vunpack.c.l.b16 %v21
  %v58 = vunpack.c.l.b16 %v22
  %v59 = vunpack.c.l.b16 %v23
  %v60 = vunpack.c.l.b16 %v24
  %v61 = vunpack.c.l.b16 %v25
  %v62 = vunpack.c.l.b16 %v26
  %v63 = vunpack.c.l.b16 %v27
  %v64 = vunpack.c.l.b16 %v28
  %v65 = vunpack.c.l.b16 %v29
  %v66 = vunpack.c.l.b16 %v30
  %v67 = vunpack.c.l.b16 %v31
  %v68 = vunpack.c.l.b16 %v32
  %v69 = vunpack.c.l.b16 %v33
  %v70 = vpack.c.b16 %v55, %v54
  %v71 = vpack.c.b16 %v57, %v56
  %v72 = vpack.c.b16 %v59, %v58
  %v73 = vpack.c.b16 %v61, %v60
  %v74 = vpack.c.b16 %v63, %v62
  %v75 = vpack.c.b16 %v65, %v64
  %v76 = vpack.c.b16 %v67, %v66
  %v77 = vpack.c.b16 %v69, %v68
  %v82 = vunpack.c.l.b16 %v34
  %v83 = vunpack.c.l.b16 %v35
  %v84 = vunpack.c.l.b16 %v36
  %v85 = vunpack.c.l.b16 %v37
  %v86 = vpack.c.b16 %v83, %v82
  %v87 = vpack.c.b16 %v85, %v84
  %vm90 = vcmask 261120
  %v92 = vsel %vm90, %v70, 0
  %v95 = vsel %vm90, %v71, 0
  %v98 = vsel %vm90, %v72, 0
  %v101 = vsel %vm90, %v73, 0
  %v104 = vsel %vm90, %v74, 0
  %v107 = vsel %vm90, %v75, 0
  %v110 = vsel %vm90, %v76, 0
  %v113 = vsel %vm90, %v77, 0
  %115 = vmatprep.subr.bf16.mxu0 0
  %116 = vmatpush1.bf16.msra.mxu0 %v86
  %117 = vmatprep.subr.bf16.mxu0 0
  %118 = vmatpush1.bf16.msra.mxu0 %v87
  %119 = vmatprep.subr.bf16.mxu0 0
  %120 = vmatpush1.bf16.msra.mxu0 0
  %121 = vmatprep.subr.bf16.mxu0 0
  %122 = vmatpush1.bf16.msra.mxu0 0
  %123 = vmatprep.subr.bf16.mxu0 0
  %124 = vmatpush1.bf16.msra.mxu0 0
  %125 = vmatprep.subr.bf16.mxu0 0
  %126 = vmatpush1.bf16.msra.mxu0 0
  %127 = vmatprep.subr.bf16.mxu0 0
  %128 = vmatpush1.bf16.msra.mxu0 0
  %129 = vmatprep.subr.bf16.mxu0 0
  %130 = vmatpush1.bf16.msra.mxu0 0
  %131 = vmatprep.subr.bf16.mxu0 0
  %132 = vmatpush1.bf16.msra.mxu0 0
  %133 = vmatprep.subr.bf16.mxu0 0
  %134 = vmatpush1.bf16.msra.mxu0 0
  %135 = vmatprep.subr.bf16.mxu0 0
  %136 = vmatpush1.bf16.msra.mxu0 0
  %137 = vmatprep.subr.bf16.mxu0 0
  %138 = vmatpush1.bf16.msra.mxu0 0
  %139 = vmatprep.subr.bf16.mxu0 0
  %140 = vmatpush1.bf16.msra.mxu0 0
  %141 = vmatprep.subr.bf16.mxu0 0
  %142 = vmatpush1.bf16.msra.mxu0 0
  %143 = vmatprep.subr.bf16.mxu0 0
  %144 = vmatpush1.bf16.msra.mxu0 0
  %145 = vmatprep.subr.bf16.mxu0 0
  %146 = vmatpush1.bf16.msra.mxu0 0
  %147 = vmatprep.mubr.bf16.mxu0 0
  %148 = vmatmul.mubr.bf16.gmra.mrb[0].mxu0 %v92
  %v149 = vpop.f32.mrb[0].mxu0
  %v150 = vadd.f32 0.0, %v149
  %v151 = vpop.f32.mrb[0].mxu0
  %v152 = vpop.f32.mrb[0].mxu0
  %v153 = vadd.f32 0.0, %v152
  %v154 = vpop.f32.mrb[0].mxu0
  %155 = vmatprep.mubr.bf16.mxu0 0
  %156 = vmatmul.mubr.bf16.gmra.mrb[0].mxu0 %v95
  %v157 = vpop.f32.mrb[0].mxu0
  %v158 = vadd.f32 0.0, %v157
  %v159 = vpop.f32.mrb[0].mxu0
  %v160 = vpop.f32.mrb[0].mxu0
  %v161 = vadd.f32 0.0, %v160
  %v162 = vpop.f32.mrb[0].mxu0
  %163 = vmatprep.mubr.bf16.mxu0 0
  %164 = vmatmul.mubr.bf16.gmra.mrb[0].mxu0 %v98
  %v165 = vpop.f32.mrb[0].mxu0
  %v166 = vadd.f32 0.0, %v165
  %v167 = vpop.f32.mrb[0].mxu0
  %v168 = vpop.f32.mrb[0].mxu0
  %v169 = vadd.f32 0.0, %v168
  %v170 = vpop.f32.mrb[0].mxu0
  %171 = vmatprep.mubr.bf16.mxu0 0
  %172 = vmatmul.mubr.bf16.gmra.mrb[0].mxu0 %v101
  %v173 = vpop.f32.mrb[0].mxu0
  %v174 = vadd.f32 0.0, %v173
  %v175 = vpop.f32.mrb[0].mxu0
  %v176 = vpop.f32.mrb[0].mxu0
  %v177 = vadd.f32 0.0, %v176
  %v178 = vpop.f32.mrb[0].mxu0
  %179 = vmatprep.mubr.bf16.mxu0 0
  %180 = vmatmul.mubr.bf16.gmra.mrb[0].mxu0 %v104
  %v181 = vpop.f32.mrb[0].mxu0
  %v182 = vadd.f32 0.0, %v181
  %v183 = vpop.f32.mrb[0].mxu0
  %v184 = vpop.f32.mrb[0].mxu0
  %v185 = vadd.f32 0.0, %v184
  %v186 = vpop.f32.mrb[0].mxu0
  %187 = vmatprep.mubr.bf16.mxu0 0
  %188 = vmatmul.mubr.bf16.gmra.mrb[0].mxu0 %v107
  %v189 = vpop.f32.mrb[0].mxu0
  %v190 = vadd.f32 0.0, %v189
  %v191 = vpop.f32.mrb[0].mxu0
  %v192 = vpop.f32.mrb[0].mxu0
  %v193 = vadd.f32 0.0, %v192
  %v194 = vpop.f32.mrb[0].mxu0
  %195 = vmatprep.mubr.bf16.mxu0 0
  %196 = vmatmul.mubr.bf16.gmra.mrb[0].mxu0 %v110
  %v197 = vpop.f32.mrb[0].mxu0
  %v198 = vadd.f32 0.0, %v197
  %v199 = vpop.f32.mrb[0].mxu0
  %v200 = vpop.f32.mrb[0].mxu0
  %v201 = vadd.f32 0.0, %v200
  %v202 = vpop.f32.mrb[0].mxu0
  %203 = vmatprep.mubr.bf16.mxu0 0
  %204 = vmatmul.mubr.bf16.gmra.mrb[0].mxu0 %v113
  %v205 = vpop.f32.mrb[0].mxu0
  %v206 = vadd.f32 0.0, %v205
  %v207 = vpop.f32.mrb[0].mxu0
  %v208 = vpop.f32.mrb[0].mxu0
  %v209 = vadd.f32 0.0, %v208
  %v210 = vpop.f32.mrb[0].mxu0
  %211 = vdwg.mxu0
  %v212 = vld [vmem:[%s2] sm:$0x1]
  %v214 = vlaneseq
  %v215 = vshrl.u32 %v214, 7
  %v216 = vsub.s32 0, %v215
  %v217 = vrot.slane %v212, %v216
  %v219 = vmul.f32 %v150, %v217
  %v220 = vmul.f32 %v153, %v217
  %v221 = vmul.f32 %v158, %v217
  %v222 = vmul.f32 %v161, %v217
  %v223 = vmul.f32 %v166, %v217
  %v224 = vmul.f32 %v169, %v217
  %v225 = vmul.f32 %v174, %v217
  %v226 = vmul.f32 %v177, %v217
  %v227 = vmul.f32 %v182, %v217
  %v228 = vmul.f32 %v185, %v217
  %v229 = vmul.f32 %v190, %v217
  %v230 = vmul.f32 %v193, %v217
  %v231 = vmul.f32 %v198, %v217
  %v232 = vmul.f32 %v201, %v217
  %v233 = vmul.f32 %v206, %v217
  %v234 = vmul.f32 %v209, %v217
  %v235 = vld [vmem:[%s3] sm:$0x1]
  %v237 = vlaneseq
  %v238 = vshrl.u32 %v237, 7
  %v239 = vsub.s32 0, %v238
  %v240 = vrot.slane %v235, %v239
  %v242 = vadd.f32 %v219, %v240
  %v243 = vadd.f32 %v220, %v240
  %v244 = vadd.f32 %v221, %v240
  %v245 = vadd.f32 %v222, %v240
  %v246 = vadd.f32 %v223, %v240
  %v247 = vadd.f32 %v224, %v240
  %v248 = vadd.f32 %v225, %v240
  %v249 = vadd.f32 %v226, %v240
  %v250 = vadd.f32 %v227, %v240
  %v251 = vadd.f32 %v228, %v240
  %v252 = vadd.f32 %v229, %v240
  %v253 = vadd.f32 %v230, %v240
  %v254 = vadd.f32 %v231, %v240
  %v255 = vadd.f32 %v232, %v240
  %v256 = vadd.f32 %v233, %v240
  %v257 = vadd.f32 %v234, %v240
  %v258 = vpack.c.bf16 %v243, %v242
  %v259 = vpack.c.bf16 %v245, %v244
  %v260 = vpack.c.bf16 %v247, %v246
  %v261 = vpack.c.bf16 %v249, %v248
  %v262 = vpack.c.bf16 %v251, %v250
  %v263 = vpack.c.bf16 %v253, %v252
  %v264 = vpack.c.bf16 %v255, %v254
  %v265 = vpack.c.bf16 %v257, %v256
  %v274 = vunpack.c.l.b16 %v258
  %v275 = vunpack.c.h.b16 %v258
  %v276 = vunpack.c.l.b16 %v259
  %v277 = vunpack.c.h.b16 %v259
  %v278 = vunpack.c.l.b16 %v260
  %v279 = vunpack.c.h.b16 %v260
  %v280 = vunpack.c.l.b16 %v261
  %v281 = vunpack.c.h.b16 %v261
  %v282 = vunpack.c.l.b16 %v262
  %v283 = vunpack.c.h.b16 %v262
  %v284 = vunpack.c.l.b16 %v263
  %v285 = vunpack.c.h.b16 %v263
  %v286 = vunpack.c.l.b16 %v264
  %v287 = vunpack.c.h.b16 %v264
  %v288 = vunpack.c.l.b16 %v265
  %v289 = vunpack.c.h.b16 %v265
  %v290 = vpack.c.b16 %v274, %v274
  %v291 = vpack.c.b16 %v275, %v275
  %v292 = vpack.c.b16 %v276, %v276
  %v293 = vpack.c.b16 %v277, %v277
  %v294 = vpack.c.b16 %v278, %v278
  %v295 = vpack.c.b16 %v279, %v279
  %v296 = vpack.c.b16 %v280, %v280
  %v297 = vpack.c.b16 %v281, %v281
  %v298 = vpack.c.b16 %v282, %v282
  %v299 = vpack.c.b16 %v283, %v283
  %v300 = vpack.c.b16 %v284, %v284
  %v301 = vpack.c.b16 %v285, %v285
  %v302 = vpack.c.b16 %v286, %v286
  %v303 = vpack.c.b16 %v287, %v287
  %v304 = vpack.c.b16 %v288, %v288
  %v305 = vpack.c.b16 %v289, %v289
  %vm322 = vcmask 257024
  %323 = vst.msk [vmem:[%s4] sm:$0xf] %vm322, %v290
  %324 = vst.msk [vmem:[%s4 + $0x4] sm:$0xf] %vm322, %v291
  %325 = vst.msk [vmem:[%s4 + $0x8] sm:$0xf] %vm322, %v292
  %326 = vst.msk [vmem:[%s4 + $0xc] sm:$0xf] %vm322, %v293
  %327 = vst.msk [vmem:[%s4 + $0x10] sm:$0xf] %vm322, %v294
  %328 = vst.msk [vmem:[%s4 + $0x14] sm:$0xf] %vm322, %v295
  %329 = vst.msk [vmem:[%s4 + $0x18] sm:$0xf] %vm322, %v296
  %330 = vst.msk [vmem:[%s4 + $0x1c] sm:$0xf] %vm322, %v297
  %331 = vst.msk [vmem:[%s4 + $0x20] sm:$0xf] %vm322, %v298
  %332 = vst.msk [vmem:[%s4 + $0x24] sm:$0xf] %vm322, %v299
  %333 = vst.msk [vmem:[%s4 + $0x28] sm:$0xf] %vm322, %v300
  %334 = vst.msk [vmem:[%s4 + $0x2c] sm:$0xf] %vm322, %v301
  %335 = vst.msk [vmem:[%s4 + $0x30] sm:$0xf] %vm322, %v302
  %336 = vst.msk [vmem:[%s4 + $0x34] sm:$0xf] %vm322, %v303
  %337 = vst.msk [vmem:[%s4 + $0x38] sm:$0xf] %vm322, %v304
  %338 = vst.msk [vmem:[%s4 + $0x3c] sm:$0xf] %vm322, %v305
  // Predicated region
  $region18: #{gan_critic_forward.31} parent=0 // pred_check
    _
  $region19: #{gan_critic_forward.31} parent=0 // pred_check_branch
    %340 = sbr.rel (0) target = $region21
  $region20: #{gan_critic_forward.31} parent=0 // pred_region
    _
  $region21: #{gan_critic_forward.31} parent=0 // pred_fallthru
    _
  // Predicated region
  $region22: #{gan_critic_forward.31} parent=0 // pred_check
    _
  $region23: #{gan_critic_forward.31} parent=0 // pred_check_branch
    %342 = sbr.rel (0) target = $region25
  $region24: #{gan_critic_forward.31} parent=0 // pred_region
    _
  $region25: #{gan_critic_forward.31} parent=0 // pred_fallthru
    _

// kernel: gan_critic_forward.32
$region0: #{gan_critic_forward.32}
  #allocation0 [shape = 'u32[]', space=smem, size = 0x4, offset = 0x4, fixed_abs, tag = 'smem constant byte address 0x4 - core index']
  #allocation1 [shape = 'u32[144,128]{1,0:T(1,128)}', space=vmem, size = 0x12000, scoped, tag = 'internal scratch']
  %s0 = inlined_call_operand.vmem [shape: bf16[128,288], index: 0, kind: input, shape index: {}]
  %s1 = inlined_call_operand.vmem [shape: bf16[288,32], index: 1, kind: input, shape index: {}]
  %s2 = inlined_call_operand.vmem [shape: f32[1,32], index: 2, kind: input, shape index: {}]
  %s3 = inlined_call_operand.vmem [shape: f32[1,32], index: 3, kind: input, shape index: {}]
  %s4 = inlined_call_operand.vmem [shape: bf16[128,32], index: 4, kind: input, shape index: {}]
  %s5 = inlined_call_operand.vmem [shape: bf16[128,32], index: 5, kind: output, shape index: {}]
  %s6 = sld [smem:[#allocation0]]
  $region30: #{gan_critic_forward.32} parent=0
    _
  %s8 = ssub.s32 1, %s6
  %s9 = scalar_select 0, %s8, %s6
  // Predicated region
  $region2: #{gan_critic_forward.32} parent=0 // pred_check
    _
  $region3: #{gan_critic_forward.32} parent=0 // pred_check_branch
    %11 = sbr.rel (0) target = $region5
  $region4: #{gan_critic_forward.32} parent=0 // pred_region
    _
  $region5: #{gan_critic_forward.32} parent=0 // pred_fallthru
    _
  // Predicated region
  $region6: #{gan_critic_forward.32} parent=0 // pred_check
    _
  $region7: #{gan_critic_forward.32} parent=0 // pred_check_branch
    %13 = sbr.rel (0) target = $region9
  $region8: #{gan_critic_forward.32} parent=0 // pred_region
    _
  $region9: #{gan_critic_forward.32} parent=0 // pred_fallthru
    _
  // Predicated region
  $region10: #{gan_critic_forward.32} parent=0 // pred_check
    _
  $region11: #{gan_critic_forward.32} parent=0 // pred_check_branch
    %15 = sbr.rel (0) target = $region13
  $region12: #{gan_critic_forward.32} parent=0 // pred_region
    _
  $region13: #{gan_critic_forward.32} parent=0 // pred_fallthru
    _
  // Predicated region
  $region14: #{gan_critic_forward.32} parent=0 // pred_check
    _
  $region15: #{gan_critic_forward.32} parent=0 // pred_check_branch
    %17 = sbr.rel (0) target = $region17
  $region16: #{gan_critic_forward.32} parent=0 // pred_region
    _
  $region17: #{gan_critic_forward.32} parent=0 // pred_fallthru
    _
  // Predicated region
  $region18: #{gan_critic_forward.32} parent=0 // pred_check
    _
  $region19: #{gan_critic_forward.32} parent=0 // pred_check_branch
    %19 = sbr.rel (0) target = $region21
  $region20: #{gan_critic_forward.32} parent=0 // pred_region
    _
  $region21: #{gan_critic_forward.32} parent=0 // pred_fallthru
    _
  %v21 = vld [vmem:[%s0] sm:$0xff]
  %v22 = vld [vmem:[%s0 + $0x8] sm:$0xf]
  %v23 = vld [vmem:[%s0 + $0xc] sm:$0xff]
  %v24 = vld [vmem:[%s0 + $0x14] sm:$0xf]
  %v25 = vld [vmem:[%s0 + $0x18] sm:$0xff]
  %v26 = vld [vmem:[%s0 + $0x20] sm:$0xf]
  %v27 = vld [vmem:[%s0 + $0x24] sm:$0xff]
  %v28 = vld [vmem:[%s0 + $0x2c] sm:$0xf]
  %v29 = vld [vmem:[%s0 + $0x30] sm:$0xff]
  %v30 = vld [vmem:[%s0 + $0x38] sm:$0xf]
  %v31 = vld [vmem:[%s0 + $0x3c] sm:$0xff]
  %v32 = vld [vmem:[%s0 + $0x44] sm:$0xf]
  %v33 = vld [vmem:[%s0 + $0x48] sm:$0xff]
  %v34 = vld [vmem:[%s0 + $0x50] sm:$0xf]
  %v35 = vld [vmem:[%s0 + $0x54] sm:$0xff]
  %v36 = vld [vmem:[%s0 + $0x5c] sm:$0xf]
  %v37 = vld [vmem:[%s0 + $0x60] sm:$0xff]
  %v38 = vld [vmem:[%s0 + $0x68] sm:$0xf]
  %v39 = vld [vmem:[%s0 + $0x6c] sm:$0xff]
  %v40 = vld [vmem:[%s0 + $0x74] sm:$0xf]
  %v41 = vld [vmem:[%s0 + $0x78] sm:$0xff]
  %v42 = vld [vmem:[%s0 + $0x80] sm:$0xf]
  %v43 = vld [vmem:[%s0 + $0x84] sm:$0xff]
  %v44 = vld [vmem:[%s0 + $0x8c] sm:$0xf]
  %v45 = vld [vmem:[%s0 + $0x90] sm:$0xff]
  %v46 = vld [vmem:[%s0 + $0x98] sm:$0xf]
  %v47 = vld [vmem:[%s0 + $0x9c] sm:$0xff]
  %v48 = vld [vmem:[%s0 + $0xa4] sm:$0xf]
  %v49 = vld [vmem:[%s0 + $0xa8] sm:$0xff]
  %v50 = vld [vmem:[%s0 + $0xb0] sm:$0xf]
  %v51 = vld [vmem:[%s0 + $0xb4] sm:$0xff]
  %v52 = vld [vmem:[%s0 + $0xbc] sm:$0xf]
  %v53 = vld [vmem:[%s1] sm:$0xf]
  %v54 = vld [vmem:[%s1 + $0x4] sm:$0xf]
  %v55 = vld [vmem:[%s1 + $0x8] sm:$0xf]
  %v56 = vld [vmem:[%s1 + $0xc] sm:$0xf]
  %v57 = vld [vmem:[%s1 + $0x10] sm:$0xf]
  %v58 = vld [vmem:[%s1 + $0x14] sm:$0xf]
  %v59 = vld [vmem:[%s1 + $0x18] sm:$0xf]
  %v60 = vld [vmem:[%s1 + $0x1c] sm:$0xf]
  %v61 = vld [vmem:[%s1 + $0x20] sm:$0xf]
  %v62 = vld [vmem:[%s1 + $0x24] sm:$0xf]
  %v63 = vld [vmem:[%s1 + $0x28] sm:$0xf]
  %v64 = vld [vmem:[%s1 + $0x2c] sm:$0xf]
  %v65 = vld [vmem:[%s1 + $0x30] sm:$0xf]
  %v66 = vld [vmem:[%s1 + $0x34] sm:$0xf]
  %v67 = vld [vmem:[%s1 + $0x38] sm:$0xf]
  %v68 = vld [vmem:[%s1 + $0x3c] sm:$0xf]
  %v69 = vld [vmem:[%s1 + $0x40] sm:$0xf]
  %v70 = vld [vmem:[%s1 + $0x44] sm:$0xf]
  %v71 = vld [vmem:[%s1 + $0x48] sm:$0xf]
  %v72 = vld [vmem:[%s1 + $0x4c] sm:$0xf]
  %v73 = vld [vmem:[%s1 + $0x50] sm:$0xf]
  %v74 = vld [vmem:[%s1 + $0x54] sm:$0xf]
  %v75 = vld [vmem:[%s1 + $0x58] sm:$0xf]
  %v76 = vld [vmem:[%s1 + $0x5c] sm:$0xf]
  %v77 = vld [vmem:[%s1 + $0x60] sm:$0xf]
  %v78 = vld [vmem:[%s1 + $0x64] sm:$0xf]
  %v79 = vld [vmem:[%s1 + $0x68] sm:$0xf]
  %v80 = vld [vmem:[%s1 + $0x6c] sm:$0xf]
  %v81 = vld [vmem:[%s1 + $0x70] sm:$0xf]
  %v82 = vld [vmem:[%s1 + $0x74] sm:$0xf]
  %v83 = vld [vmem:[%s1 + $0x78] sm:$0xf]
  %v84 = vld [vmem:[%s1 + $0x7c] sm:$0xf]
  %v85 = vld [vmem:[%s1 + $0x80] sm:$0xf]
  %v86 = vld [vmem:[%s1 + $0x84] sm:$0xf]
  %v87 = vld [vmem:[%s1 + $0x88] sm:$0xf]
  %v88 = vld [vmem:[%s1 + $0x8c] sm:$0xf]
  %v121 = vunpack.c.l.b16 %v21
  %v122 = vunpack.c.h.b16 %v21
  %v123 = vunpack.c.l.b16 %v22
  %v124 = vunpack.c.l.b16 %v23
  %v125 = vunpack.c.h.b16 %v23
  %v126 = vunpack.c.l.b16 %v24
  %v127 = vunpack.c.l.b16 %v25
  %v128 = vunpack.c.h.b16 %v25
  %v129 = vunpack.c.l.b16 %v26
  %v130 = vunpack.c.l.b16 %v27
  %v131 = vunpack.c.h.b16 %v27
  %v132 = vunpack.c.l.b16 %v28
  %v133 = vunpack.c.l.b16 %v29
  %v134 = vunpack.c.h.b16 %v29
  %v135 = vunpack.c.l.b16 %v30
  %v136 = vunpack.c.l.b16 %v31
  %v137 = vunpack.c.h.b16 %v31
  %v138 = vunpack.c.l.b16 %v32
  %v139 = vunpack.c.l.b16 %v33
  %v140 = vunpack.c.h.b16 %v33
  %v141 = vunpack.c.l.b16 %v34
  %v142 = vunpack.c.l.b16 %v35
  %v143 = vunpack.c.h.b16 %v35
  %v144 = vunpack.c.l.b16 %v36
  %v145 = vunpack.c.l.b16 %v37
  %v146 = vunpack.c.h.b16 %v37
  %v147 = vunpack.c.l.b16 %v38
  %v148 = vunpack.c.l.b16 %v39
  %v149 = vunpack.c.h.b16 %v39
  %v150 = vunpack.c.l.b16 %v40
  %v151 = vunpack.c.l.b16 %v41
  %v152 = vunpack.c.h.b16 %v41
  %v153 = vunpack.c.l.b16 %v42
  %v154 = vunpack.c.l.b16 %v43
  %v155 = vunpack.c.h.b16 %v43
  %v156 = vunpack.c.l.b16 %v44
  %v157 = vunpack.c.l.b16 %v45
  %v158 = vunpack.c.h.b16 %v45
  %v159 = vunpack.c.l.b16 %v46
  %v160 = vunpack.c.l.b16 %v47
  %v161 = vunpack.c.h.b16 %v47
  %v162 = vunpack.c.l.b16 %v48
  %v163 = vunpack.c.l.b16 %v49
  %v164 = vunpack.c.h.b16 %v49
  %v165 = vunpack.c.l.b16 %v50
  %v166 = vunpack.c.l.b16 %v51
  %v167 = vunpack.c.h.b16 %v51
  %v168 = vunpack.c.l.b16 %v52
  %v169 = vpack.c.b16 %v124, %v121
  %v170 = vpack.c.b16 %v125, %v122
  %v171 = vpack.c.b16 %v126, %v123
  %v172 = vpack.c.b16 %v130, %v127
  %v173 = vpack.c.b16 %v131, %v128
  %v174 = vpack.c.b16 %v132, %v129
  %v175 = vpack.c.b16 %v136, %v133
  %v176 = vpack.c.b16 %v137, %v134
  %v177 = vpack.c.b16 %v138, %v135
  %v178 = vpack.c.b16 %v142, %v139
  %v179 = vpack.c.b16 %v143, %v140
  %v180 = vpack.c.b16 %v144, %v141
  %v181 = vpack.c.b16 %v148, %v145
  %v182 = vpack.c.b16 %v149, %v146
  %v183 = vpack.c.b16 %v150, %v147
  %v184 = vpack.c.b16 %v154, %v151
  %v185 = vpack.c.b16 %v155, %v152
  %v186 = vpack.c.b16 %v156, %v153
  %v187 = vpack.c.b16 %v160, %v157
  %v188 = vpack.c.b16 %v161, %v158
  %v189 = vpack.c.b16 %v162, %v159
  %v190 = vpack.c.b16 %v166, %v163
  %v191 = vpack.c.b16 %v167, %v164
  %v192 = vpack.c.b16 %v168, %v165
  %v245 = vunpack.c.l.b16 %v53
  %v246 = vunpack.c.l.b16 %v54
  %v247 = vunpack.c.l.b16 %v55
  %v248 = vunpack.c.l.b16 %v56
  %v249 = vunpack.c.l.b16 %v57
  %v250 = vunpack.c.l.b16 %v58
  %v251 = vunpack.c.l.b16 %v59
  %v252 = vunpack.c.l.b16 %v60
  %v253 = vunpack.c.l.b16 %v61
  %v254 = vunpack.c.l.b16 %v62
  %v255 = vunpack.c.l.b16 %v63
  %v256 = vunpack.c.l.b16 %v64
  %v257 = vunpack.c.l.b16 %v65
  %v258 = vunpack.c.l.b16 %v66
  %v259 = vunpack.c.l.b16 %v67
  %v260 = vunpack.c.l.b16 %v68
  %v261 = vunpack.c.l.b16 %v69
  %v262 = vunpack.c.l.b16 %v70
  %v263 = vunpack.c.l.b16 %v71
  %v264 = vunpack.c.l.b16 %v72
  %v265 = vunpack.c.l.b16 %v73
  %v266 = vunpack.c.l.b16 %v74
  %v267 = vunpack.c.l.b16 %v75
  %v268 = vunpack.c.l.b16 %v76
  %v269 = vunpack.c.l.b16 %v77
  %v270 = vunpack.c.l.b16 %v78
  %v271 = vunpack.c.l.b16 %v79
  %v272 = vunpack.c.l.b16 %v80
  %v273 = vunpack.c.l.b16 %v81
  %v274 = vunpack.c.l.b16 %v82
  %v275 = vunpack.c.l.b16 %v83
  %v276 = vunpack.c.l.b16 %v84
  %v277 = vunpack.c.l.b16 %v85
  %v278 = vunpack.c.l.b16 %v86
  %v279 = vunpack.c.l.b16 %v87
  %v280 = vunpack.c.l.b16 %v88
  %v281 = vpack.c.b16 %v246, %v245
  %v282 = vpack.c.b16 %v248, %v247
  %v283 = vpack.c.b16 %v250, %v249
  %v284 = vpack.c.b16 %v252, %v251
  %v285 = vpack.c.b16 %v254, %v253
  %v286 = vpack.c.b16 %v256, %v255
  %v287 = vpack.c.b16 %v258, %v257
  %v288 = vpack.c.b16 %v260, %v259
  %v289 = vpack.c.b16 %v262, %v261
  %v290 = vpack.c.b16 %v264, %v263
  %v291 = vpack.c.b16 %v266, %v265
  %v292 = vpack.c.b16 %v268, %v267
  %v293 = vpack.c.b16 %v270, %v269
  %v294 = vpack.c.b16 %v272, %v271
  %v295 = vpack.c.b16 %v274, %v273
  %v296 = vpack.c.b16 %v276, %v275
  %v297 = vpack.c.b16 %v278, %v277
  %v298 = vpack.c.b16 %v280, %v279
  %vm317 = vcmask 261120
  %v319 = vsel %vm317, %v171, 0
  %v322 = vsel %vm317, %v174, 0
  %v325 = vsel %vm317, %v177, 0
  %v328 = vsel %vm317, %v180, 0
  %v331 = vsel %vm317, %v183, 0
  %v334 = vsel %vm317, %v186, 0
  %v337 = vsel %vm317, %v189, 0
  %v340 = vsel %vm317, %v192, 0
  %342 = vmatprep.subr.bf16.mxu0 0
  %343 = vmatpush1.bf16.msra.mxu0 %v281
  %344 = vmatprep.subr.bf16.mxu0 0
  %345 = vmatpush1.bf16.msra.mxu0 %v282
  %346 = vmatprep.subr.bf16.mxu0 0
  %347 = vmatpush1.bf16.msra.mxu0 %v283
  %348 = vmatprep.subr.bf16.mxu0 0
  %349 = vmatpush1.bf16.msra.mxu0 %v284
  %350 = vmatprep.subr.bf16.mxu0 0
  %351 = vmatpush1.bf16.msra.mxu0 %v285
  %352 = vmatprep.subr.bf16.mxu0 0
  %353 = vmatpush1.bf16.msra.mxu0 %v286
  %354 = vmatprep.subr.bf16.mxu0 0
  %355 = vmatpush1.bf16.msra.mxu0 %v287
  %356 = vmatprep.subr.bf16.mxu0 0
  %357 = vmatpush1.bf16.msra.mxu0 %v288
  %358 = vmatprep.subr.bf16.mxu0 0
  %359 = vmatpush1.bf16.msra.mxu0 %v289
  %360 = vmatprep.subr.bf16.mxu0 0
  %361 = vmatpush1.bf16.msra.mxu0 %v290
  %362 = vmatprep.subr.bf16.mxu0 0
  %363 = vmatpush1.bf16.msra.mxu0 %v291
  %364 = vmatprep.subr.bf16.mxu0 0
  %365 = vmatpush1.bf16.msra.mxu0 %v292
  %366 = vmatprep.subr.bf16.mxu0 0
  %367 = vmatpush1.bf16.msra.mxu0 %v293
  %368 = vmatprep.subr.bf16.mxu0 0
  %369 = vmatpush1.bf16.msra.mxu0 %v294
  %370 = vmatprep.subr.bf16.mxu0 0
  %371 = vmatpush1.bf16.msra.mxu0 %v295
  %372 = vmatprep.subr.bf16.mxu0 0
  %373 = vmatpush1.bf16.msra.mxu0 %v296
  %374 = vmatprep.mubr.bf16.mxu0 %v170
  %375 = vmatmul.mubr.bf16.gmra.mrb[0].mxu0 %v169
  %v376 = vpop.f32.mrb[0].mxu0
  %v377 = vadd.f32 0.0, %v376
  %v378 = vpop.f32.mrb[0].mxu0
  %v379 = vpop.f32.mrb[0].mxu0
  %v380 = vadd.f32 0.0, %v379
  %v381 = vpop.f32.mrb[0].mxu0
  %382 = vmatprep.mubr.bf16.mxu0 %v173
  %383 = vmatmul.mubr.bf16.gmra.mrb[0].mxu0 %v172
  %v384 = vpop.f32.mrb[0].mxu0
  %v385 = vadd.f32 0.0, %v384
  %v386 = vpop.f32.mrb[0].mxu0
  %v387 = vpop.f32.mrb[0].mxu0
  %v388 = vadd.f32 0.0, %v387
  %v389 = vpop.f32.mrb[0].mxu0
  %390 = vmatprep.mubr.bf16.mxu0 %v176
  %391 = vmatmul.mubr.bf16.gmra.mrb[0].mxu0 %v175
  %v392 = vpop.f32.mrb[0].mxu0
  %v393 = vadd.f32 0.0, %v392
  %v394 = vpop.f32.mrb[0].mxu0
  %v395 = vpop.f32.mrb[0].mxu0
  %v396 = vadd.f32 0.0, %v395
  %v397 = vpop.f32.mrb[0].mxu0
  %398 = vmatprep.mubr.bf16.mxu0 %v179
  %399 = vmatmul.mubr.bf16.gmra.mrb[0].mxu0 %v178
  %v400 = vpop.f32.mrb[0].mxu0
  %v401 = vadd.f32 0.0, %v400
  %v402 = vpop.f32.mrb[0].mxu0
  %v403 = vpop.f32.mrb[0].mxu0
  %v404 = vadd.f32 0.0, %v403
  %v405 = vpop.f32.mrb[0].mxu0
  %406 = vmatprep.mubr.bf16.mxu0 %v182
  %407 = vmatmul.mubr.bf16.gmra.mrb[0].mxu0 %v181
  %v408 = vpop.f32.mrb[0].mxu0
  %v409 = vadd.f32 0.0, %v408
  %v410 = vpop.f32.mrb[0].mxu0
  %v411 = vpop.f32.mrb[0].mxu0
  %v412 = vadd.f32 0.0, %v411
  %v413 = vpop.f32.mrb[0].mxu0
  %414 = vmatprep.mubr.bf16.mxu0 %v185
  %415 = vmatmul.mubr.bf16.gmra.mrb[0].mxu0 %v184
  %v416 = vpop.f32.mrb[0].mxu0
  %v417 = vadd.f32 0.0, %v416
  %v418 = vpop.f32.mrb[0].mxu0
  %v419 = vpop.f32.mrb[0].mxu0
  %v420 = vadd.f32 0.0, %v419
  %v421 = vpop.f32.mrb[0].mxu0
  %422 = vmatprep.mubr.bf16.mxu0 %v188
  %423 = vmatmul.mubr.bf16.gmra.mrb[0].mxu0 %v187
  %v424 = vpop.f32.mrb[0].mxu0
  %v425 = vadd.f32 0.0, %v424
  %v426 = vpop.f32.mrb[0].mxu0
  %v427 = vpop.f32.mrb[0].mxu0
  %v428 = vadd.f32 0.0, %v427
  %v429 = vpop.f32.mrb[0].mxu0
  %430 = vmatprep.mubr.bf16.mxu0 %v191
  %431 = vmatmul.mubr.bf16.gmra.mrb[0].mxu0 %v190
  %v432 = vpop.f32.mrb[0].mxu0
  %v433 = vadd.f32 0.0, %v432
  %v434 = vpop.f32.mrb[0].mxu0
  %v435 = vpop.f32.mrb[0].mxu0
  %v436 = vadd.f32 0.0, %v435
  %v437 = vpop.f32.mrb[0].mxu0
  %438 = vdwg.mxu0
  %439 = vmatprep.subr.bf16.mxu0 0
  %440 = vmatpush1.bf16.msra.mxu0 %v297
  %441 = vmatprep.subr.bf16.mxu0 0
  %442 = vmatpush1.bf16.msra.mxu0 %v298
  %443 = vmatprep.subr.bf16.mxu0 0
  %444 = vmatpush1.bf16.msra.mxu0 0
  %445 = vmatprep.subr.bf16.mxu0 0
  %446 = vmatpush1.bf16.msra.mxu0 0
  %447 = vmatprep.subr.bf16.mxu0 0
  %448 = vmatpush1.bf16.msra.mxu0 0
  %449 = vmatprep.subr.bf16.mxu0 0
  %450 = vmatpush1.bf16.msra.mxu0 0
  %451 = vmatprep.subr.bf16.mxu0 0
  %452 = vmatpush1.bf16.msra.mxu0 0
  %453 = vmatprep.subr.bf16.mxu0 0
  %454 = vmatpush1.bf16.msra.mxu0 0
  %455 = vmatprep.subr.bf16.mxu0 0
  %456 = vmatpush1.bf16.msra.mxu0 0
  %457 = vmatprep.subr.bf16.mxu0 0
  %458 = vmatpush1.bf16.msra.mxu0 0
  %459 = vmatprep.subr.bf16.mxu0 0
  %460 = vmatpush1.bf16.msra.mxu0 0
  %461 = vmatprep.subr.bf16.mxu0 0
  %462 = vmatpush1.bf16.msra.mxu0 0
  %463 = vmatprep.subr.bf16.mxu0 0
  %464 = vmatpush1.bf16.msra.mxu0 0
  %465 = vmatprep.subr.bf16.mxu0 0
  %466 = vmatpush1.bf16.msra.mxu0 0
  %467 = vmatprep.subr.bf16.mxu0 0
  %468 = vmatpush1.bf16.msra.mxu0 0
  %469 = vmatprep.subr.bf16.mxu0 0
  %470 = vmatpush1.bf16.msra.mxu0 0
  %471 = vmatprep.mubr.bf16.mxu0 0
  %472 = vmatmul.mubr.bf16.gmra.mrb[0].mxu0 %v319
  %v473 = vpop.f32.mrb[0].mxu0
  %v474 = vadd.f32 %v377, %v473
  %v475 = vpop.f32.mrb[0].mxu0
  %v476 = vpop.f32.mrb[0].mxu0
  %v477 = vadd.f32 %v380, %v476
  %v478 = vpop.f32.mrb[0].mxu0
  %479 = vmatprep.mubr.bf16.mxu0 0
  %480 = vmatmul.mubr.bf16.gmra.mrb[0].mxu0 %v322
  %v481 = vpop.f32.mrb[0].mxu0
  %v482 = vadd.f32 %v385, %v481
  %v483 = vpop.f32.mrb[0].mxu0
  %v484 = vpop.f32.mrb[0].mxu0
  %v485 = vadd.f32 %v388, %v484
  %v486 = vpop.f32.mrb[0].mxu0
  %487 = vmatprep.mubr.bf16.mxu0 0
  %488 = vmatmul.mubr.bf16.gmra.mrb[0].mxu0 %v325
  %v489 = vpop.f32.mrb[0].mxu0
  %v490 = vadd.f32 %v393, %v489
  %v491 = vpop.f32.mrb[0].mxu0
  %v492 = vpop.f32.mrb[0].mxu0
  %v493 = vadd.f32 %v396, %v492
  %v494 = vpop.f32.mrb[0].mxu0
  %495 = vmatprep.mubr.bf16.mxu0 0
  %496 = vmatmul.mubr.bf16.gmra.mrb[0].mxu0 %v328
  %v497 = vpop.f32.mrb[0].mxu0
  %v498 = vadd.f32 %v401, %v497
  %v499 = vpop.f32.mrb[0].mxu0
  %v500 = vpop.f32.mrb[0].mxu0
  %v501 = vadd.f32 %v404, %v500
  %v502 = vpop.f32.mrb[0].mxu0
  %503 = vmatprep.mubr.bf16.mxu0 0
  %504 = vmatmul.mubr.bf16.gmra.mrb[0].mxu0 %v331
  %v505 = vpop.f32.mrb[0].mxu0
  %v506 = vadd.f32 %v409, %v505
  %v507 = vpop.f32.mrb[0].mxu0
  %v508 = vpop.f32.mrb[0].mxu0
  %v509 = vadd.f32 %v412, %v508
  %v510 = vpop.f32.mrb[0].mxu0
  %511 = vmatprep.mubr.bf16.mxu0 0
  %512 = vmatmul.mubr.bf16.gmra.mrb[0].mxu0 %v334
  %v513 = vpop.f32.mrb[0].mxu0
  %v514 = vadd.f32 %v417, %v513
  %v515 = vpop.f32.mrb[0].mxu0
  %v516 = vpop.f32.mrb[0].mxu0
  %v517 = vadd.f32 %v420, %v516
  %v518 = vpop.f32.mrb[0].mxu0
  %519 = vmatprep.mubr.bf16.mxu0 0
  %520 = vmatmul.mubr.bf16.gmra.mrb[0].mxu0 %v337
  %v521 = vpop.f32.mrb[0].mxu0
  %v522 = vadd.f32 %v425, %v521
  %v523 = vpop.f32.mrb[0].mxu0
  %v524 = vpop.f32.mrb[0].mxu0
  %v525 = vadd.f32 %v428, %v524
  %v526 = vpop.f32.mrb[0].mxu0
  %527 = vmatprep.mubr.bf16.mxu0 0
  %528 = vmatmul.mubr.bf16.gmra.mrb[0].mxu0 %v340
  %v529 = vpop.f32.mrb[0].mxu0
  %v530 = vadd.f32 %v433, %v529
  %v531 = vpop.f32.mrb[0].mxu0
  %v532 = vpop.f32.mrb[0].mxu0
  %v533 = vadd.f32 %v436, %v532
  %v534 = vpop.f32.mrb[0].mxu0
  %535 = vdwg.mxu0
  %v536 = vld [vmem:[%s2] sm:$0x1]
  %v538 = vlaneseq
  %v539 = vshrl.u32 %v538, 7
  %v540 = vsub.s32 0, %v539
  %v541 = vrot.slane %v536, %v540
  %v543 = vmul.f32 %v474, %v541
  %v544 = vmul.f32 %v477, %v541
  %v545 = vmul.f32 %v482, %v541
  %v546 = vmul.f32 %v485, %v541
  %v547 = vmul.f32 %v490, %v541
  %v548 = vmul.f32 %v493, %v541
  %v549 = vmul.f32 %v498, %v541
  %v550 = vmul.f32 %v501, %v541
  %v551 = vmul.f32 %v506, %v541
  %v552 = vmul.f32 %v509, %v541
  %v553 = vmul.f32 %v514, %v541
  %v554 = vmul.f32 %v517, %v541
  %v555 = vmul.f32 %v522, %v541
  %v556 = vmul.f32 %v525, %v541
  %v557 = vmul.f32 %v530, %v541
  %v558 = vmul.f32 %v533, %v541
  %v559 = vld [vmem:[%s3] sm:$0x1]
  %v561 = vlaneseq
  %v562 = vshrl.u32 %v561, 7
  %v563 = vsub.s32 0, %v562
  %v564 = vrot.slane %v559, %v563
  %v566 = vadd.f32 %v543, %v564
  %v567 = vadd.f32 %v544, %v564
  %v568 = vadd.f32 %v545, %v564
  %v569 = vadd.f32 %v546, %v564
  %v570 = vadd.f32 %v547, %v564
  %v571 = vadd.f32 %v548, %v564
  %v572 = vadd.f32 %v549, %v564
  %v573 = vadd.f32 %v550, %v564
  %v574 = vadd.f32 %v551, %v564
  %v575 = vadd.f32 %v552, %v564
  %v576 = vadd.f32 %v553, %v564
  %v577 = vadd.f32 %v554, %v564
  %v578 = vadd.f32 %v555, %v564
  %v579 = vadd.f32 %v556, %v564
  %v580 = vadd.f32 %v557, %v564
  %v581 = vadd.f32 %v558, %v564
  %v582 = vld [vmem:[%s4] sm:$0xf]
  %v583 = vld [vmem:[%s4 + $0x4] sm:$0xf]
  %v584 = vld [vmem:[%s4 + $0x8] sm:$0xf]
  %v585 = vld [vmem:[%s4 + $0xc] sm:$0xf]
  %v586 = vld [vmem:[%s4 + $0x10] sm:$0xf]
  %v587 = vld [vmem:[%s4 + $0x14] sm:$0xf]
  %v588 = vld [vmem:[%s4 + $0x18] sm:$0xf]
  %v589 = vld [vmem:[%s4 + $0x1c] sm:$0xf]
  %v590 = vld [vmem:[%s4 + $0x20] sm:$0xf]
  %v591 = vld [vmem:[%s4 + $0x24] sm:$0xf]
  %v592 = vld [vmem:[%s4 + $0x28] sm:$0xf]
  %v593 = vld [vmem:[%s4 + $0x2c] sm:$0xf]
  %v594 = vld [vmem:[%s4 + $0x30] sm:$0xf]
  %v595 = vld [vmem:[%s4 + $0x34] sm:$0xf]
  %v596 = vld [vmem:[%s4 + $0x38] sm:$0xf]
  %v597 = vld [vmem:[%s4 + $0x3c] sm:$0xf]
  %v598 = vunpack.c.l.bf16 %v582
  %v599 = vunpack.c.l.bf16 %v583
  %v600 = vunpack.c.l.bf16 %v584
  %v601 = vunpack.c.l.bf16 %v585
  %v602 = vunpack.c.l.bf16 %v586
  %v603 = vunpack.c.l.bf16 %v587
  %v604 = vunpack.c.l.bf16 %v588
  %v605 = vunpack.c.l.bf16 %v589
  %v606 = vunpack.c.l.bf16 %v590
  %v607 = vunpack.c.l.bf16 %v591
  %v608 = vunpack.c.l.bf16 %v592
  %v609 = vunpack.c.l.bf16 %v593
  %v610 = vunpack.c.l.bf16 %v594
  %v611 = vunpack.c.l.bf16 %v595
  %v612 = vunpack.c.l.bf16 %v596
  %v613 = vunpack.c.l.bf16 %v597
  %v614 = vadd.f32 %v566, %v598
  %v615 = vadd.f32 %v567, %v599
  %v616 = vadd.f32 %v568, %v600
  %v617 = vadd.f32 %v569, %v601
  %v618 = vadd.f32 %v570, %v602
  %v619 = vadd.f32 %v571, %v603
  %v620 = vadd.f32 %v572, %v604
  %v621 = vadd.f32 %v573, %v605
  %v622 = vadd.f32 %v574, %v606
  %v623 = vadd.f32 %v575, %v607
  %v624 = vadd.f32 %v576, %v608
  %v625 = vadd.f32 %v577, %v609
  %v626 = vadd.f32 %v578, %v610
  %v627 = vadd.f32 %v579, %v611
  %v628 = vadd.f32 %v580, %v612
  %v629 = vadd.f32 %v581, %v613
  %v630 = vmax.f32 %v614, 0.0
  %v631 = vmax.f32 %v615, 0.0
  %v632 = vmax.f32 %v616, 0.0
  %v633 = vmax.f32 %v617, 0.0
  %v634 = vmax.f32 %v618, 0.0
  %v635 = vmax.f32 %v619, 0.0
  %v636 = vmax.f32 %v620, 0.0
  %v637 = vmax.f32 %v621, 0.0
  %v638 = vmax.f32 %v622, 0.0
  %v639 = vmax.f32 %v623, 0.0
  %v640 = vmax.f32 %v624, 0.0
  %v641 = vmax.f32 %v625, 0.0
  %v642 = vmax.f32 %v626, 0.0
  %v643 = vmax.f32 %v627, 0.0
  %v644 = vmax.f32 %v628, 0.0
  %v645 = vmax.f32 %v629, 0.0
  %v646 = vpack.c.bf16 %v631, %v630
  %v647 = vpack.c.bf16 %v633, %v632
  %v648 = vpack.c.bf16 %v635, %v634
  %v649 = vpack.c.bf16 %v637, %v636
  %v650 = vpack.c.bf16 %v639, %v638
  %v651 = vpack.c.bf16 %v641, %v640
  %v652 = vpack.c.bf16 %v643, %v642
  %v653 = vpack.c.bf16 %v645, %v644
  %v662 = vunpack.c.l.b16 %v646
  %v663 = vunpack.c.h.b16 %v646
  %v664 = vunpack.c.l.b16 %v647
  %v665 = vunpack.c.h.b16 %v647
  %v666 = vunpack.c.l.b16 %v648
  %v667 = vunpack.c.h.b16 %v648
  %v668 = vunpack.c.l.b16 %v649
  %v669 = vunpack.c.h.b16 %v649
  %v670 = vunpack.c.l.b16 %v650
  %v671 = vunpack.c.h.b16 %v650
  %v672 = vunpack.c.l.b16 %v651
  %v673 = vunpack.c.h.b16 %v651
  %v674 = vunpack.c.l.b16 %v652
  %v675 = vunpack.c.h.b16 %v652
  %v676 = vunpack.c.l.b16 %v653
  %v677 = vunpack.c.h.b16 %v653
  %v678 = vpack.c.b16 %v662, %v662
  %v679 = vpack.c.b16 %v663, %v663
  %v680 = vpack.c.b16 %v664, %v664
  %v681 = vpack.c.b16 %v665, %v665
  %v682 = vpack.c.b16 %v666, %v666
  %v683 = vpack.c.b16 %v667, %v667
  %v684 = vpack.c.b16 %v668, %v668
  %v685 = vpack.c.b16 %v669, %v669
  %v686 = vpack.c.b16 %v670, %v670
  %v687 = vpack.c.b16 %v671, %v671
  %v688 = vpack.c.b16 %v672, %v672
  %v689 = vpack.c.b16 %v673, %v673
  %v690 = vpack.c.b16 %v674, %v674
  %v691 = vpack.c.b16 %v675, %v675
  %v692 = vpack.c.b16 %v676, %v676
  %v693 = vpack.c.b16 %v677, %v677
  %vm710 = vcmask 257024
  %711 = vst.msk [vmem:[%s5] sm:$0xf] %vm710, %v678
  %712 = vst.msk [vmem:[%s5 + $0x4] sm:$0xf] %vm710, %v679
  %713 = vst.msk [vmem:[%s5 + $0x8] sm:$0xf] %vm710, %v680
  %714 = vst.msk [vmem:[%s5 + $0xc] sm:$0xf] %vm710, %v681
  %715 = vst.msk [vmem:[%s5 + $0x10] sm:$0xf] %vm710, %v682
  %716 = vst.msk [vmem:[%s5 + $0x14] sm:$0xf] %vm710, %v683
  %717 = vst.msk [vmem:[%s5 + $0x18] sm:$0xf] %vm710, %v684
  %718 = vst.msk [vmem:[%s5 + $0x1c] sm:$0xf] %vm710, %v685
  %719 = vst.msk [vmem:[%s5 + $0x20] sm:$0xf] %vm710, %v686
  %720 = vst.msk [vmem:[%s5 + $0x24] sm:$0xf] %vm710, %v687
  %721 = vst.msk [vmem:[%s5 + $0x28] sm:$0xf] %vm710, %v688
  %722 = vst.msk [vmem:[%s5 + $0x2c] sm:$0xf] %vm710, %v689
  %723 = vst.msk [vmem:[%s5 + $0x30] sm:$0xf] %vm710, %v690
  %724 = vst.msk [vmem:[%s5 + $0x34] sm:$0xf] %vm710, %v691
  %725 = vst.msk [vmem:[%s5 + $0x38] sm:$0xf] %vm710, %v692
  %726 = vst.msk [vmem:[%s5 + $0x3c] sm:$0xf] %vm710, %v693
  // Predicated region
  $region22: #{gan_critic_forward.32} parent=0 // pred_check
    _
  $region23: #{gan_critic_forward.32} parent=0 // pred_check_branch
    %728 = sbr.rel (0) target = $region25
  $region24: #{gan_critic_forward.32} parent=0 // pred_region
    _
  $region25: #{gan_critic_forward.32} parent=0 // pred_fallthru
    _
  // Predicated region
  $region26: #{gan_critic_forward.32} parent=0 // pred_check
    _
  $region27: #{gan_critic_forward.32} parent=0 // pred_check_branch
    %730 = sbr.rel (0) target = $region29
  $region28: #{gan_critic_forward.32} parent=0 // pred_region
    _
  $region29: #{gan_critic_forward.32} parent=0 // pred_fallthru
    _

// kernel: gan_critic_forward.39
$region0: #{gan_critic_forward.39}
  #allocation0 [shape = 'u32[]', space=smem, size = 0x4, offset = 0x4, fixed_abs, tag = 'smem constant byte address 0x4 - core index']
  #allocation1 [shape = 'u32[144,128]{1,0:T(1,128)}', space=vmem, size = 0x12000, scoped, tag = 'internal scratch']
  %s0 = inlined_call_operand.vmem [shape: bf16[32,288], index: 0, kind: input, shape index: {}]
  %s1 = inlined_call_operand.vmem [shape: bf16[288,64], index: 1, kind: input, shape index: {}]
  %s2 = inlined_call_operand.vmem [shape: f32[1,64], index: 2, kind: input, shape index: {}]
  %s3 = inlined_call_operand.vmem [shape: f32[1,64], index: 3, kind: input, shape index: {}]
  %s4 = inlined_call_operand.vmem [shape: bf16[32,64], index: 4, kind: output, shape index: {}]
  %s5 = sld [smem:[#allocation0]]
  $region26: #{gan_critic_forward.39} parent=0
    _
  %s7 = ssub.s32 1, %s5
  %s8 = scalar_select 0, %s7, %s5
  // Predicated region
  $region2: #{gan_critic_forward.39} parent=0 // pred_check
    _
  $region3: #{gan_critic_forward.39} parent=0 // pred_check_branch
    %10 = sbr.rel (0) target = $region5
  $region4: #{gan_critic_forward.39} parent=0 // pred_region
    _
  $region5: #{gan_critic_forward.39} parent=0 // pred_fallthru
    _
  // Predicated region
  $region6: #{gan_critic_forward.39} parent=0 // pred_check
    _
  $region7: #{gan_critic_forward.39} parent=0 // pred_check_branch
    %12 = sbr.rel (0) target = $region9
  $region8: #{gan_critic_forward.39} parent=0 // pred_region
    _
  $region9: #{gan_critic_forward.39} parent=0 // pred_fallthru
    _
  // Predicated region
  $region10: #{gan_critic_forward.39} parent=0 // pred_check
    _
  $region11: #{gan_critic_forward.39} parent=0 // pred_check_branch
    %14 = sbr.rel (0) target = $region13
  $region12: #{gan_critic_forward.39} parent=0 // pred_region
    _
  $region13: #{gan_critic_forward.39} parent=0 // pred_fallthru
    _
  // Predicated region
  $region14: #{gan_critic_forward.39} parent=0 // pred_check
    _
  $region15: #{gan_critic_forward.39} parent=0 // pred_check_branch
    %16 = sbr.rel (0) target = $region17
  $region16: #{gan_critic_forward.39} parent=0 // pred_region
    _
  $region17: #{gan_critic_forward.39} parent=0 // pred_fallthru
    _
  %v18 = vld [vmem:[%s0] sm:$0xff]
  %v19 = vld [vmem:[%s0 + $0x8] sm:$0xf]
  %v20 = vld [vmem:[%s0 + $0xc] sm:$0xff]
  %v21 = vld [vmem:[%s0 + $0x14] sm:$0xf]
  %v22 = vld [vmem:[%s0 + $0x18] sm:$0xff]
  %v23 = vld [vmem:[%s0 + $0x20] sm:$0xf]
  %v24 = vld [vmem:[%s0 + $0x24] sm:$0xff]
  %v25 = vld [vmem:[%s0 + $0x2c] sm:$0xf]
  %v26 = vld [vmem:[%s1] sm:$0xf]
  %v27 = vld [vmem:[%s1 + $0x4] sm:$0xf]
  %v28 = vld [vmem:[%s1 + $0x8] sm:$0xf]
  %v29 = vld [vmem:[%s1 + $0xc] sm:$0xf]
  %v30 = vld [vmem:[%s1 + $0x10] sm:$0xf]
  %v31 = vld [vmem:[%s1 + $0x14] sm:$0xf]
  %v32 = vld [vmem:[%s1 + $0x18] sm:$0xf]
  %v33 = vld [vmem:[%s1 + $0x1c] sm:$0xf]
  %v34 = vld [vmem:[%s1 + $0x20] sm:$0xf]
  %v35 = vld [vmem:[%s1 + $0x24] sm:$0xf]
  %v36 = vld [vmem:[%s1 + $0x28] sm:$0xf]
  %v37 = vld [vmem:[%s1 + $0x2c] sm:$0xf]
  %v38 = vld [vmem:[%s1 + $0x30] sm:$0xf]
  %v39 = vld [vmem:[%s1 + $0x34] sm:$0xf]
  %v40 = vld [vmem:[%s1 + $0x38] sm:$0xf]
  %v41 = vld [vmem:[%s1 + $0x3c] sm:$0xf]
  %v42 = vld [vmem:[%s1 + $0x40] sm:$0xf]
  %v43 = vld [vmem:[%s1 + $0x44] sm:$0xf]
  %v44 = vld [vmem:[%s1 + $0x48] sm:$0xf]
  %v45 = vld [vmem:[%s1 + $0x4c] sm:$0xf]
  %v46 = vld [vmem:[%s1 + $0x50] sm:$0xf]
  %v47 = vld [vmem:[%s1 + $0x54] sm:$0xf]
  %v48 = vld [vmem:[%s1 + $0x58] sm:$0xf]
  %v49 = vld [vmem:[%s1 + $0x5c] sm:$0xf]
  %v50 = vld [vmem:[%s1 + $0x60] sm:$0xf]
  %v51 = vld [vmem:[%s1 + $0x64] sm:$0xf]
  %v52 = vld [vmem:[%s1 + $0x68] sm:$0xf]
  %v53 = vld [vmem:[%s1 + $0x6c] sm:$0xf]
  %v54 = vld [vmem:[%s1 + $0x70] sm:$0xf]
  %v55 = vld [vmem:[%s1 + $0x74] sm:$0xf]
  %v56 = vld [vmem:[%s1 + $0x78] sm:$0xf]
  %v57 = vld [vmem:[%s1 + $0x7c] sm:$0xf]
  %v58 = vld [vmem:[%s1 + $0x80] sm:$0xf]
  %v59 = vld [vmem:[%s1 + $0x84] sm:$0xf]
  %v60 = vld [vmem:[%s1 + $0x88] sm:$0xf]
  %v61 = vld [vmem:[%s1 + $0x8c] sm:$0xf]
  %v70 = vunpack.c.l.b16 %v18
  %v71 = vunpack.c.h.b16 %v18
  %v72 = vunpack.c.l.b16 %v19
  %v73 = vunpack.c.l.b16 %v20
  %v74 = vunpack.c.h.b16 %v20
  %v75 = vunpack.c.l.b16 %v21
  %v76 = vunpack.c.l.b16 %v22
  %v77 = vunpack.c.h.b16 %v22
  %v78 = vunpack.c.l.b16 %v23
  %v79 = vunpack.c.l.b16 %v24
  %v80 = vunpack.c.h.b16 %v24
  %v81 = vunpack.c.l.b16 %v25
  %v82 = vpack.c.b16 %v73, %v70
  %v83 = vpack.c.b16 %v74, %v71
  %v84 = vpack.c.b16 %v75, %v72
  %v85 = vpack.c.b16 %v79, %v76
  %v86 = vpack.c.b16 %v80, %v77
  %v87 = vpack.c.b16 %v81, %v78
  %v128 = vunpack.c.l.b16 %v26
  %v129 = vunpack.c.l.b16 %v27
  %v130 = vunpack.c.l.b16 %v28
  %v131 = vunpack.c.l.b16 %v29
  %v132 = vunpack.c.l.b16 %v30
  %v133 = vunpack.c.l.b16 %v31
  %v134 = vunpack.c.l.b16 %v32
  %v135 = vunpack.c.l.b16 %v33
  %v136 = vunpack.c.l.b16 %v34
  %v137 = vunpack.c.l.b16 %v35
  %v138 = vunpack.c.l.b16 %v36
  %v139 = vunpack.c.l.b16 %v37
  %v140 = vunpack.c.l.b16 %v38
  %v141 = vunpack.c.l.b16 %v39
  %v142 = vunpack.c.l.b16 %v40
  %v143 = vunpack.c.l.b16 %v41
  %v144 = vunpack.c.l.b16 %v42
  %v145 = vunpack.c.l.b16 %v43
  %v146 = vunpack.c.l.b16 %v44
  %v147 = vunpack.c.l.b16 %v45
  %v148 = vunpack.c.l.b16 %v46
  %v149 = vunpack.c.l.b16 %v47
  %v150 = vunpack.c.l.b16 %v48
  %v151 = vunpack.c.l.b16 %v49
  %v152 = vunpack.c.l.b16 %v50
  %v153 = vunpack.c.l.b16 %v51
  %v154 = vunpack.c.l.b16 %v52
  %v155 = vunpack.c.l.b16 %v53
  %v156 = vunpack.c.l.b16 %v54
  %v157 = vunpack.c.l.b16 %v55
  %v158 = vunpack.c.l.b16 %v56
  %v159 = vunpack.c.l.b16 %v57
  %v160 = vunpack.c.l.b16 %v58
  %v161 = vunpack.c.l.b16 %v59
  %v162 = vunpack.c.l.b16 %v60
  %v163 = vunpack.c.l.b16 %v61
  %v164 = vpack.c.b16 %v129, %v128
  %v165 = vpack.c.b16 %v131, %v130
  %v166 = vpack.c.b16 %v133, %v132
  %v167 = vpack.c.b16 %v135, %v134
  %v168 = vpack.c.b16 %v137, %v136
  %v169 = vpack.c.b16 %v139, %v138
  %v170 = vpack.c.b16 %v141, %v140
  %v171 = vpack.c.b16 %v143, %v142
  %v172 = vpack.c.b16 %v145, %v144
  %v173 = vpack.c.b16 %v147, %v146
  %v174 = vpack.c.b16 %v149, %v148
  %v175 = vpack.c.b16 %v151, %v150
  %v176 = vpack.c.b16 %v153, %v152
  %v177 = vpack.c.b16 %v155, %v154
  %v178 = vpack.c.b16 %v157, %v156
  %v179 = vpack.c.b16 %v159, %v158
  %v180 = vpack.c.b16 %v161, %v160
  %v181 = vpack.c.b16 %v163, %v162
  %vm200 = vcmask 261120
  %v202 = vsel %vm200, %v84, 0
  %v205 = vsel %vm200, %v87, 0
  %207 = vmatprep.subr.bf16.mxu0 0
  %208 = vmatpush1.bf16.msra.mxu0 %v164
  %209 = vmatprep.subr.bf16.mxu0 0
  %210 = vmatpush1.bf16.msra.mxu0 %v165
  %211 = vmatprep.subr.bf16.mxu0 0
  %212 = vmatpush1.bf16.msra.mxu0 %v166
  %213 = vmatprep.subr.bf16.mxu0 0
  %214 = vmatpush1.bf16.msra.mxu0 %v167
  %215 = vmatprep.subr.bf16.mxu0 0
  %216 = vmatpush1.bf16.msra.mxu0 %v168
  %217 = vmatprep.subr.bf16.mxu0 0
  %218 = vmatpush1.bf16.msra.mxu0 %v169
  %219 = vmatprep.subr.bf16.mxu0 0
  %220 = vmatpush1.bf16.msra.mxu0 %v170
  %221 = vmatprep.subr.bf16.mxu0 0
  %222 = vmatpush1.bf16.msra.mxu0 %v171
  %223 = vmatprep.subr.bf16.mxu0 0
  %224 = vmatpush1.bf16.msra.mxu0 %v172
  %225 = vmatprep.subr.bf16.mxu0 0
  %226 = vmatpush1.bf16.msra.mxu0 %v173
  %227 = vmatprep.subr.bf16.mxu0 0
  %228 = vmatpush1.bf16.msra.mxu0 %v174
  %229 = vmatprep.subr.bf16.mxu0 0
  %230 = vmatpush1.bf16.msra.mxu0 %v175
  %231 = vmatprep.subr.bf16.mxu0 0
  %232 = vmatpush1.bf16.msra.mxu0 %v176
  %233 = vmatprep.subr.bf16.mxu0 0
  %234 = vmatpush1.bf16.msra.mxu0 %v177
  %235 = vmatprep.subr.bf16.mxu0 0
  %236 = vmatpush1.bf16.msra.mxu0 %v178
  %237 = vmatprep.subr.bf16.mxu0 0
  %238 = vmatpush1.bf16.msra.mxu0 %v179
  %239 = vmatprep.mubr.bf16.mxu0 %v83
  %240 = vmatmul.mubr.bf16.gmra.mrb[0].mxu0 %v82
  %v241 = vpop.f32.mrb[0].mxu0
  %v242 = vadd.f32 0.0, %v241
  %v243 = vpop.f32.mrb[0].mxu0
  %v244 = vpop.f32.mrb[0].mxu0
  %v245 = vadd.f32 0.0, %v244
  %v246 = vpop.f32.mrb[0].mxu0
  %247 = vmatprep.mubr.bf16.mxu0 %v86
  %248 = vmatmul.mubr.bf16.gmra.mrb[0].mxu0 %v85
  %v249 = vpop.f32.mrb[0].mxu0
  %v250 = vadd.f32 0.0, %v249
  %v251 = vpop.f32.mrb[0].mxu0
  %v252 = vpop.f32.mrb[0].mxu0
  %v253 = vadd.f32 0.0, %v252
  %v254 = vpop.f32.mrb[0].mxu0
  %255 = vdwg.mxu0
  %256 = vmatprep.subr.bf16.mxu0 0
  %257 = vmatpush1.bf16.msra.mxu0 %v180
  %258 = vmatprep.subr.bf16.mxu0 0
  %259 = vmatpush1.bf16.msra.mxu0 %v181
  %260 = vmatprep.subr.bf16.mxu0 0
  %261 = vmatpush1.bf16.msra.mxu0 0
  %262 = vmatprep.subr.bf16.mxu0 0
  %263 = vmatpush1.bf16.msra.mxu0 0
  %264 = vmatprep.subr.bf16.mxu0 0
  %265 = vmatpush1.bf16.msra.mxu0 0
  %266 = vmatprep.subr.bf16.mxu0 0
  %267 = vmatpush1.bf16.msra.mxu0 0
  %268 = vmatprep.subr.bf16.mxu0 0
  %269 = vmatpush1.bf16.msra.mxu0 0
  %270 = vmatprep.subr.bf16.mxu0 0
  %271 = vmatpush1.bf16.msra.mxu0 0
  %272 = vmatprep.subr.bf16.mxu0 0
  %273 = vmatpush1.bf16.msra.mxu0 0
  %274 = vmatprep.subr.bf16.mxu0 0
  %275 = vmatpush1.bf16.msra.mxu0 0
  %276 = vmatprep.subr.bf16.mxu0 0
  %277 = vmatpush1.bf16.msra.mxu0 0
  %278 = vmatprep.subr.bf16.mxu0 0
  %279 = vmatpush1.bf16.msra.mxu0 0
  %280 = vmatprep.subr.bf16.mxu0 0
  %281 = vmatpush1.bf16.msra.mxu0 0
  %282 = vmatprep.subr.bf16.mxu0 0
  %283 = vmatpush1.bf16.msra.mxu0 0
  %284 = vmatprep.subr.bf16.mxu0 0
  %285 = vmatpush1.bf16.msra.mxu0 0
  %286 = vmatprep.subr.bf16.mxu0 0
  %287 = vmatpush1.bf16.msra.mxu0 0
  %288 = vmatprep.mubr.bf16.mxu0 0
  %289 = vmatmul.mubr.bf16.gmra.mrb[0].mxu0 %v202
  %v290 = vpop.f32.mrb[0].mxu0
  %v291 = vadd.f32 %v242, %v290
  %v292 = vpop.f32.mrb[0].mxu0
  %v293 = vpop.f32.mrb[0].mxu0
  %v294 = vadd.f32 %v245, %v293
  %v295 = vpop.f32.mrb[0].mxu0
  %296 = vmatprep.mubr.bf16.mxu0 0
  %297 = vmatmul.mubr.bf16.gmra.mrb[0].mxu0 %v205
  %v298 = vpop.f32.mrb[0].mxu0
  %v299 = vadd.f32 %v250, %v298
  %v300 = vpop.f32.mrb[0].mxu0
  %v301 = vpop.f32.mrb[0].mxu0
  %v302 = vadd.f32 %v253, %v301
  %v303 = vpop.f32.mrb[0].mxu0
  %304 = vdwg.mxu0
  %v305 = vld [vmem:[%s2] sm:$0x1]
  %v307 = vlaneseq
  %v308 = vshrl.u32 %v307, 7
  %v309 = vsub.s32 0, %v308
  %v310 = vrot.slane %v305, %v309
  %v312 = vmul.f32 %v291, %v310
  %v313 = vmul.f32 %v294, %v310
  %v314 = vmul.f32 %v299, %v310
  %v315 = vmul.f32 %v302, %v310
  %v316 = vld [vmem:[%s3] sm:$0x1]
  %v318 = vlaneseq
  %v319 = vshrl.u32 %v318, 7
  %v320 = vsub.s32 0, %v319
  %v321 = vrot.slane %v316, %v320
  %v323 = vadd.f32 %v312, %v321
  %v324 = vadd.f32 %v313, %v321
  %v325 = vadd.f32 %v314, %v321
  %v326 = vadd.f32 %v315, %v321
  %v327 = vmax.f32 %v323, 0.0
  %v328 = vmax.f32 %v324, 0.0
  %v329 = vmax.f32 %v325, 0.0
  %v330 = vmax.f32 %v326, 0.0
  %v331 = vpack.c.bf16 %v328, %v327
  %v332 = vpack.c.bf16 %v330, %v329
  %v335 = vunpack.c.l.b16 %v331
  %v336 = vunpack.c.h.b16 %v331
  %v337 = vunpack.c.l.b16 %v332
  %v338 = vunpack.c.h.b16 %v332
  %v339 = vpack.c.b16 %v335, %v335
  %v340 = vpack.c.b16 %v336, %v336
  %v341 = vpack.c.b16 %v337, %v337
  %v342 = vpack.c.b16 %v338, %v338
  %vm347 = vcmask 519168
  %348 = vst.msk [vmem:[%s4] sm:$0xf] %vm347, %v339
  %349 = vst.msk [vmem:[%s4 + $0x4] sm:$0xf] %vm347, %v340
  %350 = vst.msk [vmem:[%s4 + $0x8] sm:$0xf] %vm347, %v341
  %351 = vst.msk [vmem:[%s4 + $0xc] sm:$0xf] %vm347, %v342
  // Predicated region
  $region18: #{gan_critic_forward.39} parent=0 // pred_check
    _
  $region19: #{gan_critic_forward.39} parent=0 // pred_check_branch
    %353 = sbr.rel (0) target = $region21
  $region20: #{gan_critic_forward.39} parent=0 // pred_region
    _
  $region21: #{gan_critic_forward.39} parent=0 // pred_fallthru
    _
  // Predicated region
  $region22: #{gan_critic_forward.39} parent=0 // pred_check
    _
  $region23: #{gan_critic_forward.39} parent=0 // pred_check_branch
    %355 = sbr.rel (0) target = $region25
  $region24: #{gan_critic_forward.39} parent=0 // pred_region
    _
  $region25: #{gan_critic_forward.39} parent=0 // pred_fallthru
    _

// kernel: gan_critic_forward.40
$region0: #{gan_critic_forward.40}
  #allocation0 [shape = 'u32[]', space=smem, size = 0x4, offset = 0x4, fixed_abs, tag = 'smem constant byte address 0x4 - core index']
  #allocation1 [shape = 'u32[144,128]{1,0:T(1,128)}', space=vmem, size = 0x12000, scoped, tag = 'internal scratch']
  %s0 = inlined_call_operand.vmem [shape: bf16[32,32], index: 0, kind: input, shape index: {}]
  %s1 = inlined_call_operand.vmem [shape: bf16[32,64], index: 1, kind: input, shape index: {}]
  %s2 = inlined_call_operand.vmem [shape: f32[1,64], index: 2, kind: input, shape index: {}]
  %s3 = inlined_call_operand.vmem [shape: f32[1,64], index: 3, kind: input, shape index: {}]
  %s4 = inlined_call_operand.vmem [shape: bf16[32,64], index: 4, kind: output, shape index: {}]
  %s5 = sld [smem:[#allocation0]]
  $region26: #{gan_critic_forward.40} parent=0
    _
  %s7 = ssub.s32 1, %s5
  %s8 = scalar_select 0, %s7, %s5
  // Predicated region
  $region2: #{gan_critic_forward.40} parent=0 // pred_check
    _
  $region3: #{gan_critic_forward.40} parent=0 // pred_check_branch
    %10 = sbr.rel (0) target = $region5
  $region4: #{gan_critic_forward.40} parent=0 // pred_region
    _
  $region5: #{gan_critic_forward.40} parent=0 // pred_fallthru
    _
  // Predicated region
  $region6: #{gan_critic_forward.40} parent=0 // pred_check
    _
  $region7: #{gan_critic_forward.40} parent=0 // pred_check_branch
    %12 = sbr.rel (0) target = $region9
  $region8: #{gan_critic_forward.40} parent=0 // pred_region
    _
  $region9: #{gan_critic_forward.40} parent=0 // pred_fallthru
    _
  // Predicated region
  $region10: #{gan_critic_forward.40} parent=0 // pred_check
    _
  $region11: #{gan_critic_forward.40} parent=0 // pred_check_branch
    %14 = sbr.rel (0) target = $region13
  $region12: #{gan_critic_forward.40} parent=0 // pred_region
    _
  $region13: #{gan_critic_forward.40} parent=0 // pred_fallthru
    _
  // Predicated region
  $region14: #{gan_critic_forward.40} parent=0 // pred_check
    _
  $region15: #{gan_critic_forward.40} parent=0 // pred_check_branch
    %16 = sbr.rel (0) target = $region17
  $region16: #{gan_critic_forward.40} parent=0 // pred_region
    _
  $region17: #{gan_critic_forward.40} parent=0 // pred_fallthru
    _
  %v18 = vld [vmem:[%s0] sm:$0xf]
  %v19 = vld [vmem:[%s0 + $0x4] sm:$0xf]
  %v20 = vld [vmem:[%s0 + $0x8] sm:$0xf]
  %v21 = vld [vmem:[%s0 + $0xc] sm:$0xf]
  %v22 = vld [vmem:[%s1] sm:$0xf]
  %v23 = vld [vmem:[%s1 + $0x4] sm:$0xf]
  %v24 = vld [vmem:[%s1 + $0x8] sm:$0xf]
  %v25 = vld [vmem:[%s1 + $0xc] sm:$0xf]
  %v30 = vunpack.c.l.b16 %v18
  %v31 = vunpack.c.l.b16 %v19
  %v32 = vunpack.c.l.b16 %v20
  %v33 = vunpack.c.l.b16 %v21
  %v34 = vpack.c.b16 %v31, %v30
  %v35 = vpack.c.b16 %v33, %v32
  %v40 = vunpack.c.l.b16 %v22
  %v41 = vunpack.c.l.b16 %v23
  %v42 = vunpack.c.l.b16 %v24
  %v43 = vunpack.c.l.b16 %v25
  %v44 = vpack.c.b16 %v41, %v40
  %v45 = vpack.c.b16 %v43, %v42
  %vm48 = vcmask 261120
  %v50 = vsel %vm48, %v34, 0
  %v53 = vsel %vm48, %v35, 0
  %55 = vmatprep.subr.bf16.mxu0 0
  %56 = vmatpush1.bf16.msra.mxu0 %v44
  %57 = vmatprep.subr.bf16.mxu0 0
  %58 = vmatpush1.bf16.msra.mxu0 %v45
  %59 = vmatprep.subr.bf16.mxu0 0
  %60 = vmatpush1.bf16.msra.mxu0 0
  %61 = vmatprep.subr.bf16.mxu0 0
  %62 = vmatpush1.bf16.msra.mxu0 0
  %63 = vmatprep.subr.bf16.mxu0 0
  %64 = vmatpush1.bf16.msra.mxu0 0
  %65 = vmatprep.subr.bf16.mxu0 0
  %66 = vmatpush1.bf16.msra.mxu0 0
  %67 = vmatprep.subr.bf16.mxu0 0
  %68 = vmatpush1.bf16.msra.mxu0 0
  %69 = vmatprep.subr.bf16.mxu0 0
  %70 = vmatpush1.bf16.msra.mxu0 0
  %71 = vmatprep.subr.bf16.mxu0 0
  %72 = vmatpush1.bf16.msra.mxu0 0
  %73 = vmatprep.subr.bf16.mxu0 0
  %74 = vmatpush1.bf16.msra.mxu0 0
  %75 = vmatprep.subr.bf16.mxu0 0
  %76 = vmatpush1.bf16.msra.mxu0 0
  %77 = vmatprep.subr.bf16.mxu0 0
  %78 = vmatpush1.bf16.msra.mxu0 0
  %79 = vmatprep.subr.bf16.mxu0 0
  %80 = vmatpush1.bf16.msra.mxu0 0
  %81 = vmatprep.subr.bf16.mxu0 0
  %82 = vmatpush1.bf16.msra.mxu0 0
  %83 = vmatprep.subr.bf16.mxu0 0
  %84 = vmatpush1.bf16.msra.mxu0 0
  %85 = vmatprep.subr.bf16.mxu0 0
  %86 = vmatpush1.bf16.msra.mxu0 0
  %87 = vmatprep.mubr.bf16.mxu0 0
  %88 = vmatmul.mubr.bf16.gmra.mrb[0].mxu0 %v50
  %v89 = vpop.f32.mrb[0].mxu0
  %v90 = vadd.f32 0.0, %v89
  %v91 = vpop.f32.mrb[0].mxu0
  %v92 = vpop.f32.mrb[0].mxu0
  %v93 = vadd.f32 0.0, %v92
  %v94 = vpop.f32.mrb[0].mxu0
  %95 = vmatprep.mubr.bf16.mxu0 0
  %96 = vmatmul.mubr.bf16.gmra.mrb[0].mxu0 %v53
  %v97 = vpop.f32.mrb[0].mxu0
  %v98 = vadd.f32 0.0, %v97
  %v99 = vpop.f32.mrb[0].mxu0
  %v100 = vpop.f32.mrb[0].mxu0
  %v101 = vadd.f32 0.0, %v100
  %v102 = vpop.f32.mrb[0].mxu0
  %103 = vdwg.mxu0
  %v104 = vld [vmem:[%s2] sm:$0x1]
  %v106 = vlaneseq
  %v107 = vshrl.u32 %v106, 7
  %v108 = vsub.s32 0, %v107
  %v109 = vrot.slane %v104, %v108
  %v111 = vmul.f32 %v90, %v109
  %v112 = vmul.f32 %v93, %v109
  %v113 = vmul.f32 %v98, %v109
  %v114 = vmul.f32 %v101, %v109
  %v115 = vld [vmem:[%s3] sm:$0x1]
  %v117 = vlaneseq
  %v118 = vshrl.u32 %v117, 7
  %v119 = vsub.s32 0, %v118
  %v120 = vrot.slane %v115, %v119
  %v122 = vadd.f32 %v111, %v120
  %v123 = vadd.f32 %v112, %v120
  %v124 = vadd.f32 %v113, %v120
  %v125 = vadd.f32 %v114, %v120
  %v126 = vpack.c.bf16 %v123, %v122
  %v127 = vpack.c.bf16 %v125, %v124
  %v130 = vunpack.c.l.b16 %v126
  %v131 = vunpack.c.h.b16 %v126
  %v132 = vunpack.c.l.b16 %v127
  %v133 = vunpack.c.h.b16 %v127
  %v134 = vpack.c.b16 %v130, %v130
  %v135 = vpack.c.b16 %v131, %v131
  %v136 = vpack.c.b16 %v132, %v132
  %v137 = vpack.c.b16 %v133, %v133
  %vm142 = vcmask 519168
  %143 = vst.msk [vmem:[%s4] sm:$0xf] %vm142, %v134
  %144 = vst.msk [vmem:[%s4 + $0x4] sm:$0xf] %vm142, %v135
  %145 = vst.msk [vmem:[%s4 + $0x8] sm:$0xf] %vm142, %v136
  %146 = vst.msk [vmem:[%s4 + $0xc] sm:$0xf] %vm142, %v137
  // Predicated region
  $region18: #{gan_critic_forward.40} parent=0 // pred_check
    _
  $region19: #{gan_critic_forward.40} parent=0 // pred_check_branch
    %148 = sbr.rel (0) target = $region21
  $region20: #{gan_critic_forward.40} parent=0 // pred_region
    _
  $region21: #{gan_critic_forward.40} parent=0 // pred_fallthru
    _
  // Predicated region
  $region22: #{gan_critic_forward.40} parent=0 // pred_check
    _
  $region23: #{gan_critic_forward.40} parent=0 // pred_check_branch
    %150 = sbr.rel (0) target = $region25
  $region24: #{gan_critic_forward.40} parent=0 // pred_region
    _
  $region25: #{gan_critic_forward.40} parent=0 // pred_fallthru
    _

// kernel: gan_critic_forward.41
$region0: #{gan_critic_forward.41}
  #allocation0 [shape = 'u32[]', space=smem, size = 0x4, offset = 0x4, fixed_abs, tag = 'smem constant byte address 0x4 - core index']
  #allocation1 [shape = 'u32[144,128]{1,0:T(1,128)}', space=vmem, size = 0x12000, scoped, tag = 'internal scratch']
  %s0 = inlined_call_operand.vmem [shape: bf16[32,576], index: 0, kind: input, shape index: {}]
  %s1 = inlined_call_operand.vmem [shape: bf16[576,64], index: 1, kind: input, shape index: {}]
  %s2 = inlined_call_operand.vmem [shape: f32[1,64], index: 2, kind: input, shape index: {}]
  %s3 = inlined_call_operand.vmem [shape: f32[1,64], index: 3, kind: input, shape index: {}]
  %s4 = inlined_call_operand.vmem [shape: bf16[32,64], index: 4, kind: input, shape index: {}]
  %s5 = inlined_call_operand.vmem [shape: bf16[32,64], index: 5, kind: output, shape index: {}]
  %s6 = sld [smem:[#allocation0]]
  $region30: #{gan_critic_forward.41} parent=0
    _
  %s8 = ssub.s32 1, %s6
  %s9 = scalar_select 0, %s8, %s6
  // Predicated region
  $region2: #{gan_critic_forward.41} parent=0 // pred_check
    _
  $region3: #{gan_critic_forward.41} parent=0 // pred_check_branch
    %11 = sbr.rel (0) target = $region5
  $region4: #{gan_critic_forward.41} parent=0 // pred_region
    _
  $region5: #{gan_critic_forward.41} parent=0 // pred_fallthru
    _
  // Predicated region
  $region6: #{gan_critic_forward.41} parent=0 // pred_check
    _
  $region7: #{gan_critic_forward.41} parent=0 // pred_check_branch
    %13 = sbr.rel (0) target = $region9
  $region8: #{gan_critic_forward.41} parent=0 // pred_region
    _
  $region9: #{gan_critic_forward.41} parent=0 // pred_fallthru
    _
  // Predicated region
  $region10: #{gan_critic_forward.41} parent=0 // pred_check
    _
  $region11: #{gan_critic_forward.41} parent=0 // pred_check_branch
    %15 = sbr.rel (0) target = $region13
  $region12: #{gan_critic_forward.41} parent=0 // pred_region
    _
  $region13: #{gan_critic_forward.41} parent=0 // pred_fallthru
    _
  // Predicated region
  $region14: #{gan_critic_forward.41} parent=0 // pred_check
    _
  $region15: #{gan_critic_forward.41} parent=0 // pred_check_branch
    %17 = sbr.rel (0) target = $region17
  $region16: #{gan_critic_forward.41} parent=0 // pred_region
    _
  $region17: #{gan_critic_forward.41} parent=0 // pred_fallthru
    _
  // Predicated region
  $region18: #{gan_critic_forward.41} parent=0 // pred_check
    _
  $region19: #{gan_critic_forward.41} parent=0 // pred_check_branch
    %19 = sbr.rel (0) target = $region21
  $region20: #{gan_critic_forward.41} parent=0 // pred_region
    _
  $region21: #{gan_critic_forward.41} parent=0 // pred_fallthru
    _
  %v21 = vld [vmem:[%s0] sm:$0xff]
  %v22 = vld [vmem:[%s0 + $0x8] sm:$0xff]
  %v23 = vld [vmem:[%s0 + $0x10] sm:$0xf]
  %v24 = vld [vmem:[%s0 + $0x14] sm:$0xff]
  %v25 = vld [vmem:[%s0 + $0x1c] sm:$0xff]
  %v26 = vld [vmem:[%s0 + $0x24] sm:$0xf]
  %v27 = vld [vmem:[%s0 + $0x28] sm:$0xff]
  %v28 = vld [vmem:[%s0 + $0x30] sm:$0xff]
  %v29 = vld [vmem:[%s0 + $0x38] sm:$0xf]
  %v30 = vld [vmem:[%s0 + $0x3c] sm:$0xff]
  %v31 = vld [vmem:[%s0 + $0x44] sm:$0xff]
  %v32 = vld [vmem:[%s0 + $0x4c] sm:$0xf]
  %v33 = vld [vmem:[%s1] sm:$0xf]
  %v34 = vld [vmem:[%s1 + $0x4] sm:$0xf]
  %v35 = vld [vmem:[%s1 + $0x8] sm:$0xf]
  %v36 = vld [vmem:[%s1 + $0xc] sm:$0xf]
  %v37 = vld [vmem:[%s1 + $0x10] sm:$0xf]
  %v38 = vld [vmem:[%s1 + $0x14] sm:$0xf]
  %v39 = vld [vmem:[%s1 + $0x18] sm:$0xf]
  %v40 = vld [vmem:[%s1 + $0x1c] sm:$0xf]
  %v41 = vld [vmem:[%s1 + $0x20] sm:$0xf]
  %v42 = vld [vmem:[%s1 + $0x24] sm:$0xf]
  %v43 = vld [vmem:[%s1 + $0x28] sm:$0xf]
  %v44 = vld [vmem:[%s1 + $0x2c] sm:$0xf]
  %v45 = vld [vmem:[%s1 + $0x30] sm:$0xf]
  %v46 = vld [vmem:[%s1 + $0x34] sm:$0xf]
  %v47 = vld [vmem:[%s1 + $0x38] sm:$0xf]
  %v48 = vld [vmem:[%s1 + $0x3c] sm:$0xf]
  %v49 = vld [vmem:[%s1 + $0x40] sm:$0xf]
  %v50 = vld [vmem:[%s1 + $0x44] sm:$0xf]
  %v51 = vld [vmem:[%s1 + $0x48] sm:$0xf]
  %v52 = vld [vmem:[%s1 + $0x4c] sm:$0xf]
  %v53 = vld [vmem:[%s1 + $0x50] sm:$0xf]
  %v54 = vld [vmem:[%s1 + $0x54] sm:$0xf]
  %v55 = vld [vmem:[%s1 + $0x58] sm:$0xf]
  %v56 = vld [vmem:[%s1 + $0x5c] sm:$0xf]
  %v57 = vld [vmem:[%s1 + $0x60] sm:$0xf]
  %v58 = vld [vmem:[%s1 + $0x64] sm:$0xf]
  %v59 = vld [vmem:[%s1 + $0x68] sm:$0xf]
  %v60 = vld [vmem:[%s1 + $0x6c] sm:$0xf]
  %v61 = vld [vmem:[%s1 + $0x70] sm:$0xf]
  %v62 = vld [vmem:[%s1 + $0x74] sm:$0xf]
  %v63 = vld [vmem:[%s1 + $0x78] sm:$0xf]
  %v64 = vld [vmem:[%s1 + $0x7c] sm:$0xf]
  %v65 = vld [vmem:[%s1 + $0x80] sm:$0xf]
  %v66 = vld [vmem:[%s1 + $0x84] sm:$0xf]
  %v67 = vld [vmem:[%s1 + $0x88] sm:$0xf]
  %v68 = vld [vmem:[%s1 + $0x8c] sm:$0xf]
  %v69 = vld [vmem:[%s1 + $0x90] sm:$0xf]
  %v70 = vld [vmem:[%s1 + $0x94] sm:$0xf]
  %v71 = vld [vmem:[%s1 + $0x98] sm:$0xf]
  %v72 = vld [vmem:[%s1 + $0x9c] sm:$0xf]
  %v73 = vld [vmem:[%s1 + $0xa0] sm:$0xf]
  %v74 = vld [vmem:[%s1 + $0xa4] sm:$0xf]
  %v75 = vld [vmem:[%s1 + $0xa8] sm:$0xf]
  %v76 = vld [vmem:[%s1 + $0xac] sm:$0xf]
  %v77 = vld [vmem:[%s1 + $0xb0] sm:$0xf]
  %v78 = vld [vmem:[%s1 + $0xb4] sm:$0xf]
  %v79 = vld [vmem:[%s1 + $0xb8] sm:$0xf]
  %v80 = vld [vmem:[%s1 + $0xbc] sm:$0xf]
  %v81 = vld [vmem:[%s1 + $0xc0] sm:$0xf]
  %v82 = vld [vmem:[%s1 + $0xc4] sm:$0xf]
  %v83 = vld [vmem:[%s1 + $0xc8] sm:$0xf]
  %v84 = vld [vmem:[%s1 + $0xcc] sm:$0xf]
  %v85 = vld [vmem:[%s1 + $0xd0] sm:$0xf]
  %v86 = vld [vmem:[%s1 + $0xd4] sm:$0xf]
  %v87 = vld [vmem:[%s1 + $0xd8] sm:$0xf]
  %v88 = vld [vmem:[%s1 + $0xdc] sm:$0xf]
  %v89 = vld [vmem:[%s1 + $0xe0] sm:$0xf]
  %v90 = vld [vmem:[%s1 + $0xe4] sm:$0xf]
  %v91 = vld [vmem:[%s1 + $0xe8] sm:$0xf]
  %v92 = vld [vmem:[%s1 + $0xec] sm:$0xf]
  %v93 = vld [vmem:[%s1 + $0xf0] sm:$0xf]
  %v94 = vld [vmem:[%s1 + $0xf4] sm:$0xf]
  %v95 = vld [vmem:[%s1 + $0xf8] sm:$0xf]
  %v96 = vld [vmem:[%s1 + $0xfc] sm:$0xf]
  %v97 = vld [vmem:[%s1 + $0x100] sm:$0xf]
  %v98 = vld [vmem:[%s1 + $0x104] sm:$0xf]
  %v99 = vld [vmem:[%s1 + $0x108] sm:$0xf]
  %v100 = vld [vmem:[%s1 + $0x10c] sm:$0xf]
  %v101 = vld [vmem:[%s1 + $0x110] sm:$0xf]
  %v102 = vld [vmem:[%s1 + $0x114] sm:$0xf]
  %v103 = vld [vmem:[%s1 + $0x118] sm:$0xf]
  %v104 = vld [vmem:[%s1 + $0x11c] sm:$0xf]
  %v117 = vunpack.c.l.b16 %v21
  %v118 = vunpack.c.h.b16 %v21
  %v119 = vunpack.c.l.b16 %v22
  %v120 = vunpack.c.h.b16 %v22
  %v121 = vunpack.c.l.b16 %v23
  %v122 = vunpack.c.l.b16 %v24
  %v123 = vunpack.c.h.b16 %v24
  %v124 = vunpack.c.l.b16 %v25
  %v125 = vunpack.c.h.b16 %v25
  %v126 = vunpack.c.l.b16 %v26
  %v127 = vunpack.c.l.b16 %v27
  %v128 = vunpack.c.h.b16 %v27
  %v129 = vunpack.c.l.b16 %v28
  %v130 = vunpack.c.h.b16 %v28
  %v131 = vunpack.c.l.b16 %v29
  %v132 = vunpack.c.l.b16 %v30
  %v133 = vunpack.c.h.b16 %v30
  %v134 = vunpack.c.l.b16 %v31
  %v135 = vunpack.c.h.b16 %v31
  %v136 = vunpack.c.l.b16 %v32
  %v137 = vpack.c.b16 %v122, %v117
  %v138 = vpack.c.b16 %v123, %v118
  %v139 = vpack.c.b16 %v124, %v119
  %v140 = vpack.c.b16 %v125, %v120
  %v141 = vpack.c.b16 %v126, %v121
  %v142 = vpack.c.b16 %v132, %v127
  %v143 = vpack.c.b16 %v133, %v128
  %v144 = vpack.c.b16 %v134, %v129
  %v145 = vpack.c.b16 %v135, %v130
  %v146 = vpack.c.b16 %v136, %v131
  %v227 = vunpack.c.l.b16 %v33
  %v228 = vunpack.c.l.b16 %v34
  %v229 = vunpack.c.l.b16 %v35
  %v230 = vunpack.c.l.b16 %v36
  %v231 = vunpack.c.l.b16 %v37
  %v232 = vunpack.c.l.b16 %v38
  %v233 = vunpack.c.l.b16 %v39
  %v234 = vunpack.c.l.b16 %v40
  %v235 = vunpack.c.l.b16 %v41
  %v236 = vunpack.c.l.b16 %v42
  %v237 = vunpack.c.l.b16 %v43
  %v238 = vunpack.c.l.b16 %v44
  %v239 = vunpack.c.l.b16 %v45
  %v240 = vunpack.c.l.b16 %v46
  %v241 = vunpack.c.l.b16 %v47
  %v242 = vunpack.c.l.b16 %v48
  %v243 = vunpack.c.l.b16 %v49
  %v244 = vunpack.c.l.b16 %v50
  %v245 = vunpack.c.l.b16 %v51
  %v246 = vunpack.c.l.b16 %v52
  %v247 = vunpack.c.l.b16 %v53
  %v248 = vunpack.c.l.b16 %v54
  %v249 = vunpack.c.l.b16 %v55
  %v250 = vunpack.c.l.b16 %v56
  %v251 = vunpack.c.l.b16 %v57
  %v252 = vunpack.c.l.b16 %v58
  %v253 = vunpack.c.l.b16 %v59
  %v254 = vunpack.c.l.b16 %v60
  %v255 = vunpack.c.l.b16 %v61
  %v256 = vunpack.c.l.b16 %v62
  %v257 = vunpack.c.l.b16 %v63
  %v258 = vunpack.c.l.b16 %v64
  %v259 = vunpack.c.l.b16 %v65
  %v260 = vunpack.c.l.b16 %v66
  %v261 = vunpack.c.l.b16 %v67
  %v262 = vunpack.c.l.b16 %v68
  %v263 = vunpack.c.l.b16 %v69
  %v264 = vunpack.c.l.b16 %v70
  %v265 = vunpack.c.l.b16 %v71
  %v266 = vunpack.c.l.b16 %v72
  %v267 = vunpack.c.l.b16 %v73
  %v268 = vunpack.c.l.b16 %v74
  %v269 = vunpack.c.l.b16 %v75
  %v270 = vunpack.c.l.b16 %v76
  %v271 = vunpack.c.l.b16 %v77
  %v272 = vunpack.c.l.b16 %v78
  %v273 = vunpack.c.l.b16 %v79
  %v274 = vunpack.c.l.b16 %v80
  %v275 = vunpack.c.l.b16 %v81
  %v276 = vunpack.c.l.b16 %v82
  %v277 = vunpack.c.l.b16 %v83
  %v278 = vunpack.c.l.b16 %v84
  %v279 = vunpack.c.l.b16 %v85
  %v280 = vunpack.c.l.b16 %v86
  %v281 = vunpack.c.l.b16 %v87
  %v282 = vunpack.c.l.b16 %v88
  %v283 = vunpack.c.l.b16 %v89
  %v284 = vunpack.c.l.b16 %v90
  %v285 = vunpack.c.l.b16 %v91
  %v286 = vunpack.c.l.b16 %v92
  %v287 = vunpack.c.l.b16 %v93
  %v288 = vunpack.c.l.b16 %v94
  %v289 = vunpack.c.l.b16 %v95
  %v290 = vunpack.c.l.b16 %v96
  %v291 = vunpack.c.l.b16 %v97
  %v292 = vunpack.c.l.b16 %v98
  %v293 = vunpack.c.l.b16 %v99
  %v294 = vunpack.c.l.b16 %v100
  %v295 = vunpack.c.l.b16 %v101
  %v296 = vunpack.c.l.b16 %v102
  %v297 = vunpack.c.l.b16 %v103
  %v298 = vunpack.c.l.b16 %v104
  %v299 = vpack.c.b16 %v228, %v227
  %v300 = vpack.c.b16 %v230, %v229
  %v301 = vpack.c.b16 %v232, %v231
  %v302 = vpack.c.b16 %v234, %v233
  %v303 = vpack.c.b16 %v236, %v235
  %v304 = vpack.c.b16 %v238, %v237
  %v305 = vpack.c.b16 %v240, %v239
  %v306 = vpack.c.b16 %v242, %v241
  %v307 = vpack.c.b16 %v244, %v243
  %v308 = vpack.c.b16 %v246, %v245
  %v309 = vpack.c.b16 %v248, %v247
  %v310 = vpack.c.b16 %v250, %v249
  %v311 = vpack.c.b16 %v252, %v251
  %v312 = vpack.c.b16 %v254, %v253
  %v313 = vpack.c.b16 %v256, %v255
  %v314 = vpack.c.b16 %v258, %v257
  %v315 = vpack.c.b16 %v260, %v259
  %v316 = vpack.c.b16 %v262, %v261
  %v317 = vpack.c.b16 %v264, %v263
  %v318 = vpack.c.b16 %v266, %v265
  %v319 = vpack.c.b16 %v268, %v267
  %v320 = vpack.c.b16 %v270, %v269
  %v321 = vpack.c.b16 %v272, %v271
  %v322 = vpack.c.b16 %v274, %v273
  %v323 = vpack.c.b16 %v276, %v275
  %v324 = vpack.c.b16 %v278, %v277
  %v325 = vpack.c.b16 %v280, %v279
  %v326 = vpack.c.b16 %v282, %v281
  %v327 = vpack.c.b16 %v284, %v283
  %v328 = vpack.c.b16 %v286, %v285
  %v329 = vpack.c.b16 %v288, %v287
  %v330 = vpack.c.b16 %v290, %v289
  %v331 = vpack.c.b16 %v292, %v291
  %v332 = vpack.c.b16 %v294, %v293
  %v333 = vpack.c.b16 %v296, %v295
  %v334 = vpack.c.b16 %v298, %v297
  %vm371 = vcmask 523264
  %v373 = vsel %vm371, %v141, 0
  %v376 = vsel %vm371, %v146, 0
  %378 = vmatprep.subr.bf16.mxu0 0
  %379 = vmatpush1.bf16.msra.mxu0 %v299
  %380 = vmatprep.subr.bf16.mxu0 0
  %381 = vmatpush1.bf16.msra.mxu0 %v300
  %382 = vmatprep.subr.bf16.mxu0 0
  %383 = vmatpush1.bf16.msra.mxu0 %v301
  %384 = vmatprep.subr.bf16.mxu0 0
  %385 = vmatpush1.bf16.msra.mxu0 %v302
  %386 = vmatprep.subr.bf16.mxu0 0
  %387 = vmatpush1.bf16.msra.mxu0 %v303
  %388 = vmatprep.subr.bf16.mxu0 0
  %389 = vmatpush1.bf16.msra.mxu0 %v304
  %390 = vmatprep.subr.bf16.mxu0 0
  %391 = vmatpush1.bf16.msra.mxu0 %v305
  %392 = vmatprep.subr.bf16.mxu0 0
  %393 = vmatpush1.bf16.msra.mxu0 %v306
  %394 = vmatprep.subr.bf16.mxu0 0
  %395 = vmatpush1.bf16.msra.mxu0 %v307
  %396 = vmatprep.subr.bf16.mxu0 0
  %397 = vmatpush1.bf16.msra.mxu0 %v308
  %398 = vmatprep.subr.bf16.mxu0 0
  %399 = vmatpush1.bf16.msra.mxu0 %v309
  %400 = vmatprep.subr.bf16.mxu0 0
  %401 = vmatpush1.bf16.msra.mxu0 %v310
  %402 = vmatprep.subr.bf16.mxu0 0
  %403 = vmatpush1.bf16.msra.mxu0 %v311
  %404 = vmatprep.subr.bf16.mxu0 0
  %405 = vmatpush1.bf16.msra.mxu0 %v312
  %406 = vmatprep.subr.bf16.mxu0 0
  %407 = vmatpush1.bf16.msra.mxu0 %v313
  %408 = vmatprep.subr.bf16.mxu0 0
  %409 = vmatpush1.bf16.msra.mxu0 %v314
  %410 = vmatprep.mubr.bf16.mxu0 %v138
  %411 = vmatmul.mubr.bf16.gmra.mrb[0].mxu0 %v137
  %v412 = vpop.f32.mrb[0].mxu0
  %v413 = vadd.f32 0.0, %v412
  %v414 = vpop.f32.mrb[0].mxu0
  %v415 = vpop.f32.mrb[0].mxu0
  %v416 = vadd.f32 0.0, %v415
  %v417 = vpop.f32.mrb[0].mxu0
  %418 = vmatprep.mubr.bf16.mxu0 %v143
  %419 = vmatmul.mubr.bf16.gmra.mrb[0].mxu0 %v142
  %v420 = vpop.f32.mrb[0].mxu0
  %v421 = vadd.f32 0.0, %v420
  %v422 = vpop.f32.mrb[0].mxu0
  %v423 = vpop.f32.mrb[0].mxu0
  %v424 = vadd.f32 0.0, %v423
  %v425 = vpop.f32.mrb[0].mxu0
  %426 = vdwg.mxu0
  %427 = vmatprep.subr.bf16.mxu0 0
  %428 = vmatpush1.bf16.msra.mxu0 %v315
  %429 = vmatprep.subr.bf16.mxu0 0
  %430 = vmatpush1.bf16.msra.mxu0 %v316
  %431 = vmatprep.subr.bf16.mxu0 0
  %432 = vmatpush1.bf16.msra.mxu0 %v317
  %433 = vmatprep.subr.bf16.mxu0 0
  %434 = vmatpush1.bf16.msra.mxu0 %v318
  %435 = vmatprep.subr.bf16.mxu0 0
  %436 = vmatpush1.bf16.msra.mxu0 %v319
  %437 = vmatprep.subr.bf16.mxu0 0
  %438 = vmatpush1.bf16.msra.mxu0 %v320
  %439 = vmatprep.subr.bf16.mxu0 0
  %440 = vmatpush1.bf16.msra.mxu0 %v321
  %441 = vmatprep.subr.bf16.mxu0 0
  %442 = vmatpush1.bf16.msra.mxu0 %v322
  %443 = vmatprep.subr.bf16.mxu0 0
  %444 = vmatpush1.bf16.msra.mxu0 %v323
  %445 = vmatprep.subr.bf16.mxu0 0
  %446 = vmatpush1.bf16.msra.mxu0 %v324
  %447 = vmatprep.subr.bf16.mxu0 0
  %448 = vmatpush1.bf16.msra.mxu0 %v325
  %449 = vmatprep.subr.bf16.mxu0 0
  %450 = vmatpush1.bf16.msra.mxu0 %v326
  %451 = vmatprep.subr.bf16.mxu0 0
  %452 = vmatpush1.bf16.msra.mxu0 %v327
  %453 = vmatprep.subr.bf16.mxu0 0
  %454 = vmatpush1.bf16.msra.mxu0 %v328
  %455 = vmatprep.subr.bf16.mxu0 0
  %456 = vmatpush1.bf16.msra.mxu0 %v329
  %457 = vmatprep.subr.bf16.mxu0 0
  %458 = vmatpush1.bf16.msra.mxu0 %v330
  %459 = vmatprep.mubr.bf16.mxu0 %v140
  %460 = vmatmul.mubr.bf16.gmra.mrb[0].mxu0 %v139
  %v461 = vpop.f32.mrb[0].mxu0
  %v462 = vadd.f32 %v413, %v461
  %v463 = vpop.f32.mrb[0].mxu0
  %v464 = vpop.f32.mrb[0].mxu0
  %v465 = vadd.f32 %v416, %v464
  %v466 = vpop.f32.mrb[0].mxu0
  %467 = vmatprep.mubr.bf16.mxu0 %v145
  %468 = vmatmul.mubr.bf16.gmra.mrb[0].mxu0 %v144
  %v469 = vpop.f32.mrb[0].mxu0
  %v470 = vadd.f32 %v421, %v469
  %v471 = vpop.f32.mrb[0].mxu0
  %v472 = vpop.f32.mrb[0].mxu0
  %v473 = vadd.f32 %v424, %v472
  %v474 = vpop.f32.mrb[0].mxu0
  %475 = vdwg.mxu0
  %476 = vmatprep.subr.bf16.mxu0 0
  %477 = vmatpush1.bf16.msra.mxu0 %v331
  %478 = vmatprep.subr.bf16.mxu0 0
  %479 = vmatpush1.bf16.msra.mxu0 %v332
  %480 = vmatprep.subr.bf16.mxu0 0
  %481 = vmatpush1.bf16.msra.mxu0 %v333
  %482 = vmatprep.subr.bf16.mxu0 0
  %483 = vmatpush1.bf16.msra.mxu0 %v334
  %484 = vmatprep.subr.bf16.mxu0 0
  %485 = vmatpush1.bf16.msra.mxu0 0
  %486 = vmatprep.subr.bf16.mxu0 0
  %487 = vmatpush1.bf16.msra.mxu0 0
  %488 = vmatprep.subr.bf16.mxu0 0
  %489 = vmatpush1.bf16.msra.mxu0 0
  %490 = vmatprep.subr.bf16.mxu0 0
  %491 = vmatpush1.bf16.msra.mxu0 0
  %492 = vmatprep.subr.bf16.mxu0 0
  %493 = vmatpush1.bf16.msra.mxu0 0
  %494 = vmatprep.subr.bf16.mxu0 0
  %495 = vmatpush1.bf16.msra.mxu0 0
  %496 = vmatprep.subr.bf16.mxu0 0
  %497 = vmatpush1.bf16.msra.mxu0 0
  %498 = vmatprep.subr.bf16.mxu0 0
  %499 = vmatpush1.bf16.msra.mxu0 0
  %500 = vmatprep.subr.bf16.mxu0 0
  %501 = vmatpush1.bf16.msra.mxu0 0
  %502 = vmatprep.subr.bf16.mxu0 0
  %503 = vmatpush1.bf16.msra.mxu0 0
  %504 = vmatprep.subr.bf16.mxu0 0
  %505 = vmatpush1.bf16.msra.mxu0 0
  %506 = vmatprep.subr.bf16.mxu0 0
  %507 = vmatpush1.bf16.msra.mxu0 0
  %508 = vmatprep.mubr.bf16.mxu0 0
  %509 = vmatmul.mubr.bf16.gmra.mrb[0].mxu0 %v373
  %v510 = vpop.f32.mrb[0].mxu0
  %v511 = vadd.f32 %v462, %v510
  %v512 = vpop.f32.mrb[0].mxu0
  %v513 = vpop.f32.mrb[0].mxu0
  %v514 = vadd.f32 %v465, %v513
  %v515 = vpop.f32.mrb[0].mxu0
  %516 = vmatprep.mubr.bf16.mxu0 0
  %517 = vmatmul.mubr.bf16.gmra.mrb[0].mxu0 %v376
  %v518 = vpop.f32.mrb[0].mxu0
  %v519 = vadd.f32 %v470, %v518
  %v520 = vpop.f32.mrb[0].mxu0
  %v521 = vpop.f32.mrb[0].mxu0
  %v522 = vadd.f32 %v473, %v521
  %v523 = vpop.f32.mrb[0].mxu0
  %524 = vdwg.mxu0
  %v525 = vld [vmem:[%s2] sm:$0x1]
  %v527 = vlaneseq
  %v528 = vshrl.u32 %v527, 7
  %v529 = vsub.s32 0, %v528
  %v530 = vrot.slane %v525, %v529
  %v532 = vmul.f32 %v511, %v530
  %v533 = vmul.f32 %v514, %v530
  %v534 = vmul.f32 %v519, %v530
  %v535 = vmul.f32 %v522, %v530
  %v536 = vld [vmem:[%s3] sm:$0x1]
  %v538 = vlaneseq
  %v539 = vshrl.u32 %v538, 7
  %v540 = vsub.s32 0, %v539
  %v541 = vrot.slane %v536, %v540
  %v543 = vadd.f32 %v532, %v541
  %v544 = vadd.f32 %v533, %v541
  %v545 = vadd.f32 %v534, %v541
  %v546 = vadd.f32 %v535, %v541
  %v547 = vld [vmem:[%s4] sm:$0xf]
  %v548 = vld [vmem:[%s4 + $0x4] sm:$0xf]
  %v549 = vld [vmem:[%s4 + $0x8] sm:$0xf]
  %v550 = vld [vmem:[%s4 + $0xc] sm:$0xf]
  %v551 = vunpack.c.l.bf16 %v547
  %v552 = vunpack.c.l.bf16 %v548
  %v553 = vunpack.c.l.bf16 %v549
  %v554 = vunpack.c.l.bf16 %v550
  %v555 = vadd.f32 %v543, %v551
  %v556 = vadd.f32 %v544, %v552
  %v557 = vadd.f32 %v545, %v553
  %v558 = vadd.f32 %v546, %v554
  %v559 = vmax.f32 %v555, 0.0
  %v560 = vmax.f32 %v556, 0.0
  %v561 = vmax.f32 %v557, 0.0
  %v562 = vmax.f32 %v558, 0.0
  %v563 = vpack.c.bf16 %v560, %v559
  %v564 = vpack.c.bf16 %v562, %v561
  %v567 = vunpack.c.l.b16 %v563
  %v568 = vunpack.c.h.b16 %v563
  %v569 = vunpack.c.l.b16 %v564
  %v570 = vunpack.c.h.b16 %v564
  %v571 = vpack.c.b16 %v567, %v567
  %v572 = vpack.c.b16 %v568, %v568
  %v573 = vpack.c.b16 %v569, %v569
  %v574 = vpack.c.b16 %v570, %v570
  %vm579 = vcmask 519168
  %580 = vst.msk [vmem:[%s5] sm:$0xf] %vm579, %v571
  %581 = vst.msk [vmem:[%s5 + $0x4] sm:$0xf] %vm579, %v572
  %582 = vst.msk [vmem:[%s5 + $0x8] sm:$0xf] %vm579, %v573
  %583 = vst.msk [vmem:[%s5 + $0xc] sm:$0xf] %vm579, %v574
  // Predicated region
  $region22: #{gan_critic_forward.41} parent=0 // pred_check
    _
  $region23: #{gan_critic_forward.41} parent=0 // pred_check_branch
    %585 = sbr.rel (0) target = $region25
  $region24: #{gan_critic_forward.41} parent=0 // pred_region
    _
  $region25: #{gan_critic_forward.41} parent=0 // pred_fallthru
    _
  // Predicated region
  $region26: #{gan_critic_forward.41} parent=0 // pred_check
    _
  $region27: #{gan_critic_forward.41} parent=0 // pred_check_branch
    %587 = sbr.rel (0) target = $region29
  $region28: #{gan_critic_forward.41} parent=0 // pred_region
    _
  $region29: #{gan_critic_forward.41} parent=0 // pred_fallthru
    _

// kernel: gan_critic_forward.42
$region0: #{gan_critic_forward.42}
  #allocation0 [shape = 'u32[]', space=smem, size = 0x4, offset = 0x4, fixed_abs, tag = 'smem constant byte address 0x4 - core index']
  #allocation1 [shape = 'u32[144,128]{1,0:T(1,128)}', space=vmem, size = 0x12000, scoped, tag = 'internal scratch']
  %s0 = inlined_call_operand.vmem [shape: bf16[32,576], index: 0, kind: input, shape index: {}]
  %s1 = inlined_call_operand.vmem [shape: bf16[576,64], index: 1, kind: input, shape index: {}]
  %s2 = inlined_call_operand.vmem [shape: f32[1,64], index: 2, kind: input, shape index: {}]
  %s3 = inlined_call_operand.vmem [shape: f32[1,64], index: 3, kind: input, shape index: {}]
  %s4 = inlined_call_operand.vmem [shape: bf16[32,64], index: 4, kind: output, shape index: {}]
  %s5 = sld [smem:[#allocation0]]
  $region26: #{gan_critic_forward.42} parent=0
    _
  %s7 = ssub.s32 1, %s5
  %s8 = scalar_select 0, %s7, %s5
  // Predicated region
  $region2: #{gan_critic_forward.42} parent=0 // pred_check
    _
  $region3: #{gan_critic_forward.42} parent=0 // pred_check_branch
    %10 = sbr.rel (0) target = $region5
  $region4: #{gan_critic_forward.42} parent=0 // pred_region
    _
  $region5: #{gan_critic_forward.42} parent=0 // pred_fallthru
    _
  // Predicated region
  $region6: #{gan_critic_forward.42} parent=0 // pred_check
    _
  $region7: #{gan_critic_forward.42} parent=0 // pred_check_branch
    %12 = sbr.rel (0) target = $region9
  $region8: #{gan_critic_forward.42} parent=0 // pred_region
    _
  $region9: #{gan_critic_forward.42} parent=0 // pred_fallthru
    _
  // Predicated region
  $region10: #{gan_critic_forward.42} parent=0 // pred_check
    _
  $region11: #{gan_critic_forward.42} parent=0 // pred_check_branch
    %14 = sbr.rel (0) target = $region13
  $region12: #{gan_critic_forward.42} parent=0 // pred_region
    _
  $region13: #{gan_critic_forward.42} parent=0 // pred_fallthru
    _
  // Predicated region
  $region14: #{gan_critic_forward.42} parent=0 // pred_check
    _
  $region15: #{gan_critic_forward.42} parent=0 // pred_check_branch
    %16 = sbr.rel (0) target = $region17
  $region16: #{gan_critic_forward.42} parent=0 // pred_region
    _
  $region17: #{gan_critic_forward.42} parent=0 // pred_fallthru
    _
  %v18 = vld [vmem:[%s0] sm:$0xff]
  %v19 = vld [vmem:[%s0 + $0x8] sm:$0xff]
  %v20 = vld [vmem:[%s0 + $0x10] sm:$0xf]
  %v21 = vld [vmem:[%s0 + $0x14] sm:$0xff]
  %v22 = vld [vmem:[%s0 + $0x1c] sm:$0xff]
  %v23 = vld [vmem:[%s0 + $0x24] sm:$0xf]
  %v24 = vld [vmem:[%s0 + $0x28] sm:$0xff]
  %v25 = vld [vmem:[%s0 + $0x30] sm:$0xff]
  %v26 = vld [vmem:[%s0 + $0x38] sm:$0xf]
  %v27 = vld [vmem:[%s0 + $0x3c] sm:$0xff]
  %v28 = vld [vmem:[%s0 + $0x44] sm:$0xff]
  %v29 = vld [vmem:[%s0 + $0x4c] sm:$0xf]
  %v30 = vld [vmem:[%s1] sm:$0xf]
  %v31 = vld [vmem:[%s1 + $0x4] sm:$0xf]
  %v32 = vld [vmem:[%s1 + $0x8] sm:$0xf]
  %v33 = vld [vmem:[%s1 + $0xc] sm:$0xf]
  %v34 = vld [vmem:[%s1 + $0x10] sm:$0xf]
  %v35 = vld [vmem:[%s1 + $0x14] sm:$0xf]
  %v36 = vld [vmem:[%s1 + $0x18] sm:$0xf]
  %v37 = vld [vmem:[%s1 + $0x1c] sm:$0xf]
  %v38 = vld [vmem:[%s1 + $0x20] sm:$0xf]
  %v39 = vld [vmem:[%s1 + $0x24] sm:$0xf]
  %v40 = vld [vmem:[%s1 + $0x28] sm:$0xf]
  %v41 = vld [vmem:[%s1 + $0x2c] sm:$0xf]
  %v42 = vld [vmem:[%s1 + $0x30] sm:$0xf]
  %v43 = vld [vmem:[%s1 + $0x34] sm:$0xf]
  %v44 = vld [vmem:[%s1 + $0x38] sm:$0xf]
  %v45 = vld [vmem:[%s1 + $0x3c] sm:$0xf]
  %v46 = vld [vmem:[%s1 + $0x40] sm:$0xf]
  %v47 = vld [vmem:[%s1 + $0x44] sm:$0xf]
  %v48 = vld [vmem:[%s1 + $0x48] sm:$0xf]
  %v49 = vld [vmem:[%s1 + $0x4c] sm:$0xf]
  %v50 = vld [vmem:[%s1 + $0x50] sm:$0xf]
  %v51 = vld [vmem:[%s1 + $0x54] sm:$0xf]
  %v52 = vld [vmem:[%s1 + $0x58] sm:$0xf]
  %v53 = vld [vmem:[%s1 + $0x5c] sm:$0xf]
  %v54 = vld [vmem:[%s1 + $0x60] sm:$0xf]
  %v55 = vld [vmem:[%s1 + $0x64] sm:$0xf]
  %v56 = vld [vmem:[%s1 + $0x68] sm:$0xf]
  %v57 = vld [vmem:[%s1 + $0x6c] sm:$0xf]
  %v58 = vld [vmem:[%s1 + $0x70] sm:$0xf]
  %v59 = vld [vmem:[%s1 + $0x74] sm:$0xf]
  %v60 = vld [vmem:[%s1 + $0x78] sm:$0xf]
  %v61 = vld [vmem:[%s1 + $0x7c] sm:$0xf]
  %v62 = vld [vmem:[%s1 + $0x80] sm:$0xf]
  %v63 = vld [vmem:[%s1 + $0x84] sm:$0xf]
  %v64 = vld [vmem:[%s1 + $0x88] sm:$0xf]
  %v65 = vld [vmem:[%s1 + $0x8c] sm:$0xf]
  %v66 = vld [vmem:[%s1 + $0x90] sm:$0xf]
  %v67 = vld [vmem:[%s1 + $0x94] sm:$0xf]
  %v68 = vld [vmem:[%s1 + $0x98] sm:$0xf]
  %v69 = vld [vmem:[%s1 + $0x9c] sm:$0xf]
  %v70 = vld [vmem:[%s1 + $0xa0] sm:$0xf]
  %v71 = vld [vmem:[%s1 + $0xa4] sm:$0xf]
  %v72 = vld [vmem:[%s1 + $0xa8] sm:$0xf]
  %v73 = vld [vmem:[%s1 + $0xac] sm:$0xf]
  %v74 = vld [vmem:[%s1 + $0xb0] sm:$0xf]
  %v75 = vld [vmem:[%s1 + $0xb4] sm:$0xf]
  %v76 = vld [vmem:[%s1 + $0xb8] sm:$0xf]
  %v77 = vld [vmem:[%s1 + $0xbc] sm:$0xf]
  %v78 = vld [vmem:[%s1 + $0xc0] sm:$0xf]
  %v79 = vld [vmem:[%s1 + $0xc4] sm:$0xf]
  %v80 = vld [vmem:[%s1 + $0xc8] sm:$0xf]
  %v81 = vld [vmem:[%s1 + $0xcc] sm:$0xf]
  %v82 = vld [vmem:[%s1 + $0xd0] sm:$0xf]
  %v83 = vld [vmem:[%s1 + $0xd4] sm:$0xf]
  %v84 = vld [vmem:[%s1 + $0xd8] sm:$0xf]
  %v85 = vld [vmem:[%s1 + $0xdc] sm:$0xf]
  %v86 = vld [vmem:[%s1 + $0xe0] sm:$0xf]
  %v87 = vld [vmem:[%s1 + $0xe4] sm:$0xf]
  %v88 = vld [vmem:[%s1 + $0xe8] sm:$0xf]
  %v89 = vld [vmem:[%s1 + $0xec] sm:$0xf]
  %v90 = vld [vmem:[%s1 + $0xf0] sm:$0xf]
  %v91 = vld [vmem:[%s1 + $0xf4] sm:$0xf]
  %v92 = vld [vmem:[%s1 + $0xf8] sm:$0xf]
  %v93 = vld [vmem:[%s1 + $0xfc] sm:$0xf]
  %v94 = vld [vmem:[%s1 + $0x100] sm:$0xf]
  %v95 = vld [vmem:[%s1 + $0x104] sm:$0xf]
  %v96 = vld [vmem:[%s1 + $0x108] sm:$0xf]
  %v97 = vld [vmem:[%s1 + $0x10c] sm:$0xf]
  %v98 = vld [vmem:[%s1 + $0x110] sm:$0xf]
  %v99 = vld [vmem:[%s1 + $0x114] sm:$0xf]
  %v100 = vld [vmem:[%s1 + $0x118] sm:$0xf]
  %v101 = vld [vmem:[%s1 + $0x11c] sm:$0xf]
  %v114 = vunpack.c.l.b16 %v18
  %v115 = vunpack.c.h.b16 %v18
  %v116 = vunpack.c.l.b16 %v19
  %v117 = vunpack.c.h.b16 %v19
  %v118 = vunpack.c.l.b16 %v20
  %v119 = vunpack.c.l.b16 %v21
  %v120 = vunpack.c.h.b16 %v21
  %v121 = vunpack.c.l.b16 %v22
  %v122 = vunpack.c.h.b16 %v22
  %v123 = vunpack.c.l.b16 %v23
  %v124 = vunpack.c.l.b16 %v24
  %v125 = vunpack.c.h.b16 %v24
  %v126 = vunpack.c.l.b16 %v25
  %v127 = vunpack.c.h.b16 %v25
  %v128 = vunpack.c.l.b16 %v26
  %v129 = vunpack.c.l.b16 %v27
  %v130 = vunpack.c.h.b16 %v27
  %v131 = vunpack.c.l.b16 %v28
  %v132 = vunpack.c.h.b16 %v28
  %v133 = vunpack.c.l.b16 %v29
  %v134 = vpack.c.b16 %v119, %v114
  %v135 = vpack.c.b16 %v120, %v115
  %v136 = vpack.c.b16 %v121, %v116
  %v137 = vpack.c.b16 %v122, %v117
  %v138 = vpack.c.b16 %v123, %v118
  %v139 = vpack.c.b16 %v129, %v124
  %v140 = vpack.c.b16 %v130, %v125
  %v141 = vpack.c.b16 %v131, %v126
  %v142 = vpack.c.b16 %v132, %v127
  %v143 = vpack.c.b16 %v133, %v128
  %v224 = vunpack.c.l.b16 %v30
  %v225 = vunpack.c.l.b16 %v31
  %v226 = vunpack.c.l.b16 %v32
  %v227 = vunpack.c.l.b16 %v33
  %v228 = vunpack.c.l.b16 %v34
  %v229 = vunpack.c.l.b16 %v35
  %v230 = vunpack.c.l.b16 %v36
  %v231 = vunpack.c.l.b16 %v37
  %v232 = vunpack.c.l.b16 %v38
  %v233 = vunpack.c.l.b16 %v39
  %v234 = vunpack.c.l.b16 %v40
  %v235 = vunpack.c.l.b16 %v41
  %v236 = vunpack.c.l.b16 %v42
  %v237 = vunpack.c.l.b16 %v43
  %v238 = vunpack.c.l.b16 %v44
  %v239 = vunpack.c.l.b16 %v45
  %v240 = vunpack.c.l.b16 %v46
  %v241 = vunpack.c.l.b16 %v47
  %v242 = vunpack.c.l.b16 %v48
  %v243 = vunpack.c.l.b16 %v49
  %v244 = vunpack.c.l.b16 %v50
  %v245 = vunpack.c.l.b16 %v51
  %v246 = vunpack.c.l.b16 %v52
  %v247 = vunpack.c.l.b16 %v53
  %v248 = vunpack.c.l.b16 %v54
  %v249 = vunpack.c.l.b16 %v55
  %v250 = vunpack.c.l.b16 %v56
  %v251 = vunpack.c.l.b16 %v57
  %v252 = vunpack.c.l.b16 %v58
  %v253 = vunpack.c.l.b16 %v59
  %v254 = vunpack.c.l.b16 %v60
  %v255 = vunpack.c.l.b16 %v61
  %v256 = vunpack.c.l.b16 %v62
  %v257 = vunpack.c.l.b16 %v63
  %v258 = vunpack.c.l.b16 %v64
  %v259 = vunpack.c.l.b16 %v65
  %v260 = vunpack.c.l.b16 %v66
  %v261 = vunpack.c.l.b16 %v67
  %v262 = vunpack.c.l.b16 %v68
  %v263 = vunpack.c.l.b16 %v69
  %v264 = vunpack.c.l.b16 %v70
  %v265 = vunpack.c.l.b16 %v71
  %v266 = vunpack.c.l.b16 %v72
  %v267 = vunpack.c.l.b16 %v73
  %v268 = vunpack.c.l.b16 %v74
  %v269 = vunpack.c.l.b16 %v75
  %v270 = vunpack.c.l.b16 %v76
  %v271 = vunpack.c.l.b16 %v77
  %v272 = vunpack.c.l.b16 %v78
  %v273 = vunpack.c.l.b16 %v79
  %v274 = vunpack.c.l.b16 %v80
  %v275 = vunpack.c.l.b16 %v81
  %v276 = vunpack.c.l.b16 %v82
  %v277 = vunpack.c.l.b16 %v83
  %v278 = vunpack.c.l.b16 %v84
  %v279 = vunpack.c.l.b16 %v85
  %v280 = vunpack.c.l.b16 %v86
  %v281 = vunpack.c.l.b16 %v87
  %v282 = vunpack.c.l.b16 %v88
  %v283 = vunpack.c.l.b16 %v89
  %v284 = vunpack.c.l.b16 %v90
  %v285 = vunpack.c.l.b16 %v91
  %v286 = vunpack.c.l.b16 %v92
  %v287 = vunpack.c.l.b16 %v93
  %v288 = vunpack.c.l.b16 %v94
  %v289 = vunpack.c.l.b16 %v95
  %v290 = vunpack.c.l.b16 %v96
  %v291 = vunpack.c.l.b16 %v97
  %v292 = vunpack.c.l.b16 %v98
  %v293 = vunpack.c.l.b16 %v99
  %v294 = vunpack.c.l.b16 %v100
  %v295 = vunpack.c.l.b16 %v101
  %v296 = vpack.c.b16 %v225, %v224
  %v297 = vpack.c.b16 %v227, %v226
  %v298 = vpack.c.b16 %v229, %v228
  %v299 = vpack.c.b16 %v231, %v230
  %v300 = vpack.c.b16 %v233, %v232
  %v301 = vpack.c.b16 %v235, %v234
  %v302 = vpack.c.b16 %v237, %v236
  %v303 = vpack.c.b16 %v239, %v238
  %v304 = vpack.c.b16 %v241, %v240
  %v305 = vpack.c.b16 %v243, %v242
  %v306 = vpack.c.b16 %v245, %v244
  %v307 = vpack.c.b16 %v247, %v246
  %v308 = vpack.c.b16 %v249, %v248
  %v309 = vpack.c.b16 %v251, %v250
  %v310 = vpack.c.b16 %v253, %v252
  %v311 = vpack.c.b16 %v255, %v254
  %v312 = vpack.c.b16 %v257, %v256
  %v313 = vpack.c.b16 %v259, %v258
  %v314 = vpack.c.b16 %v261, %v260
  %v315 = vpack.c.b16 %v263, %v262
  %v316 = vpack.c.b16 %v265, %v264
  %v317 = vpack.c.b16 %v267, %v266
  %v318 = vpack.c.b16 %v269, %v268
  %v319 = vpack.c.b16 %v271, %v270
  %v320 = vpack.c.b16 %v273, %v272
  %v321 = vpack.c.b16 %v275, %v274
  %v322 = vpack.c.b16 %v277, %v276
  %v323 = vpack.c.b16 %v279, %v278
  %v324 = vpack.c.b16 %v281, %v280
  %v325 = vpack.c.b16 %v283, %v282
  %v326 = vpack.c.b16 %v285, %v284
  %v327 = vpack.c.b16 %v287, %v286
  %v328 = vpack.c.b16 %v289, %v288
  %v329 = vpack.c.b16 %v291, %v290
  %v330 = vpack.c.b16 %v293, %v292
  %v331 = vpack.c.b16 %v295, %v294
  %vm368 = vcmask 523264
  %v370 = vsel %vm368, %v138, 0
  %v373 = vsel %vm368, %v143, 0
  %375 = vmatprep.subr.bf16.mxu0 0
  %376 = vmatpush1.bf16.msra.mxu0 %v296
  %377 = vmatprep.subr.bf16.mxu0 0
  %378 = vmatpush1.bf16.msra.mxu0 %v297
  %379 = vmatprep.subr.bf16.mxu0 0
  %380 = vmatpush1.bf16.msra.mxu0 %v298
  %381 = vmatprep.subr.bf16.mxu0 0
  %382 = vmatpush1.bf16.msra.mxu0 %v299
  %383 = vmatprep.subr.bf16.mxu0 0
  %384 = vmatpush1.bf16.msra.mxu0 %v300
  %385 = vmatprep.subr.bf16.mxu0 0
  %386 = vmatpush1.bf16.msra.mxu0 %v301
  %387 = vmatprep.subr.bf16.mxu0 0
  %388 = vmatpush1.bf16.msra.mxu0 %v302
  %389 = vmatprep.subr.bf16.mxu0 0
  %390 = vmatpush1.bf16.msra.mxu0 %v303
  %391 = vmatprep.subr.bf16.mxu0 0
  %392 = vmatpush1.bf16.msra.mxu0 %v304
  %393 = vmatprep.subr.bf16.mxu0 0
  %394 = vmatpush1.bf16.msra.mxu0 %v305
  %395 = vmatprep.subr.bf16.mxu0 0
  %396 = vmatpush1.bf16.msra.mxu0 %v306
  %397 = vmatprep.subr.bf16.mxu0 0
  %398 = vmatpush1.bf16.msra.mxu0 %v307
  %399 = vmatprep.subr.bf16.mxu0 0
  %400 = vmatpush1.bf16.msra.mxu0 %v308
  %401 = vmatprep.subr.bf16.mxu0 0
  %402 = vmatpush1.bf16.msra.mxu0 %v309
  %403 = vmatprep.subr.bf16.mxu0 0
  %404 = vmatpush1.bf16.msra.mxu0 %v310
  %405 = vmatprep.subr.bf16.mxu0 0
  %406 = vmatpush1.bf16.msra.mxu0 %v311
  %407 = vmatprep.mubr.bf16.mxu0 %v135
  %408 = vmatmul.mubr.bf16.gmra.mrb[0].mxu0 %v134
  %v409 = vpop.f32.mrb[0].mxu0
  %v410 = vadd.f32 0.0, %v409
  %v411 = vpop.f32.mrb[0].mxu0
  %v412 = vpop.f32.mrb[0].mxu0
  %v413 = vadd.f32 0.0, %v412
  %v414 = vpop.f32.mrb[0].mxu0
  %415 = vmatprep.mubr.bf16.mxu0 %v140
  %416 = vmatmul.mubr.bf16.gmra.mrb[0].mxu0 %v139
  %v417 = vpop.f32.mrb[0].mxu0
  %v418 = vadd.f32 0.0, %v417
  %v419 = vpop.f32.mrb[0].mxu0
  %v420 = vpop.f32.mrb[0].mxu0
  %v421 = vadd.f32 0.0, %v420
  %v422 = vpop.f32.mrb[0].mxu0
  %423 = vdwg.mxu0
  %424 = vmatprep.subr.bf16.mxu0 0
  %425 = vmatpush1.bf16.msra.mxu0 %v312
  %426 = vmatprep.subr.bf16.mxu0 0
  %427 = vmatpush1.bf16.msra.mxu0 %v313
  %428 = vmatprep.subr.bf16.mxu0 0
  %429 = vmatpush1.bf16.msra.mxu0 %v314
  %430 = vmatprep.subr.bf16.mxu0 0
  %431 = vmatpush1.bf16.msra.mxu0 %v315
  %432 = vmatprep.subr.bf16.mxu0 0
  %433 = vmatpush1.bf16.msra.mxu0 %v316
  %434 = vmatprep.subr.bf16.mxu0 0
  %435 = vmatpush1.bf16.msra.mxu0 %v317
  %436 = vmatprep.subr.bf16.mxu0 0
  %437 = vmatpush1.bf16.msra.mxu0 %v318
  %438 = vmatprep.subr.bf16.mxu0 0
  %439 = vmatpush1.bf16.msra.mxu0 %v319
  %440 = vmatprep.subr.bf16.mxu0 0
  %441 = vmatpush1.bf16.msra.mxu0 %v320
  %442 = vmatprep.subr.bf16.mxu0 0
  %443 = vmatpush1.bf16.msra.mxu0 %v321
  %444 = vmatprep.subr.bf16.mxu0 0
  %445 = vmatpush1.bf16.msra.mxu0 %v322
  %446 = vmatprep.subr.bf16.mxu0 0
  %447 = vmatpush1.bf16.msra.mxu0 %v323
  %448 = vmatprep.subr.bf16.mxu0 0
  %449 = vmatpush1.bf16.msra.mxu0 %v324
  %450 = vmatprep.subr.bf16.mxu0 0
  %451 = vmatpush1.bf16.msra.mxu0 %v325
  %452 = vmatprep.subr.bf16.mxu0 0
  %453 = vmatpush1.bf16.msra.mxu0 %v326
  %454 = vmatprep.subr.bf16.mxu0 0
  %455 = vmatpush1.bf16.msra.mxu0 %v327
  %456 = vmatprep.mubr.bf16.mxu0 %v137
  %457 = vmatmul.mubr.bf16.gmra.mrb[0].mxu0 %v136
  %v458 = vpop.f32.mrb[0].mxu0
  %v459 = vadd.f32 %v410, %v458
  %v460 = vpop.f32.mrb[0].mxu0
  %v461 = vpop.f32.mrb[0].mxu0
  %v462 = vadd.f32 %v413, %v461
  %v463 = vpop.f32.mrb[0].mxu0
  %464 = vmatprep.mubr.bf16.mxu0 %v142
  %465 = vmatmul.mubr.bf16.gmra.mrb[0].mxu0 %v141
  %v466 = vpop.f32.mrb[0].mxu0
  %v467 = vadd.f32 %v418, %v466
  %v468 = vpop.f32.mrb[0].mxu0
  %v469 = vpop.f32.mrb[0].mxu0
  %v470 = vadd.f32 %v421, %v469
  %v471 = vpop.f32.mrb[0].mxu0
  %472 = vdwg.mxu0
  %473 = vmatprep.subr.bf16.mxu0 0
  %474 = vmatpush1.bf16.msra.mxu0 %v328
  %475 = vmatprep.subr.bf16.mxu0 0
  %476 = vmatpush1.bf16.msra.mxu0 %v329
  %477 = vmatprep.subr.bf16.mxu0 0
  %478 = vmatpush1.bf16.msra.mxu0 %v330
  %479 = vmatprep.subr.bf16.mxu0 0
  %480 = vmatpush1.bf16.msra.mxu0 %v331
  %481 = vmatprep.subr.bf16.mxu0 0
  %482 = vmatpush1.bf16.msra.mxu0 0
  %483 = vmatprep.subr.bf16.mxu0 0
  %484 = vmatpush1.bf16.msra.mxu0 0
  %485 = vmatprep.subr.bf16.mxu0 0
  %486 = vmatpush1.bf16.msra.mxu0 0
  %487 = vmatprep.subr.bf16.mxu0 0
  %488 = vmatpush1.bf16.msra.mxu0 0
  %489 = vmatprep.subr.bf16.mxu0 0
  %490 = vmatpush1.bf16.msra.mxu0 0
  %491 = vmatprep.subr.bf16.mxu0 0
  %492 = vmatpush1.bf16.msra.mxu0 0
  %493 = vmatprep.subr.bf16.mxu0 0
  %494 = vmatpush1.bf16.msra.mxu0 0
  %495 = vmatprep.subr.bf16.mxu0 0
  %496 = vmatpush1.bf16.msra.mxu0 0
  %497 = vmatprep.subr.bf16.mxu0 0
  %498 = vmatpush1.bf16.msra.mxu0 0
  %499 = vmatprep.subr.bf16.mxu0 0
  %500 = vmatpush1.bf16.msra.mxu0 0
  %501 = vmatprep.subr.bf16.mxu0 0
  %502 = vmatpush1.bf16.msra.mxu0 0
  %503 = vmatprep.subr.bf16.mxu0 0
  %504 = vmatpush1.bf16.msra.mxu0 0
  %505 = vmatprep.mubr.bf16.mxu0 0
  %506 = vmatmul.mubr.bf16.gmra.mrb[0].mxu0 %v370
  %v507 = vpop.f32.mrb[0].mxu0
  %v508 = vadd.f32 %v459, %v507
  %v509 = vpop.f32.mrb[0].mxu0
  %v510 = vpop.f32.mrb[0].mxu0
  %v511 = vadd.f32 %v462, %v510
  %v512 = vpop.f32.mrb[0].mxu0
  %513 = vmatprep.mubr.bf16.mxu0 0
  %514 = vmatmul.mubr.bf16.gmra.mrb[0].mxu0 %v373
  %v515 = vpop.f32.mrb[0].mxu0
  %v516 = vadd.f32 %v467, %v515
  %v517 = vpop.f32.mrb[0].mxu0
  %v518 = vpop.f32.mrb[0].mxu0
  %v519 = vadd.f32 %v470, %v518
  %v520 = vpop.f32.mrb[0].mxu0
  %521 = vdwg.mxu0
  %v522 = vld [vmem:[%s2] sm:$0x1]
  %v524 = vlaneseq
  %v525 = vshrl.u32 %v524, 7
  %v526 = vsub.s32 0, %v525
  %v527 = vrot.slane %v522, %v526
  %v529 = vmul.f32 %v508, %v527
  %v530 = vmul.f32 %v511, %v527
  %v531 = vmul.f32 %v516, %v527
  %v532 = vmul.f32 %v519, %v527
  %v533 = vld [vmem:[%s3] sm:$0x1]
  %v535 = vlaneseq
  %v536 = vshrl.u32 %v535, 7
  %v537 = vsub.s32 0, %v536
  %v538 = vrot.slane %v533, %v537
  %v540 = vadd.f32 %v529, %v538
  %v541 = vadd.f32 %v530, %v538
  %v542 = vadd.f32 %v531, %v538
  %v543 = vadd.f32 %v532, %v538
  %v544 = vmax.f32 %v540, 0.0
  %v545 = vmax.f32 %v541, 0.0
  %v546 = vmax.f32 %v542, 0.0
  %v547 = vmax.f32 %v543, 0.0
  %v548 = vpack.c.bf16 %v545, %v544
  %v549 = vpack.c.bf16 %v547, %v546
  %v552 = vunpack.c.l.b16 %v548
  %v553 = vunpack.c.h.b16 %v548
  %v554 = vunpack.c.l.b16 %v549
  %v555 = vunpack.c.h.b16 %v549
  %v556 = vpack.c.b16 %v552, %v552
  %v557 = vpack.c.b16 %v553, %v553
  %v558 = vpack.c.b16 %v554, %v554
  %v559 = vpack.c.b16 %v555, %v555
  %vm564 = vcmask 519168
  %565 = vst.msk [vmem:[%s4] sm:$0xf] %vm564, %v556
  %566 = vst.msk [vmem:[%s4 + $0x4] sm:$0xf] %vm564, %v557
  %567 = vst.msk [vmem:[%s4 + $0x8] sm:$0xf] %vm564, %v558
  %568 = vst.msk [vmem:[%s4 + $0xc] sm:$0xf] %vm564, %v559
  // Predicated region
  $region18: #{gan_critic_forward.42} parent=0 // pred_check
    _
  $region19: #{gan_critic_forward.42} parent=0 // pred_check_branch
    %570 = sbr.rel (0) target = $region21
  $region20: #{gan_critic_forward.42} parent=0 // pred_region
    _
  $region21: #{gan_critic_forward.42} parent=0 // pred_fallthru
    _
  // Predicated region
  $region22: #{gan_critic_forward.42} parent=0 // pred_check
    _
  $region23: #{gan_critic_forward.42} parent=0 // pred_check_branch
    %572 = sbr.rel (0) target = $region25
  $region24: #{gan_critic_forward.42} parent=0 // pred_region
    _
  $region25: #{gan_critic_forward.42} parent=0 // pred_fallthru
    _

// kernel: gan_critic_forward.48
$region0: #{gan_critic_forward.48}
  #allocation0 [shape = 'u32[]', space=smem, size = 0x4, offset = 0x4, fixed_abs, tag = 'smem constant byte address 0x4 - core index']
  #allocation1 [shape = 'u32[144,128]{1,0:T(1,128)}', space=vmem, size = 0x12000, scoped, tag = 'internal scratch']
  %s0 = inlined_call_operand.vmem [shape: bf16[8,576], index: 0, kind: input, shape index: {}]
  %s1 = inlined_call_operand.vmem [shape: bf16[576,128], index: 1, kind: input, shape index: {}]
  %s2 = inlined_call_operand.vmem [shape: f32[1,128], index: 2, kind: input, shape index: {}]
  %s3 = inlined_call_operand.vmem [shape: f32[1,128], index: 3, kind: input, shape index: {}]
  %s4 = inlined_call_operand.vmem [shape: bf16[8,128], index: 4, kind: output, shape index: {}]
  %s5 = sld [smem:[#allocation0]]
  $region26: #{gan_critic_forward.48} parent=0
    _
  %s7 = ssub.s32 1, %s5
  %s8 = scalar_select 0, %s7, %s5
  // Predicated region
  $region2: #{gan_critic_forward.48} parent=0 // pred_check
    _
  $region3: #{gan_critic_forward.48} parent=0 // pred_check_branch
    %10 = sbr.rel (0) target = $region5
  $region4: #{gan_critic_forward.48} parent=0 // pred_region
    _
  $region5: #{gan_critic_forward.48} parent=0 // pred_fallthru
    _
  // Predicated region
  $region6: #{gan_critic_forward.48} parent=0 // pred_check
    _
  $region7: #{gan_critic_forward.48} parent=0 // pred_check_branch
    %12 = sbr.rel (0) target = $region9
  $region8: #{gan_critic_forward.48} parent=0 // pred_region
    _
  $region9: #{gan_critic_forward.48} parent=0 // pred_fallthru
    _
  // Predicated region
  $region10: #{gan_critic_forward.48} parent=0 // pred_check
    _
  $region11: #{gan_critic_forward.48} parent=0 // pred_check_branch
    %14 = sbr.rel (0) target = $region13
  $region12: #{gan_critic_forward.48} parent=0 // pred_region
    _
  $region13: #{gan_critic_forward.48} parent=0 // pred_fallthru
    _
  // Predicated region
  $region14: #{gan_critic_forward.48} parent=0 // pred_check
    _
  $region15: #{gan_critic_forward.48} parent=0 // pred_check_branch
    %16 = sbr.rel (0) target = $region17
  $region16: #{gan_critic_forward.48} parent=0 // pred_region
    _
  $region17: #{gan_critic_forward.48} parent=0 // pred_fallthru
    _
  %v18 = vld [vmem:[%s0] sm:$0xff]
  %v19 = vld [vmem:[%s0 + $0x8] sm:$0xff]
  %v20 = vld [vmem:[%s0 + $0x10] sm:$0xf]
  %v21 = vld [vmem:[%s1] sm:$0xf]
  %v22 = vld [vmem:[%s1 + $0x4] sm:$0xf]
  %v23 = vld [vmem:[%s1 + $0x8] sm:$0xf]
  %v24 = vld [vmem:[%s1 + $0xc] sm:$0xf]
  %v25 = vld [vmem:[%s1 + $0x10] sm:$0xf]
  %v26 = vld [vmem:[%s1 + $0x14] sm:$0xf]
  %v27 = vld [vmem:[%s1 + $0x18] sm:$0xf]
  %v28 = vld [vmem:[%s1 + $0x1c] sm:$0xf]
  %v29 = vld [vmem:[%s1 + $0x20] sm:$0xf]
  %v30 = vld [vmem:[%s1 + $0x24] sm:$0xf]
  %v31 = vld [vmem:[%s1 + $0x28] sm:$0xf]
  %v32 = vld [vmem:[%s1 + $0x2c] sm:$0xf]
  %v33 = vld [vmem:[%s1 + $0x30] sm:$0xf]
  %v34 = vld [vmem:[%s1 + $0x34] sm:$0xf]
  %v35 = vld [vmem:[%s1 + $0x38] sm:$0xf]
  %v36 = vld [vmem:[%s1 + $0x3c] sm:$0xf]
  %v37 = vld [vmem:[%s1 + $0x40] sm:$0xf]
  %v38 = vld [vmem:[%s1 + $0x44] sm:$0xf]
  %v39 = vld [vmem:[%s1 + $0x48] sm:$0xf]
  %v40 = vld [vmem:[%s1 + $0x4c] sm:$0xf]
  %v41 = vld [vmem:[%s1 + $0x50] sm:$0xf]
  %v42 = vld [vmem:[%s1 + $0x54] sm:$0xf]
  %v43 = vld [vmem:[%s1 + $0x58] sm:$0xf]
  %v44 = vld [vmem:[%s1 + $0x5c] sm:$0xf]
  %v45 = vld [vmem:[%s1 + $0x60] sm:$0xf]
  %v46 = vld [vmem:[%s1 + $0x64] sm:$0xf]
  %v47 = vld [vmem:[%s1 + $0x68] sm:$0xf]
  %v48 = vld [vmem:[%s1 + $0x6c] sm:$0xf]
  %v49 = vld [vmem:[%s1 + $0x70] sm:$0xf]
  %v50 = vld [vmem:[%s1 + $0x74] sm:$0xf]
  %v51 = vld [vmem:[%s1 + $0x78] sm:$0xf]
  %v52 = vld [vmem:[%s1 + $0x7c] sm:$0xf]
  %v53 = vld [vmem:[%s1 + $0x80] sm:$0xf]
  %v54 = vld [vmem:[%s1 + $0x84] sm:$0xf]
  %v55 = vld [vmem:[%s1 + $0x88] sm:$0xf]
  %v56 = vld [vmem:[%s1 + $0x8c] sm:$0xf]
  %v57 = vld [vmem:[%s1 + $0x90] sm:$0xf]
  %v58 = vld [vmem:[%s1 + $0x94] sm:$0xf]
  %v59 = vld [vmem:[%s1 + $0x98] sm:$0xf]
  %v60 = vld [vmem:[%s1 + $0x9c] sm:$0xf]
  %v61 = vld [vmem:[%s1 + $0xa0] sm:$0xf]
  %v62 = vld [vmem:[%s1 + $0xa4] sm:$0xf]
  %v63 = vld [vmem:[%s1 + $0xa8] sm:$0xf]
  %v64 = vld [vmem:[%s1 + $0xac] sm:$0xf]
  %v65 = vld [vmem:[%s1 + $0xb0] sm:$0xf]
  %v66 = vld [vmem:[%s1 + $0xb4] sm:$0xf]
  %v67 = vld [vmem:[%s1 + $0xb8] sm:$0xf]
  %v68 = vld [vmem:[%s1 + $0xbc] sm:$0xf]
  %v69 = vld [vmem:[%s1 + $0xc0] sm:$0xf]
  %v70 = vld [vmem:[%s1 + $0xc4] sm:$0xf]
  %v71 = vld [vmem:[%s1 + $0xc8] sm:$0xf]
  %v72 = vld [vmem:[%s1 + $0xcc] sm:$0xf]
  %v73 = vld [vmem:[%s1 + $0xd0] sm:$0xf]
  %v74 = vld [vmem:[%s1 + $0xd4] sm:$0xf]
  %v75 = vld [vmem:[%s1 + $0xd8] sm:$0xf]
  %v76 = vld [vmem:[%s1 + $0xdc] sm:$0xf]
  %v77 = vld [vmem:[%s1 + $0xe0] sm:$0xf]
  %v78 = vld [vmem:[%s1 + $0xe4] sm:$0xf]
  %v79 = vld [vmem:[%s1 + $0xe8] sm:$0xf]
  %v80 = vld [vmem:[%s1 + $0xec] sm:$0xf]
  %v81 = vld [vmem:[%s1 + $0xf0] sm:$0xf]
  %v82 = vld [vmem:[%s1 + $0xf4] sm:$0xf]
  %v83 = vld [vmem:[%s1 + $0xf8] sm:$0xf]
  %v84 = vld [vmem:[%s1 + $0xfc] sm:$0xf]
  %v85 = vld [vmem:[%s1 + $0x100] sm:$0xf]
  %v86 = vld [vmem:[%s1 + $0x104] sm:$0xf]
  %v87 = vld [vmem:[%s1 + $0x108] sm:$0xf]
  %v88 = vld [vmem:[%s1 + $0x10c] sm:$0xf]
  %v89 = vld [vmem:[%s1 + $0x110] sm:$0xf]
  %v90 = vld [vmem:[%s1 + $0x114] sm:$0xf]
  %v91 = vld [vmem:[%s1 + $0x118] sm:$0xf]
  %v92 = vld [vmem:[%s1 + $0x11c] sm:$0xf]
  %v96 = vunpack.c.l.b16 %v18
  %v97 = vunpack.c.h.b16 %v18
  %v98 = vunpack.c.l.b16 %v19
  %v99 = vunpack.c.h.b16 %v19
  %v100 = vunpack.c.l.b16 %v20
  %v101 = vpack.c.b16 %v96, %v96
  %v102 = vpack.c.b16 %v97, %v97
  %v103 = vpack.c.b16 %v98, %v98
  %v104 = vpack.c.b16 %v99, %v99
  %v105 = vpack.c.b16 %v100, %v100
  %v182 = vunpack.c.l.b16 %v21
  %v183 = vunpack.c.l.b16 %v22
  %v184 = vunpack.c.l.b16 %v23
  %v185 = vunpack.c.l.b16 %v24
  %v186 = vunpack.c.l.b16 %v25
  %v187 = vunpack.c.l.b16 %v26
  %v188 = vunpack.c.l.b16 %v27
  %v189 = vunpack.c.l.b16 %v28
  %v190 = vunpack.c.l.b16 %v29
  %v191 = vunpack.c.l.b16 %v30
  %v192 = vunpack.c.l.b16 %v31
  %v193 = vunpack.c.l.b16 %v32
  %v194 = vunpack.c.l.b16 %v33
  %v195 = vunpack.c.l.b16 %v34
  %v196 = vunpack.c.l.b16 %v35
  %v197 = vunpack.c.l.b16 %v36
  %v198 = vunpack.c.l.b16 %v37
  %v199 = vunpack.c.l.b16 %v38
  %v200 = vunpack.c.l.b16 %v39
  %v201 = vunpack.c.l.b16 %v40
  %v202 = vunpack.c.l.b16 %v41
  %v203 = vunpack.c.l.b16 %v42
  %v204 = vunpack.c.l.b16 %v43
  %v205 = vunpack.c.l.b16 %v44
  %v206 = vunpack.c.l.b16 %v45
  %v207 = vunpack.c.l.b16 %v46
  %v208 = vunpack.c.l.b16 %v47
  %v209 = vunpack.c.l.b16 %v48
  %v210 = vunpack.c.l.b16 %v49
  %v211 = vunpack.c.l.b16 %v50
  %v212 = vunpack.c.l.b16 %v51
  %v213 = vunpack.c.l.b16 %v52
  %v214 = vunpack.c.l.b16 %v53
  %v215 = vunpack.c.l.b16 %v54
  %v216 = vunpack.c.l.b16 %v55
  %v217 = vunpack.c.l.b16 %v56
  %v218 = vunpack.c.l.b16 %v57
  %v219 = vunpack.c.l.b16 %v58
  %v220 = vunpack.c.l.b16 %v59
  %v221 = vunpack.c.l.b16 %v60
  %v222 = vunpack.c.l.b16 %v61
  %v223 = vunpack.c.l.b16 %v62
  %v224 = vunpack.c.l.b16 %v63
  %v225 = vunpack.c.l.b16 %v64
  %v226 = vunpack.c.l.b16 %v65
  %v227 = vunpack.c.l.b16 %v66
  %v228 = vunpack.c.l.b16 %v67
  %v229 = vunpack.c.l.b16 %v68
  %v230 = vunpack.c.l.b16 %v69
  %v231 = vunpack.c.l.b16 %v70
  %v232 = vunpack.c.l.b16 %v71
  %v233 = vunpack.c.l.b16 %v72
  %v234 = vunpack.c.l.b16 %v73
  %v235 = vunpack.c.l.b16 %v74
  %v236 = vunpack.c.l.b16 %v75
  %v237 = vunpack.c.l.b16 %v76
  %v238 = vunpack.c.l.b16 %v77
  %v239 = vunpack.c.l.b16 %v78
  %v240 = vunpack.c.l.b16 %v79
  %v241 = vunpack.c.l.b16 %v80
  %v242 = vunpack.c.l.b16 %v81
  %v243 = vunpack.c.l.b16 %v82
  %v244 = vunpack.c.l.b16 %v83
  %v245 = vunpack.c.l.b16 %v84
  %v246 = vunpack.c.l.b16 %v85
  %v247 = vunpack.c.l.b16 %v86
  %v248 = vunpack.c.l.b16 %v87
  %v249 = vunpack.c.l.b16 %v88
  %v250 = vunpack.c.l.b16 %v89
  %v251 = vunpack.c.l.b16 %v90
  %v252 = vunpack.c.l.b16 %v91
  %v253 = vunpack.c.l.b16 %v92
  %v254 = vpack.c.b16 %v183, %v182
  %v255 = vpack.c.b16 %v185, %v184
  %v256 = vpack.c.b16 %v187, %v186
  %v257 = vpack.c.b16 %v189, %v188
  %v258 = vpack.c.b16 %v191, %v190
  %v259 = vpack.c.b16 %v193, %v192
  %v260 = vpack.c.b16 %v195, %v194
  %v261 = vpack.c.b16 %v197, %v196
  %v262 = vpack.c.b16 %v199, %v198
  %v263 = vpack.c.b16 %v201, %v200
  %v264 = vpack.c.b16 %v203, %v202
  %v265 = vpack.c.b16 %v205, %v204
  %v266 = vpack.c.b16 %v207, %v206
  %v267 = vpack.c.b16 %v209, %v208
  %v268 = vpack.c.b16 %v211, %v210
  %v269 = vpack.c.b16 %v213, %v212
  %v270 = vpack.c.b16 %v215, %v214
  %v271 = vpack.c.b16 %v217, %v216
  %v272 = vpack.c.b16 %v219, %v218
  %v273 = vpack.c.b16 %v221, %v220
  %v274 = vpack.c.b16 %v223, %v222
  %v275 = vpack.c.b16 %v225, %v224
  %v276 = vpack.c.b16 %v227, %v226
  %v277 = vpack.c.b16 %v229, %v228
  %v278 = vpack.c.b16 %v231, %v230
  %v279 = vpack.c.b16 %v233, %v232
  %v280 = vpack.c.b16 %v235, %v234
  %v281 = vpack.c.b16 %v237, %v236
  %v282 = vpack.c.b16 %v239, %v238
  %v283 = vpack.c.b16 %v241, %v240
  %v284 = vpack.c.b16 %v243, %v242
  %v285 = vpack.c.b16 %v245, %v244
  %v286 = vpack.c.b16 %v247, %v246
  %v287 = vpack.c.b16 %v249, %v248
  %v288 = vpack.c.b16 %v251, %v250
  %v289 = vpack.c.b16 %v253, %v252
  %vm326 = vcmask 523264
  %v328 = vsel %vm326, %v105, 0
  %330 = vmatprep.subr.bf16.mxu0 0
  %331 = vmatpush1.bf16.msra.mxu0 %v254
  %332 = vmatprep.subr.bf16.mxu0 0
  %333 = vmatpush1.bf16.msra.mxu0 %v255
  %334 = vmatprep.subr.bf16.mxu0 0
  %335 = vmatpush1.bf16.msra.mxu0 %v256
  %336 = vmatprep.subr.bf16.mxu0 0
  %337 = vmatpush1.bf16.msra.mxu0 %v257
  %338 = vmatprep.subr.bf16.mxu0 0
  %339 = vmatpush1.bf16.msra.mxu0 %v258
  %340 = vmatprep.subr.bf16.mxu0 0
  %341 = vmatpush1.bf16.msra.mxu0 %v259
  %342 = vmatprep.subr.bf16.mxu0 0
  %343 = vmatpush1.bf16.msra.mxu0 %v260
  %344 = vmatprep.subr.bf16.mxu0 0
  %345 = vmatpush1.bf16.msra.mxu0 %v261
  %346 = vmatprep.subr.bf16.mxu0 0
  %347 = vmatpush1.bf16.msra.mxu0 %v262
  %348 = vmatprep.subr.bf16.mxu0 0
  %349 = vmatpush1.bf16.msra.mxu0 %v263
  %350 = vmatprep.subr.bf16.mxu0 0
  %351 = vmatpush1.bf16.msra.mxu0 %v264
  %352 = vmatprep.subr.bf16.mxu0 0
  %353 = vmatpush1.bf16.msra.mxu0 %v265
  %354 = vmatprep.subr.bf16.mxu0 0
  %355 = vmatpush1.bf16.msra.mxu0 %v266
  %356 = vmatprep.subr.bf16.mxu0 0
  %357 = vmatpush1.bf16.msra.mxu0 %v267
  %358 = vmatprep.subr.bf16.mxu0 0
  %359 = vmatpush1.bf16.msra.mxu0 %v268
  %360 = vmatprep.subr.bf16.mxu0 0
  %361 = vmatpush1.bf16.msra.mxu0 %v269
  %362 = vmatprep.mubr.bf16.mxu0 %v102
  %363 = vmatmul.mubr.bf16.gmra.mrb[0].mxu0 %v101
  %v364 = vpop.f32.mrb[0].mxu0
  %v365 = vadd.f32 0.0, %v364
  %v366 = vpop.f32.mrb[0].mxu0
  %v367 = vpop.f32.mrb[0].mxu0
  %v368 = vpop.f32.mrb[0].mxu0
  %369 = vdwg.mxu0
  %370 = vmatprep.subr.bf16.mxu0 0
  %371 = vmatpush1.bf16.msra.mxu0 %v270
  %372 = vmatprep.subr.bf16.mxu0 0
  %373 = vmatpush1.bf16.msra.mxu0 %v271
  %374 = vmatprep.subr.bf16.mxu0 0
  %375 = vmatpush1.bf16.msra.mxu0 %v272
  %376 = vmatprep.subr.bf16.mxu0 0
  %377 = vmatpush1.bf16.msra.mxu0 %v273
  %378 = vmatprep.subr.bf16.mxu0 0
  %379 = vmatpush1.bf16.msra.mxu0 %v274
  %380 = vmatprep.subr.bf16.mxu0 0
  %381 = vmatpush1.bf16.msra.mxu0 %v275
  %382 = vmatprep.subr.bf16.mxu0 0
  %383 = vmatpush1.bf16.msra.mxu0 %v276
  %384 = vmatprep.subr.bf16.mxu0 0
  %385 = vmatpush1.bf16.msra.mxu0 %v277
  %386 = vmatprep.subr.bf16.mxu0 0
  %387 = vmatpush1.bf16.msra.mxu0 %v278
  %388 = vmatprep.subr.bf16.mxu0 0
  %389 = vmatpush1.bf16.msra.mxu0 %v279
  %390 = vmatprep.subr.bf16.mxu0 0
  %391 = vmatpush1.bf16.msra.mxu0 %v280
  %392 = vmatprep.subr.bf16.mxu0 0
  %393 = vmatpush1.bf16.msra.mxu0 %v281
  %394 = vmatprep.subr.bf16.mxu0 0
  %395 = vmatpush1.bf16.msra.mxu0 %v282
  %396 = vmatprep.subr.bf16.mxu0 0
  %397 = vmatpush1.bf16.msra.mxu0 %v283
  %398 = vmatprep.subr.bf16.mxu0 0
  %399 = vmatpush1.bf16.msra.mxu0 %v284
  %400 = vmatprep.subr.bf16.mxu0 0
  %401 = vmatpush1.bf16.msra.mxu0 %v285
  %402 = vmatprep.mubr.bf16.mxu0 %v104
  %403 = vmatmul.mubr.bf16.gmra.mrb[0].mxu0 %v103
  %v404 = vpop.f32.mrb[0].mxu0
  %v405 = vadd.f32 %v365, %v404
  %v406 = vpop.f32.mrb[0].mxu0
  %v407 = vpop.f32.mrb[0].mxu0
  %v408 = vpop.f32.mrb[0].mxu0
  %409 = vdwg.mxu0
  %410 = vmatprep.subr.bf16.mxu0 0
  %411 = vmatpush1.bf16.msra.mxu0 %v286
  %412 = vmatprep.subr.bf16.mxu0 0
  %413 = vmatpush1.bf16.msra.mxu0 %v287
  %414 = vmatprep.subr.bf16.mxu0 0
  %415 = vmatpush1.bf16.msra.mxu0 %v288
  %416 = vmatprep.subr.bf16.mxu0 0
  %417 = vmatpush1.bf16.msra.mxu0 %v289
  %418 = vmatprep.subr.bf16.mxu0 0
  %419 = vmatpush1.bf16.msra.mxu0 0
  %420 = vmatprep.subr.bf16.mxu0 0
  %421 = vmatpush1.bf16.msra.mxu0 0
  %422 = vmatprep.subr.bf16.mxu0 0
  %423 = vmatpush1.bf16.msra.mxu0 0
  %424 = vmatprep.subr.bf16.mxu0 0
  %425 = vmatpush1.bf16.msra.mxu0 0
  %426 = vmatprep.subr.bf16.mxu0 0
  %427 = vmatpush1.bf16.msra.mxu0 0
  %428 = vmatprep.subr.bf16.mxu0 0
  %429 = vmatpush1.bf16.msra.mxu0 0
  %430 = vmatprep.subr.bf16.mxu0 0
  %431 = vmatpush1.bf16.msra.mxu0 0
  %432 = vmatprep.subr.bf16.mxu0 0
  %433 = vmatpush1.bf16.msra.mxu0 0
  %434 = vmatprep.subr.bf16.mxu0 0
  %435 = vmatpush1.bf16.msra.mxu0 0
  %436 = vmatprep.subr.bf16.mxu0 0
  %437 = vmatpush1.bf16.msra.mxu0 0
  %438 = vmatprep.subr.bf16.mxu0 0
  %439 = vmatpush1.bf16.msra.mxu0 0
  %440 = vmatprep.subr.bf16.mxu0 0
  %441 = vmatpush1.bf16.msra.mxu0 0
  %442 = vmatprep.mubr.bf16.mxu0 0
  %443 = vmatmul.mubr.bf16.gmra.mrb[0].mxu0 %v328
  %v444 = vpop.f32.mrb[0].mxu0
  %v445 = vadd.f32 %v405, %v444
  %v446 = vpop.f32.mrb[0].mxu0
  %v447 = vpop.f32.mrb[0].mxu0
  %v448 = vpop.f32.mrb[0].mxu0
  %449 = vdwg.mxu0
  %v450 = vld [vmem:[%s2] sm:$0x1]
  %v452 = vlaneseq
  %v453 = vshrl.u32 %v452, 7
  %v454 = vsub.s32 0, %v453
  %v455 = vrot.slane %v450, %v454
  %v457 = vmul.f32 %v445, %v455
  %v458 = vld [vmem:[%s3] sm:$0x1]
  %v460 = vlaneseq
  %v461 = vshrl.u32 %v460, 7
  %v462 = vsub.s32 0, %v461
  %v463 = vrot.slane %v458, %v462
  %v465 = vadd.f32 %v457, %v463
  %v466 = vmax.f32 %v465, 0.0
  %v467 = vpack.c.bf16 %v466, %v466
  %468 = vst [vmem:[%s4] sm:$0xf] %v467
  // Predicated region
  $region18: #{gan_critic_forward.48} parent=0 // pred_check
    _
  $region19: #{gan_critic_forward.48} parent=0 // pred_check_branch
    %470 = sbr.rel (0) target = $region21
  $region20: #{gan_critic_forward.48} parent=0 // pred_region
    _
  $region21: #{gan_critic_forward.48} parent=0 // pred_fallthru
    _
  // Predicated region
  $region22: #{gan_critic_forward.48} parent=0 // pred_check
    _
  $region23: #{gan_critic_forward.48} parent=0 // pred_check_branch
    %472 = sbr.rel (0) target = $region25
  $region24: #{gan_critic_forward.48} parent=0 // pred_region
    _
  $region25: #{gan_critic_forward.48} parent=0 // pred_fallthru
    _

// kernel: gan_critic_forward.49
$region0: #{gan_critic_forward.49}
  #allocation0 [shape = 'u32[]', space=smem, size = 0x4, offset = 0x4, fixed_abs, tag = 'smem constant byte address 0x4 - core index']
  #allocation1 [shape = 'u32[144,128]{1,0:T(1,128)}', space=vmem, size = 0x12000, scoped, tag = 'internal scratch']
  %s0 = inlined_call_operand.vmem [shape: bf16[8,64], index: 0, kind: input, shape index: {}]
  %s1 = inlined_call_operand.vmem [shape: bf16[64,128], index: 1, kind: input, shape index: {}]
  %s2 = inlined_call_operand.vmem [shape: f32[1,128], index: 2, kind: input, shape index: {}]
  %s3 = inlined_call_operand.vmem [shape: f32[1,128], index: 3, kind: input, shape index: {}]
  %s4 = inlined_call_operand.vmem [shape: bf16[8,128], index: 4, kind: output, shape index: {}]
  %s5 = sld [smem:[#allocation0]]
  $region26: #{gan_critic_forward.49} parent=0
    _
  %s7 = ssub.s32 1, %s5
  %s8 = scalar_select 0, %s7, %s5
  // Predicated region
  $region2: #{gan_critic_forward.49} parent=0 // pred_check
    _
  $region3: #{gan_critic_forward.49} parent=0 // pred_check_branch
    %10 = sbr.rel (0) target = $region5
  $region4: #{gan_critic_forward.49} parent=0 // pred_region
    _
  $region5: #{gan_critic_forward.49} parent=0 // pred_fallthru
    _
  // Predicated region
  $region6: #{gan_critic_forward.49} parent=0 // pred_check
    _
  $region7: #{gan_critic_forward.49} parent=0 // pred_check_branch
    %12 = sbr.rel (0) target = $region9
  $region8: #{gan_critic_forward.49} parent=0 // pred_region
    _
  $region9: #{gan_critic_forward.49} parent=0 // pred_fallthru
    _
  // Predicated region
  $region10: #{gan_critic_forward.49} parent=0 // pred_check
    _
  $region11: #{gan_critic_forward.49} parent=0 // pred_check_branch
    %14 = sbr.rel (0) target = $region13
  $region12: #{gan_critic_forward.49} parent=0 // pred_region
    _
  $region13: #{gan_critic_forward.49} parent=0 // pred_fallthru
    _
  // Predicated region
  $region14: #{gan_critic_forward.49} parent=0 // pred_check
    _
  $region15: #{gan_critic_forward.49} parent=0 // pred_check_branch
    %16 = sbr.rel (0) target = $region17
  $region16: #{gan_critic_forward.49} parent=0 // pred_region
    _
  $region17: #{gan_critic_forward.49} parent=0 // pred_fallthru
    _
  %v18 = vld [vmem:[%s0] sm:$0xf]
  %v19 = vld [vmem:[%s1] sm:$0xf]
  %v20 = vld [vmem:[%s1 + $0x4] sm:$0xf]
  %v21 = vld [vmem:[%s1 + $0x8] sm:$0xf]
  %v22 = vld [vmem:[%s1 + $0xc] sm:$0xf]
  %v23 = vld [vmem:[%s1 + $0x10] sm:$0xf]
  %v24 = vld [vmem:[%s1 + $0x14] sm:$0xf]
  %v25 = vld [vmem:[%s1 + $0x18] sm:$0xf]
  %v26 = vld [vmem:[%s1 + $0x1c] sm:$0xf]
  %v35 = vunpack.c.l.b16 %v19
  %v36 = vunpack.c.l.b16 %v20
  %v37 = vunpack.c.l.b16 %v21
  %v38 = vunpack.c.l.b16 %v22
  %v39 = vunpack.c.l.b16 %v23
  %v40 = vunpack.c.l.b16 %v24
  %v41 = vunpack.c.l.b16 %v25
  %v42 = vunpack.c.l.b16 %v26
  %v43 = vpack.c.b16 %v36, %v35
  %v44 = vpack.c.b16 %v38, %v37
  %v45 = vpack.c.b16 %v40, %v39
  %v46 = vpack.c.b16 %v42, %v41
  %vm51 = vcmask 523264
  %v53 = vsel %vm51, %v18, 0
  %55 = vmatprep.subr.bf16.mxu0 0
  %56 = vmatpush1.bf16.msra.mxu0 %v43
  %57 = vmatprep.subr.bf16.mxu0 0
  %58 = vmatpush1.bf16.msra.mxu0 %v44
  %59 = vmatprep.subr.bf16.mxu0 0
  %60 = vmatpush1.bf16.msra.mxu0 %v45
  %61 = vmatprep.subr.bf16.mxu0 0
  %62 = vmatpush1.bf16.msra.mxu0 %v46
  %63 = vmatprep.subr.bf16.mxu0 0
  %64 = vmatpush1.bf16.msra.mxu0 0
  %65 = vmatprep.subr.bf16.mxu0 0
  %66 = vmatpush1.bf16.msra.mxu0 0
  %67 = vmatprep.subr.bf16.mxu0 0
  %68 = vmatpush1.bf16.msra.mxu0 0
  %69 = vmatprep.subr.bf16.mxu0 0
  %70 = vmatpush1.bf16.msra.mxu0 0
  %71 = vmatprep.subr.bf16.mxu0 0
  %72 = vmatpush1.bf16.msra.mxu0 0
  %73 = vmatprep.subr.bf16.mxu0 0
  %74 = vmatpush1.bf16.msra.mxu0 0
  %75 = vmatprep.subr.bf16.mxu0 0
  %76 = vmatpush1.bf16.msra.mxu0 0
  %77 = vmatprep.subr.bf16.mxu0 0
  %78 = vmatpush1.bf16.msra.mxu0 0
  %79 = vmatprep.subr.bf16.mxu0 0
  %80 = vmatpush1.bf16.msra.mxu0 0
  %81 = vmatprep.subr.bf16.mxu0 0
  %82 = vmatpush1.bf16.msra.mxu0 0
  %83 = vmatprep.subr.bf16.mxu0 0
  %84 = vmatpush1.bf16.msra.mxu0 0
  %85 = vmatprep.subr.bf16.mxu0 0
  %86 = vmatpush1.bf16.msra.mxu0 0
  %87 = vmatprep.mubr.bf16.mxu0 0
  %88 = vmatmul.mubr.bf16.gmra.mrb[0].mxu0 %v53
  %v89 = vpop.f32.mrb[0].mxu0
  %v90 = vadd.f32 0.0, %v89
  %v91 = vpop.f32.mrb[0].mxu0
  %v92 = vpop.f32.mrb[0].mxu0
  %v93 = vpop.f32.mrb[0].mxu0
  %94 = vdwg.mxu0
  %v95 = vld [vmem:[%s2] sm:$0x1]
  %v97 = vlaneseq
  %v98 = vshrl.u32 %v97, 7
  %v99 = vsub.s32 0, %v98
  %v100 = vrot.slane %v95, %v99
  %v102 = vmul.f32 %v90, %v100
  %v103 = vld [vmem:[%s3] sm:$0x1]
  %v105 = vlaneseq
  %v106 = vshrl.u32 %v105, 7
  %v107 = vsub.s32 0, %v106
  %v108 = vrot.slane %v103, %v107
  %v110 = vadd.f32 %v102, %v108
  %v111 = vpack.c.bf16 %v110, %v110
  %112 = vst [vmem:[%s4] sm:$0xf] %v111
  // Predicated region
  $region18: #{gan_critic_forward.49} parent=0 // pred_check
    _
  $region19: #{gan_critic_forward.49} parent=0 // pred_check_branch
    %114 = sbr.rel (0) target = $region21
  $region20: #{gan_critic_forward.49} parent=0 // pred_region
    _
  $region21: #{gan_critic_forward.49} parent=0 // pred_fallthru
    _
  // Predicated region
  $region22: #{gan_critic_forward.49} parent=0 // pred_check
    _
  $region23: #{gan_critic_forward.49} parent=0 // pred_check_branch
    %116 = sbr.rel (0) target = $region25
  $region24: #{gan_critic_forward.49} parent=0 // pred_region
    _
  $region25: #{gan_critic_forward.49} parent=0 // pred_fallthru
    _

// kernel: gan_critic_forward.57
$region0: #{gan_critic_forward.57}
  #allocation0 [shape = 'u32[]', space=smem, size = 0x4, offset = 0x4, fixed_abs, tag = 'smem constant byte address 0x4 - core index']
  #allocation1 [shape = 'u32[144,128]{1,0:T(1,128)}', space=vmem, size = 0x12000, scoped, tag = 'internal scratch']
  #allocation2 [shape = 'f32[1,1]{1,0:T(1,128)S(1)}', space=vmem, size = 0x200, scoped, tag = 'scoped memory for gan_critic_forward.57']
  %s0 = inlined_call_operand.vmem [shape: bf16[2,4,128], index: 0, kind: input, shape index: {}]
  %s1 = inlined_call_operand.vmem [shape: f32[128,1], index: 1, kind: input, shape index: {}]
  %s2 = inlined_call_operand.<no memory space> [shape: f32[1,1], index: 2, kind: input, shape index: {}]
  %s3 = inlined_call_operand.vmem [shape: f32[2,1], index: 3, kind: output, shape index: {}]
  %s4 = sld [smem:[#allocation0]]
  $region22: #{gan_critic_forward.57} parent=0
    _
  %s6 = ssub.s32 1, %s4
  %s7 = scalar_select 0, %s6, %s4
  %v8 = vstv %s2
  %9 = vst [vmem:[#allocation2] sm:$0x1] %v8
  // Predicated region
  $region2: #{gan_critic_forward.57} parent=0 // pred_check
    _
  $region3: #{gan_critic_forward.57} parent=0 // pred_check_branch
    %11 = sbr.rel (0) target = $region5
  $region4: #{gan_critic_forward.57} parent=0 // pred_region
    _
  $region5: #{gan_critic_forward.57} parent=0 // pred_fallthru
    _
  // Predicated region
  $region6: #{gan_critic_forward.57} parent=0 // pred_check
    _
  $region7: #{gan_critic_forward.57} parent=0 // pred_check_branch
    %13 = sbr.rel (0) target = $region9
  $region8: #{gan_critic_forward.57} parent=0 // pred_region
    _
  $region9: #{gan_critic_forward.57} parent=0 // pred_fallthru
    _
  // Predicated region
  $region10: #{gan_critic_forward.57} parent=0 // pred_check
    _
  $region11: #{gan_critic_forward.57} parent=0 // pred_check_branch
    %15 = sbr.rel (0) target = $region13
  $region12: #{gan_critic_forward.57} parent=0 // pred_region
    _
  $region13: #{gan_critic_forward.57} parent=0 // pred_fallthru
    _
  %v16 = vld [vmem:[%s0] sm:$0x3]
  %v17 = vld [vmem:[%s0 + $0x2] sm:$0x3]
  %v18 = vunpack.c.l.bf16 %v16
  %v19 = vunpack.c.l.bf16 %v17
  %vm20 = vcmask 1043456
  %v21 = vsel %vm20, %v18, 0.0
  %v22 = vrot.slane %v21, 4
  %v23 = vadd.f32 %v21, %v22
  %v24 = vrot.slane %v23, 2
  %v25 = vadd.f32 %v23, %v24
  %v26 = vrot.slane %v25, 1
  %v27 = vadd.f32 %v25, %v26
  %v28 = vsel %vm20, %v19, 0.0
  %v29 = vrot.slane %v28, 4
  %v30 = vadd.f32 %v28, %v29
  %v31 = vrot.slane %v30, 2
  %v32 = vadd.f32 %v30, %v31
  %v33 = vrot.slane %v32, 1
  %v34 = vadd.f32 %v32, %v33
  %v35 = vrcp.pop 4.0
  %v36 = vmul.f32 %v27, %v35
  %v37 = vmul.f32 %v34, %v35
  %v38 = vld [vmem:[%s1] sm:$0xff]
  %v39 = vld [vmem:[%s1 + $0x8] sm:$0xff]
  %v40 = vld [vmem:[%s1 + $0x10] sm:$0xff]
  %v41 = vld [vmem:[%s1 + $0x18] sm:$0xff]
  %v42 = vld [vmem:[%s1 + $0x20] sm:$0xff]
  %v43 = vld [vmem:[%s1 + $0x28] sm:$0xff]
  %v44 = vld [vmem:[%s1 + $0x30] sm:$0xff]
  %v45 = vld [vmem:[%s1 + $0x38] sm:$0xff]
  %v46 = vld [vmem:[%s1 + $0x40] sm:$0xff]
  %v47 = vld [vmem:[%s1 + $0x48] sm:$0xff]
  %v48 = vld [vmem:[%s1 + $0x50] sm:$0xff]
  %v49 = vld [vmem:[%s1 + $0x58] sm:$0xff]
  %v50 = vld [vmem:[%s1 + $0x60] sm:$0xff]
  %v51 = vld [vmem:[%s1 + $0x68] sm:$0xff]
  %v52 = vld [vmem:[%s1 + $0x70] sm:$0xff]
  %v53 = vld [vmem:[%s1 + $0x78] sm:$0xff]
  %v54 = vld [vmem:[#allocation2] sm:$0x1]
  %v56 = vlaneseq
  %v57 = vshrl.u32 %v56, 7
  %v58 = vsub.s32 0, %v57
  %v59 = vrot.slane %v54, %v58
  %vm63 = vcmask 1041409
  %v64 = vsel %vm63, %v37, %v36
  %66 = vmatprep.subr.mxu0 0.0
  %67 = vmatpush1.msra.mxu0 %v38
  %68 = vmatprep.subr.mxu0 0.0
  %69 = vmatpush1.msra.mxu0 %v39
  %70 = vmatprep.subr.mxu0 0.0
  %71 = vmatpush1.msra.mxu0 %v40
  %72 = vmatprep.subr.mxu0 0.0
  %73 = vmatpush1.msra.mxu0 %v41
  %74 = vmatprep.subr.mxu0 0.0
  %75 = vmatpush1.msra.mxu0 %v42
  %76 = vmatprep.subr.mxu0 0.0
  %77 = vmatpush1.msra.mxu0 %v43
  %78 = vmatprep.subr.mxu0 0.0
  %79 = vmatpush1.msra.mxu0 %v44
  %80 = vmatprep.subr.mxu0 0.0
  %81 = vmatpush1.msra.mxu0 %v45
  %82 = vmatprep.subr.mxu0 0.0
  %83 = vmatpush1.msra.mxu0 %v46
  %84 = vmatprep.subr.mxu0 0.0
  %85 = vmatpush1.msra.mxu0 %v47
  %86 = vmatprep.subr.mxu0 0.0
  %87 = vmatpush1.msra.mxu0 %v48
  %88 = vmatprep.subr.mxu0 0.0
  %89 = vmatpush1.msra.mxu0 %v49
  %90 = vmatprep.subr.mxu0 0.0
  %91 = vmatpush1.msra.mxu0 %v50
  %92 = vmatprep.subr.mxu0 0.0
  %93 = vmatpush1.msra.mxu0 %v51
  %94 = vmatprep.subr.mxu0 0.0
  %95 = vmatpush1.msra.mxu0 %v52
  %96 = vmatprep.subr.mxu0 0.0
  %97 = vmatpush1.msra.mxu0 %v53
  %98 = vmatprep.subr.mxu0 0.0
  %99 = vmatpush1.msra.mxu0 0.0
  %100 = vmatprep.subr.mxu0 0.0
  %101 = vmatpush1.msra.mxu0 0.0
  %102 = vmatprep.subr.mxu0 0.0
  %103 = vmatpush1.msra.mxu0 0.0
  %104 = vmatprep.subr.mxu0 0.0
  %105 = vmatpush1.msra.mxu0 0.0
  %106 = vmatprep.subr.mxu0 0.0
  %107 = vmatpush1.msra.mxu0 0.0
  %108 = vmatprep.subr.mxu0 0.0
  %109 = vmatpush1.msra.mxu0 0.0
  %110 = vmatprep.subr.mxu0 0.0
  %111 = vmatpush1.msra.mxu0 0.0
  %112 = vmatprep.subr.mxu0 0.0
  %113 = vmatpush1.msra.mxu0 0.0
  %114 = vmatprep.subr.mxu0 0.0
  %115 = vmatpush1.msra.mxu0 0.0
  %116 = vmatprep.subr.mxu0 0.0
  %117 = vmatpush1.msra.mxu0 0.0
  %118 = vmatprep.subr.mxu0 0.0
  %119 = vmatpush1.msra.mxu0 0.0
  %120 = vmatprep.subr.mxu0 0.0
  %121 = vmatpush1.msra.mxu0 0.0
  %122 = vmatprep.subr.mxu0 0.0
  %123 = vmatpush1.msra.mxu0 0.0
  %124 = vmatprep.subr.mxu0 0.0
  %125 = vmatpush1.msra.mxu0 0.0
  %126 = vmatprep.subr.mxu0 0.0
  %127 = vmatpush1.msra.mxu0 0.0
  %128 = vmatprep.subr.mxu0 0.0
  %129 = vmatpush1.msra.mxu0 0.0
  %130 = vmatprep.mubr.f32.mxu0 0.0
  %131 = vmatmul.mubr.f32.gmra.mrb[0].mxu0 %v64
  %v132 = vpop.f32.mrb[0].mxu0
  %v133 = vadd.f32 %v59, %v132
  %v134 = vpop.f32.mrb[0].mxu0
  %135 = vdwg.mxu0
  %vm136 = vcmask 1024
  %137 = vst.msk [vmem:[%s3] sm:$0x3] %vm136, %v133
  // Predicated region
  $region14: #{gan_critic_forward.57} parent=0 // pred_check
    _
  $region15: #{gan_critic_forward.57} parent=0 // pred_check_branch
    %139 = sbr.rel (0) target = $region17
  $region16: #{gan_critic_forward.57} parent=0 // pred_region
    _
  $region17: #{gan_critic_forward.57} parent=0 // pred_fallthru
    _
  // Predicated region
  $region18: #{gan_critic_forward.57} parent=0 // pred_check
    _
  $region19: #{gan_critic_forward.57} parent=0 // pred_check_branch
    %141 = sbr.rel (0) target = $region21
  $region20: #{gan_critic_forward.57} parent=0 // pred_region
    _
  $region21: #{gan_critic_forward.57} parent=0 // pred_fallthru
    _

// kernel: gan_critic_forward.50
$region0: #{gan_critic_forward.50}
  #allocation0 [shape = 'u32[]', space=smem, size = 0x4, offset = 0x4, fixed_abs, tag = 'smem constant byte address 0x4 - core index']
  #allocation1 [shape = 'u32[144,128]{1,0:T(1,128)}', space=vmem, size = 0x12000, scoped, tag = 'internal scratch']
  %s0 = inlined_call_operand.vmem [shape: bf16[8,1152], index: 0, kind: input, shape index: {}]
  %s1 = inlined_call_operand.vmem [shape: bf16[1152,128], index: 1, kind: input, shape index: {}]
  %s2 = inlined_call_operand.vmem [shape: f32[1,128], index: 2, kind: input, shape index: {}]
  %s3 = inlined_call_operand.vmem [shape: f32[1,128], index: 3, kind: input, shape index: {}]
  %s4 = inlined_call_operand.vmem [shape: bf16[8,128], index: 4, kind: input, shape index: {}]
  %s5 = inlined_call_operand.vmem [shape: bf16[8,128], index: 5, kind: output, shape index: {}]
  %s6 = sld [smem:[#allocation0]]
  $region30: #{gan_critic_forward.50} parent=0
    _
  %s8 = ssub.s32 1, %s6
  %s9 = scalar_select 0, %s8, %s6
  // Predicated region
  $region2: #{gan_critic_forward.50} parent=0 // pred_check
    _
  $region3: #{gan_critic_forward.50} parent=0 // pred_check_branch
    %11 = sbr.rel (0) target = $region5
  $region4: #{gan_critic_forward.50} parent=0 // pred_region
    _
  $region5: #{gan_critic_forward.50} parent=0 // pred_fallthru
    _
  // Predicated region
  $region6: #{gan_critic_forward.50} parent=0 // pred_check
    _
  $region7: #{gan_critic_forward.50} parent=0 // pred_check_branch
    %13 = sbr.rel (0) target = $region9
  $region8: #{gan_critic_forward.50} parent=0 // pred_region
    _
  $region9: #{gan_critic_forward.50} parent=0 // pred_fallthru
    _
  // Predicated region
  $region10: #{gan_critic_forward.50} parent=0 // pred_check
    _
  $region11: #{gan_critic_forward.50} parent=0 // pred_check_branch
    %15 = sbr.rel (0) target = $region13
  $region12: #{gan_critic_forward.50} parent=0 // pred_region
    _
  $region13: #{gan_critic_forward.50} parent=0 // pred_fallthru
    _
  // Predicated region
  $region14: #{gan_critic_forward.50} parent=0 // pred_check
    _
  $region15: #{gan_critic_forward.50} parent=0 // pred_check_branch
    %17 = sbr.rel (0) target = $region17
  $region16: #{gan_critic_forward.50} parent=0 // pred_region
    _
  $region17: #{gan_critic_forward.50} parent=0 // pred_fallthru
    _
  // Predicated region
  $region18: #{gan_critic_forward.50} parent=0 // pred_check
    _
  $region19: #{gan_critic_forward.50} parent=0 // pred_check_branch
    %19 = sbr.rel (0) target = $region21
  $region20: #{gan_critic_forward.50} parent=0 // pred_region
    _
  $region21: #{gan_critic_forward.50} parent=0 // pred_fallthru
    _
  %v21 = vld [vmem:[%s0] sm:$0xff]
  %v22 = vld [vmem:[%s0 + $0x8] sm:$0xff]
  %v23 = vld [vmem:[%s0 + $0x10] sm:$0xff]
  %v24 = vld [vmem:[%s0 + $0x18] sm:$0xff]
  %v25 = vld [vmem:[%s0 + $0x20] sm:$0xf]
  %v26 = vld [vmem:[%s1] sm:$0xf]
  %v27 = vld [vmem:[%s1 + $0x4] sm:$0xf]
  %v28 = vld [vmem:[%s1 + $0x8] sm:$0xf]
  %v29 = vld [vmem:[%s1 + $0xc] sm:$0xf]
  %v30 = vld [vmem:[%s1 + $0x10] sm:$0xf]
  %v31 = vld [vmem:[%s1 + $0x14] sm:$0xf]
  %v32 = vld [vmem:[%s1 + $0x18] sm:$0xf]
  %v33 = vld [vmem:[%s1 + $0x1c] sm:$0xf]
  %v34 = vld [vmem:[%s1 + $0x20] sm:$0xf]
  %v35 = vld [vmem:[%s1 + $0x24] sm:$0xf]
  %v36 = vld [vmem:[%s1 + $0x28] sm:$0xf]
  %v37 = vld [vmem:[%s1 + $0x2c] sm:$0xf]
  %v38 = vld [vmem:[%s1 + $0x30] sm:$0xf]
  %v39 = vld [vmem:[%s1 + $0x34] sm:$0xf]
  %v40 = vld [vmem:[%s1 + $0x38] sm:$0xf]
  %v41 = vld [vmem:[%s1 + $0x3c] sm:$0xf]
  %v42 = vld [vmem:[%s1 + $0x40] sm:$0xf]
  %v43 = vld [vmem:[%s1 + $0x44] sm:$0xf]
  %v44 = vld [vmem:[%s1 + $0x48] sm:$0xf]
  %v45 = vld [vmem:[%s1 + $0x4c] sm:$0xf]
  %v46 = vld [vmem:[%s1 + $0x50] sm:$0xf]
  %v47 = vld [vmem:[%s1 + $0x54] sm:$0xf]
  %v48 = vld [vmem:[%s1 + $0x58] sm:$0xf]
  %v49 = vld [vmem:[%s1 + $0x5c] sm:$0xf]
  %v50 = vld [vmem:[%s1 + $0x60] sm:$0xf]
  %v51 = vld [vmem:[%s1 + $0x64] sm:$0xf]
  %v52 = vld [vmem:[%s1 + $0x68] sm:$0xf]
  %v53 = vld [vmem:[%s1 + $0x6c] sm:$0xf]
  %v54 = vld [vmem:[%s1 + $0x70] sm:$0xf]
  %v55 = vld [vmem:[%s1 + $0x74] sm:$0xf]
  %v56 = vld [vmem:[%s1 + $0x78] sm:$0xf]
  %v57 = vld [vmem:[%s1 + $0x7c] sm:$0xf]
  %v58 = vld [vmem:[%s1 + $0x80] sm:$0xf]
  %v59 = vld [vmem:[%s1 + $0x84] sm:$0xf]
  %v60 = vld [vmem:[%s1 + $0x88] sm:$0xf]
  %v61 = vld [vmem:[%s1 + $0x8c] sm:$0xf]
  %v62 = vld [vmem:[%s1 + $0x90] sm:$0xf]
  %v63 = vld [vmem:[%s1 + $0x94] sm:$0xf]
  %v64 = vld [vmem:[%s1 + $0x98] sm:$0xf]
  %v65 = vld [vmem:[%s1 + $0x9c] sm:$0xf]
  %v66 = vld [vmem:[%s1 + $0xa0] sm:$0xf]
  %v67 = vld [vmem:[%s1 + $0xa4] sm:$0xf]
  %v68 = vld [vmem:[%s1 + $0xa8] sm:$0xf]
  %v69 = vld [vmem:[%s1 + $0xac] sm:$0xf]
  %v70 = vld [vmem:[%s1 + $0xb0] sm:$0xf]
  %v71 = vld [vmem:[%s1 + $0xb4] sm:$0xf]
  %v72 = vld [vmem:[%s1 + $0xb8] sm:$0xf]
  %v73 = vld [vmem:[%s1 + $0xbc] sm:$0xf]
  %v74 = vld [vmem:[%s1 + $0xc0] sm:$0xf]
  %v75 = vld [vmem:[%s1 + $0xc4] sm:$0xf]
  %v76 = vld [vmem:[%s1 + $0xc8] sm:$0xf]
  %v77 = vld [vmem:[%s1 + $0xcc] sm:$0xf]
  %v78 = vld [vmem:[%s1 + $0xd0] sm:$0xf]
  %v79 = vld [vmem:[%s1 + $0xd4] sm:$0xf]
  %v80 = vld [vmem:[%s1 + $0xd8] sm:$0xf]
  %v81 = vld [vmem:[%s1 + $0xdc] sm:$0xf]
  %v82 = vld [vmem:[%s1 + $0xe0] sm:$0xf]
  %v83 = vld [vmem:[%s1 + $0xe4] sm:$0xf]
  %v84 = vld [vmem:[%s1 + $0xe8] sm:$0xf]
  %v85 = vld [vmem:[%s1 + $0xec] sm:$0xf]
  %v86 = vld [vmem:[%s1 + $0xf0] sm:$0xf]
  %v87 = vld [vmem:[%s1 + $0xf4] sm:$0xf]
  %v88 = vld [vmem:[%s1 + $0xf8] sm:$0xf]
  %v89 = vld [vmem:[%s1 + $0xfc] sm:$0xf]
  %v90 = vld [vmem:[%s1 + $0x100] sm:$0xf]
  %v91 = vld [vmem:[%s1 + $0x104] sm:$0xf]
  %v92 = vld [vmem:[%s1 + $0x108] sm:$0xf]
  %v93 = vld [vmem:[%s1 + $0x10c] sm:$0xf]
  %v94 = vld [vmem:[%s1 + $0x110] sm:$0xf]
  %v95 = vld [vmem:[%s1 + $0x114] sm:$0xf]
  %v96 = vld [vmem:[%s1 + $0x118] sm:$0xf]
  %v97 = vld [vmem:[%s1 + $0x11c] sm:$0xf]
  %v98 = vld [vmem:[%s1 + $0x120] sm:$0xf]
  %v99 = vld [vmem:[%s1 + $0x124] sm:$0xf]
  %v100 = vld [vmem:[%s1 + $0x128] sm:$0xf]
  %v101 = vld [vmem:[%s1 + $0x12c] sm:$0xf]
  %v102 = vld [vmem:[%s1 + $0x130] sm:$0xf]
  %v103 = vld [vmem:[%s1 + $0x134] sm:$0xf]
  %v104 = vld [vmem:[%s1 + $0x138] sm:$0xf]
  %v105 = vld [vmem:[%s1 + $0x13c] sm:$0xf]
  %v106 = vld [vmem:[%s1 + $0x140] sm:$0xf]
  %v107 = vld [vmem:[%s1 + $0x144] sm:$0xf]
  %v108 = vld [vmem:[%s1 + $0x148] sm:$0xf]
  %v109 = vld [vmem:[%s1 + $0x14c] sm:$0xf]
  %v110 = vld [vmem:[%s1 + $0x150] sm:$0xf]
  %v111 = vld [vmem:[%s1 + $0x154] sm:$0xf]
  %v112 = vld [vmem:[%s1 + $0x158] sm:$0xf]
  %v113 = vld [vmem:[%s1 + $0x15c] sm:$0xf]
  %v114 = vld [vmem:[%s1 + $0x160] sm:$0xf]
  %v115 = vld [vmem:[%s1 + $0x164] sm:$0xf]
  %v116 = vld [vmem:[%s1 + $0x168] sm:$0xf]
  %v117 = vld [vmem:[%s1 + $0x16c] sm:$0xf]
  %v118 = vld [vmem:[%s1 + $0x170] sm:$0xf]
  %v119 = vld [vmem:[%s1 + $0x174] sm:$0xf]
  %v120 = vld [vmem:[%s1 + $0x178] sm:$0xf]
  %v121 = vld [vmem:[%s1 + $0x17c] sm:$0xf]
  %v122 = vld [vmem:[%s1 + $0x180] sm:$0xf]
  %v123 = vld [vmem:[%s1 + $0x184] sm:$0xf]
  %v124 = vld [vmem:[%s1 + $0x188] sm:$0xf]
  %v125 = vld [vmem:[%s1 + $0x18c] sm:$0xf]
  %v126 = vld [vmem:[%s1 + $0x190] sm:$0xf]
  %v127 = vld [vmem:[%s1 + $0x194] sm:$0xf]
  %v128 = vld [vmem:[%s1 + $0x198] sm:$0xf]
  %v129 = vld [vmem:[%s1 + $0x19c] sm:$0xf]
  %v130 = vld [vmem:[%s1 + $0x1a0] sm:$0xf]
  %v131 = vld [vmem:[%s1 + $0x1a4] sm:$0xf]
  %v132 = vld [vmem:[%s1 + $0x1a8] sm:$0xf]
  %v133 = vld [vmem:[%s1 + $0x1ac] sm:$0xf]
  %v134 = vld [vmem:[%s1 + $0x1b0] sm:$0xf]
  %v135 = vld [vmem:[%s1 + $0x1b4] sm:$0xf]
  %v136 = vld [vmem:[%s1 + $0x1b8] sm:$0xf]
  %v137 = vld [vmem:[%s1 + $0x1bc] sm:$0xf]
  %v138 = vld [vmem:[%s1 + $0x1c0] sm:$0xf]
  %v139 = vld [vmem:[%s1 + $0x1c4] sm:$0xf]
  %v140 = vld [vmem:[%s1 + $0x1c8] sm:$0xf]
  %v141 = vld [vmem:[%s1 + $0x1cc] sm:$0xf]
  %v142 = vld [vmem:[%s1 + $0x1d0] sm:$0xf]
  %v143 = vld [vmem:[%s1 + $0x1d4] sm:$0xf]
  %v144 = vld [vmem:[%s1 + $0x1d8] sm:$0xf]
  %v145 = vld [vmem:[%s1 + $0x1dc] sm:$0xf]
  %v146 = vld [vmem:[%s1 + $0x1e0] sm:$0xf]
  %v147 = vld [vmem:[%s1 + $0x1e4] sm:$0xf]
  %v148 = vld [vmem:[%s1 + $0x1e8] sm:$0xf]
  %v149 = vld [vmem:[%s1 + $0x1ec] sm:$0xf]
  %v150 = vld [vmem:[%s1 + $0x1f0] sm:$0xf]
  %v151 = vld [vmem:[%s1 + $0x1f4] sm:$0xf]
  %v152 = vld [vmem:[%s1 + $0x1f8] sm:$0xf]
  %v153 = vld [vmem:[%s1 + $0x1fc] sm:$0xf]
  %v154 = vld [vmem:[%s1 + $0x200] sm:$0xf]
  %v155 = vld [vmem:[%s1 + $0x204] sm:$0xf]
  %v156 = vld [vmem:[%s1 + $0x208] sm:$0xf]
  %v157 = vld [vmem:[%s1 + $0x20c] sm:$0xf]
  %v158 = vld [vmem:[%s1 + $0x210] sm:$0xf]
  %v159 = vld [vmem:[%s1 + $0x214] sm:$0xf]
  %v160 = vld [vmem:[%s1 + $0x218] sm:$0xf]
  %v161 = vld [vmem:[%s1 + $0x21c] sm:$0xf]
  %v162 = vld [vmem:[%s1 + $0x220] sm:$0xf]
  %v163 = vld [vmem:[%s1 + $0x224] sm:$0xf]
  %v164 = vld [vmem:[%s1 + $0x228] sm:$0xf]
  %v165 = vld [vmem:[%s1 + $0x22c] sm:$0xf]
  %v166 = vld [vmem:[%s1 + $0x230] sm:$0xf]
  %v167 = vld [vmem:[%s1 + $0x234] sm:$0xf]
  %v168 = vld [vmem:[%s1 + $0x238] sm:$0xf]
  %v169 = vld [vmem:[%s1 + $0x23c] sm:$0xf]
  %v175 = vunpack.c.l.b16 %v21
  %v176 = vunpack.c.h.b16 %v21
  %v177 = vunpack.c.l.b16 %v22
  %v178 = vunpack.c.h.b16 %v22
  %v179 = vunpack.c.l.b16 %v23
  %v180 = vunpack.c.h.b16 %v23
  %v181 = vunpack.c.l.b16 %v24
  %v182 = vunpack.c.h.b16 %v24
  %v183 = vunpack.c.l.b16 %v25
  %v184 = vpack.c.b16 %v175, %v175
  %v185 = vpack.c.b16 %v176, %v176
  %v186 = vpack.c.b16 %v177, %v177
  %v187 = vpack.c.b16 %v178, %v178
  %v188 = vpack.c.b16 %v179, %v179
  %v189 = vpack.c.b16 %v180, %v180
  %v190 = vpack.c.b16 %v181, %v181
  %v191 = vpack.c.b16 %v182, %v182
  %v192 = vpack.c.b16 %v183, %v183
  %v346 = vunpack.c.l.b16 %v26
  %v347 = vunpack.c.l.b16 %v27
  %v348 = vunpack.c.l.b16 %v28
  %v349 = vunpack.c.l.b16 %v29
  %v350 = vunpack.c.l.b16 %v30
  %v351 = vunpack.c.l.b16 %v31
  %v352 = vunpack.c.l.b16 %v32
  %v353 = vunpack.c.l.b16 %v33
  %v354 = vunpack.c.l.b16 %v34
  %v355 = vunpack.c.l.b16 %v35
  %v356 = vunpack.c.l.b16 %v36
  %v357 = vunpack.c.l.b16 %v37
  %v358 = vunpack.c.l.b16 %v38
  %v359 = vunpack.c.l.b16 %v39
  %v360 = vunpack.c.l.b16 %v40
  %v361 = vunpack.c.l.b16 %v41
  %v362 = vunpack.c.l.b16 %v42
  %v363 = vunpack.c.l.b16 %v43
  %v364 = vunpack.c.l.b16 %v44
  %v365 = vunpack.c.l.b16 %v45
  %v366 = vunpack.c.l.b16 %v46
  %v367 = vunpack.c.l.b16 %v47
  %v368 = vunpack.c.l.b16 %v48
  %v369 = vunpack.c.l.b16 %v49
  %v370 = vunpack.c.l.b16 %v50
  %v371 = vunpack.c.l.b16 %v51
  %v372 = vunpack.c.l.b16 %v52
  %v373 = vunpack.c.l.b16 %v53
  %v374 = vunpack.c.l.b16 %v54
  %v375 = vunpack.c.l.b16 %v55
  %v376 = vunpack.c.l.b16 %v56
  %v377 = vunpack.c.l.b16 %v57
  %v378 = vunpack.c.l.b16 %v58
  %v379 = vunpack.c.l.b16 %v59
  %v380 = vunpack.c.l.b16 %v60
  %v381 = vunpack.c.l.b16 %v61
  %v382 = vunpack.c.l.b16 %v62
  %v383 = vunpack.c.l.b16 %v63
  %v384 = vunpack.c.l.b16 %v64
  %v385 = vunpack.c.l.b16 %v65
  %v386 = vunpack.c.l.b16 %v66
  %v387 = vunpack.c.l.b16 %v67
  %v388 = vunpack.c.l.b16 %v68
  %v389 = vunpack.c.l.b16 %v69
  %v390 = vunpack.c.l.b16 %v70
  %v391 = vunpack.c.l.b16 %v71
  %v392 = vunpack.c.l.b16 %v72
  %v393 = vunpack.c.l.b16 %v73
  %v394 = vunpack.c.l.b16 %v74
  %v395 = vunpack.c.l.b16 %v75
  %v396 = vunpack.c.l.b16 %v76
  %v397 = vunpack.c.l.b16 %v77
  %v398 = vunpack.c.l.b16 %v78
  %v399 = vunpack.c.l.b16 %v79
  %v400 = vunpack.c.l.b16 %v80
  %v401 = vunpack.c.l.b16 %v81
  %v402 = vunpack.c.l.b16 %v82
  %v403 = vunpack.c.l.b16 %v83
  %v404 = vunpack.c.l.b16 %v84
  %v405 = vunpack.c.l.b16 %v85
  %v406 = vunpack.c.l.b16 %v86
  %v407 = vunpack.c.l.b16 %v87
  %v408 = vunpack.c.l.b16 %v88
  %v409 = vunpack.c.l.b16 %v89
  %v410 = vunpack.c.l.b16 %v90
  %v411 = vunpack.c.l.b16 %v91
  %v412 = vunpack.c.l.b16 %v92
  %v413 = vunpack.c.l.b16 %v93
  %v414 = vunpack.c.l.b16 %v94
  %v415 = vunpack.c.l.b16 %v95
  %v416 = vunpack.c.l.b16 %v96
  %v417 = vunpack.c.l.b16 %v97
  %v418 = vunpack.c.l.b16 %v98
  %v419 = vunpack.c.l.b16 %v99
  %v420 = vunpack.c.l.b16 %v100
  %v421 = vunpack.c.l.b16 %v101
  %v422 = vunpack.c.l.b16 %v102
  %v423 = vunpack.c.l.b16 %v103
  %v424 = vunpack.c.l.b16 %v104
  %v425 = vunpack.c.l.b16 %v105
  %v426 = vunpack.c.l.b16 %v106
  %v427 = vunpack.c.l.b16 %v107
  %v428 = vunpack.c.l.b16 %v108
  %v429 = vunpack.c.l.b16 %v109
  %v430 = vunpack.c.l.b16 %v110
  %v431 = vunpack.c.l.b16 %v111
  %v432 = vunpack.c.l.b16 %v112
  %v433 = vunpack.c.l.b16 %v113
  %v434 = vunpack.c.l.b16 %v114
  %v435 = vunpack.c.l.b16 %v115
  %v436 = vunpack.c.l.b16 %v116
  %v437 = vunpack.c.l.b16 %v117
  %v438 = vunpack.c.l.b16 %v118
  %v439 = vunpack.c.l.b16 %v119
  %v440 = vunpack.c.l.b16 %v120
  %v441 = vunpack.c.l.b16 %v121
  %v442 = vunpack.c.l.b16 %v122
  %v443 = vunpack.c.l.b16 %v123
  %v444 = vunpack.c.l.b16 %v124
  %v445 = vunpack.c.l.b16 %v125
  %v446 = vunpack.c.l.b16 %v126
  %v447 = vunpack.c.l.b16 %v127
  %v448 = vunpack.c.l.b16 %v128
  %v449 = vunpack.c.l.b16 %v129
  %v450 = vunpack.c.l.b16 %v130
  %v451 = vunpack.c.l.b16 %v131
  %v452 = vunpack.c.l.b16 %v132
  %v453 = vunpack.c.l.b16 %v133
  %v454 = vunpack.c.l.b16 %v134
  %v455 = vunpack.c.l.b16 %v135
  %v456 = vunpack.c.l.b16 %v136
  %v457 = vunpack.c.l.b16 %v137
  %v458 = vunpack.c.l.b16 %v138
  %v459 = vunpack.c.l.b16 %v139
  %v460 = vunpack.c.l.b16 %v140
  %v461 = vunpack.c.l.b16 %v141
  %v462 = vunpack.c.l.b16 %v142
  %v463 = vunpack.c.l.b16 %v143
  %v464 = vunpack.c.l.b16 %v144
  %v465 = vunpack.c.l.b16 %v145
  %v466 = vunpack.c.l.b16 %v146
  %v467 = vunpack.c.l.b16 %v147
  %v468 = vunpack.c.l.b16 %v148
  %v469 = vunpack.c.l.b16 %v149
  %v470 = vunpack.c.l.b16 %v150
  %v471 = vunpack.c.l.b16 %v151
  %v472 = vunpack.c.l.b16 %v152
  %v473 = vunpack.c.l.b16 %v153
  %v474 = vunpack.c.l.b16 %v154
  %v475 = vunpack.c.l.b16 %v155
  %v476 = vunpack.c.l.b16 %v156
  %v477 = vunpack.c.l.b16 %v157
  %v478 = vunpack.c.l.b16 %v158
  %v479 = vunpack.c.l.b16 %v159
  %v480 = vunpack.c.l.b16 %v160
  %v481 = vunpack.c.l.b16 %v161
  %v482 = vunpack.c.l.b16 %v162
  %v483 = vunpack.c.l.b16 %v163
  %v484 = vunpack.c.l.b16 %v164
  %v485 = vunpack.c.l.b16 %v165
  %v486 = vunpack.c.l.b16 %v166
  %v487 = vunpack.c.l.b16 %v167
  %v488 = vunpack.c.l.b16 %v168
  %v489 = vunpack.c.l.b16 %v169
  %v490 = vpack.c.b16 %v347, %v346
  %v491 = vpack.c.b16 %v349, %v348
  %v492 = vpack.c.b16 %v351, %v350
  %v493 = vpack.c.b16 %v353, %v352
  %v494 = vpack.c.b16 %v355, %v354
  %v495 = vpack.c.b16 %v357, %v356
  %v496 = vpack.c.b16 %v359, %v358
  %v497 = vpack.c.b16 %v361, %v360
  %v498 = vpack.c.b16 %v363, %v362
  %v499 = vpack.c.b16 %v365, %v364
  %v500 = vpack.c.b16 %v367, %v366
  %v501 = vpack.c.b16 %v369, %v368
  %v502 = vpack.c.b16 %v371, %v370
  %v503 = vpack.c.b16 %v373, %v372
  %v504 = vpack.c.b16 %v375, %v374
  %v505 = vpack.c.b16 %v377, %v376
  %v506 = vpack.c.b16 %v379, %v378
  %v507 = vpack.c.b16 %v381, %v380
  %v508 = vpack.c.b16 %v383, %v382
  %v509 = vpack.c.b16 %v385, %v384
  %v510 = vpack.c.b16 %v387, %v386
  %v511 = vpack.c.b16 %v389, %v388
  %v512 = vpack.c.b16 %v391, %v390
  %v513 = vpack.c.b16 %v393, %v392
  %v514 = vpack.c.b16 %v395, %v394
  %v515 = vpack.c.b16 %v397, %v396
  %v516 = vpack.c.b16 %v399, %v398
  %v517 = vpack.c.b16 %v401, %v400
  %v518 = vpack.c.b16 %v403, %v402
  %v519 = vpack.c.b16 %v405, %v404
  %v520 = vpack.c.b16 %v407, %v406
  %v521 = vpack.c.b16 %v409, %v408
  %v522 = vpack.c.b16 %v411, %v410
  %v523 = vpack.c.b16 %v413, %v412
  %v524 = vpack.c.b16 %v415, %v414
  %v525 = vpack.c.b16 %v417, %v416
  %v526 = vpack.c.b16 %v419, %v418
  %v527 = vpack.c.b16 %v421, %v420
  %v528 = vpack.c.b16 %v423, %v422
  %v529 = vpack.c.b16 %v425, %v424
  %v530 = vpack.c.b16 %v427, %v426
  %v531 = vpack.c.b16 %v429, %v428
  %v532 = vpack.c.b16 %v431, %v430
  %v533 = vpack.c.b16 %v433, %v432
  %v534 = vpack.c.b16 %v435, %v434
  %v535 = vpack.c.b16 %v437, %v436
  %v536 = vpack.c.b16 %v439, %v438
  %v537 = vpack.c.b16 %v441, %v440
  %v538 = vpack.c.b16 %v443, %v442
  %v539 = vpack.c.b16 %v445, %v444
  %v540 = vpack.c.b16 %v447, %v446
  %v541 = vpack.c.b16 %v449, %v448
  %v542 = vpack.c.b16 %v451, %v450
  %v543 = vpack.c.b16 %v453, %v452
  %v544 = vpack.c.b16 %v455, %v454
  %v545 = vpack.c.b16 %v457, %v456
  %v546 = vpack.c.b16 %v459, %v458
  %v547 = vpack.c.b16 %v461, %v460
  %v548 = vpack.c.b16 %v463, %v462
  %v549 = vpack.c.b16 %v465, %v464
  %v550 = vpack.c.b16 %v467, %v466
  %v551 = vpack.c.b16 %v469, %v468
  %v552 = vpack.c.b16 %v471, %v470
  %v553 = vpack.c.b16 %v473, %v472
  %v554 = vpack.c.b16 %v475, %v474
  %v555 = vpack.c.b16 %v477, %v476
  %v556 = vpack.c.b16 %v479, %v478
  %v557 = vpack.c.b16 %v481, %v480
  %v558 = vpack.c.b16 %v483, %v482
  %v559 = vpack.c.b16 %v485, %v484
  %v560 = vpack.c.b16 %v487, %v486
  %v561 = vpack.c.b16 %v489, %v488
  %634 = vmatprep.subr.bf16.mxu0 0
  %635 = vmatpush1.bf16.msra.mxu0 %v490
  %636 = vmatprep.subr.bf16.mxu0 0
  %637 = vmatpush1.bf16.msra.mxu0 %v491
  %638 = vmatprep.subr.bf16.mxu0 0
  %639 = vmatpush1.bf16.msra.mxu0 %v492
  %640 = vmatprep.subr.bf16.mxu0 0
  %641 = vmatpush1.bf16.msra.mxu0 %v493
  %642 = vmatprep.subr.bf16.mxu0 0
  %643 = vmatpush1.bf16.msra.mxu0 %v494
  %644 = vmatprep.subr.bf16.mxu0 0
  %645 = vmatpush1.bf16.msra.mxu0 %v495
  %646 = vmatprep.subr.bf16.mxu0 0
  %647 = vmatpush1.bf16.msra.mxu0 %v496
  %648 = vmatprep.subr.bf16.mxu0 0
  %649 = vmatpush1.bf16.msra.mxu0 %v497
  %650 = vmatprep.subr.bf16.mxu0 0
  %651 = vmatpush1.bf16.msra.mxu0 %v498
  %652 = vmatprep.subr.bf16.mxu0 0
  %653 = vmatpush1.bf16.msra.mxu0 %v499
  %654 = vmatprep.subr.bf16.mxu0 0
  %655 = vmatpush1.bf16.msra.mxu0 %v500
  %656 = vmatprep.subr.bf16.mxu0 0
  %657 = vmatpush1.bf16.msra.mxu0 %v501
  %658 = vmatprep.subr.bf16.mxu0 0
  %659 = vmatpush1.bf16.msra.mxu0 %v502
  %660 = vmatprep.subr.bf16.mxu0 0
  %661 = vmatpush1.bf16.msra.mxu0 %v503
  %662 = vmatprep.subr.bf16.mxu0 0
  %663 = vmatpush1.bf16.msra.mxu0 %v504
  %664 = vmatprep.subr.bf16.mxu0 0
  %665 = vmatpush1.bf16.msra.mxu0 %v505
  %666 = vmatprep.mubr.bf16.mxu0 %v185
  %667 = vmatmul.mubr.bf16.gmra.mrb[0].mxu0 %v184
  %v668 = vpop.f32.mrb[0].mxu0
  %v669 = vadd.f32 0.0, %v668
  %v670 = vpop.f32.mrb[0].mxu0
  %v671 = vpop.f32.mrb[0].mxu0
  %v672 = vpop.f32.mrb[0].mxu0
  %673 = vdwg.mxu0
  %674 = vmatprep.subr.bf16.mxu0 0
  %675 = vmatpush1.bf16.msra.mxu0 %v506
  %676 = vmatprep.subr.bf16.mxu0 0
  %677 = vmatpush1.bf16.msra.mxu0 %v507
  %678 = vmatprep.subr.bf16.mxu0 0
  %679 = vmatpush1.bf16.msra.mxu0 %v508
  %680 = vmatprep.subr.bf16.mxu0 0
  %681 = vmatpush1.bf16.msra.mxu0 %v509
  %682 = vmatprep.subr.bf16.mxu0 0
  %683 = vmatpush1.bf16.msra.mxu0 %v510
  %684 = vmatprep.subr.bf16.mxu0 0
  %685 = vmatpush1.bf16.msra.mxu0 %v511
  %686 = vmatprep.subr.bf16.mxu0 0
  %687 = vmatpush1.bf16.msra.mxu0 %v512
  %688 = vmatprep.subr.bf16.mxu0 0
  %689 = vmatpush1.bf16.msra.mxu0 %v513
  %690 = vmatprep.subr.bf16.mxu0 0
  %691 = vmatpush1.bf16.msra.mxu0 %v514
  %692 = vmatprep.subr.bf16.mxu0 0
  %693 = vmatpush1.bf16.msra.mxu0 %v515
  %694 = vmatprep.subr.bf16.mxu0 0
  %695 = vmatpush1.bf16.msra.mxu0 %v516
  %696 = vmatprep.subr.bf16.mxu0 0
  %697 = vmatpush1.bf16.msra.mxu0 %v517
  %698 = vmatprep.subr.bf16.mxu0 0
  %699 = vmatpush1.bf16.msra.mxu0 %v518
  %700 = vmatprep.subr.bf16.mxu0 0
  %701 = vmatpush1.bf16.msra.mxu0 %v519
  %702 = vmatprep.subr.bf16.mxu0 0
  %703 = vmatpush1.bf16.msra.mxu0 %v520
  %704 = vmatprep.subr.bf16.mxu0 0
  %705 = vmatpush1.bf16.msra.mxu0 %v521
  %706 = vmatprep.mubr.bf16.mxu0 %v187
  %707 = vmatmul.mubr.bf16.gmra.mrb[0].mxu0 %v186
  %v708 = vpop.f32.mrb[0].mxu0
  %v709 = vadd.f32 %v669, %v708
  %v710 = vpop.f32.mrb[0].mxu0
  %v711 = vpop.f32.mrb[0].mxu0
  %v712 = vpop.f32.mrb[0].mxu0
  %713 = vdwg.mxu0
  %714 = vmatprep.subr.bf16.mxu0 0
  %715 = vmatpush1.bf16.msra.mxu0 %v522
  %716 = vmatprep.subr.bf16.mxu0 0
  %717 = vmatpush1.bf16.msra.mxu0 %v523
  %718 = vmatprep.subr.bf16.mxu0 0
  %719 = vmatpush1.bf16.msra.mxu0 %v524
  %720 = vmatprep.subr.bf16.mxu0 0
  %721 = vmatpush1.bf16.msra.mxu0 %v525
  %722 = vmatprep.subr.bf16.mxu0 0
  %723 = vmatpush1.bf16.msra.mxu0 %v526
  %724 = vmatprep.subr.bf16.mxu0 0
  %725 = vmatpush1.bf16.msra.mxu0 %v527
  %726 = vmatprep.subr.bf16.mxu0 0
  %727 = vmatpush1.bf16.msra.mxu0 %v528
  %728 = vmatprep.subr.bf16.mxu0 0
  %729 = vmatpush1.bf16.msra.mxu0 %v529
  %730 = vmatprep.subr.bf16.mxu0 0
  %731 = vmatpush1.bf16.msra.mxu0 %v530
  %732 = vmatprep.subr.bf16.mxu0 0
  %733 = vmatpush1.bf16.msra.mxu0 %v531
  %734 = vmatprep.subr.bf16.mxu0 0
  %735 = vmatpush1.bf16.msra.mxu0 %v532
  %736 = vmatprep.subr.bf16.mxu0 0
  %737 = vmatpush1.bf16.msra.mxu0 %v533
  %738 = vmatprep.subr.bf16.mxu0 0
  %739 = vmatpush1.bf16.msra.mxu0 %v534
  %740 = vmatprep.subr.bf16.mxu0 0
  %741 = vmatpush1.bf16.msra.mxu0 %v535
  %742 = vmatprep.subr.bf16.mxu0 0
  %743 = vmatpush1.bf16.msra.mxu0 %v536
  %744 = vmatprep.subr.bf16.mxu0 0
  %745 = vmatpush1.bf16.msra.mxu0 %v537
  %746 = vmatprep.mubr.bf16.mxu0 %v189
  %747 = vmatmul.mubr.bf16.gmra.mrb[0].mxu0 %v188
  %v748 = vpop.f32.mrb[0].mxu0
  %v749 = vadd.f32 %v709, %v748
  %v750 = vpop.f32.mrb[0].mxu0
  %v751 = vpop.f32.mrb[0].mxu0
  %v752 = vpop.f32.mrb[0].mxu0
  %753 = vdwg.mxu0
  %754 = vmatprep.subr.bf16.mxu0 0
  %755 = vmatpush1.bf16.msra.mxu0 %v538
  %756 = vmatprep.subr.bf16.mxu0 0
  %757 = vmatpush1.bf16.msra.mxu0 %v539
  %758 = vmatprep.subr.bf16.mxu0 0
  %759 = vmatpush1.bf16.msra.mxu0 %v540
  %760 = vmatprep.subr.bf16.mxu0 0
  %761 = vmatpush1.bf16.msra.mxu0 %v541
  %762 = vmatprep.subr.bf16.mxu0 0
  %763 = vmatpush1.bf16.msra.mxu0 %v542
  %764 = vmatprep.subr.bf16.mxu0 0
  %765 = vmatpush1.bf16.msra.mxu0 %v543
  %766 = vmatprep.subr.bf16.mxu0 0
  %767 = vmatpush1.bf16.msra.mxu0 %v544
  %768 = vmatprep.subr.bf16.mxu0 0
  %769 = vmatpush1.bf16.msra.mxu0 %v545
  %770 = vmatprep.subr.bf16.mxu0 0
  %771 = vmatpush1.bf16.msra.mxu0 %v546
  %772 = vmatprep.subr.bf16.mxu0 0
  %773 = vmatpush1.bf16.msra.mxu0 %v547
  %774 = vmatprep.subr.bf16.mxu0 0
  %775 = vmatpush1.bf16.msra.mxu0 %v548
  %776 = vmatprep.subr.bf16.mxu0 0
  %777 = vmatpush1.bf16.msra.mxu0 %v549
  %778 = vmatprep.subr.bf16.mxu0 0
  %779 = vmatpush1.bf16.msra.mxu0 %v550
  %780 = vmatprep.subr.bf16.mxu0 0
  %781 = vmatpush1.bf16.msra.mxu0 %v551
  %782 = vmatprep.subr.bf16.mxu0 0
  %783 = vmatpush1.bf16.msra.mxu0 %v552
  %784 = vmatprep.subr.bf16.mxu0 0
  %785 = vmatpush1.bf16.msra.mxu0 %v553
  %786 = vmatprep.mubr.bf16.mxu0 %v191
  %787 = vmatmul.mubr.bf16.gmra.mrb[0].mxu0 %v190
  %v788 = vpop.f32.mrb[0].mxu0
  %v789 = vadd.f32 %v749, %v788
  %v790 = vpop.f32.mrb[0].mxu0
  %v791 = vpop.f32.mrb[0].mxu0
  %v792 = vpop.f32.mrb[0].mxu0
  %793 = vdwg.mxu0
  %794 = vmatprep.subr.bf16.mxu0 0
  %795 = vmatpush1.bf16.msra.mxu0 %v554
  %796 = vmatprep.subr.bf16.mxu0 0
  %797 = vmatpush1.bf16.msra.mxu0 %v555
  %798 = vmatprep.subr.bf16.mxu0 0
  %799 = vmatpush1.bf16.msra.mxu0 %v556
  %800 = vmatprep.subr.bf16.mxu0 0
  %801 = vmatpush1.bf16.msra.mxu0 %v557
  %802 = vmatprep.subr.bf16.mxu0 0
  %803 = vmatpush1.bf16.msra.mxu0 %v558
  %804 = vmatprep.subr.bf16.mxu0 0
  %805 = vmatpush1.bf16.msra.mxu0 %v559
  %806 = vmatprep.subr.bf16.mxu0 0
  %807 = vmatpush1.bf16.msra.mxu0 %v560
  %808 = vmatprep.subr.bf16.mxu0 0
  %809 = vmatpush1.bf16.msra.mxu0 %v561
  %810 = vmatprep.subr.bf16.mxu0 0
  %811 = vmatpush1.bf16.msra.mxu0 0
  %812 = vmatprep.subr.bf16.mxu0 0
  %813 = vmatpush1.bf16.msra.mxu0 0
  %814 = vmatprep.subr.bf16.mxu0 0
  %815 = vmatpush1.bf16.msra.mxu0 0
  %816 = vmatprep.subr.bf16.mxu0 0
  %817 = vmatpush1.bf16.msra.mxu0 0
  %818 = vmatprep.subr.bf16.mxu0 0
  %819 = vmatpush1.bf16.msra.mxu0 0
  %820 = vmatprep.subr.bf16.mxu0 0
  %821 = vmatpush1.bf16.msra.mxu0 0
  %822 = vmatprep.subr.bf16.mxu0 0
  %823 = vmatpush1.bf16.msra.mxu0 0
  %824 = vmatprep.subr.bf16.mxu0 0
  %825 = vmatpush1.bf16.msra.mxu0 0
  %826 = vmatprep.mubr.bf16.mxu0 0
  %827 = vmatmul.mubr.bf16.gmra.mrb[0].mxu0 %v192
  %v828 = vpop.f32.mrb[0].mxu0
  %v829 = vadd.f32 %v789, %v828
  %v830 = vpop.f32.mrb[0].mxu0
  %v831 = vpop.f32.mrb[0].mxu0
  %v832 = vpop.f32.mrb[0].mxu0
  %833 = vdwg.mxu0
  %v834 = vld [vmem:[%s2] sm:$0x1]
  %v836 = vlaneseq
  %v837 = vshrl.u32 %v836, 7
  %v838 = vsub.s32 0, %v837
  %v839 = vrot.slane %v834, %v838
  %v841 = vmul.f32 %v829, %v839
  %v842 = vld [vmem:[%s3] sm:$0x1]
  %v844 = vlaneseq
  %v845 = vshrl.u32 %v844, 7
  %v846 = vsub.s32 0, %v845
  %v847 = vrot.slane %v842, %v846
  %v849 = vadd.f32 %v841, %v847
  %v850 = vld [vmem:[%s4] sm:$0xf]
  %v851 = vunpack.c.l.bf16 %v850
  %v852 = vadd.f32 %v849, %v851
  %v853 = vmax.f32 %v852, 0.0
  %v854 = vpack.c.bf16 %v853, %v853
  %855 = vst [vmem:[%s5] sm:$0xf] %v854
  // Predicated region
  $region22: #{gan_critic_forward.50} parent=0 // pred_check
    _
  $region23: #{gan_critic_forward.50} parent=0 // pred_check_branch
    %857 = sbr.rel (0) target = $region25
  $region24: #{gan_critic_forward.50} parent=0 // pred_region
    _
  $region25: #{gan_critic_forward.50} parent=0 // pred_fallthru
    _
  // Predicated region
  $region26: #{gan_critic_forward.50} parent=0 // pred_check
    _
  $region27: #{gan_critic_forward.50} parent=0 // pred_check_branch
    %859 = sbr.rel (0) target = $region29
  $region28: #{gan_critic_forward.50} parent=0 // pred_region
    _
  $region29: #{gan_critic_forward.50} parent=0 // pred_fallthru
    _

// kernel: gan_critic_forward.51
$region0: #{gan_critic_forward.51}
  #allocation0 [shape = 'u32[]', space=smem, size = 0x4, offset = 0x4, fixed_abs, tag = 'smem constant byte address 0x4 - core index']
  #allocation1 [shape = 'u32[144,128]{1,0:T(1,128)}', space=vmem, size = 0x12000, scoped, tag = 'internal scratch']
  %s0 = inlined_call_operand.vmem [shape: bf16[8,1152], index: 0, kind: input, shape index: {}]
  %s1 = inlined_call_operand.vmem [shape: bf16[1152,128], index: 1, kind: input, shape index: {}]
  %s2 = inlined_call_operand.vmem [shape: f32[1,128], index: 2, kind: input, shape index: {}]
  %s3 = inlined_call_operand.vmem [shape: f32[1,128], index: 3, kind: input, shape index: {}]
  %s4 = inlined_call_operand.vmem [shape: bf16[8,128], index: 4, kind: output, shape index: {}]
  %s5 = sld [smem:[#allocation0]]
  $region26: #{gan_critic_forward.51} parent=0
    _
  %s7 = ssub.s32 1, %s5
  %s8 = scalar_select 0, %s7, %s5
  // Predicated region
  $region2: #{gan_critic_forward.51} parent=0 // pred_check
    _
  $region3: #{gan_critic_forward.51} parent=0 // pred_check_branch
    %10 = sbr.rel (0) target = $region5
  $region4: #{gan_critic_forward.51} parent=0 // pred_region
    _
  $region5: #{gan_critic_forward.51} parent=0 // pred_fallthru
    _
  // Predicated region
  $region6: #{gan_critic_forward.51} parent=0 // pred_check
    _
  $region7: #{gan_critic_forward.51} parent=0 // pred_check_branch
    %12 = sbr.rel (0) target = $region9
  $region8: #{gan_critic_forward.51} parent=0 // pred_region
    _
  $region9: #{gan_critic_forward.51} parent=0 // pred_fallthru
    _
  // Predicated region
  $region10: #{gan_critic_forward.51} parent=0 // pred_check
    _
  $region11: #{gan_critic_forward.51} parent=0 // pred_check_branch
    %14 = sbr.rel (0) target = $region13
  $region12: #{gan_critic_forward.51} parent=0 // pred_region
    _
  $region13: #{gan_critic_forward.51} parent=0 // pred_fallthru
    _
  // Predicated region
  $region14: #{gan_critic_forward.51} parent=0 // pred_check
    _
  $region15: #{gan_critic_forward.51} parent=0 // pred_check_branch
    %16 = sbr.rel (0) target = $region17
  $region16: #{gan_critic_forward.51} parent=0 // pred_region
    _
  $region17: #{gan_critic_forward.51} parent=0 // pred_fallthru
    _
  %v18 = vld [vmem:[%s0] sm:$0xff]
  %v19 = vld [vmem:[%s0 + $0x8] sm:$0xff]
  %v20 = vld [vmem:[%s0 + $0x10] sm:$0xff]
  %v21 = vld [vmem:[%s0 + $0x18] sm:$0xff]
  %v22 = vld [vmem:[%s0 + $0x20] sm:$0xf]
  %v23 = vld [vmem:[%s1] sm:$0xf]
  %v24 = vld [vmem:[%s1 + $0x4] sm:$0xf]
  %v25 = vld [vmem:[%s1 + $0x8] sm:$0xf]
  %v26 = vld [vmem:[%s1 + $0xc] sm:$0xf]
  %v27 = vld [vmem:[%s1 + $0x10] sm:$0xf]
  %v28 = vld [vmem:[%s1 + $0x14] sm:$0xf]
  %v29 = vld [vmem:[%s1 + $0x18] sm:$0xf]
  %v30 = vld [vmem:[%s1 + $0x1c] sm:$0xf]
  %v31 = vld [vmem:[%s1 + $0x20] sm:$0xf]
  %v32 = vld [vmem:[%s1 + $0x24] sm:$0xf]
  %v33 = vld [vmem:[%s1 + $0x28] sm:$0xf]
  %v34 = vld [vmem:[%s1 + $0x2c] sm:$0xf]
  %v35 = vld [vmem:[%s1 + $0x30] sm:$0xf]
  %v36 = vld [vmem:[%s1 + $0x34] sm:$0xf]
  %v37 = vld [vmem:[%s1 + $0x38] sm:$0xf]
  %v38 = vld [vmem:[%s1 + $0x3c] sm:$0xf]
  %v39 = vld [vmem:[%s1 + $0x40] sm:$0xf]
  %v40 = vld [vmem:[%s1 + $0x44] sm:$0xf]
  %v41 = vld [vmem:[%s1 + $0x48] sm:$0xf]
  %v42 = vld [vmem:[%s1 + $0x4c] sm:$0xf]
  %v43 = vld [vmem:[%s1 + $0x50] sm:$0xf]
  %v44 = vld [vmem:[%s1 + $0x54] sm:$0xf]
  %v45 = vld [vmem:[%s1 + $0x58] sm:$0xf]
  %v46 = vld [vmem:[%s1 + $0x5c] sm:$0xf]
  %v47 = vld [vmem:[%s1 + $0x60] sm:$0xf]
  %v48 = vld [vmem:[%s1 + $0x64] sm:$0xf]
  %v49 = vld [vmem:[%s1 + $0x68] sm:$0xf]
  %v50 = vld [vmem:[%s1 + $0x6c] sm:$0xf]
  %v51 = vld [vmem:[%s1 + $0x70] sm:$0xf]
  %v52 = vld [vmem:[%s1 + $0x74] sm:$0xf]
  %v53 = vld [vmem:[%s1 + $0x78] sm:$0xf]
  %v54 = vld [vmem:[%s1 + $0x7c] sm:$0xf]
  %v55 = vld [vmem:[%s1 + $0x80] sm:$0xf]
  %v56 = vld [vmem:[%s1 + $0x84] sm:$0xf]
  %v57 = vld [vmem:[%s1 + $0x88] sm:$0xf]
  %v58 = vld [vmem:[%s1 + $0x8c] sm:$0xf]
  %v59 = vld [vmem:[%s1 + $0x90] sm:$0xf]
  %v60 = vld [vmem:[%s1 + $0x94] sm:$0xf]
  %v61 = vld [vmem:[%s1 + $0x98] sm:$0xf]
  %v62 = vld [vmem:[%s1 + $0x9c] sm:$0xf]
  %v63 = vld [vmem:[%s1 + $0xa0] sm:$0xf]
  %v64 = vld [vmem:[%s1 + $0xa4] sm:$0xf]
  %v65 = vld [vmem:[%s1 + $0xa8] sm:$0xf]
  %v66 = vld [vmem:[%s1 + $0xac] sm:$0xf]
  %v67 = vld [vmem:[%s1 + $0xb0] sm:$0xf]
  %v68 = vld [vmem:[%s1 + $0xb4] sm:$0xf]
  %v69 = vld [vmem:[%s1 + $0xb8] sm:$0xf]
  %v70 = vld [vmem:[%s1 + $0xbc] sm:$0xf]
  %v71 = vld [vmem:[%s1 + $0xc0] sm:$0xf]
  %v72 = vld [vmem:[%s1 + $0xc4] sm:$0xf]
  %v73 = vld [vmem:[%s1 + $0xc8] sm:$0xf]
  %v74 = vld [vmem:[%s1 + $0xcc] sm:$0xf]
  %v75 = vld [vmem:[%s1 + $0xd0] sm:$0xf]
  %v76 = vld [vmem:[%s1 + $0xd4] sm:$0xf]
  %v77 = vld [vmem:[%s1 + $0xd8] sm:$0xf]
  %v78 = vld [vmem:[%s1 + $0xdc] sm:$0xf]
  %v79 = vld [vmem:[%s1 + $0xe0] sm:$0xf]
  %v80 = vld [vmem:[%s1 + $0xe4] sm:$0xf]
  %v81 = vld [vmem:[%s1 + $0xe8] sm:$0xf]
  %v82 = vld [vmem:[%s1 + $0xec] sm:$0xf]
  %v83 = vld [vmem:[%s1 + $0xf0] sm:$0xf]
  %v84 = vld [vmem:[%s1 + $0xf4] sm:$0xf]
  %v85 = vld [vmem:[%s1 + $0xf8] sm:$0xf]
  %v86 = vld [vmem:[%s1 + $0xfc] sm:$0xf]
  %v87 = vld [vmem:[%s1 + $0x100] sm:$0xf]
  %v88 = vld [vmem:[%s1 + $0x104] sm:$0xf]
  %v89 = vld [vmem:[%s1 + $0x108] sm:$0xf]
  %v90 = vld [vmem:[%s1 + $0x10c] sm:$0xf]
  %v91 = vld [vmem:[%s1 + $0x110] sm:$0xf]
  %v92 = vld [vmem:[%s1 + $0x114] sm:$0xf]
  %v93 = vld [vmem:[%s1 + $0x118] sm:$0xf]
  %v94 = vld [vmem:[%s1 + $0x11c] sm:$0xf]
  %v95 = vld [vmem:[%s1 + $0x120] sm:$0xf]
  %v96 = vld [vmem:[%s1 + $0x124] sm:$0xf]
  %v97 = vld [vmem:[%s1 + $0x128] sm:$0xf]
  %v98 = vld [vmem:[%s1 + $0x12c] sm:$0xf]
  %v99 = vld [vmem:[%s1 + $0x130] sm:$0xf]
  %v100 = vld [vmem:[%s1 + $0x134] sm:$0xf]
  %v101 = vld [vmem:[%s1 + $0x138] sm:$0xf]
  %v102 = vld [vmem:[%s1 + $0x13c] sm:$0xf]
  %v103 = vld [vmem:[%s1 + $0x140] sm:$0xf]
  %v104 = vld [vmem:[%s1 + $0x144] sm:$0xf]
  %v105 = vld [vmem:[%s1 + $0x148] sm:$0xf]
  %v106 = vld [vmem:[%s1 + $0x14c] sm:$0xf]
  %v107 = vld [vmem:[%s1 + $0x150] sm:$0xf]
  %v108 = vld [vmem:[%s1 + $0x154] sm:$0xf]
  %v109 = vld [vmem:[%s1 + $0x158] sm:$0xf]
  %v110 = vld [vmem:[%s1 + $0x15c] sm:$0xf]
  %v111 = vld [vmem:[%s1 + $0x160] sm:$0xf]
  %v112 = vld [vmem:[%s1 + $0x164] sm:$0xf]
  %v113 = vld [vmem:[%s1 + $0x168] sm:$0xf]
  %v114 = vld [vmem:[%s1 + $0x16c] sm:$0xf]
  %v115 = vld [vmem:[%s1 + $0x170] sm:$0xf]
  %v116 = vld [vmem:[%s1 + $0x174] sm:$0xf]
  %v117 = vld [vmem:[%s1 + $0x178] sm:$0xf]
  %v118 = vld [vmem:[%s1 + $0x17c] sm:$0xf]
  %v119 = vld [vmem:[%s1 + $0x180] sm:$0xf]
  %v120 = vld [vmem:[%s1 + $0x184] sm:$0xf]
  %v121 = vld [vmem:[%s1 + $0x188] sm:$0xf]
  %v122 = vld [vmem:[%s1 + $0x18c] sm:$0xf]
  %v123 = vld [vmem:[%s1 + $0x190] sm:$0xf]
  %v124 = vld [vmem:[%s1 + $0x194] sm:$0xf]
  %v125 = vld [vmem:[%s1 + $0x198] sm:$0xf]
  %v126 = vld [vmem:[%s1 + $0x19c] sm:$0xf]
  %v127 = vld [vmem:[%s1 + $0x1a0] sm:$0xf]
  %v128 = vld [vmem:[%s1 + $0x1a4] sm:$0xf]
  %v129 = vld [vmem:[%s1 + $0x1a8] sm:$0xf]
  %v130 = vld [vmem:[%s1 + $0x1ac] sm:$0xf]
  %v131 = vld [vmem:[%s1 + $0x1b0] sm:$0xf]
  %v132 = vld [vmem:[%s1 + $0x1b4] sm:$0xf]
  %v133 = vld [vmem:[%s1 + $0x1b8] sm:$0xf]
  %v134 = vld [vmem:[%s1 + $0x1bc] sm:$0xf]
  %v135 = vld [vmem:[%s1 + $0x1c0] sm:$0xf]
  %v136 = vld [vmem:[%s1 + $0x1c4] sm:$0xf]
  %v137 = vld [vmem:[%s1 + $0x1c8] sm:$0xf]
  %v138 = vld [vmem:[%s1 + $0x1cc] sm:$0xf]
  %v139 = vld [vmem:[%s1 + $0x1d0] sm:$0xf]
  %v140 = vld [vmem:[%s1 + $0x1d4] sm:$0xf]
  %v141 = vld [vmem:[%s1 + $0x1d8] sm:$0xf]
  %v142 = vld [vmem:[%s1 + $0x1dc] sm:$0xf]
  %v143 = vld [vmem:[%s1 + $0x1e0] sm:$0xf]
  %v144 = vld [vmem:[%s1 + $0x1e4] sm:$0xf]
  %v145 = vld [vmem:[%s1 + $0x1e8] sm:$0xf]
  %v146 = vld [vmem:[%s1 + $0x1ec] sm:$0xf]
  %v147 = vld [vmem:[%s1 + $0x1f0] sm:$0xf]
  %v148 = vld [vmem:[%s1 + $0x1f4] sm:$0xf]
  %v149 = vld [vmem:[%s1 + $0x1f8] sm:$0xf]
  %v150 = vld [vmem:[%s1 + $0x1fc] sm:$0xf]
  %v151 = vld [vmem:[%s1 + $0x200] sm:$0xf]
  %v152 = vld [vmem:[%s1 + $0x204] sm:$0xf]
  %v153 = vld [vmem:[%s1 + $0x208] sm:$0xf]
  %v154 = vld [vmem:[%s1 + $0x20c] sm:$0xf]
  %v155 = vld [vmem:[%s1 + $0x210] sm:$0xf]
  %v156 = vld [vmem:[%s1 + $0x214] sm:$0xf]
  %v157 = vld [vmem:[%s1 + $0x218] sm:$0xf]
  %v158 = vld [vmem:[%s1 + $0x21c] sm:$0xf]
  %v159 = vld [vmem:[%s1 + $0x220] sm:$0xf]
  %v160 = vld [vmem:[%s1 + $0x224] sm:$0xf]
  %v161 = vld [vmem:[%s1 + $0x228] sm:$0xf]
  %v162 = vld [vmem:[%s1 + $0x22c] sm:$0xf]
  %v163 = vld [vmem:[%s1 + $0x230] sm:$0xf]
  %v164 = vld [vmem:[%s1 + $0x234] sm:$0xf]
  %v165 = vld [vmem:[%s1 + $0x238] sm:$0xf]
  %v166 = vld [vmem:[%s1 + $0x23c] sm:$0xf]
  %v172 = vunpack.c.l.b16 %v18
  %v173 = vunpack.c.h.b16 %v18
  %v174 = vunpack.c.l.b16 %v19
  %v175 = vunpack.c.h.b16 %v19
  %v176 = vunpack.c.l.b16 %v20
  %v177 = vunpack.c.h.b16 %v20
  %v178 = vunpack.c.l.b16 %v21
  %v179 = vunpack.c.h.b16 %v21
  %v180 = vunpack.c.l.b16 %v22
  %v181 = vpack.c.b16 %v172, %v172
  %v182 = vpack.c.b16 %v173, %v173
  %v183 = vpack.c.b16 %v174, %v174
  %v184 = vpack.c.b16 %v175, %v175
  %v185 = vpack.c.b16 %v176, %v176
  %v186 = vpack.c.b16 %v177, %v177
  %v187 = vpack.c.b16 %v178, %v178
  %v188 = vpack.c.b16 %v179, %v179
  %v189 = vpack.c.b16 %v180, %v180
  %v343 = vunpack.c.l.b16 %v23
  %v344 = vunpack.c.l.b16 %v24
  %v345 = vunpack.c.l.b16 %v25
  %v346 = vunpack.c.l.b16 %v26
  %v347 = vunpack.c.l.b16 %v27
  %v348 = vunpack.c.l.b16 %v28
  %v349 = vunpack.c.l.b16 %v29
  %v350 = vunpack.c.l.b16 %v30
  %v351 = vunpack.c.l.b16 %v31
  %v352 = vunpack.c.l.b16 %v32
  %v353 = vunpack.c.l.b16 %v33
  %v354 = vunpack.c.l.b16 %v34
  %v355 = vunpack.c.l.b16 %v35
  %v356 = vunpack.c.l.b16 %v36
  %v357 = vunpack.c.l.b16 %v37
  %v358 = vunpack.c.l.b16 %v38
  %v359 = vunpack.c.l.b16 %v39
  %v360 = vunpack.c.l.b16 %v40
  %v361 = vunpack.c.l.b16 %v41
  %v362 = vunpack.c.l.b16 %v42
  %v363 = vunpack.c.l.b16 %v43
  %v364 = vunpack.c.l.b16 %v44
  %v365 = vunpack.c.l.b16 %v45
  %v366 = vunpack.c.l.b16 %v46
  %v367 = vunpack.c.l.b16 %v47
  %v368 = vunpack.c.l.b16 %v48
  %v369 = vunpack.c.l.b16 %v49
  %v370 = vunpack.c.l.b16 %v50
  %v371 = vunpack.c.l.b16 %v51
  %v372 = vunpack.c.l.b16 %v52
  %v373 = vunpack.c.l.b16 %v53
  %v374 = vunpack.c.l.b16 %v54
  %v375 = vunpack.c.l.b16 %v55
  %v376 = vunpack.c.l.b16 %v56
  %v377 = vunpack.c.l.b16 %v57
  %v378 = vunpack.c.l.b16 %v58
  %v379 = vunpack.c.l.b16 %v59
  %v380 = vunpack.c.l.b16 %v60
  %v381 = vunpack.c.l.b16 %v61
  %v382 = vunpack.c.l.b16 %v62
  %v383 = vunpack.c.l.b16 %v63
  %v384 = vunpack.c.l.b16 %v64
  %v385 = vunpack.c.l.b16 %v65
  %v386 = vunpack.c.l.b16 %v66
  %v387 = vunpack.c.l.b16 %v67
  %v388 = vunpack.c.l.b16 %v68
  %v389 = vunpack.c.l.b16 %v69
  %v390 = vunpack.c.l.b16 %v70
  %v391 = vunpack.c.l.b16 %v71
  %v392 = vunpack.c.l.b16 %v72
  %v393 = vunpack.c.l.b16 %v73
  %v394 = vunpack.c.l.b16 %v74
  %v395 = vunpack.c.l.b16 %v75
  %v396 = vunpack.c.l.b16 %v76
  %v397 = vunpack.c.l.b16 %v77
  %v398 = vunpack.c.l.b16 %v78
  %v399 = vunpack.c.l.b16 %v79
  %v400 = vunpack.c.l.b16 %v80
  %v401 = vunpack.c.l.b16 %v81
  %v402 = vunpack.c.l.b16 %v82
  %v403 = vunpack.c.l.b16 %v83
  %v404 = vunpack.c.l.b16 %v84
  %v405 = vunpack.c.l.b16 %v85
  %v406 = vunpack.c.l.b16 %v86
  %v407 = vunpack.c.l.b16 %v87
  %v408 = vunpack.c.l.b16 %v88
  %v409 = vunpack.c.l.b16 %v89
  %v410 = vunpack.c.l.b16 %v90
  %v411 = vunpack.c.l.b16 %v91
  %v412 = vunpack.c.l.b16 %v92
  %v413 = vunpack.c.l.b16 %v93
  %v414 = vunpack.c.l.b16 %v94
  %v415 = vunpack.c.l.b16 %v95
  %v416 = vunpack.c.l.b16 %v96
  %v417 = vunpack.c.l.b16 %v97
  %v418 = vunpack.c.l.b16 %v98
  %v419 = vunpack.c.l.b16 %v99
  %v420 = vunpack.c.l.b16 %v100
  %v421 = vunpack.c.l.b16 %v101
  %v422 = vunpack.c.l.b16 %v102
  %v423 = vunpack.c.l.b16 %v103
  %v424 = vunpack.c.l.b16 %v104
  %v425 = vunpack.c.l.b16 %v105
  %v426 = vunpack.c.l.b16 %v106
  %v427 = vunpack.c.l.b16 %v107
  %v428 = vunpack.c.l.b16 %v108
  %v429 = vunpack.c.l.b16 %v109
  %v430 = vunpack.c.l.b16 %v110
  %v431 = vunpack.c.l.b16 %v111
  %v432 = vunpack.c.l.b16 %v112
  %v433 = vunpack.c.l.b16 %v113
  %v434 = vunpack.c.l.b16 %v114
  %v435 = vunpack.c.l.b16 %v115
  %v436 = vunpack.c.l.b16 %v116
  %v437 = vunpack.c.l.b16 %v117
  %v438 = vunpack.c.l.b16 %v118
  %v439 = vunpack.c.l.b16 %v119
  %v440 = vunpack.c.l.b16 %v120
  %v441 = vunpack.c.l.b16 %v121
  %v442 = vunpack.c.l.b16 %v122
  %v443 = vunpack.c.l.b16 %v123
  %v444 = vunpack.c.l.b16 %v124
  %v445 = vunpack.c.l.b16 %v125
  %v446 = vunpack.c.l.b16 %v126
  %v447 = vunpack.c.l.b16 %v127
  %v448 = vunpack.c.l.b16 %v128
  %v449 = vunpack.c.l.b16 %v129
  %v450 = vunpack.c.l.b16 %v130
  %v451 = vunpack.c.l.b16 %v131
  %v452 = vunpack.c.l.b16 %v132
  %v453 = vunpack.c.l.b16 %v133
  %v454 = vunpack.c.l.b16 %v134
  %v455 = vunpack.c.l.b16 %v135
  %v456 = vunpack.c.l.b16 %v136
  %v457 = vunpack.c.l.b16 %v137
  %v458 = vunpack.c.l.b16 %v138
  %v459 = vunpack.c.l.b16 %v139
  %v460 = vunpack.c.l.b16 %v140
  %v461 = vunpack.c.l.b16 %v141
  %v462 = vunpack.c.l.b16 %v142
  %v463 = vunpack.c.l.b16 %v143
  %v464 = vunpack.c.l.b16 %v144
  %v465 = vunpack.c.l.b16 %v145
  %v466 = vunpack.c.l.b16 %v146
  %v467 = vunpack.c.l.b16 %v147
  %v468 = vunpack.c.l.b16 %v148
  %v469 = vunpack.c.l.b16 %v149
  %v470 = vunpack.c.l.b16 %v150
  %v471 = vunpack.c.l.b16 %v151
  %v472 = vunpack.c.l.b16 %v152
  %v473 = vunpack.c.l.b16 %v153
  %v474 = vunpack.c.l.b16 %v154
  %v475 = vunpack.c.l.b16 %v155
  %v476 = vunpack.c.l.b16 %v156
  %v477 = vunpack.c.l.b16 %v157
  %v478 = vunpack.c.l.b16 %v158
  %v479 = vunpack.c.l.b16 %v159
  %v480 = vunpack.c.l.b16 %v160
  %v481 = vunpack.c.l.b16 %v161
  %v482 = vunpack.c.l.b16 %v162
  %v483 = vunpack.c.l.b16 %v163
  %v484 = vunpack.c.l.b16 %v164
  %v485 = vunpack.c.l.b16 %v165
  %v486 = vunpack.c.l.b16 %v166
  %v487 = vpack.c.b16 %v344, %v343
  %v488 = vpack.c.b16 %v346, %v345
  %v489 = vpack.c.b16 %v348, %v347
  %v490 = vpack.c.b16 %v350, %v349
  %v491 = vpack.c.b16 %v352, %v351
  %v492 = vpack.c.b16 %v354, %v353
  %v493 = vpack.c.b16 %v356, %v355
  %v494 = vpack.c.b16 %v358, %v357
  %v495 = vpack.c.b16 %v360, %v359
  %v496 = vpack.c.b16 %v362, %v361
  %v497 = vpack.c.b16 %v364, %v363
  %v498 = vpack.c.b16 %v366, %v365
  %v499 = vpack.c.b16 %v368, %v367
  %v500 = vpack.c.b16 %v370, %v369
  %v501 = vpack.c.b16 %v372, %v371
  %v502 = vpack.c.b16 %v374, %v373
  %v503 = vpack.c.b16 %v376, %v375
  %v504 = vpack.c.b16 %v378, %v377
  %v505 = vpack.c.b16 %v380, %v379
  %v506 = vpack.c.b16 %v382, %v381
  %v507 = vpack.c.b16 %v384, %v383
  %v508 = vpack.c.b16 %v386, %v385
  %v509 = vpack.c.b16 %v388, %v387
  %v510 = vpack.c.b16 %v390, %v389
  %v511 = vpack.c.b16 %v392, %v391
  %v512 = vpack.c.b16 %v394, %v393
  %v513 = vpack.c.b16 %v396, %v395
  %v514 = vpack.c.b16 %v398, %v397
  %v515 = vpack.c.b16 %v400, %v399
  %v516 = vpack.c.b16 %v402, %v401
  %v517 = vpack.c.b16 %v404, %v403
  %v518 = vpack.c.b16 %v406, %v405
  %v519 = vpack.c.b16 %v408, %v407
  %v520 = vpack.c.b16 %v410, %v409
  %v521 = vpack.c.b16 %v412, %v411
  %v522 = vpack.c.b16 %v414, %v413
  %v523 = vpack.c.b16 %v416, %v415
  %v524 = vpack.c.b16 %v418, %v417
  %v525 = vpack.c.b16 %v420, %v419
  %v526 = vpack.c.b16 %v422, %v421
  %v527 = vpack.c.b16 %v424, %v423
  %v528 = vpack.c.b16 %v426, %v425
  %v529 = vpack.c.b16 %v428, %v427
  %v530 = vpack.c.b16 %v430, %v429
  %v531 = vpack.c.b16 %v432, %v431
  %v532 = vpack.c.b16 %v434, %v433
  %v533 = vpack.c.b16 %v436, %v435
  %v534 = vpack.c.b16 %v438, %v437
  %v535 = vpack.c.b16 %v440, %v439
  %v536 = vpack.c.b16 %v442, %v441
  %v537 = vpack.c.b16 %v444, %v443
  %v538 = vpack.c.b16 %v446, %v445
  %v539 = vpack.c.b16 %v448, %v447
  %v540 = vpack.c.b16 %v450, %v449
  %v541 = vpack.c.b16 %v452, %v451
  %v542 = vpack.c.b16 %v454, %v453
  %v543 = vpack.c.b16 %v456, %v455
  %v544 = vpack.c.b16 %v458, %v457
  %v545 = vpack.c.b16 %v460, %v459
  %v546 = vpack.c.b16 %v462, %v461
  %v547 = vpack.c.b16 %v464, %v463
  %v548 = vpack.c.b16 %v466, %v465
  %v549 = vpack.c.b16 %v468, %v467
  %v550 = vpack.c.b16 %v470, %v469
  %v551 = vpack.c.b16 %v472, %v471
  %v552 = vpack.c.b16 %v474, %v473
  %v553 = vpack.c.b16 %v476, %v475
  %v554 = vpack.c.b16 %v478, %v477
  %v555 = vpack.c.b16 %v480, %v479
  %v556 = vpack.c.b16 %v482, %v481
  %v557 = vpack.c.b16 %v484, %v483
  %v558 = vpack.c.b16 %v486, %v485
  %631 = vmatprep.subr.bf16.mxu0 0
  %632 = vmatpush1.bf16.msra.mxu0 %v487
  %633 = vmatprep.subr.bf16.mxu0 0
  %634 = vmatpush1.bf16.msra.mxu0 %v488
  %635 = vmatprep.subr.bf16.mxu0 0
  %636 = vmatpush1.bf16.msra.mxu0 %v489
  %637 = vmatprep.subr.bf16.mxu0 0
  %638 = vmatpush1.bf16.msra.mxu0 %v490
  %639 = vmatprep.subr.bf16.mxu0 0
  %640 = vmatpush1.bf16.msra.mxu0 %v491
  %641 = vmatprep.subr.bf16.mxu0 0
  %642 = vmatpush1.bf16.msra.mxu0 %v492
  %643 = vmatprep.subr.bf16.mxu0 0
  %644 = vmatpush1.bf16.msra.mxu0 %v493
  %645 = vmatprep.subr.bf16.mxu0 0
  %646 = vmatpush1.bf16.msra.mxu0 %v494
  %647 = vmatprep.subr.bf16.mxu0 0
  %648 = vmatpush1.bf16.msra.mxu0 %v495
  %649 = vmatprep.subr.bf16.mxu0 0
  %650 = vmatpush1.bf16.msra.mxu0 %v496
  %651 = vmatprep.subr.bf16.mxu0 0
  %652 = vmatpush1.bf16.msra.mxu0 %v497
  %653 = vmatprep.subr.bf16.mxu0 0
  %654 = vmatpush1.bf16.msra.mxu0 %v498
  %655 = vmatprep.subr.bf16.mxu0 0
  %656 = vmatpush1.bf16.msra.mxu0 %v499
  %657 = vmatprep.subr.bf16.mxu0 0
  %658 = vmatpush1.bf16.msra.mxu0 %v500
  %659 = vmatprep.subr.bf16.mxu0 0
  %660 = vmatpush1.bf16.msra.mxu0 %v501
  %661 = vmatprep.subr.bf16.mxu0 0
  %662 = vmatpush1.bf16.msra.mxu0 %v502
  %663 = vmatprep.mubr.bf16.mxu0 %v182
  %664 = vmatmul.mubr.bf16.gmra.mrb[0].mxu0 %v181
  %v665 = vpop.f32.mrb[0].mxu0
  %v666 = vadd.f32 0.0, %v665
  %v667 = vpop.f32.mrb[0].mxu0
  %v668 = vpop.f32.mrb[0].mxu0
  %v669 = vpop.f32.mrb[0].mxu0
  %670 = vdwg.mxu0
  %671 = vmatprep.subr.bf16.mxu0 0
  %672 = vmatpush1.bf16.msra.mxu0 %v503
  %673 = vmatprep.subr.bf16.mxu0 0
  %674 = vmatpush1.bf16.msra.mxu0 %v504
  %675 = vmatprep.subr.bf16.mxu0 0
  %676 = vmatpush1.bf16.msra.mxu0 %v505
  %677 = vmatprep.subr.bf16.mxu0 0
  %678 = vmatpush1.bf16.msra.mxu0 %v506
  %679 = vmatprep.subr.bf16.mxu0 0
  %680 = vmatpush1.bf16.msra.mxu0 %v507
  %681 = vmatprep.subr.bf16.mxu0 0
  %682 = vmatpush1.bf16.msra.mxu0 %v508
  %683 = vmatprep.subr.bf16.mxu0 0
  %684 = vmatpush1.bf16.msra.mxu0 %v509
  %685 = vmatprep.subr.bf16.mxu0 0
  %686 = vmatpush1.bf16.msra.mxu0 %v510
  %687 = vmatprep.subr.bf16.mxu0 0
  %688 = vmatpush1.bf16.msra.mxu0 %v511
  %689 = vmatprep.subr.bf16.mxu0 0
  %690 = vmatpush1.bf16.msra.mxu0 %v512
  %691 = vmatprep.subr.bf16.mxu0 0
  %692 = vmatpush1.bf16.msra.mxu0 %v513
  %693 = vmatprep.subr.bf16.mxu0 0
  %694 = vmatpush1.bf16.msra.mxu0 %v514
  %695 = vmatprep.subr.bf16.mxu0 0
  %696 = vmatpush1.bf16.msra.mxu0 %v515
  %697 = vmatprep.subr.bf16.mxu0 0
  %698 = vmatpush1.bf16.msra.mxu0 %v516
  %699 = vmatprep.subr.bf16.mxu0 0
  %700 = vmatpush1.bf16.msra.mxu0 %v517
  %701 = vmatprep.subr.bf16.mxu0 0
  %702 = vmatpush1.bf16.msra.mxu0 %v518
  %703 = vmatprep.mubr.bf16.mxu0 %v184
  %704 = vmatmul.mubr.bf16.gmra.mrb[0].mxu0 %v183
  %v705 = vpop.f32.mrb[0].mxu0
  %v706 = vadd.f32 %v666, %v705
  %v707 = vpop.f32.mrb[0].mxu0
  %v708 = vpop.f32.mrb[0].mxu0
  %v709 = vpop.f32.mrb[0].mxu0
  %710 = vdwg.mxu0
  %711 = vmatprep.subr.bf16.mxu0 0
  %712 = vmatpush1.bf16.msra.mxu0 %v519
  %713 = vmatprep.subr.bf16.mxu0 0
  %714 = vmatpush1.bf16.msra.mxu0 %v520
  %715 = vmatprep.subr.bf16.mxu0 0
  %716 = vmatpush1.bf16.msra.mxu0 %v521
  %717 = vmatprep.subr.bf16.mxu0 0
  %718 = vmatpush1.bf16.msra.mxu0 %v522
  %719 = vmatprep.subr.bf16.mxu0 0
  %720 = vmatpush1.bf16.msra.mxu0 %v523
  %721 = vmatprep.subr.bf16.mxu0 0
  %722 = vmatpush1.bf16.msra.mxu0 %v524
  %723 = vmatprep.subr.bf16.mxu0 0
  %724 = vmatpush1.bf16.msra.mxu0 %v525
  %725 = vmatprep.subr.bf16.mxu0 0
  %726 = vmatpush1.bf16.msra.mxu0 %v526
  %727 = vmatprep.subr.bf16.mxu0 0
  %728 = vmatpush1.bf16.msra.mxu0 %v527
  %729 = vmatprep.subr.bf16.mxu0 0
  %730 = vmatpush1.bf16.msra.mxu0 %v528
  %731 = vmatprep.subr.bf16.mxu0 0
  %732 = vmatpush1.bf16.msra.mxu0 %v529
  %733 = vmatprep.subr.bf16.mxu0 0
  %734 = vmatpush1.bf16.msra.mxu0 %v530
  %735 = vmatprep.subr.bf16.mxu0 0
  %736 = vmatpush1.bf16.msra.mxu0 %v531
  %737 = vmatprep.subr.bf16.mxu0 0
  %738 = vmatpush1.bf16.msra.mxu0 %v532
  %739 = vmatprep.subr.bf16.mxu0 0
  %740 = vmatpush1.bf16.msra.mxu0 %v533
  %741 = vmatprep.subr.bf16.mxu0 0
  %742 = vmatpush1.bf16.msra.mxu0 %v534
  %743 = vmatprep.mubr.bf16.mxu0 %v186
  %744 = vmatmul.mubr.bf16.gmra.mrb[0].mxu0 %v185
  %v745 = vpop.f32.mrb[0].mxu0
  %v746 = vadd.f32 %v706, %v745
  %v747 = vpop.f32.mrb[0].mxu0
  %v748 = vpop.f32.mrb[0].mxu0
  %v749 = vpop.f32.mrb[0].mxu0
  %750 = vdwg.mxu0
  %751 = vmatprep.subr.bf16.mxu0 0
  %752 = vmatpush1.bf16.msra.mxu0 %v535
  %753 = vmatprep.subr.bf16.mxu0 0
  %754 = vmatpush1.bf16.msra.mxu0 %v536
  %755 = vmatprep.subr.bf16.mxu0 0
  %756 = vmatpush1.bf16.msra.mxu0 %v537
  %757 = vmatprep.subr.bf16.mxu0 0
  %758 = vmatpush1.bf16.msra.mxu0 %v538
  %759 = vmatprep.subr.bf16.mxu0 0
  %760 = vmatpush1.bf16.msra.mxu0 %v539
  %761 = vmatprep.subr.bf16.mxu0 0
  %762 = vmatpush1.bf16.msra.mxu0 %v540
  %763 = vmatprep.subr.bf16.mxu0 0
  %764 = vmatpush1.bf16.msra.mxu0 %v541
  %765 = vmatprep.subr.bf16.mxu0 0
  %766 = vmatpush1.bf16.msra.mxu0 %v542
  %767 = vmatprep.subr.bf16.mxu0 0
  %768 = vmatpush1.bf16.msra.mxu0 %v543
  %769 = vmatprep.subr.bf16.mxu0 0
  %770 = vmatpush1.bf16.msra.mxu0 %v544
  %771 = vmatprep.subr.bf16.mxu0 0
  %772 = vmatpush1.bf16.msra.mxu0 %v545
  %773 = vmatprep.subr.bf16.mxu0 0
  %774 = vmatpush1.bf16.msra.mxu0 %v546
  %775 = vmatprep.subr.bf16.mxu0 0
  %776 = vmatpush1.bf16.msra.mxu0 %v547
  %777 = vmatprep.subr.bf16.mxu0 0
  %778 = vmatpush1.bf16.msra.mxu0 %v548
  %779 = vmatprep.subr.bf16.mxu0 0
  %780 = vmatpush1.bf16.msra.mxu0 %v549
  %781 = vmatprep.subr.bf16.mxu0 0
  %782 = vmatpush1.bf16.msra.mxu0 %v550
  %783 = vmatprep.mubr.bf16.mxu0 %v188
  %784 = vmatmul.mubr.bf16.gmra.mrb[0].mxu0 %v187
  %v785 = vpop.f32.mrb[0].mxu0
  %v786 = vadd.f32 %v746, %v785
  %v787 = vpop.f32.mrb[0].mxu0
  %v788 = vpop.f32.mrb[0].mxu0
  %v789 = vpop.f32.mrb[0].mxu0
  %790 = vdwg.mxu0
  %791 = vmatprep.subr.bf16.mxu0 0
  %792 = vmatpush1.bf16.msra.mxu0 %v551
  %793 = vmatprep.subr.bf16.mxu0 0
  %794 = vmatpush1.bf16.msra.mxu0 %v552
  %795 = vmatprep.subr.bf16.mxu0 0
  %796 = vmatpush1.bf16.msra.mxu0 %v553
  %797 = vmatprep.subr.bf16.mxu0 0
  %798 = vmatpush1.bf16.msra.mxu0 %v554
  %799 = vmatprep.subr.bf16.mxu0 0
  %800 = vmatpush1.bf16.msra.mxu0 %v555
  %801 = vmatprep.subr.bf16.mxu0 0
  %802 = vmatpush1.bf16.msra.mxu0 %v556
  %803 = vmatprep.subr.bf16.mxu0 0
  %804 = vmatpush1.bf16.msra.mxu0 %v557
  %805 = vmatprep.subr.bf16.mxu0 0
  %806 = vmatpush1.bf16.msra.mxu0 %v558
  %807 = vmatprep.subr.bf16.mxu0 0
  %808 = vmatpush1.bf16.msra.mxu0 0
  %809 = vmatprep.subr.bf16.mxu0 0
  %810 = vmatpush1.bf16.msra.mxu0 0
  %811 = vmatprep.subr.bf16.mxu0 0
  %812 = vmatpush1.bf16.msra.mxu0 0
  %813 = vmatprep.subr.bf16.mxu0 0
  %814 = vmatpush1.bf16.msra.mxu0 0
  %815 = vmatprep.subr.bf16.mxu0 0
  %816 = vmatpush1.bf16.msra.mxu0 0
  %817 = vmatprep.subr.bf16.mxu0 0
  %818 = vmatpush1.bf16.msra.mxu0 0
  %819 = vmatprep.subr.bf16.mxu0 0
  %820 = vmatpush1.bf16.msra.mxu0 0
  %821 = vmatprep.subr.bf16.mxu0 0
  %822 = vmatpush1.bf16.msra.mxu0 0
  %823 = vmatprep.mubr.bf16.mxu0 0
  %824 = vmatmul.mubr.bf16.gmra.mrb[0].mxu0 %v189
  %v825 = vpop.f32.mrb[0].mxu0
  %v826 = vadd.f32 %v786, %v825
  %v827 = vpop.f32.mrb[0].mxu0
  %v828 = vpop.f32.mrb[0].mxu0
  %v829 = vpop.f32.mrb[0].mxu0
  %830 = vdwg.mxu0
  %v831 = vld [vmem:[%s2] sm:$0x1]
  %v833 = vlaneseq
  %v834 = vshrl.u32 %v833, 7
  %v835 = vsub.s32 0, %v834
  %v836 = vrot.slane %v831, %v835
  %v838 = vmul.f32 %v826, %v836
  %v839 = vld [vmem:[%s3] sm:$0x1]
  %v841 = vlaneseq
  %v842 = vshrl.u32 %v841, 7
  %v843 = vsub.s32 0, %v842
  %v844 = vrot.slane %v839, %v843
  %v846 = vadd.f32 %v838, %v844
  %v847 = vmax.f32 %v846, 0.0
  %v848 = vpack.c.bf16 %v847, %v847
  %849 = vst [vmem:[%s4] sm:$0xf] %v848
  // Predicated region
  $region18: #{gan_critic_forward.51} parent=0 // pred_check
    _
  $region19: #{gan_critic_forward.51} parent=0 // pred_check_branch
    %851 = sbr.rel (0) target = $region21
  $region20: #{gan_critic_forward.51} parent=0 // pred_region
    _
  $region21: #{gan_critic_forward.51} parent=0 // pred_fallthru
    _
  // Predicated region
  $region22: #{gan_critic_forward.51} parent=0 // pred_check
    _
  $region23: #{gan_critic_forward.51} parent=0 // pred_check_branch
    %853 = sbr.rel (0) target = $region25
  $region24: #{gan_critic_forward.51} parent=0 // pred_region
    _
  $region25: #{gan_critic_forward.51} parent=0 // pred_fallthru
    _

</llo_original>
